<compile_context>
chip_gen: v7x
topology: tpu7x:2x2x1
jax: 0.10.0
libtpu: 0.0.40
codegen_flags: <defaults>
</compile_context>

<pallas_src>
import functools
import numpy as np
import jax
import jax.numpy as jnp
from jax import lax
from jax.experimental import pallas as pl
from jax.experimental.pallas import tpu as pltpu

# ----------------------------- config (small, synthetic) -----------------------------
B = 2            # batch of videos / texts
T = 3            # frames per video
C = 3            # image channels
IMG = 16         # image resolution
PATCH = 8        # ViT patch size  -> 2x2 = 4 patches
VIT_W = 32       # ViT width
HEADS = 4        # attention heads (head_dim = 8)
VIT_LAYERS = 2
EMBED = 32       # CLIP joint embedding dim
CTX = 8          # text context length
VOCAB = 64
TXT_W = 32
TXT_LAYERS = 2
TEMP_LAYERS = 1

NPATCH = (IMG // PATCH) ** 2
CPP = C * PATCH * PATCH


# ----------------------------- in-kernel helpers (traced inside Pallas kernels) -----------------------------
def _mm(a, b):
    # bf16 operands, f32 accumulation: MXU fast path on v5e/v6e/v7x.
    return jnp.dot(a.astype(jnp.bfloat16), b.astype(jnp.bfloat16),
                   preferred_element_type=jnp.float32)


def _layernorm(x, g, b, eps=1e-5):
    mu = jnp.mean(x, axis=-1, keepdims=True)
    var = jnp.mean(jnp.square(x - mu), axis=-1, keepdims=True)
    return (x - mu) * lax.rsqrt(var + eps) * g + b


def _quick_gelu(y):
    return y * jax.nn.sigmoid(1.702 * y)


def _mha(x, qkv_w, qkv_b, proj_w, proj_b, heads, causal_mask):
    # Multi-head attention fully in-kernel: head split/merge via static lane slices.
    L, D = x.shape
    dh = D // heads
    scale = 1.0 / float(np.sqrt(dh))
    qkv = _mm(x, qkv_w) + qkv_b                       # (L, 3D) f32
    q = qkv[:, 0:D]
    k = qkv[:, D:2 * D]
    v = qkv[:, 2 * D:3 * D]
    outs = []
    for h in range(heads):                            # unrolled at trace time
        sl = slice(h * dh, (h + 1) * dh)
        qh, kh, vh = q[:, sl], k[:, sl], v[:, sl]
        s = _mm(qh, kh.T) * scale                     # (L, L) f32
        if causal_mask is not None:
            s = jnp.where(causal_mask, s, -1e30)
        s = s - jnp.max(s, axis=-1, keepdims=True)
        p = jnp.exp(s)
        p = p * pl.reciprocal(jnp.sum(p, axis=-1, keepdims=True), approx=True)
        outs.append(_mm(p, vh))                       # (L, dh)
    o = jnp.concatenate(outs, axis=-1)                # (L, D)
    return _mm(o, proj_w) + proj_b


def _residual_block(x, heads, causal_mask,
                    ln1_g, ln1_b, qkv_w, qkv_b, proj_w, proj_b,
                    ln2_g, ln2_b, fc1_w, fc1_b, fc2_w, fc2_b):
    h = _layernorm(x, ln1_g, ln1_b)
    x = x + _mha(h, qkv_w, qkv_b, proj_w, proj_b, heads, causal_mask)
    h = _layernorm(x, ln2_g, ln2_b)
    h = _quick_gelu(_mm(h, fc1_w) + fc1_b)
    h = _mm(h, fc2_w) + fc2_b
    return x + h


def _run_blocks(x, nl, heads, causal_mask, blk_refs):
    (ln1g, ln1b, qkvw, qkvb, projw, projb,
     ln2g, ln2b, fc1w, fc1b, fc2w, fc2b) = blk_refs
    for l in range(nl):                               # unrolled; static indices into stacked params
        x = _residual_block(x, heads, causal_mask,
                            ln1g[l], ln1b[l], qkvw[l], qkvb[l], projw[l], projb[l],
                            ln2g[l], ln2b[l], fc1w[l], fc1b[l], fc2w[l], fc2b[l])
    return x


# ----------------------------- fused tower kernels -----------------------------
def _vit_tower_kernel(nl, heads,
                      x_ref, conv_w_ref, cls_ref, pos_ref, lnpre_g_ref, lnpre_b_ref,
                      lnpost_g_ref, lnpost_b_ref, projout_ref,
                      ln1g, ln1b, qkvw, qkvb, projw, projb,
                      ln2g, ln2b, fc1w, fc1b, fc2w, fc2b,
                      o_ref):
    # one frame per grid step
    x = _mm(x_ref[0], conv_w_ref[...])                              # patch embed (Conv2d bias=False)
    x = jnp.concatenate([cls_ref[...], x], axis=0) + pos_ref[...]   # (L, D)
    x = _layernorm(x, lnpre_g_ref[...], lnpre_b_ref[...])
    x = _run_blocks(x, nl, heads, None,
                    (ln1g, ln1b, qkvw, qkvb, projw, projb,
                     ln2g, ln2b, fc1w, fc1b, fc2w, fc2b))
    cls_out = _layernorm(x[0:1, :], lnpost_g_ref[...], lnpost_b_ref[...])
    o_ref[0] = _mm(cls_out, projout_ref[...])                        # (1, EMBED)


def _gpt_tower_kernel(nl, heads, ctx,
                      x_ref, eot_ref, pos_ref, lnf_g_ref, lnf_b_ref, projout_ref,
                      ln1g, ln1b, qkvw, qkvb, projw, projb,
                      ln2g, ln2b, fc1w, fc1b, fc2w, fc2b,
                      o_ref):
    # one text sequence per grid step
    x = x_ref[0] + pos_ref[...]                                      # (CTX, D)
    row = lax.broadcasted_iota(jnp.int32, (ctx, ctx), 0)
    col = lax.broadcasted_iota(jnp.int32, (ctx, ctx), 1)
    causal_mask = col <= row
    x = _run_blocks(x, nl, heads, causal_mask,
                    (ln1g, ln1b, qkvw, qkvb, projw, projb,
                     ln2g, ln2b, fc1w, fc1b, fc2w, fc2b))
    x = _layernorm(x, lnf_g_ref[...], lnf_b_ref[...])                # (CTX, D)
    x_eot = jnp.dot(eot_ref[0], x, preferred_element_type=jnp.float32)   # (1,CTX)@(CTX,D) EOT gather
    o_ref[0] = _mm(x_eot, projout_ref[...])                          # (1, EMBED)


def _temporal_tower_kernel(nl, heads,
                           x_ref, cls_ref, pos_ref, lnf_g_ref, lnf_b_ref,
                           ln1g, ln1b, qkvw, qkvb, projw, projb,
                           ln2g, ln2b, fc1w, fc1b, fc2w, fc2b,
                           o_ref):
    # one video per grid step.
    # TODO(synk): official MineCLIP temporal transformer uses GLU/Swish FFN; plain CLIP block used here.
    x = jnp.concatenate([cls_ref[...], x_ref[0]], axis=0) + pos_ref[...]   # (T+1, D)
    x = _run_blocks(x, nl, heads, None,
                    (ln1g, ln1b, qkvw, qkvb, projw, projb,
                     ln2g, ln2b, fc1w, fc1b, fc2w, fc2b))
    o_ref[0] = _layernorm(x[0:1, :], lnf_g_ref[...], lnf_b_ref[...])


def _adapter_norm_kernel(v_ref, t_ref,
                         vw1_ref, vb1_ref, vw2_ref, vb2_ref,
                         tw1_ref, tb1_ref, tw2_ref, tb2_ref, ls_ref,
                         ov_ref, ot_ref):
    v = v_ref[...]
    t = t_ref[...]
    dv = _mm(_quick_gelu(_mm(v, vw1_ref[...]) + vb1_ref[...]), vw2_ref[...]) + vb2_ref[...]
    dt = _mm(_quick_gelu(_mm(t, tw1_ref[...]) + tb1_ref[...]), tw2_ref[...]) + tb2_ref[...]
    av = v + dv
    at = t + dt
    # L2-normalize along dim=1 (no eps, matching reference CLIP), scale video features.
    vn = av * lax.rsqrt(jnp.sum(av * av, axis=-1, keepdims=True))
    tn = at * lax.rsqrt(jnp.sum(at * at, axis=-1, keepdims=True))
    ov_ref[...] = jnp.exp(ls_ref[0, 0]) * vn
    ot_ref[...] = tn


# ----------------------------- host-side wrappers -----------------------------
def _replicated_spec(arr):
    zeros = (0,) * arr.ndim
    return pl.BlockSpec(arr.shape, lambda i, _z=zeros: _z)


def _stack_blocks(blocks):
    """Stack per-layer params into (NL, ...) arrays so the fused kernel indexes them statically."""
    return (
        jnp.stack([b["ln1_g"].reshape(1, -1) for b in blocks]),
        jnp.stack([b["ln1_b"].reshape(1, -1) for b in blocks]),
        jnp.stack([b["qkv"]["w"] for b in blocks]),
        jnp.stack([b["qkv"]["b"].reshape(1, -1) for b in blocks]),
        jnp.stack([b["proj"]["w"] for b in blocks]),
        jnp.stack([b["proj"]["b"].reshape(1, -1) for b in blocks]),
        jnp.stack([b["ln2_g"].reshape(1, -1) for b in blocks]),
        jnp.stack([b["ln2_b"].reshape(1, -1) for b in blocks]),
        jnp.stack([b["fc1"]["w"] for b in blocks]),
        jnp.stack([b["fc1"]["b"].reshape(1, -1) for b in blocks]),
        jnp.stack([b["fc2"]["w"] for b in blocks]),
        jnp.stack([b["fc2"]["b"].reshape(1, -1) for b in blocks]),
    )


def vit_forward(p, videos):
    Bv, Tv, Cv, H, W = videos.shape
    gp = H // PATCH
    npatch = gp * gp
    BT = Bv * Tv
    # patchify, channel-major like Conv2d weight (out, C, P, P) — glue only (no compute)
    x = videos.reshape(BT, Cv, gp, PATCH, gp, PATCH)
    x = x.transpose(0, 2, 4, 1, 3, 5).reshape(BT, npatch, Cv * PATCH * PATCH).astype(jnp.float32)

    blocks = _stack_blocks(p["blocks"])
    args = (x, p["conv_w"], p["cls"].reshape(1, VIT_W), p["pos"],
            p["ln_pre_g"].reshape(1, VIT_W), p["ln_pre_b"].reshape(1, VIT_W),
            p["ln_post_g"].reshape(1, VIT_W), p["ln_post_b"].reshape(1, VIT_W),
            p["proj_out"]) + blocks

    in_specs = [pl.BlockSpec((1, npatch, Cv * PATCH * PATCH), lambda i: (i, 0, 0))]
    in_specs += [_replicated_spec(a) for a in args[1:]]

    out = pl.pallas_call(
        functools.partial(_vit_tower_kernel, len(p["blocks"]), HEADS),
        out_shape=jax.ShapeDtypeStruct((BT, 1, EMBED), jnp.float32),
        grid=(BT,),
        in_specs=in_specs,
        out_specs=pl.BlockSpec((1, 1, EMBED), lambda i: (i, 0, 0)),
        compiler_params=pltpu.CompilerParams(dimension_semantics=("parallel",)),
    )(*args)
    return out.reshape(Bv, Tv, EMBED)


def gpt_forward(p, text):
    Bt, L = text.shape
    # embedding lookup + EOT index (CLIP convention: argmax of token ids) — glue only
    x = jnp.take(p["tok_emb"], text, axis=0).astype(jnp.float32)       # (B, CTX, D)
    eot = jnp.argmax(text, axis=-1)
    eot_oh = jax.nn.one_hot(eot, L, dtype=jnp.float32).reshape(Bt, 1, L)

    blocks = _stack_blocks(p["blocks"])
    args = (x, eot_oh, p["pos"],
            p["lnf_g"].reshape(1, TXT_W), p["lnf_b"].reshape(1, TXT_W),
            p["proj_out"]) + blocks

    in_specs = [pl.BlockSpec((1, L, TXT_W), lambda i: (i, 0, 0)),
                pl.BlockSpec((1, 1, L), lambda i: (i, 0, 0))]
    in_specs += [_replicated_spec(a) for a in args[2:]]

    out = pl.pallas_call(
        functools.partial(_gpt_tower_kernel, len(p["blocks"]), HEADS, L),
        out_shape=jax.ShapeDtypeStruct((Bt, 1, EMBED), jnp.float32),
        grid=(Bt,),
        in_specs=in_specs,
        out_specs=pl.BlockSpec((1, 1, EMBED), lambda i: (i, 0, 0)),
        compiler_params=pltpu.CompilerParams(dimension_semantics=("parallel",)),
    )(*args)
    return out.reshape(Bt, EMBED)


def temporal_forward(p, x):
    Bv, Tv, D = x.shape
    blocks = _stack_blocks(p["blocks"])
    args = (x, p["cls"].reshape(1, D), p["pos"],
            p["lnf_g"].reshape(1, D), p["lnf_b"].reshape(1, D)) + blocks

    in_specs = [pl.BlockSpec((1, Tv, D), lambda i: (i, 0, 0))]
    in_specs += [_replicated_spec(a) for a in args[1:]]

    out = pl.pallas_call(
        functools.partial(_temporal_tower_kernel, len(p["blocks"]), HEADS),
        out_shape=jax.ShapeDtypeStruct((Bv, 1, D), jnp.float32),
        grid=(Bv,),
        in_specs=in_specs,
        out_specs=pl.BlockSpec((1, 1, D), lambda i: (i, 0, 0)),
        compiler_params=pltpu.CompilerParams(dimension_semantics=("parallel",)),
    )(*args)
    return out.reshape(Bv, D)


def adapter_and_normalize(p, v, t, logit_scale):
    Bv, D = v.shape
    ls = jnp.reshape(logit_scale, (1, 1)).astype(jnp.float32)
    args = (v, t,
            p["v_fc1"]["w"], p["v_fc1"]["b"].reshape(1, -1),
            p["v_fc2"]["w"], p["v_fc2"]["b"].reshape(1, -1),
            p["t_fc1"]["w"], p["t_fc1"]["b"].reshape(1, -1),
            p["t_fc2"]["w"], p["t_fc2"]["b"].reshape(1, -1),
            ls)
    in_specs = [_replicated_spec(a) for a in args]
    out_spec = pl.BlockSpec((Bv, D), lambda i: (0, 0))
    return pl.pallas_call(
        _adapter_norm_kernel,
        out_shape=(jax.ShapeDtypeStruct((Bv, D), jnp.float32),
                   jax.ShapeDtypeStruct((Bv, D), jnp.float32)),
        grid=(1,),
        in_specs=in_specs,
        out_specs=(out_spec, out_spec),
        compiler_params=pltpu.CompilerParams(dimension_semantics=("arbitrary",)),
    )(*args)


def video_clip_forward(params, videos, texts):
    videos = videos.astype(jnp.float32)                              # torch.as_tensor(..., dtype=float)
    images_emb = vit_forward(params["image"], videos)                # (B, T, EMBED)
    text_emb = gpt_forward(params["text"], texts)                    # (B, EMBED)
    video_emb = temporal_forward(params["temporal"], images_emb)     # (B, EMBED)
    return adapter_and_normalize(params["adapter"], video_emb, text_emb, params["logit_scale"])


# ----------------------------- deterministic parameter init -----------------------------
def init_params(key):
    keys = iter(jax.random.split(key, 128))

    def nk():
        return next(keys)

    std = 0.02

    def lin(din, dout):
        return {"w": std * jax.random.normal(nk(), (din, dout), jnp.float32),
                "b": jnp.zeros((dout,), jnp.float32)}

    def block(d):
        return {"ln1_g": jnp.ones((d,), jnp.float32), "ln1_b": jnp.zeros((d,), jnp.float32),
                "ln2_g": jnp.ones((d,), jnp.float32), "ln2_b": jnp.zeros((d,), jnp.float32),
                "qkv": lin(d, 3 * d), "proj": lin(d, d),
                "fc1": lin(d, 4 * d), "fc2": lin(4 * d, d)}

    npatch = (IMG // PATCH) ** 2
    image = {
        "conv_w": std * jax.random.normal(nk(), (C * PATCH * PATCH, VIT_W), jnp.float32),
        "cls": std * jax.random.normal(nk(), (VIT_W,), jnp.float32),
        "pos": std * jax.random.normal(nk(), (npatch + 1, VIT_W), jnp.float32),
        "ln_pre_g": jnp.ones((VIT_W,), jnp.float32), "ln_pre_b": jnp.zeros((VIT_W,), jnp.float32),
        "blocks": [block(VIT_W) for _ in range(VIT_LAYERS)],
        "ln_post_g": jnp.ones((VIT_W,), jnp.float32), "ln_post_b": jnp.zeros((VIT_W,), jnp.float32),
        "proj_out": std * jax.random.normal(nk(), (VIT_W, EMBED), jnp.float32),
    }
    text = {
        "tok_emb": std * jax.random.normal(nk(), (VOCAB, TXT_W), jnp.float32),
        "pos": std * jax.random.normal(nk(), (CTX, TXT_W), jnp.float32),
        "blocks": [block(TXT_W) for _ in range(TXT_LAYERS)],
        "lnf_g": jnp.ones((TXT_W,), jnp.float32), "lnf_b": jnp.zeros((TXT_W,), jnp.float32),
        "proj_out": std * jax.random.normal(nk(), (TXT_W, EMBED), jnp.float32),
    }
    temporal = {
        "cls": std * jax.random.normal(nk(), (EMBED,), jnp.float32),
        "pos": std * jax.random.normal(nk(), (T + 1, EMBED), jnp.float32),
        "blocks": [block(EMBED) for _ in range(TEMP_LAYERS)],
        "lnf_g": jnp.ones((EMBED,), jnp.float32), "lnf_b": jnp.zeros((EMBED,), jnp.float32),
    }
    adapter = {"v_fc1": lin(EMBED, EMBED), "v_fc2": lin(EMBED, EMBED),
               "t_fc1": lin(EMBED, EMBED), "t_fc2": lin(EMBED, EMBED)}
    return {"image": image, "text": text, "temporal": temporal, "adapter": adapter,
            "logit_scale": jnp.array(np.log(1.0 / 0.07), jnp.float32)}


# ----------------------------- main -----------------------------
if __name__ == "__main__":
    root = jax.random.PRNGKey(0)
    k_params, k_vid, k_txt = jax.random.split(root, 3)
    params = init_params(k_params)
    videos = jax.random.normal(k_vid, (B, T, C, IMG, IMG), jnp.float32)
    texts = jax.random.randint(k_txt, (B, CTX), 0, VOCAB, dtype=jnp.int32)

    video_features, text_features = jax.jit(video_clip_forward)(params, videos, texts)
    jax.block_until_ready((video_features, text_features))

    assert video_features.shape == (B, EMBED)
    assert text_features.shape == (B, EMBED)
    assert video_features.dtype == jnp.float32 and text_features.dtype == jnp.float32
    assert bool(jnp.all(jnp.isfinite(video_features))) and bool(jnp.all(jnp.isfinite(text_features)))
    print("KERNEL_OK")
</pallas_src>

<mosaic_0001>
module attributes {stable_mosaic.version = 11 : i64} {
  func.func @_temporal_tower_kernel(%arg0: i32, %arg1: memref<1x3x32xf32, #tpu.memory_space<vmem>>, %arg2: memref<1x32xf32, #tpu.memory_space<vmem>>, %arg3: memref<4x32xf32, #tpu.memory_space<vmem>>, %arg4: memref<1x32xf32, #tpu.memory_space<vmem>>, %arg5: memref<1x32xf32, #tpu.memory_space<vmem>>, %arg6: memref<1x1x32xf32, #tpu.memory_space<vmem>>, %arg7: memref<1x1x32xf32, #tpu.memory_space<vmem>>, %arg8: memref<1x32x96xf32, #tpu.memory_space<vmem>>, %arg9: memref<1x1x96xf32, #tpu.memory_space<vmem>>, %arg10: memref<1x32x32xf32, #tpu.memory_space<vmem>>, %arg11: memref<1x1x32xf32, #tpu.memory_space<vmem>>, %arg12: memref<1x1x32xf32, #tpu.memory_space<vmem>>, %arg13: memref<1x1x32xf32, #tpu.memory_space<vmem>>, %arg14: memref<1x32x128xf32, #tpu.memory_space<vmem>>, %arg15: memref<1x1x128xf32, #tpu.memory_space<vmem>>, %arg16: memref<1x128x32xf32, #tpu.memory_space<vmem>>, %arg17: memref<1x1x32xf32, #tpu.memory_space<vmem>>, %arg18: memref<1x1x32xf32, #tpu.memory_space<vmem>>) attributes {dimension_semantics = [#tpu.dimension_semantics<parallel>], iteration_bounds = array<i64: 2>, scalar_prefetch = 0 : i64, scratch_operands = 0 : i64, tpu.core_type = #tpu.core_type<tc>, window_params = [{transform_indices = @transform_0, window_bounds = array<i64: 1, 3, 32>}, {pipeline_mode = #tpu.pipeline_mode<synchronous>, transform_indices = @transform_1, window_bounds = array<i64: 1, 32>}, {pipeline_mode = #tpu.pipeline_mode<synchronous>, transform_indices = @transform_2, window_bounds = array<i64: 4, 32>}, {pipeline_mode = #tpu.pipeline_mode<synchronous>, transform_indices = @transform_3, window_bounds = array<i64: 1, 32>}, {pipeline_mode = #tpu.pipeline_mode<synchronous>, transform_indices = @transform_4, window_bounds = array<i64: 1, 32>}, {pipeline_mode = #tpu.pipeline_mode<synchronous>, transform_indices = @transform_5, window_bounds = array<i64: 1, 1, 32>}, {pipeline_mode = #tpu.pipeline_mode<synchronous>, transform_indices = @transform_6, window_bounds = array<i64: 1, 1, 32>}, {pipeline_mode = #tpu.pipeline_mode<synchronous>, transform_indices = @transform_7, window_bounds = array<i64: 1, 32, 96>}, {pipeline_mode = #tpu.pipeline_mode<synchronous>, transform_indices = @transform_8, window_bounds = array<i64: 1, 1, 96>}, {pipeline_mode = #tpu.pipeline_mode<synchronous>, transform_indices = @transform_9, window_bounds = array<i64: 1, 32, 32>}, {pipeline_mode = #tpu.pipeline_mode<synchronous>, transform_indices = @transform_10, window_bounds = array<i64: 1, 1, 32>}, {pipeline_mode = #tpu.pipeline_mode<synchronous>, transform_indices = @transform_11, window_bounds = array<i64: 1, 1, 32>}, {pipeline_mode = #tpu.pipeline_mode<synchronous>, transform_indices = @transform_12, window_bounds = array<i64: 1, 1, 32>}, {pipeline_mode = #tpu.pipeline_mode<synchronous>, transform_indices = @transform_13, window_bounds = array<i64: 1, 32, 128>}, {pipeline_mode = #tpu.pipeline_mode<synchronous>, transform_indices = @transform_14, window_bounds = array<i64: 1, 1, 128>}, {pipeline_mode = #tpu.pipeline_mode<synchronous>, transform_indices = @transform_15, window_bounds = array<i64: 1, 128, 32>}, {pipeline_mode = #tpu.pipeline_mode<synchronous>, transform_indices = @transform_16, window_bounds = array<i64: 1, 1, 32>}, {transform_indices = @transform_17, window_bounds = array<i64: 1, 1, 32>}]} {
    %c0 = arith.constant 0 : index
    %c0_0 = arith.constant 0 : index
    %0 = vector.load %arg2[%c0, %c0_0] : memref<1x32xf32, #tpu.memory_space<vmem>>, vector<1x32xf32>
    %c0_1 = arith.constant 0 : index
    %c0_2 = arith.constant 0 : index
    %c0_3 = arith.constant 0 : index
    %1 = vector.load %arg1[%c0_1, %c0_2, %c0_3] : memref<1x3x32xf32, #tpu.memory_space<vmem>>, vector<1x3x32xf32>
    %2 = vector.shape_cast %1 : vector<1x3x32xf32> to vector<3x32xf32>
    %3 = tpu.concatenate %0, %2 in 0 : vector<1x32xf32>, vector<3x32xf32> -> vector<4x32xf32>
    %c0_4 = arith.constant 0 : index
    %c0_5 = arith.constant 0 : index
    %4 = vector.load %arg3[%c0_4, %c0_5] : memref<4x32xf32, #tpu.memory_space<vmem>>, vector<4x32xf32>
    %5 = arith.addf %3, %4 : vector<4x32xf32>
    %c0_6 = arith.constant 0 : index
    %c0_7 = arith.constant 0 : index
    %c0_8 = arith.constant 0 : index
    %6 = vector.load %arg6[%c0_6, %c0_7, %c0_8] : memref<1x1x32xf32, #tpu.memory_space<vmem>>, vector<1x1x32xf32>
    %7 = vector.shape_cast %6 : vector<1x1x32xf32> to vector<1x32xf32>
    %c0_9 = arith.constant 0 : index
    %c0_10 = arith.constant 0 : index
    %c0_11 = arith.constant 0 : index
    %8 = vector.load %arg7[%c0_9, %c0_10, %c0_11] : memref<1x1x32xf32, #tpu.memory_space<vmem>>, vector<1x1x32xf32>
    %9 = vector.shape_cast %8 : vector<1x1x32xf32> to vector<1x32xf32>
    %c0_12 = arith.constant 0 : index
    %c0_13 = arith.constant 0 : index
    %c0_14 = arith.constant 0 : index
    %10 = vector.load %arg8[%c0_12, %c0_13, %c0_14] : memref<1x32x96xf32, #tpu.memory_space<vmem>>, vector<1x32x96xf32>
    %11 = vector.shape_cast %10 : vector<1x32x96xf32> to vector<32x96xf32>
    %c0_15 = arith.constant 0 : index
    %c0_16 = arith.constant 0 : index
    %c0_17 = arith.constant 0 : index
    %12 = vector.load %arg9[%c0_15, %c0_16, %c0_17] : memref<1x1x96xf32, #tpu.memory_space<vmem>>, vector<1x1x96xf32>
    %13 = vector.shape_cast %12 : vector<1x1x96xf32> to vector<1x96xf32>
    %c0_18 = arith.constant 0 : index
    %c0_19 = arith.constant 0 : index
    %c0_20 = arith.constant 0 : index
    %14 = vector.load %arg10[%c0_18, %c0_19, %c0_20] : memref<1x32x32xf32, #tpu.memory_space<vmem>>, vector<1x32x32xf32>
    %15 = vector.shape_cast %14 : vector<1x32x32xf32> to vector<32x32xf32>
    %c0_21 = arith.constant 0 : index
    %c0_22 = arith.constant 0 : index
    %c0_23 = arith.constant 0 : index
    %16 = vector.load %arg11[%c0_21, %c0_22, %c0_23] : memref<1x1x32xf32, #tpu.memory_space<vmem>>, vector<1x1x32xf32>
    %17 = vector.shape_cast %16 : vector<1x1x32xf32> to vector<1x32xf32>
    %c0_24 = arith.constant 0 : index
    %c0_25 = arith.constant 0 : index
    %c0_26 = arith.constant 0 : index
    %18 = vector.load %arg12[%c0_24, %c0_25, %c0_26] : memref<1x1x32xf32, #tpu.memory_space<vmem>>, vector<1x1x32xf32>
    %19 = vector.shape_cast %18 : vector<1x1x32xf32> to vector<1x32xf32>
    %c0_27 = arith.constant 0 : index
    %c0_28 = arith.constant 0 : index
    %c0_29 = arith.constant 0 : index
    %20 = vector.load %arg13[%c0_27, %c0_28, %c0_29] : memref<1x1x32xf32, #tpu.memory_space<vmem>>, vector<1x1x32xf32>
    %21 = vector.shape_cast %20 : vector<1x1x32xf32> to vector<1x32xf32>
    %c0_30 = arith.constant 0 : index
    %c0_31 = arith.constant 0 : index
    %c0_32 = arith.constant 0 : index
    %22 = vector.load %arg14[%c0_30, %c0_31, %c0_32] : memref<1x32x128xf32, #tpu.memory_space<vmem>>, vector<1x32x128xf32>
    %23 = vector.shape_cast %22 : vector<1x32x128xf32> to vector<32x128xf32>
    %c0_33 = arith.constant 0 : index
    %c0_34 = arith.constant 0 : index
    %c0_35 = arith.constant 0 : index
    %24 = vector.load %arg15[%c0_33, %c0_34, %c0_35] : memref<1x1x128xf32, #tpu.memory_space<vmem>>, vector<1x1x128xf32>
    %25 = vector.shape_cast %24 : vector<1x1x128xf32> to vector<1x128xf32>
    %c0_36 = arith.constant 0 : index
    %c0_37 = arith.constant 0 : index
    %c0_38 = arith.constant 0 : index
    %26 = vector.load %arg16[%c0_36, %c0_37, %c0_38] : memref<1x128x32xf32, #tpu.memory_space<vmem>>, vector<1x128x32xf32>
    %27 = vector.shape_cast %26 : vector<1x128x32xf32> to vector<128x32xf32>
    %c0_39 = arith.constant 0 : index
    %c0_40 = arith.constant 0 : index
    %c0_41 = arith.constant 0 : index
    %28 = vector.load %arg17[%c0_39, %c0_40, %c0_41] : memref<1x1x32xf32, #tpu.memory_space<vmem>>, vector<1x1x32xf32>
    %29 = vector.shape_cast %28 : vector<1x1x32xf32> to vector<1x32xf32>
    %cst = arith.constant dense<0.000000e+00> : vector<4xf32>
    %30 = vector.multi_reduction <add>, %5, %cst [1] : vector<4x32xf32> to vector<4xf32>
    %31 = vector.shape_cast %30 : vector<4xf32> to vector<4x1xf32>
    %cst_42 = arith.constant 3.200000e+01 : f32
    %32 = vector.broadcast %cst_42 : f32 to vector<4x1xf32>
    %33 = arith.divf %31, %32 : vector<4x1xf32>
    %34 = vector.broadcast %33 : vector<4x1xf32> to vector<4x32xf32>
    %35 = arith.subf %5, %34 : vector<4x32xf32>
    %36 = arith.mulf %35, %35 : vector<4x32xf32>
    %cst_43 = arith.constant dense<0.000000e+00> : vector<4xf32>
    %37 = vector.multi_reduction <add>, %36, %cst_43 [1] : vector<4x32xf32> to vector<4xf32>
    %38 = vector.shape_cast %37 : vector<4xf32> to vector<4x1xf32>
    %cst_44 = arith.constant 3.200000e+01 : f32
    %39 = vector.broadcast %cst_44 : f32 to vector<4x1xf32>
    %40 = arith.divf %38, %39 : vector<4x1xf32>
    %41 = vector.broadcast %33 : vector<4x1xf32> to vector<4x32xf32>
    %42 = arith.subf %5, %41 : vector<4x32xf32>
    %cst_45 = arith.constant 9.99999974E-6 : f32
    %43 = vector.broadcast %cst_45 : f32 to vector<4x1xf32>
    %44 = arith.addf %40, %43 : vector<4x1xf32>
    %45 = math.rsqrt %44 : vector<4x1xf32>
    %46 = vector.broadcast %45 : vector<4x1xf32> to vector<4x32xf32>
    %47 = arith.mulf %42, %46 : vector<4x32xf32>
    %48 = vector.broadcast %7 : vector<1x32xf32> to vector<4x32xf32>
    %49 = arith.mulf %47, %48 : vector<4x32xf32>
    %50 = vector.broadcast %9 : vector<1x32xf32> to vector<4x32xf32>
    %51 = arith.addf %49, %50 : vector<4x32xf32>
    %52 = arith.truncf %51 : vector<4x32xf32> to vector<4x32xbf16>
    %53 = arith.truncf %11 : vector<32x96xf32> to vector<32x96xbf16>
    %cst_46 = arith.constant dense<0.000000e+00> : vector<4x96xf32>
    %54 = tpu.matmul %52, %53, %cst_46 {dimension_numbers = #tpu.dot_dimension_numbers<[1], [0], [0], [1], [0, 0, 1, 1], [], []>} : vector<4x32xbf16>, vector<32x96xbf16>, vector<4x96xf32> -> vector<4x96xf32>
    %55 = vector.broadcast %13 : vector<1x96xf32> to vector<4x96xf32>
    %56 = arith.addf %54, %55 : vector<4x96xf32>
    %57 = vector.extract_strided_slice %56 {offsets = [0, 0], sizes = [4, 32], strides = [1, 1]} : vector<4x96xf32> to vector<4x32xf32>
    %58 = vector.extract_strided_slice %56 {offsets = [0, 32], sizes = [4, 32], strides = [1, 1]} : vector<4x96xf32> to vector<4x32xf32>
    %59 = vector.extract_strided_slice %56 {offsets = [0, 64], sizes = [4, 32], strides = [1, 1]} : vector<4x96xf32> to vector<4x32xf32>
    %60 = vector.extract_strided_slice %57 {offsets = [0, 0], sizes = [4, 8], strides = [1, 1]} : vector<4x32xf32> to vector<4x8xf32>
    %61 = vector.extract_strided_slice %58 {offsets = [0, 0], sizes = [4, 8], strides = [1, 1]} : vector<4x32xf32> to vector<4x8xf32>
    %62 = vector.extract_strided_slice %59 {offsets = [0, 0], sizes = [4, 8], strides = [1, 1]} : vector<4x32xf32> to vector<4x8xf32>
    %63 = tpu.transpose %61, [1, 0] : vector<4x8xf32> -> vector<8x4xf32>
    %64 = arith.truncf %60 : vector<4x8xf32> to vector<4x8xbf16>
    %65 = arith.truncf %63 : vector<8x4xf32> to vector<8x4xbf16>
    %cst_47 = arith.constant dense<0.000000e+00> : vector<4x4xf32>
    %66 = tpu.matmul %64, %65, %cst_47 {dimension_numbers = #tpu.dot_dimension_numbers<[1], [0], [0], [1], [0, 0, 1, 1], [], []>} : vector<4x8xbf16>, vector<8x4xbf16>, vector<4x4xf32> -> vector<4x4xf32>
    %cst_48 = arith.constant 0.353553385 : f32
    %67 = vector.broadcast %cst_48 : f32 to vector<4x4xf32>
    %68 = arith.mulf %66, %67 : vector<4x4xf32>
    %cst_49 = arith.constant dense<0xFF800000> : vector<4xf32>
    %69 = vector.multi_reduction <maximumf>, %68, %cst_49 [1] : vector<4x4xf32> to vector<4xf32>
    %70 = vector.shape_cast %69 : vector<4xf32> to vector<4x1xf32>
    %71 = vector.broadcast %70 : vector<4x1xf32> to vector<4x4xf32>
    %72 = arith.subf %68, %71 : vector<4x4xf32>
    %73 = math.exp %72 : vector<4x4xf32>
    %cst_50 = arith.constant dense<0.000000e+00> : vector<4xf32>
    %74 = vector.multi_reduction <add>, %73, %cst_50 [1] : vector<4x4xf32> to vector<4xf32>
    %75 = vector.shape_cast %74 : vector<4xf32> to vector<4x1xf32>
    %76 = tpu.reciprocal %75 {approx = true} : vector<4x1xf32> -> vector<4x1xf32>
    %77 = vector.broadcast %76 : vector<4x1xf32> to vector<4x4xf32>
    %78 = arith.mulf %73, %77 : vector<4x4xf32>
    %79 = arith.truncf %78 : vector<4x4xf32> to vector<4x4xbf16>
    %80 = arith.truncf %62 : vector<4x8xf32> to vector<4x8xbf16>
    %cst_51 = arith.constant dense<0.000000e+00> : vector<4x8xf32>
    %81 = tpu.matmul %79, %80, %cst_51 {dimension_numbers = #tpu.dot_dimension_numbers<[1], [0], [0], [1], [0, 0, 1, 1], [], []>} : vector<4x4xbf16>, vector<4x8xbf16>, vector<4x8xf32> -> vector<4x8xf32>
    %82 = vector.extract_strided_slice %57 {offsets = [0, 8], sizes = [4, 8], strides = [1, 1]} : vector<4x32xf32> to vector<4x8xf32>
    %83 = vector.extract_strided_slice %58 {offsets = [0, 8], sizes = [4, 8], strides = [1, 1]} : vector<4x32xf32> to vector<4x8xf32>
    %84 = vector.extract_strided_slice %59 {offsets = [0, 8], sizes = [4, 8], strides = [1, 1]} : vector<4x32xf32> to vector<4x8xf32>
    %85 = tpu.transpose %83, [1, 0] : vector<4x8xf32> -> vector<8x4xf32>
    %86 = arith.truncf %82 : vector<4x8xf32> to vector<4x8xbf16>
    %87 = arith.truncf %85 : vector<8x4xf32> to vector<8x4xbf16>
    %cst_52 = arith.constant dense<0.000000e+00> : vector<4x4xf32>
    %88 = tpu.matmul %86, %87, %cst_52 {dimension_numbers = #tpu.dot_dimension_numbers<[1], [0], [0], [1], [0, 0, 1, 1], [], []>} : vector<4x8xbf16>, vector<8x4xbf16>, vector<4x4xf32> -> vector<4x4xf32>
    %cst_53 = arith.constant 0.353553385 : f32
    %89 = vector.broadcast %cst_53 : f32 to vector<4x4xf32>
    %90 = arith.mulf %88, %89 : vector<4x4xf32>
    %cst_54 = arith.constant dense<0xFF800000> : vector<4xf32>
    %91 = vector.multi_reduction <maximumf>, %90, %cst_54 [1] : vector<4x4xf32> to vector<4xf32>
    %92 = vector.shape_cast %91 : vector<4xf32> to vector<4x1xf32>
    %93 = vector.broadcast %92 : vector<4x1xf32> to vector<4x4xf32>
    %94 = arith.subf %90, %93 : vector<4x4xf32>
    %95 = math.exp %94 : vector<4x4xf32>
    %cst_55 = arith.constant dense<0.000000e+00> : vector<4xf32>
    %96 = vector.multi_reduction <add>, %95, %cst_55 [1] : vector<4x4xf32> to vector<4xf32>
    %97 = vector.shape_cast %96 : vector<4xf32> to vector<4x1xf32>
    %98 = tpu.reciprocal %97 {approx = true} : vector<4x1xf32> -> vector<4x1xf32>
    %99 = vector.broadcast %98 : vector<4x1xf32> to vector<4x4xf32>
    %100 = arith.mulf %95, %99 : vector<4x4xf32>
    %101 = arith.truncf %100 : vector<4x4xf32> to vector<4x4xbf16>
    %102 = arith.truncf %84 : vector<4x8xf32> to vector<4x8xbf16>
    %cst_56 = arith.constant dense<0.000000e+00> : vector<4x8xf32>
    %103 = tpu.matmul %101, %102, %cst_56 {dimension_numbers = #tpu.dot_dimension_numbers<[1], [0], [0], [1], [0, 0, 1, 1], [], []>} : vector<4x4xbf16>, vector<4x8xbf16>, vector<4x8xf32> -> vector<4x8xf32>
    %104 = vector.extract_strided_slice %57 {offsets = [0, 16], sizes = [4, 8], strides = [1, 1]} : vector<4x32xf32> to vector<4x8xf32>
    %105 = vector.extract_strided_slice %58 {offsets = [0, 16], sizes = [4, 8], strides = [1, 1]} : vector<4x32xf32> to vector<4x8xf32>
    %106 = vector.extract_strided_slice %59 {offsets = [0, 16], sizes = [4, 8], strides = [1, 1]} : vector<4x32xf32> to vector<4x8xf32>
    %107 = tpu.transpose %105, [1, 0] : vector<4x8xf32> -> vector<8x4xf32>
    %108 = arith.truncf %104 : vector<4x8xf32> to vector<4x8xbf16>
    %109 = arith.truncf %107 : vector<8x4xf32> to vector<8x4xbf16>
    %cst_57 = arith.constant dense<0.000000e+00> : vector<4x4xf32>
    %110 = tpu.matmul %108, %109, %cst_57 {dimension_numbers = #tpu.dot_dimension_numbers<[1], [0], [0], [1], [0, 0, 1, 1], [], []>} : vector<4x8xbf16>, vector<8x4xbf16>, vector<4x4xf32> -> vector<4x4xf32>
    %cst_58 = arith.constant 0.353553385 : f32
    %111 = vector.broadcast %cst_58 : f32 to vector<4x4xf32>
    %112 = arith.mulf %110, %111 : vector<4x4xf32>
    %cst_59 = arith.constant dense<0xFF800000> : vector<4xf32>
    %113 = vector.multi_reduction <maximumf>, %112, %cst_59 [1] : vector<4x4xf32> to vector<4xf32>
    %114 = vector.shape_cast %113 : vector<4xf32> to vector<4x1xf32>
    %115 = vector.broadcast %114 : vector<4x1xf32> to vector<4x4xf32>
    %116 = arith.subf %112, %115 : vector<4x4xf32>
    %117 = math.exp %116 : vector<4x4xf32>
    %cst_60 = arith.constant dense<0.000000e+00> : vector<4xf32>
    %118 = vector.multi_reduction <add>, %117, %cst_60 [1] : vector<4x4xf32> to vector<4xf32>
    %119 = vector.shape_cast %118 : vector<4xf32> to vector<4x1xf32>
    %120 = tpu.reciprocal %119 {approx = true} : vector<4x1xf32> -> vector<4x1xf32>
    %121 = vector.broadcast %120 : vector<4x1xf32> to vector<4x4xf32>
    %122 = arith.mulf %117, %121 : vector<4x4xf32>
    %123 = arith.truncf %122 : vector<4x4xf32> to vector<4x4xbf16>
    %124 = arith.truncf %106 : vector<4x8xf32> to vector<4x8xbf16>
    %cst_61 = arith.constant dense<0.000000e+00> : vector<4x8xf32>
    %125 = tpu.matmul %123, %124, %cst_61 {dimension_numbers = #tpu.dot_dimension_numbers<[1], [0], [0], [1], [0, 0, 1, 1], [], []>} : vector<4x4xbf16>, vector<4x8xbf16>, vector<4x8xf32> -> vector<4x8xf32>
    %126 = vector.extract_strided_slice %57 {offsets = [0, 24], sizes = [4, 8], strides = [1, 1]} : vector<4x32xf32> to vector<4x8xf32>
    %127 = vector.extract_strided_slice %58 {offsets = [0, 24], sizes = [4, 8], strides = [1, 1]} : vector<4x32xf32> to vector<4x8xf32>
    %128 = vector.extract_strided_slice %59 {offsets = [0, 24], sizes = [4, 8], strides = [1, 1]} : vector<4x32xf32> to vector<4x8xf32>
    %129 = tpu.transpose %127, [1, 0] : vector<4x8xf32> -> vector<8x4xf32>
    %130 = arith.truncf %126 : vector<4x8xf32> to vector<4x8xbf16>
    %131 = arith.truncf %129 : vector<8x4xf32> to vector<8x4xbf16>
    %cst_62 = arith.constant dense<0.000000e+00> : vector<4x4xf32>
    %132 = tpu.matmul %130, %131, %cst_62 {dimension_numbers = #tpu.dot_dimension_numbers<[1], [0], [0], [1], [0, 0, 1, 1], [], []>} : vector<4x8xbf16>, vector<8x4xbf16>, vector<4x4xf32> -> vector<4x4xf32>
    %cst_63 = arith.constant 0.353553385 : f32
    %133 = vector.broadcast %cst_63 : f32 to vector<4x4xf32>
    %134 = arith.mulf %132, %133 : vector<4x4xf32>
    %cst_64 = arith.constant dense<0xFF800000> : vector<4xf32>
    %135 = vector.multi_reduction <maximumf>, %134, %cst_64 [1] : vector<4x4xf32> to vector<4xf32>
    %136 = vector.shape_cast %135 : vector<4xf32> to vector<4x1xf32>
    %137 = vector.broadcast %136 : vector<4x1xf32> to vector<4x4xf32>
    %138 = arith.subf %134, %137 : vector<4x4xf32>
    %139 = math.exp %138 : vector<4x4xf32>
    %cst_65 = arith.constant dense<0.000000e+00> : vector<4xf32>
    %140 = vector.multi_reduction <add>, %139, %cst_65 [1] : vector<4x4xf32> to vector<4xf32>
    %141 = vector.shape_cast %140 : vector<4xf32> to vector<4x1xf32>
    %142 = tpu.reciprocal %141 {approx = true} : vector<4x1xf32> -> vector<4x1xf32>
    %143 = vector.broadcast %142 : vector<4x1xf32> to vector<4x4xf32>
    %144 = arith.mulf %139, %143 : vector<4x4xf32>
    %145 = arith.truncf %144 : vector<4x4xf32> to vector<4x4xbf16>
    %146 = arith.truncf %128 : vector<4x8xf32> to vector<4x8xbf16>
    %cst_66 = arith.constant dense<0.000000e+00> : vector<4x8xf32>
    %147 = tpu.matmul %145, %146, %cst_66 {dimension_numbers = #tpu.dot_dimension_numbers<[1], [0], [0], [1], [0, 0, 1, 1], [], []>} : vector<4x4xbf16>, vector<4x8xbf16>, vector<4x8xf32> -> vector<4x8xf32>
    %148 = tpu.concatenate %81, %103, %125, %147 in 1 : vector<4x8xf32>, vector<4x8xf32>, vector<4x8xf32>, vector<4x8xf32> -> vector<4x32xf32>
    %149 = arith.truncf %148 : vector<4x32xf32> to vector<4x32xbf16>
    %150 = arith.truncf %15 : vector<32x32xf32> to vector<32x32xbf16>
    %cst_67 = arith.constant dense<0.000000e+00> : vector<4x32xf32>
    %151 = tpu.matmul %149, %150, %cst_67 {dimension_numbers = #tpu.dot_dimension_numbers<[1], [0], [0], [1], [0, 0, 1, 1], [], []>} : vector<4x32xbf16>, vector<32x32xbf16>, vector<4x32xf32> -> vector<4x32xf32>
    %152 = vector.broadcast %17 : vector<1x32xf32> to vector<4x32xf32>
    %153 = arith.addf %151, %152 : vector<4x32xf32>
    %154 = arith.addf %5, %153 : vector<4x32xf32>
    %cst_68 = arith.constant dense<0.000000e+00> : vector<4xf32>
    %155 = vector.multi_reduction <add>, %154, %cst_68 [1] : vector<4x32xf32> to vector<4xf32>
    %156 = vector.shape_cast %155 : vector<4xf32> to vector<4x1xf32>
    %cst_69 = arith.constant 3.200000e+01 : f32
    %157 = vector.broadcast %cst_69 : f32 to vector<4x1xf32>
    %158 = arith.divf %156, %157 : vector<4x1xf32>
    %159 = vector.broadcast %158 : vector<4x1xf32> to vector<4x32xf32>
    %160 = arith.subf %154, %159 : vector<4x32xf32>
    %161 = arith.mulf %160, %160 : vector<4x32xf32>
    %cst_70 = arith.constant dense<0.000000e+00> : vector<4xf32>
    %162 = vector.multi_reduction <add>, %161, %cst_70 [1] : vector<4x32xf32> to vector<4xf32>
    %163 = vector.shape_cast %162 : vector<4xf32> to vector<4x1xf32>
    %cst_71 = arith.constant 3.200000e+01 : f32
    %164 = vector.broadcast %cst_71 : f32 to vector<4x1xf32>
    %165 = arith.divf %163, %164 : vector<4x1xf32>
    %166 = vector.broadcast %158 : vector<4x1xf32> to vector<4x32xf32>
    %167 = arith.subf %154, %166 : vector<4x32xf32>
    %cst_72 = arith.constant 9.99999974E-6 : f32
    %168 = vector.broadcast %cst_72 : f32 to vector<4x1xf32>
    %169 = arith.addf %165, %168 : vector<4x1xf32>
    %170 = math.rsqrt %169 : vector<4x1xf32>
    %171 = vector.broadcast %170 : vector<4x1xf32> to vector<4x32xf32>
    %172 = arith.mulf %167, %171 : vector<4x32xf32>
    %173 = vector.broadcast %19 : vector<1x32xf32> to vector<4x32xf32>
    %174 = arith.mulf %172, %173 : vector<4x32xf32>
    %175 = vector.broadcast %21 : vector<1x32xf32> to vector<4x32xf32>
    %176 = arith.addf %174, %175 : vector<4x32xf32>
    %177 = arith.truncf %176 : vector<4x32xf32> to vector<4x32xbf16>
    %178 = arith.truncf %23 : vector<32x128xf32> to vector<32x128xbf16>
    %cst_73 = arith.constant dense<0.000000e+00> : vector<4x128xf32>
    %179 = tpu.matmul %177, %178, %cst_73 {dimension_numbers = #tpu.dot_dimension_numbers<[1], [0], [0], [1], [0, 0, 1, 1], [], []>} : vector<4x32xbf16>, vector<32x128xbf16>, vector<4x128xf32> -> vector<4x128xf32>
    %180 = vector.broadcast %25 : vector<1x128xf32> to vector<4x128xf32>
    %181 = arith.addf %179, %180 : vector<4x128xf32>
    %cst_74 = arith.constant 1.702000e+00 : f32
    %182 = vector.broadcast %cst_74 : f32 to vector<4x128xf32>
    %183 = arith.mulf %182, %181 : vector<4x128xf32>
    %184 = arith.negf %183 : vector<4x128xf32>
    %185 = math.exp %184 : vector<4x128xf32>
    %cst_75 = arith.constant 1.000000e+00 : f32
    %186 = vector.broadcast %cst_75 : f32 to vector<4x128xf32>
    %187 = arith.addf %186, %185 : vector<4x128xf32>
    %188 = arith.divf %186, %187 : vector<4x128xf32>
    %189 = arith.mulf %181, %188 : vector<4x128xf32>
    %190 = arith.truncf %189 : vector<4x128xf32> to vector<4x128xbf16>
    %191 = arith.truncf %27 : vector<128x32xf32> to vector<128x32xbf16>
    %cst_76 = arith.constant dense<0.000000e+00> : vector<4x32xf32>
    %192 = tpu.matmul %190, %191, %cst_76 {dimension_numbers = #tpu.dot_dimension_numbers<[1], [0], [0], [1], [0, 0, 1, 1], [], []>} : vector<4x128xbf16>, vector<128x32xbf16>, vector<4x32xf32> -> vector<4x32xf32>
    %193 = vector.broadcast %29 : vector<1x32xf32> to vector<4x32xf32>
    %194 = arith.addf %192, %193 : vector<4x32xf32>
    %195 = arith.addf %154, %194 : vector<4x32xf32>
    %196 = vector.extract_strided_slice %195 {offsets = [0, 0], sizes = [1, 32], strides = [1, 1]} : vector<4x32xf32> to vector<1x32xf32>
    %c0_77 = arith.constant 0 : index
    %c0_78 = arith.constant 0 : index
    %197 = vector.load %arg4[%c0_77, %c0_78] : memref<1x32xf32, #tpu.memory_space<vmem>>, vector<1x32xf32>
    %c0_79 = arith.constant 0 : index
    %c0_80 = arith.constant 0 : index
    %198 = vector.load %arg5[%c0_79, %c0_80] : memref<1x32xf32, #tpu.memory_space<vmem>>, vector<1x32xf32>
    %cst_81 = arith.constant dense<0.000000e+00> : vector<1xf32>
    %199 = vector.multi_reduction <add>, %196, %cst_81 [1] : vector<1x32xf32> to vector<1xf32>
    %200 = vector.shape_cast %199 : vector<1xf32> to vector<1x1xf32>
    %cst_82 = arith.constant 3.200000e+01 : f32
    %201 = vector.broadcast %cst_82 : f32 to vector<1x1xf32>
    %202 = arith.divf %200, %201 : vector<1x1xf32>
    %203 = vector.broadcast %202 : vector<1x1xf32> to vector<1x32xf32>
    %204 = arith.subf %196, %203 : vector<1x32xf32>
    %205 = arith.mulf %204, %204 : vector<1x32xf32>
    %cst_83 = arith.constant dense<0.000000e+00> : vector<1xf32>
    %206 = vector.multi_reduction <add>, %205, %cst_83 [1] : vector<1x32xf32> to vector<1xf32>
    %207 = vector.shape_cast %206 : vector<1xf32> to vector<1x1xf32>
    %cst_84 = arith.constant 3.200000e+01 : f32
    %208 = vector.broadcast %cst_84 : f32 to vector<1x1xf32>
    %209 = arith.divf %207, %208 : vector<1x1xf32>
    %210 = vector.broadcast %202 : vector<1x1xf32> to vector<1x32xf32>
    %211 = arith.subf %196, %210 : vector<1x32xf32>
    %cst_85 = arith.constant 9.99999974E-6 : f32
    %212 = vector.broadcast %cst_85 : f32 to vector<1x1xf32>
    %213 = arith.addf %209, %212 : vector<1x1xf32>
    %214 = math.rsqrt %213 : vector<1x1xf32>
    %215 = vector.broadcast %214 : vector<1x1xf32> to vector<1x32xf32>
    %216 = arith.mulf %211, %215 : vector<1x32xf32>
    %217 = arith.mulf %216, %197 : vector<1x32xf32>
    %218 = arith.addf %217, %198 : vector<1x32xf32>
    %c0_86 = arith.constant 0 : index
    %c0_87 = arith.constant 0 : index
    %c0_88 = arith.constant 0 : index
    %219 = vector.load %arg18[%c0_86, %c0_87, %c0_88] : memref<1x1x32xf32, #tpu.memory_space<vmem>>, vector<1x1x32xf32>
    %220 = vector.shape_cast %219 : vector<1x1x32xf32> to vector<1x32xf32>
    %221 = vector.shape_cast %218 : vector<1x32xf32> to vector<1x1x32xf32>
    tpu.vector_store %arg18[%c0_86, %c0_87, %c0_88], %221 {strides = array<i32>} : memref<1x1x32xf32, #tpu.memory_space<vmem>>, vector<1x1x32xf32>,
    return
  }
  func.func @transform_0(%arg0: i32) -> (i32, i32, i32) {
    %c0_i32 = arith.constant 0 : i32
    %c0_i32_0 = arith.constant 0 : i32
    %c0_i32_1 = arith.constant 0 : i32
    return %arg0, %c0_i32, %c0_i32_0 : i32, i32, i32
  }
  func.func @transform_1(%arg0: i32) -> (i32, i32) {
    %c0_i32 = arith.constant 0 : i32
    %c0_i32_0 = arith.constant 0 : i32
    %c0_i32_1 = arith.constant 0 : i32
    return %c0_i32, %c0_i32_0 : i32, i32
  }
  func.func @transform_2(%arg0: i32) -> (i32, i32) {
    %c0_i32 = arith.constant 0 : i32
    %c0_i32_0 = arith.constant 0 : i32
    %c0_i32_1 = arith.constant 0 : i32
    return %c0_i32, %c0_i32_0 : i32, i32
  }
  func.func @transform_3(%arg0: i32) -> (i32, i32) {
    %c0_i32 = arith.constant 0 : i32
    %c0_i32_0 = arith.constant 0 : i32
    %c0_i32_1 = arith.constant 0 : i32
    return %c0_i32, %c0_i32_0 : i32, i32
  }
  func.func @transform_4(%arg0: i32) -> (i32, i32) {
    %c0_i32 = arith.constant 0 : i32
    %c0_i32_0 = arith.constant 0 : i32
    %c0_i32_1 = arith.constant 0 : i32
    return %c0_i32, %c0_i32_0 : i32, i32
  }
  func.func @transform_5(%arg0: i32) -> (i32, i32, i32) {
    %c0_i32 = arith.constant 0 : i32
    %c0_i32_0 = arith.constant 0 : i32
    %c0_i32_1 = arith.constant 0 : i32
    %c0_i32_2 = arith.constant 0 : i32
    return %c0_i32, %c0_i32_0, %c0_i32_1 : i32, i32, i32
  }
  func.func @transform_6(%arg0: i32) -> (i32, i32, i32) {
    %c0_i32 = arith.constant 0 : i32
    %c0_i32_0 = arith.constant 0 : i32
    %c0_i32_1 = arith.constant 0 : i32
    %c0_i32_2 = arith.constant 0 : i32
    return %c0_i32, %c0_i32_0, %c0_i32_1 : i32, i32, i32
  }
  func.func @transform_7(%arg0: i32) -> (i32, i32, i32) {
    %c0_i32 = arith.constant 0 : i32
    %c0_i32_0 = arith.constant 0 : i32
    %c0_i32_1 = arith.constant 0 : i32
    %c0_i32_2 = arith.constant 0 : i32
    return %c0_i32, %c0_i32_0, %c0_i32_1 : i32, i32, i32
  }
  func.func @transform_8(%arg0: i32) -> (i32, i32, i32) {
    %c0_i32 = arith.constant 0 : i32
    %c0_i32_0 = arith.constant 0 : i32
    %c0_i32_1 = arith.constant 0 : i32
    %c0_i32_2 = arith.constant 0 : i32
    return %c0_i32, %c0_i32_0, %c0_i32_1 : i32, i32, i32
  }
  func.func @transform_9(%arg0: i32) -> (i32, i32, i32) {
    %c0_i32 = arith.constant 0 : i32
    %c0_i32_0 = arith.constant 0 : i32
    %c0_i32_1 = arith.constant 0 : i32
    %c0_i32_2 = arith.constant 0 : i32
    return %c0_i32, %c0_i32_0, %c0_i32_1 : i32, i32, i32
  }
  func.func @transform_10(%arg0: i32) -> (i32, i32, i32) {
    %c0_i32 = arith.constant 0 : i32
    %c0_i32_0 = arith.constant 0 : i32
    %c0_i32_1 = arith.constant 0 : i32
    %c0_i32_2 = arith.constant 0 : i32
    return %c0_i32, %c0_i32_0, %c0_i32_1 : i32, i32, i32
  }
  func.func @transform_11(%arg0: i32) -> (i32, i32, i32) {
    %c0_i32 = arith.constant 0 : i32
    %c0_i32_0 = arith.constant 0 : i32
    %c0_i32_1 = arith.constant 0 : i32
    %c0_i32_2 = arith.constant 0 : i32
    return %c0_i32, %c0_i32_0, %c0_i32_1 : i32, i32, i32
  }
  func.func @transform_12(%arg0: i32) -> (i32, i32, i32) {
    %c0_i32 = arith.constant 0 : i32
    %c0_i32_0 = arith.constant 0 : i32
    %c0_i32_1 = arith.constant 0 : i32
    %c0_i32_2 = arith.constant 0 : i32
    return %c0_i32, %c0_i32_0, %c0_i32_1 : i32, i32, i32
  }
  func.func @transform_13(%arg0: i32) -> (i32, i32, i32) {
    %c0_i32 = arith.constant 0 : i32
    %c0_i32_0 = arith.constant 0 : i32
    %c0_i32_1 = arith.constant 0 : i32
    %c0_i32_2 = arith.constant 0 : i32
    return %c0_i32, %c0_i32_0, %c0_i32_1 : i32, i32, i32
  }
  func.func @transform_14(%arg0: i32) -> (i32, i32, i32) {
    %c0_i32 = arith.constant 0 : i32
    %c0_i32_0 = arith.constant 0 : i32
    %c0_i32_1 = arith.constant 0 : i32
    %c0_i32_2 = arith.constant 0 : i32
    return %c0_i32, %c0_i32_0, %c0_i32_1 : i32, i32, i32
  }
  func.func @transform_15(%arg0: i32) -> (i32, i32, i32) {
    %c0_i32 = arith.constant 0 : i32
    %c0_i32_0 = arith.constant 0 : i32
    %c0_i32_1 = arith.constant 0 : i32
    %c0_i32_2 = arith.constant 0 : i32
    return %c0_i32, %c0_i32_0, %c0_i32_1 : i32, i32, i32
  }
  func.func @transform_16(%arg0: i32) -> (i32, i32, i32) {
    %c0_i32 = arith.constant 0 : i32
    %c0_i32_0 = arith.constant 0 : i32
    %c0_i32_1 = arith.constant 0 : i32
    %c0_i32_2 = arith.constant 0 : i32
    return %c0_i32, %c0_i32_0, %c0_i32_1 : i32, i32, i32
  }
  func.func @transform_17(%arg0: i32) -> (i32, i32, i32) {
    %c0_i32 = arith.constant 0 : i32
    %c0_i32_0 = arith.constant 0 : i32
    %c0_i32_1 = arith.constant 0 : i32
    return %arg0, %c0_i32, %c0_i32_0 : i32, i32, i32
  }
}

module attributes {stable_mosaic.version = 11 : i64} {
  func.func @_vit_tower_kernel(%arg0: i32, %arg1: memref<1x4x192xf32, #tpu.memory_space<vmem>>, %arg2: memref<192x32xf32, #tpu.memory_space<vmem>>, %arg3: memref<1x32xf32, #tpu.memory_space<vmem>>, %arg4: memref<5x32xf32, #tpu.memory_space<vmem>>, %arg5: memref<1x32xf32, #tpu.memory_space<vmem>>, %arg6: memref<1x32xf32, #tpu.memory_space<vmem>>, %arg7: memref<1x32xf32, #tpu.memory_space<vmem>>, %arg8: memref<1x32xf32, #tpu.memory_space<vmem>>, %arg9: memref<32x32xf32, #tpu.memory_space<vmem>>, %arg10: memref<2x1x32xf32, #tpu.memory_space<vmem>>, %arg11: memref<2x1x32xf32, #tpu.memory_space<vmem>>, %arg12: memref<2x32x96xf32, #tpu.memory_space<vmem>>, %arg13: memref<2x1x96xf32, #tpu.memory_space<vmem>>, %arg14: memref<2x32x32xf32, #tpu.memory_space<vmem>>, %arg15: memref<2x1x32xf32, #tpu.memory_space<vmem>>, %arg16: memref<2x1x32xf32, #tpu.memory_space<vmem>>, %arg17: memref<2x1x32xf32, #tpu.memory_space<vmem>>, %arg18: memref<2x32x128xf32, #tpu.memory_space<vmem>>, %arg19: memref<2x1x128xf32, #tpu.memory_space<vmem>>, %arg20: memref<2x128x32xf32, #tpu.memory_space<vmem>>, %arg21: memref<2x1x32xf32, #tpu.memory_space<vmem>>, %arg22: memref<1x1x32xf32, #tpu.memory_space<vmem>>) attributes {dimension_semantics = [#tpu.dimension_semantics<parallel>], iteration_bounds = array<i64: 6>, scalar_prefetch = 0 : i64, scratch_operands = 0 : i64, tpu.core_type = #tpu.core_type<tc>, window_params = [{transform_indices = @transform_0, window_bounds = array<i64: 1, 4, 192>}, {pipeline_mode = #tpu.pipeline_mode<synchronous>, transform_indices = @transform_1, window_bounds = array<i64: 192, 32>}, {pipeline_mode = #tpu.pipeline_mode<synchronous>, transform_indices = @transform_2, window_bounds = array<i64: 1, 32>}, {pipeline_mode = #tpu.pipeline_mode<synchronous>, transform_indices = @transform_3, window_bounds = array<i64: 5, 32>}, {pipeline_mode = #tpu.pipeline_mode<synchronous>, transform_indices = @transform_4, window_bounds = array<i64: 1, 32>}, {pipeline_mode = #tpu.pipeline_mode<synchronous>, transform_indices = @transform_5, window_bounds = array<i64: 1, 32>}, {pipeline_mode = #tpu.pipeline_mode<synchronous>, transform_indices = @transform_6, window_bounds = array<i64: 1, 32>}, {pipeline_mode = #tpu.pipeline_mode<synchronous>, transform_indices = @transform_7, window_bounds = array<i64: 1, 32>}, {pipeline_mode = #tpu.pipeline_mode<synchronous>, transform_indices = @transform_8, window_bounds = array<i64: 32, 32>}, {pipeline_mode = #tpu.pipeline_mode<synchronous>, transform_indices = @transform_9, window_bounds = array<i64: 2, 1, 32>}, {pipeline_mode = #tpu.pipeline_mode<synchronous>, transform_indices = @transform_10, window_bounds = array<i64: 2, 1, 32>}, {pipeline_mode = #tpu.pipeline_mode<synchronous>, transform_indices = @transform_11, window_bounds = array<i64: 2, 32, 96>}, {pipeline_mode = #tpu.pipeline_mode<synchronous>, transform_indices = @transform_12, window_bounds = array<i64: 2, 1, 96>}, {pipeline_mode = #tpu.pipeline_mode<synchronous>, transform_indices = @transform_13, window_bounds = array<i64: 2, 32, 32>}, {pipeline_mode = #tpu.pipeline_mode<synchronous>, transform_indices = @transform_14, window_bounds = array<i64: 2, 1, 32>}, {pipeline_mode = #tpu.pipeline_mode<synchronous>, transform_indices = @transform_15, window_bounds = array<i64: 2, 1, 32>}, {pipeline_mode = #tpu.pipeline_mode<synchronous>, transform_indices = @transform_16, window_bounds = array<i64: 2, 1, 32>}, {pipeline_mode = #tpu.pipeline_mode<synchronous>, transform_indices = @transform_17, window_bounds = array<i64: 2, 32, 128>}, {pipeline_mode = #tpu.pipeline_mode<synchronous>, transform_indices = @transform_18, window_bounds = array<i64: 2, 1, 128>}, {pipeline_mode = #tpu.pipeline_mode<synchronous>, transform_indices = @transform_19, window_bounds = array<i64: 2, 128, 32>}, {pipeline_mode = #tpu.pipeline_mode<synchronous>, transform_indices = @transform_20, window_bounds = array<i64: 2, 1, 32>}, {transform_indices = @transform_21, window_bounds = array<i64: 1, 1, 32>}]} {
    %c0 = arith.constant 0 : index
    %c0_0 = arith.constant 0 : index
    %c0_1 = arith.constant 0 : index
    %0 = vector.load %arg1[%c0, %c0_0, %c0_1] : memref<1x4x192xf32, #tpu.memory_space<vmem>>, vector<1x4x192xf32>
    %1 = vector.shape_cast %0 : vector<1x4x192xf32> to vector<4x192xf32>
    %c0_2 = arith.constant 0 : index
    %c0_3 = arith.constant 0 : index
    %2 = vector.load %arg2[%c0_2, %c0_3] : memref<192x32xf32, #tpu.memory_space<vmem>>, vector<192x32xf32>
    %3 = arith.truncf %1 : vector<4x192xf32> to vector<4x192xbf16>
    %4 = arith.truncf %2 : vector<192x32xf32> to vector<192x32xbf16>
    %cst = arith.constant dense<0.000000e+00> : vector<4x32xf32>
    %5 = tpu.matmul %3, %4, %cst {dimension_numbers = #tpu.dot_dimension_numbers<[1], [0], [0], [1], [0, 0, 1, 1], [], []>} : vector<4x192xbf16>, vector<192x32xbf16>, vector<4x32xf32> -> vector<4x32xf32>
    %c0_4 = arith.constant 0 : index
    %c0_5 = arith.constant 0 : index
    %6 = vector.load %arg3[%c0_4, %c0_5] : memref<1x32xf32, #tpu.memory_space<vmem>>, vector<1x32xf32>
    %7 = tpu.concatenate %6, %5 in 0 : vector<1x32xf32>, vector<4x32xf32> -> vector<5x32xf32>
    %c0_6 = arith.constant 0 : index
    %c0_7 = arith.constant 0 : index
    %8 = vector.load %arg4[%c0_6, %c0_7] : memref<5x32xf32, #tpu.memory_space<vmem>>, vector<5x32xf32>
    %9 = arith.addf %7, %8 : vector<5x32xf32>
    %c0_8 = arith.constant 0 : index
    %c0_9 = arith.constant 0 : index
    %10 = vector.load %arg5[%c0_8, %c0_9] : memref<1x32xf32, #tpu.memory_space<vmem>>, vector<1x32xf32>
    %c0_10 = arith.constant 0 : index
    %c0_11 = arith.constant 0 : index
    %11 = vector.load %arg6[%c0_10, %c0_11] : memref<1x32xf32, #tpu.memory_space<vmem>>, vector<1x32xf32>
    %cst_12 = arith.constant dense<0.000000e+00> : vector<5xf32>
    %12 = vector.multi_reduction <add>, %9, %cst_12 [1] : vector<5x32xf32> to vector<5xf32>
    %13 = vector.shape_cast %12 : vector<5xf32> to vector<5x1xf32>
    %cst_13 = arith.constant 3.200000e+01 : f32
    %14 = vector.broadcast %cst_13 : f32 to vector<5x1xf32>
    %15 = arith.divf %13, %14 : vector<5x1xf32>
    %16 = vector.broadcast %15 : vector<5x1xf32> to vector<5x32xf32>
    %17 = arith.subf %9, %16 : vector<5x32xf32>
    %18 = arith.mulf %17, %17 : vector<5x32xf32>
    %cst_14 = arith.constant dense<0.000000e+00> : vector<5xf32>
    %19 = vector.multi_reduction <add>, %18, %cst_14 [1] : vector<5x32xf32> to vector<5xf32>
    %20 = vector.shape_cast %19 : vector<5xf32> to vector<5x1xf32>
    %cst_15 = arith.constant 3.200000e+01 : f32
    %21 = vector.broadcast %cst_15 : f32 to vector<5x1xf32>
    %22 = arith.divf %20, %21 : vector<5x1xf32>
    %23 = vector.broadcast %15 : vector<5x1xf32> to vector<5x32xf32>
    %24 = arith.subf %9, %23 : vector<5x32xf32>
    %cst_16 = arith.constant 9.99999974E-6 : f32
    %25 = vector.broadcast %cst_16 : f32 to vector<5x1xf32>
    %26 = arith.addf %22, %25 : vector<5x1xf32>
    %27 = math.rsqrt %26 : vector<5x1xf32>
    %28 = vector.broadcast %27 : vector<5x1xf32> to vector<5x32xf32>
    %29 = arith.mulf %24, %28 : vector<5x32xf32>
    %30 = vector.broadcast %10 : vector<1x32xf32> to vector<5x32xf32>
    %31 = arith.mulf %29, %30 : vector<5x32xf32>
    %32 = vector.broadcast %11 : vector<1x32xf32> to vector<5x32xf32>
    %33 = arith.addf %31, %32 : vector<5x32xf32>
    %c0_17 = arith.constant 0 : index
    %c0_18 = arith.constant 0 : index
    %c0_19 = arith.constant 0 : index
    %34 = vector.load %arg10[%c0_17, %c0_18, %c0_19] : memref<2x1x32xf32, #tpu.memory_space<vmem>>, vector<1x1x32xf32>
    %35 = vector.shape_cast %34 : vector<1x1x32xf32> to vector<1x32xf32>
    %c0_20 = arith.constant 0 : index
    %c0_21 = arith.constant 0 : index
    %c0_22 = arith.constant 0 : index
    %36 = vector.load %arg11[%c0_20, %c0_21, %c0_22] : memref<2x1x32xf32, #tpu.memory_space<vmem>>, vector<1x1x32xf32>
    %37 = vector.shape_cast %36 : vector<1x1x32xf32> to vector<1x32xf32>
    %c0_23 = arith.constant 0 : index
    %c0_24 = arith.constant 0 : index
    %c0_25 = arith.constant 0 : index
    %38 = vector.load %arg12[%c0_23, %c0_24, %c0_25] : memref<2x32x96xf32, #tpu.memory_space<vmem>>, vector<1x32x96xf32>
    %39 = vector.shape_cast %38 : vector<1x32x96xf32> to vector<32x96xf32>
    %c0_26 = arith.constant 0 : index
    %c0_27 = arith.constant 0 : index
    %c0_28 = arith.constant 0 : index
    %40 = vector.load %arg13[%c0_26, %c0_27, %c0_28] : memref<2x1x96xf32, #tpu.memory_space<vmem>>, vector<1x1x96xf32>
    %41 = vector.shape_cast %40 : vector<1x1x96xf32> to vector<1x96xf32>
    %c0_29 = arith.constant 0 : index
    %c0_30 = arith.constant 0 : index
    %c0_31 = arith.constant 0 : index
    %42 = vector.load %arg14[%c0_29, %c0_30, %c0_31] : memref<2x32x32xf32, #tpu.memory_space<vmem>>, vector<1x32x32xf32>
    %43 = vector.shape_cast %42 : vector<1x32x32xf32> to vector<32x32xf32>
    %c0_32 = arith.constant 0 : index
    %c0_33 = arith.constant 0 : index
    %c0_34 = arith.constant 0 : index
    %44 = vector.load %arg15[%c0_32, %c0_33, %c0_34] : memref<2x1x32xf32, #tpu.memory_space<vmem>>, vector<1x1x32xf32>
    %45 = vector.shape_cast %44 : vector<1x1x32xf32> to vector<1x32xf32>
    %c0_35 = arith.constant 0 : index
    %c0_36 = arith.constant 0 : index
    %c0_37 = arith.constant 0 : index
    %46 = vector.load %arg16[%c0_35, %c0_36, %c0_37] : memref<2x1x32xf32, #tpu.memory_space<vmem>>, vector<1x1x32xf32>
    %47 = vector.shape_cast %46 : vector<1x1x32xf32> to vector<1x32xf32>
    %c0_38 = arith.constant 0 : index
    %c0_39 = arith.constant 0 : index
    %c0_40 = arith.constant 0 : index
    %48 = vector.load %arg17[%c0_38, %c0_39, %c0_40] : memref<2x1x32xf32, #tpu.memory_space<vmem>>, vector<1x1x32xf32>
    %49 = vector.shape_cast %48 : vector<1x1x32xf32> to vector<1x32xf32>
    %c0_41 = arith.constant 0 : index
    %c0_42 = arith.constant 0 : index
    %c0_43 = arith.constant 0 : index
    %50 = vector.load %arg18[%c0_41, %c0_42, %c0_43] : memref<2x32x128xf32, #tpu.memory_space<vmem>>, vector<1x32x128xf32>
    %51 = vector.shape_cast %50 : vector<1x32x128xf32> to vector<32x128xf32>
    %c0_44 = arith.constant 0 : index
    %c0_45 = arith.constant 0 : index
    %c0_46 = arith.constant 0 : index
    %52 = vector.load %arg19[%c0_44, %c0_45, %c0_46] : memref<2x1x128xf32, #tpu.memory_space<vmem>>, vector<1x1x128xf32>
    %53 = vector.shape_cast %52 : vector<1x1x128xf32> to vector<1x128xf32>
    %c0_47 = arith.constant 0 : index
    %c0_48 = arith.constant 0 : index
    %c0_49 = arith.constant 0 : index
    %54 = vector.load %arg20[%c0_47, %c0_48, %c0_49] : memref<2x128x32xf32, #tpu.memory_space<vmem>>, vector<1x128x32xf32>
    %55 = vector.shape_cast %54 : vector<1x128x32xf32> to vector<128x32xf32>
    %c0_50 = arith.constant 0 : index
    %c0_51 = arith.constant 0 : index
    %c0_52 = arith.constant 0 : index
    %56 = vector.load %arg21[%c0_50, %c0_51, %c0_52] : memref<2x1x32xf32, #tpu.memory_space<vmem>>, vector<1x1x32xf32>
    %57 = vector.shape_cast %56 : vector<1x1x32xf32> to vector<1x32xf32>
    %cst_53 = arith.constant dense<0.000000e+00> : vector<5xf32>
    %58 = vector.multi_reduction <add>, %33, %cst_53 [1] : vector<5x32xf32> to vector<5xf32>
    %59 = vector.shape_cast %58 : vector<5xf32> to vector<5x1xf32>
    %cst_54 = arith.constant 3.200000e+01 : f32
    %60 = vector.broadcast %cst_54 : f32 to vector<5x1xf32>
    %61 = arith.divf %59, %60 : vector<5x1xf32>
    %62 = vector.broadcast %61 : vector<5x1xf32> to vector<5x32xf32>
    %63 = arith.subf %33, %62 : vector<5x32xf32>
    %64 = arith.mulf %63, %63 : vector<5x32xf32>
    %cst_55 = arith.constant dense<0.000000e+00> : vector<5xf32>
    %65 = vector.multi_reduction <add>, %64, %cst_55 [1] : vector<5x32xf32> to vector<5xf32>
    %66 = vector.shape_cast %65 : vector<5xf32> to vector<5x1xf32>
    %cst_56 = arith.constant 3.200000e+01 : f32
    %67 = vector.broadcast %cst_56 : f32 to vector<5x1xf32>
    %68 = arith.divf %66, %67 : vector<5x1xf32>
    %69 = vector.broadcast %61 : vector<5x1xf32> to vector<5x32xf32>
    %70 = arith.subf %33, %69 : vector<5x32xf32>
    %cst_57 = arith.constant 9.99999974E-6 : f32
    %71 = vector.broadcast %cst_57 : f32 to vector<5x1xf32>
    %72 = arith.addf %68, %71 : vector<5x1xf32>
    %73 = math.rsqrt %72 : vector<5x1xf32>
    %74 = vector.broadcast %73 : vector<5x1xf32> to vector<5x32xf32>
    %75 = arith.mulf %70, %74 : vector<5x32xf32>
    %76 = vector.broadcast %35 : vector<1x32xf32> to vector<5x32xf32>
    %77 = arith.mulf %75, %76 : vector<5x32xf32>
    %78 = vector.broadcast %37 : vector<1x32xf32> to vector<5x32xf32>
    %79 = arith.addf %77, %78 : vector<5x32xf32>
    %80 = arith.truncf %79 : vector<5x32xf32> to vector<5x32xbf16>
    %81 = arith.truncf %39 : vector<32x96xf32> to vector<32x96xbf16>
    %cst_58 = arith.constant dense<0.000000e+00> : vector<5x96xf32>
    %82 = tpu.matmul %80, %81, %cst_58 {dimension_numbers = #tpu.dot_dimension_numbers<[1], [0], [0], [1], [0, 0, 1, 1], [], []>} : vector<5x32xbf16>, vector<32x96xbf16>, vector<5x96xf32> -> vector<5x96xf32>
    %83 = vector.broadcast %41 : vector<1x96xf32> to vector<5x96xf32>
    %84 = arith.addf %82, %83 : vector<5x96xf32>
    %85 = vector.extract_strided_slice %84 {offsets = [0, 0], sizes = [5, 32], strides = [1, 1]} : vector<5x96xf32> to vector<5x32xf32>
    %86 = vector.extract_strided_slice %84 {offsets = [0, 32], sizes = [5, 32], strides = [1, 1]} : vector<5x96xf32> to vector<5x32xf32>
    %87 = vector.extract_strided_slice %84 {offsets = [0, 64], sizes = [5, 32], strides = [1, 1]} : vector<5x96xf32> to vector<5x32xf32>
    %88 = vector.extract_strided_slice %85 {offsets = [0, 0], sizes = [5, 8], strides = [1, 1]} : vector<5x32xf32> to vector<5x8xf32>
    %89 = vector.extract_strided_slice %86 {offsets = [0, 0], sizes = [5, 8], strides = [1, 1]} : vector<5x32xf32> to vector<5x8xf32>
    %90 = vector.extract_strided_slice %87 {offsets = [0, 0], sizes = [5, 8], strides = [1, 1]} : vector<5x32xf32> to vector<5x8xf32>
    %91 = tpu.transpose %89, [1, 0] : vector<5x8xf32> -> vector<8x5xf32>
    %92 = arith.truncf %88 : vector<5x8xf32> to vector<5x8xbf16>
    %93 = arith.truncf %91 : vector<8x5xf32> to vector<8x5xbf16>
    %cst_59 = arith.constant dense<0.000000e+00> : vector<5x5xf32>
    %94 = tpu.matmul %92, %93, %cst_59 {dimension_numbers = #tpu.dot_dimension_numbers<[1], [0], [0], [1], [0, 0, 1, 1], [], []>} : vector<5x8xbf16>, vector<8x5xbf16>, vector<5x5xf32> -> vector<5x5xf32>
    %cst_60 = arith.constant 0.353553385 : f32
    %95 = vector.broadcast %cst_60 : f32 to vector<5x5xf32>
    %96 = arith.mulf %94, %95 : vector<5x5xf32>
    %cst_61 = arith.constant dense<0xFF800000> : vector<5xf32>
    %97 = vector.multi_reduction <maximumf>, %96, %cst_61 [1] : vector<5x5xf32> to vector<5xf32>
    %98 = vector.shape_cast %97 : vector<5xf32> to vector<5x1xf32>
    %99 = vector.broadcast %98 : vector<5x1xf32> to vector<5x5xf32>
    %100 = arith.subf %96, %99 : vector<5x5xf32>
    %101 = math.exp %100 : vector<5x5xf32>
    %cst_62 = arith.constant dense<0.000000e+00> : vector<5xf32>
    %102 = vector.multi_reduction <add>, %101, %cst_62 [1] : vector<5x5xf32> to vector<5xf32>
    %103 = vector.shape_cast %102 : vector<5xf32> to vector<5x1xf32>
    %104 = tpu.reciprocal %103 {approx = true} : vector<5x1xf32> -> vector<5x1xf32>
    %105 = vector.broadcast %104 : vector<5x1xf32> to vector<5x5xf32>
    %106 = arith.mulf %101, %105 : vector<5x5xf32>
    %107 = arith.truncf %106 : vector<5x5xf32> to vector<5x5xbf16>
    %108 = arith.truncf %90 : vector<5x8xf32> to vector<5x8xbf16>
    %cst_63 = arith.constant dense<0.000000e+00> : vector<5x8xf32>
    %109 = tpu.matmul %107, %108, %cst_63 {dimension_numbers = #tpu.dot_dimension_numbers<[1], [0], [0], [1], [0, 0, 1, 1], [], []>} : vector<5x5xbf16>, vector<5x8xbf16>, vector<5x8xf32> -> vector<5x8xf32>
    %110 = vector.extract_strided_slice %85 {offsets = [0, 8], sizes = [5, 8], strides = [1, 1]} : vector<5x32xf32> to vector<5x8xf32>
    %111 = vector.extract_strided_slice %86 {offsets = [0, 8], sizes = [5, 8], strides = [1, 1]} : vector<5x32xf32> to vector<5x8xf32>
    %112 = vector.extract_strided_slice %87 {offsets = [0, 8], sizes = [5, 8], strides = [1, 1]} : vector<5x32xf32> to vector<5x8xf32>
    %113 = tpu.transpose %111, [1, 0] : vector<5x8xf32> -> vector<8x5xf32>
    %114 = arith.truncf %110 : vector<5x8xf32> to vector<5x8xbf16>
    %115 = arith.truncf %113 : vector<8x5xf32> to vector<8x5xbf16>
    %cst_64 = arith.constant dense<0.000000e+00> : vector<5x5xf32>
    %116 = tpu.matmul %114, %115, %cst_64 {dimension_numbers = #tpu.dot_dimension_numbers<[1], [0], [0], [1], [0, 0, 1, 1], [], []>} : vector<5x8xbf16>, vector<8x5xbf16>, vector<5x5xf32> -> vector<5x5xf32>
    %cst_65 = arith.constant 0.353553385 : f32
    %117 = vector.broadcast %cst_65 : f32 to vector<5x5xf32>
    %118 = arith.mulf %116, %117 : vector<5x5xf32>
    %cst_66 = arith.constant dense<0xFF800000> : vector<5xf32>
    %119 = vector.multi_reduction <maximumf>, %118, %cst_66 [1] : vector<5x5xf32> to vector<5xf32>
    %120 = vector.shape_cast %119 : vector<5xf32> to vector<5x1xf32>
    %121 = vector.broadcast %120 : vector<5x1xf32> to vector<5x5xf32>
    %122 = arith.subf %118, %121 : vector<5x5xf32>
    %123 = math.exp %122 : vector<5x5xf32>
    %cst_67 = arith.constant dense<0.000000e+00> : vector<5xf32>
    %124 = vector.multi_reduction <add>, %123, %cst_67 [1] : vector<5x5xf32> to vector<5xf32>
    %125 = vector.shape_cast %124 : vector<5xf32> to vector<5x1xf32>
    %126 = tpu.reciprocal %125 {approx = true} : vector<5x1xf32> -> vector<5x1xf32>
    %127 = vector.broadcast %126 : vector<5x1xf32> to vector<5x5xf32>
    %128 = arith.mulf %123, %127 : vector<5x5xf32>
    %129 = arith.truncf %128 : vector<5x5xf32> to vector<5x5xbf16>
    %130 = arith.truncf %112 : vector<5x8xf32> to vector<5x8xbf16>
    %cst_68 = arith.constant dense<0.000000e+00> : vector<5x8xf32>
    %131 = tpu.matmul %129, %130, %cst_68 {dimension_numbers = #tpu.dot_dimension_numbers<[1], [0], [0], [1], [0, 0, 1, 1], [], []>} : vector<5x5xbf16>, vector<5x8xbf16>, vector<5x8xf32> -> vector<5x8xf32>
    %132 = vector.extract_strided_slice %85 {offsets = [0, 16], sizes = [5, 8], strides = [1, 1]} : vector<5x32xf32> to vector<5x8xf32>
    %133 = vector.extract_strided_slice %86 {offsets = [0, 16], sizes = [5, 8], strides = [1, 1]} : vector<5x32xf32> to vector<5x8xf32>
    %134 = vector.extract_strided_slice %87 {offsets = [0, 16], sizes = [5, 8], strides = [1, 1]} : vector<5x32xf32> to vector<5x8xf32>
    %135 = tpu.transpose %133, [1, 0] : vector<5x8xf32> -> vector<8x5xf32>
    %136 = arith.truncf %132 : vector<5x8xf32> to vector<5x8xbf16>
    %137 = arith.truncf %135 : vector<8x5xf32> to vector<8x5xbf16>
    %cst_69 = arith.constant dense<0.000000e+00> : vector<5x5xf32>
    %138 = tpu.matmul %136, %137, %cst_69 {dimension_numbers = #tpu.dot_dimension_numbers<[1], [0], [0], [1], [0, 0, 1, 1], [], []>} : vector<5x8xbf16>, vector<8x5xbf16>, vector<5x5xf32> -> vector<5x5xf32>
    %cst_70 = arith.constant 0.353553385 : f32
    %139 = vector.broadcast %cst_70 : f32 to vector<5x5xf32>
    %140 = arith.mulf %138, %139 : vector<5x5xf32>
    %cst_71 = arith.constant dense<0xFF800000> : vector<5xf32>
    %141 = vector.multi_reduction <maximumf>, %140, %cst_71 [1] : vector<5x5xf32> to vector<5xf32>
    %142 = vector.shape_cast %141 : vector<5xf32> to vector<5x1xf32>
    %143 = vector.broadcast %142 : vector<5x1xf32> to vector<5x5xf32>
    %144 = arith.subf %140, %143 : vector<5x5xf32>
    %145 = math.exp %144 : vector<5x5xf32>
    %cst_72 = arith.constant dense<0.000000e+00> : vector<5xf32>
    %146 = vector.multi_reduction <add>, %145, %cst_72 [1] : vector<5x5xf32> to vector<5xf32>
    %147 = vector.shape_cast %146 : vector<5xf32> to vector<5x1xf32>
    %148 = tpu.reciprocal %147 {approx = true} : vector<5x1xf32> -> vector<5x1xf32>
    %149 = vector.broadcast %148 : vector<5x1xf32> to vector<5x5xf32>
    %150 = arith.mulf %145, %149 : vector<5x5xf32>
    %151 = arith.truncf %150 : vector<5x5xf32> to vector<5x5xbf16>
    %152 = arith.truncf %134 : vector<5x8xf32> to vector<5x8xbf16>
    %cst_73 = arith.constant dense<0.000000e+00> : vector<5x8xf32>
    %153 = tpu.matmul %151, %152, %cst_73 {dimension_numbers = #tpu.dot_dimension_numbers<[1], [0], [0], [1], [0, 0, 1, 1], [], []>} : vector<5x5xbf16>, vector<5x8xbf16>, vector<5x8xf32> -> vector<5x8xf32>
    %154 = vector.extract_strided_slice %85 {offsets = [0, 24], sizes = [5, 8], strides = [1, 1]} : vector<5x32xf32> to vector<5x8xf32>
    %155 = vector.extract_strided_slice %86 {offsets = [0, 24], sizes = [5, 8], strides = [1, 1]} : vector<5x32xf32> to vector<5x8xf32>
    %156 = vector.extract_strided_slice %87 {offsets = [0, 24], sizes = [5, 8], strides = [1, 1]} : vector<5x32xf32> to vector<5x8xf32>
    %157 = tpu.transpose %155, [1, 0] : vector<5x8xf32> -> vector<8x5xf32>
    %158 = arith.truncf %154 : vector<5x8xf32> to vector<5x8xbf16>
    %159 = arith.truncf %157 : vector<8x5xf32> to vector<8x5xbf16>
    %cst_74 = arith.constant dense<0.000000e+00> : vector<5x5xf32>
    %160 = tpu.matmul %158, %159, %cst_74 {dimension_numbers = #tpu.dot_dimension_numbers<[1], [0], [0], [1], [0, 0, 1, 1], [], []>} : vector<5x8xbf16>, vector<8x5xbf16>, vector<5x5xf32> -> vector<5x5xf32>
    %cst_75 = arith.constant 0.353553385 : f32
    %161 = vector.broadcast %cst_75 : f32 to vector<5x5xf32>
    %162 = arith.mulf %160, %161 : vector<5x5xf32>
    %cst_76 = arith.constant dense<0xFF800000> : vector<5xf32>
    %163 = vector.multi_reduction <maximumf>, %162, %cst_76 [1] : vector<5x5xf32> to vector<5xf32>
    %164 = vector.shape_cast %163 : vector<5xf32> to vector<5x1xf32>
    %165 = vector.broadcast %164 : vector<5x1xf32> to vector<5x5xf32>
    %166 = arith.subf %162, %165 : vector<5x5xf32>
    %167 = math.exp %166 : vector<5x5xf32>
    %cst_77 = arith.constant dense<0.000000e+00> : vector<5xf32>
    %168 = vector.multi_reduction <add>, %167, %cst_77 [1] : vector<5x5xf32> to vector<5xf32>
    %169 = vector.shape_cast %168 : vector<5xf32> to vector<5x1xf32>
    %170 = tpu.reciprocal %169 {approx = true} : vector<5x1xf32> -> vector<5x1xf32>
    %171 = vector.broadcast %170 : vector<5x1xf32> to vector<5x5xf32>
    %172 = arith.mulf %167, %171 : vector<5x5xf32>
    %173 = arith.truncf %172 : vector<5x5xf32> to vector<5x5xbf16>
    %174 = arith.truncf %156 : vector<5x8xf32> to vector<5x8xbf16>
    %cst_78 = arith.constant dense<0.000000e+00> : vector<5x8xf32>
    %175 = tpu.matmul %173, %174, %cst_78 {dimension_numbers = #tpu.dot_dimension_numbers<[1], [0], [0], [1], [0, 0, 1, 1], [], []>} : vector<5x5xbf16>, vector<5x8xbf16>, vector<5x8xf32> -> vector<5x8xf32>
    %176 = tpu.concatenate %109, %131, %153, %175 in 1 : vector<5x8xf32>, vector<5x8xf32>, vector<5x8xf32>, vector<5x8xf32> -> vector<5x32xf32>
    %177 = arith.truncf %176 : vector<5x32xf32> to vector<5x32xbf16>
    %178 = arith.truncf %43 : vector<32x32xf32> to vector<32x32xbf16>
    %cst_79 = arith.constant dense<0.000000e+00> : vector<5x32xf32>
    %179 = tpu.matmul %177, %178, %cst_79 {dimension_numbers = #tpu.dot_dimension_numbers<[1], [0], [0], [1], [0, 0, 1, 1], [], []>} : vector<5x32xbf16>, vector<32x32xbf16>, vector<5x32xf32> -> vector<5x32xf32>
    %180 = vector.broadcast %45 : vector<1x32xf32> to vector<5x32xf32>
    %181 = arith.addf %179, %180 : vector<5x32xf32>
    %182 = arith.addf %33, %181 : vector<5x32xf32>
    %cst_80 = arith.constant dense<0.000000e+00> : vector<5xf32>
    %183 = vector.multi_reduction <add>, %182, %cst_80 [1] : vector<5x32xf32> to vector<5xf32>
    %184 = vector.shape_cast %183 : vector<5xf32> to vector<5x1xf32>
    %cst_81 = arith.constant 3.200000e+01 : f32
    %185 = vector.broadcast %cst_81 : f32 to vector<5x1xf32>
    %186 = arith.divf %184, %185 : vector<5x1xf32>
    %187 = vector.broadcast %186 : vector<5x1xf32> to vector<5x32xf32>
    %188 = arith.subf %182, %187 : vector<5x32xf32>
    %189 = arith.mulf %188, %188 : vector<5x32xf32>
    %cst_82 = arith.constant dense<0.000000e+00> : vector<5xf32>
    %190 = vector.multi_reduction <add>, %189, %cst_82 [1] : vector<5x32xf32> to vector<5xf32>
    %191 = vector.shape_cast %190 : vector<5xf32> to vector<5x1xf32>
    %cst_83 = arith.constant 3.200000e+01 : f32
    %192 = vector.broadcast %cst_83 : f32 to vector<5x1xf32>
    %193 = arith.divf %191, %192 : vector<5x1xf32>
    %194 = vector.broadcast %186 : vector<5x1xf32> to vector<5x32xf32>
    %195 = arith.subf %182, %194 : vector<5x32xf32>
    %cst_84 = arith.constant 9.99999974E-6 : f32
    %196 = vector.broadcast %cst_84 : f32 to vector<5x1xf32>
    %197 = arith.addf %193, %196 : vector<5x1xf32>
    %198 = math.rsqrt %197 : vector<5x1xf32>
    %199 = vector.broadcast %198 : vector<5x1xf32> to vector<5x32xf32>
    %200 = arith.mulf %195, %199 : vector<5x32xf32>
    %201 = vector.broadcast %47 : vector<1x32xf32> to vector<5x32xf32>
    %202 = arith.mulf %200, %201 : vector<5x32xf32>
    %203 = vector.broadcast %49 : vector<1x32xf32> to vector<5x32xf32>
    %204 = arith.addf %202, %203 : vector<5x32xf32>
    %205 = arith.truncf %204 : vector<5x32xf32> to vector<5x32xbf16>
    %206 = arith.truncf %51 : vector<32x128xf32> to vector<32x128xbf16>
    %cst_85 = arith.constant dense<0.000000e+00> : vector<5x128xf32>
    %207 = tpu.matmul %205, %206, %cst_85 {dimension_numbers = #tpu.dot_dimension_numbers<[1], [0], [0], [1], [0, 0, 1, 1], [], []>} : vector<5x32xbf16>, vector<32x128xbf16>, vector<5x128xf32> -> vector<5x128xf32>
    %208 = vector.broadcast %53 : vector<1x128xf32> to vector<5x128xf32>
    %209 = arith.addf %207, %208 : vector<5x128xf32>
    %cst_86 = arith.constant 1.702000e+00 : f32
    %210 = vector.broadcast %cst_86 : f32 to vector<5x128xf32>
    %211 = arith.mulf %210, %209 : vector<5x128xf32>
    %212 = arith.negf %211 : vector<5x128xf32>
    %213 = math.exp %212 : vector<5x128xf32>
    %cst_87 = arith.constant 1.000000e+00 : f32
    %214 = vector.broadcast %cst_87 : f32 to vector<5x128xf32>
    %215 = arith.addf %214, %213 : vector<5x128xf32>
    %216 = arith.divf %214, %215 : vector<5x128xf32>
    %217 = arith.mulf %209, %216 : vector<5x128xf32>
    %218 = arith.truncf %217 : vector<5x128xf32> to vector<5x128xbf16>
    %219 = arith.truncf %55 : vector<128x32xf32> to vector<128x32xbf16>
    %cst_88 = arith.constant dense<0.000000e+00> : vector<5x32xf32>
    %220 = tpu.matmul %218, %219, %cst_88 {dimension_numbers = #tpu.dot_dimension_numbers<[1], [0], [0], [1], [0, 0, 1, 1], [], []>} : vector<5x128xbf16>, vector<128x32xbf16>, vector<5x32xf32> -> vector<5x32xf32>
    %221 = vector.broadcast %57 : vector<1x32xf32> to vector<5x32xf32>
    %222 = arith.addf %220, %221 : vector<5x32xf32>
    %223 = arith.addf %182, %222 : vector<5x32xf32>
    %c1 = arith.constant 1 : index
    %c0_89 = arith.constant 0 : index
    %c0_90 = arith.constant 0 : index
    %224 = vector.load %arg10[%c1, %c0_89, %c0_90] : memref<2x1x32xf32, #tpu.memory_space<vmem>>, vector<1x1x32xf32>
    %225 = vector.shape_cast %224 : vector<1x1x32xf32> to vector<1x32xf32>
    %c1_91 = arith.constant 1 : index
    %c0_92 = arith.constant 0 : index
    %c0_93 = arith.constant 0 : index
    %226 = vector.load %arg11[%c1_91, %c0_92, %c0_93] : memref<2x1x32xf32, #tpu.memory_space<vmem>>, vector<1x1x32xf32>
    %227 = vector.shape_cast %226 : vector<1x1x32xf32> to vector<1x32xf32>
    %c1_94 = arith.constant 1 : index
    %c0_95 = arith.constant 0 : index
    %c0_96 = arith.constant 0 : index
    %228 = vector.load %arg12[%c1_94, %c0_95, %c0_96] : memref<2x32x96xf32, #tpu.memory_space<vmem>>, vector<1x32x96xf32>
    %229 = vector.shape_cast %228 : vector<1x32x96xf32> to vector<32x96xf32>
    %c1_97 = arith.constant 1 : index
    %c0_98 = arith.constant 0 : index
    %c0_99 = arith.constant 0 : index
    %230 = vector.load %arg13[%c1_97, %c0_98, %c0_99] : memref<2x1x96xf32, #tpu.memory_space<vmem>>, vector<1x1x96xf32>
    %231 = vector.shape_cast %230 : vector<1x1x96xf32> to vector<1x96xf32>
    %c1_100 = arith.constant 1 : index
    %c0_101 = arith.constant 0 : index
    %c0_102 = arith.constant 0 : index
    %232 = vector.load %arg14[%c1_100, %c0_101, %c0_102] : memref<2x32x32xf32, #tpu.memory_space<vmem>>, vector<1x32x32xf32>
    %233 = vector.shape_cast %232 : vector<1x32x32xf32> to vector<32x32xf32>
    %c1_103 = arith.constant 1 : index
    %c0_104 = arith.constant 0 : index
    %c0_105 = arith.constant 0 : index
    %234 = vector.load %arg15[%c1_103, %c0_104, %c0_105] : memref<2x1x32xf32, #tpu.memory_space<vmem>>, vector<1x1x32xf32>
    %235 = vector.shape_cast %234 : vector<1x1x32xf32> to vector<1x32xf32>
    %c1_106 = arith.constant 1 : index
    %c0_107 = arith.constant 0 : index
    %c0_108 = arith.constant 0 : index
    %236 = vector.load %arg16[%c1_106, %c0_107, %c0_108] : memref<2x1x32xf32, #tpu.memory_space<vmem>>, vector<1x1x32xf32>
    %237 = vector.shape_cast %236 : vector<1x1x32xf32> to vector<1x32xf32>
    %c1_109 = arith.constant 1 : index
    %c0_110 = arith.constant 0 : index
    %c0_111 = arith.constant 0 : index
    %238 = vector.load %arg17[%c1_109, %c0_110, %c0_111] : memref<2x1x32xf32, #tpu.memory_space<vmem>>, vector<1x1x32xf32>
    %239 = vector.shape_cast %238 : vector<1x1x32xf32> to vector<1x32xf32>
    %c1_112 = arith.constant 1 : index
    %c0_113 = arith.constant 0 : index
    %c0_114 = arith.constant 0 : index
    %240 = vector.load %arg18[%c1_112, %c0_113, %c0_114] : memref<2x32x128xf32, #tpu.memory_space<vmem>>, vector<1x32x128xf32>
    %241 = vector.shape_cast %240 : vector<1x32x128xf32> to vector<32x128xf32>
    %c1_115 = arith.constant 1 : index
    %c0_116 = arith.constant 0 : index
    %c0_117 = arith.constant 0 : index
    %242 = vector.load %arg19[%c1_115, %c0_116, %c0_117] : memref<2x1x128xf32, #tpu.memory_space<vmem>>, vector<1x1x128xf32>
    %243 = vector.shape_cast %242 : vector<1x1x128xf32> to vector<1x128xf32>
    %c1_118 = arith.constant 1 : index
    %c0_119 = arith.constant 0 : index
    %c0_120 = arith.constant 0 : index
    %244 = vector.load %arg20[%c1_118, %c0_119, %c0_120] : memref<2x128x32xf32, #tpu.memory_space<vmem>>, vector<1x128x32xf32>
    %245 = vector.shape_cast %244 : vector<1x128x32xf32> to vector<128x32xf32>
    %c1_121 = arith.constant 1 : index
    %c0_122 = arith.constant 0 : index
    %c0_123 = arith.constant 0 : index
    %246 = vector.load %arg21[%c1_121, %c0_122, %c0_123] : memref<2x1x32xf32, #tpu.memory_space<vmem>>, vector<1x1x32xf32>
    %247 = vector.shape_cast %246 : vector<1x1x32xf32> to vector<1x32xf32>
    %cst_124 = arith.constant dense<0.000000e+00> : vector<5xf32>
    %248 = vector.multi_reduction <add>, %223, %cst_124 [1] : vector<5x32xf32> to vector<5xf32>
    %249 = vector.shape_cast %248 : vector<5xf32> to vector<5x1xf32>
    %cst_125 = arith.constant 3.200000e+01 : f32
    %250 = vector.broadcast %cst_125 : f32 to vector<5x1xf32>
    %251 = arith.divf %249, %250 : vector<5x1xf32>
    %252 = vector.broadcast %251 : vector<5x1xf32> to vector<5x32xf32>
    %253 = arith.subf %223, %252 : vector<5x32xf32>
    %254 = arith.mulf %253, %253 : vector<5x32xf32>
    %cst_126 = arith.constant dense<0.000000e+00> : vector<5xf32>
    %255 = vector.multi_reduction <add>, %254, %cst_126 [1] : vector<5x32xf32> to vector<5xf32>
    %256 = vector.shape_cast %255 : vector<5xf32> to vector<5x1xf32>
    %cst_127 = arith.constant 3.200000e+01 : f32
    %257 = vector.broadcast %cst_127 : f32 to vector<5x1xf32>
    %258 = arith.divf %256, %257 : vector<5x1xf32>
    %259 = vector.broadcast %251 : vector<5x1xf32> to vector<5x32xf32>
    %260 = arith.subf %223, %259 : vector<5x32xf32>
    %cst_128 = arith.constant 9.99999974E-6 : f32
    %261 = vector.broadcast %cst_128 : f32 to vector<5x1xf32>
    %262 = arith.addf %258, %261 : vector<5x1xf32>
    %263 = math.rsqrt %262 : vector<5x1xf32>
    %264 = vector.broadcast %263 : vector<5x1xf32> to vector<5x32xf32>
    %265 = arith.mulf %260, %264 : vector<5x32xf32>
    %266 = vector.broadcast %225 : vector<1x32xf32> to vector<5x32xf32>
    %267 = arith.mulf %265, %266 : vector<5x32xf32>
    %268 = vector.broadcast %227 : vector<1x32xf32> to vector<5x32xf32>
    %269 = arith.addf %267, %268 : vector<5x32xf32>
    %270 = arith.truncf %269 : vector<5x32xf32> to vector<5x32xbf16>
    %271 = arith.truncf %229 : vector<32x96xf32> to vector<32x96xbf16>
    %cst_129 = arith.constant dense<0.000000e+00> : vector<5x96xf32>
    %272 = tpu.matmul %270, %271, %cst_129 {dimension_numbers = #tpu.dot_dimension_numbers<[1], [0], [0], [1], [0, 0, 1, 1], [], []>} : vector<5x32xbf16>, vector<32x96xbf16>, vector<5x96xf32> -> vector<5x96xf32>
    %273 = vector.broadcast %231 : vector<1x96xf32> to vector<5x96xf32>
    %274 = arith.addf %272, %273 : vector<5x96xf32>
    %275 = vector.extract_strided_slice %274 {offsets = [0, 0], sizes = [5, 32], strides = [1, 1]} : vector<5x96xf32> to vector<5x32xf32>
    %276 = vector.extract_strided_slice %274 {offsets = [0, 32], sizes = [5, 32], strides = [1, 1]} : vector<5x96xf32> to vector<5x32xf32>
    %277 = vector.extract_strided_slice %274 {offsets = [0, 64], sizes = [5, 32], strides = [1, 1]} : vector<5x96xf32> to vector<5x32xf32>
    %278 = vector.extract_strided_slice %275 {offsets = [0, 0], sizes = [5, 8], strides = [1, 1]} : vector<5x32xf32> to vector<5x8xf32>
    %279 = vector.extract_strided_slice %276 {offsets = [0, 0], sizes = [5, 8], strides = [1, 1]} : vector<5x32xf32> to vector<5x8xf32>
    %280 = vector.extract_strided_slice %277 {offsets = [0, 0], sizes = [5, 8], strides = [1, 1]} : vector<5x32xf32> to vector<5x8xf32>
    %281 = tpu.transpose %279, [1, 0] : vector<5x8xf32> -> vector<8x5xf32>
    %282 = arith.truncf %278 : vector<5x8xf32> to vector<5x8xbf16>
    %283 = arith.truncf %281 : vector<8x5xf32> to vector<8x5xbf16>
    %cst_130 = arith.constant dense<0.000000e+00> : vector<5x5xf32>
    %284 = tpu.matmul %282, %283, %cst_130 {dimension_numbers = #tpu.dot_dimension_numbers<[1], [0], [0], [1], [0, 0, 1, 1], [], []>} : vector<5x8xbf16>, vector<8x5xbf16>, vector<5x5xf32> -> vector<5x5xf32>
    %cst_131 = arith.constant 0.353553385 : f32
    %285 = vector.broadcast %cst_131 : f32 to vector<5x5xf32>
    %286 = arith.mulf %284, %285 : vector<5x5xf32>
    %cst_132 = arith.constant dense<0xFF800000> : vector<5xf32>
    %287 = vector.multi_reduction <maximumf>, %286, %cst_132 [1] : vector<5x5xf32> to vector<5xf32>
    %288 = vector.shape_cast %287 : vector<5xf32> to vector<5x1xf32>
    %289 = vector.broadcast %288 : vector<5x1xf32> to vector<5x5xf32>
    %290 = arith.subf %286, %289 : vector<5x5xf32>
    %291 = math.exp %290 : vector<5x5xf32>
    %cst_133 = arith.constant dense<0.000000e+00> : vector<5xf32>
    %292 = vector.multi_reduction <add>, %291, %cst_133 [1] : vector<5x5xf32> to vector<5xf32>
    %293 = vector.shape_cast %292 : vector<5xf32> to vector<5x1xf32>
    %294 = tpu.reciprocal %293 {approx = true} : vector<5x1xf32> -> vector<5x1xf32>
    %295 = vector.broadcast %294 : vector<5x1xf32> to vector<5x5xf32>
    %296 = arith.mulf %291, %295 : vector<5x5xf32>
    %297 = arith.truncf %296 : vector<5x5xf32> to vector<5x5xbf16>
    %298 = arith.truncf %280 : vector<5x8xf32> to vector<5x8xbf16>
    %cst_134 = arith.constant dense<0.000000e+00> : vector<5x8xf32>
    %299 = tpu.matmul %297, %298, %cst_134 {dimension_numbers = #tpu.dot_dimension_numbers<[1], [0], [0], [1], [0, 0, 1, 1], [], []>} : vector<5x5xbf16>, vector<5x8xbf16>, vector<5x8xf32> -> vector<5x8xf32>
    %300 = vector.extract_strided_slice %275 {offsets = [0, 8], sizes = [5, 8], strides = [1, 1]} : vector<5x32xf32> to vector<5x8xf32>
    %301 = vector.extract_strided_slice %276 {offsets = [0, 8], sizes = [5, 8], strides = [1, 1]} : vector<5x32xf32> to vector<5x8xf32>
    %302 = vector.extract_strided_slice %277 {offsets = [0, 8], sizes = [5, 8], strides = [1, 1]} : vector<5x32xf32> to vector<5x8xf32>
    %303 = tpu.transpose %301, [1, 0] : vector<5x8xf32> -> vector<8x5xf32>
    %304 = arith.truncf %300 : vector<5x8xf32> to vector<5x8xbf16>
    %305 = arith.truncf %303 : vector<8x5xf32> to vector<8x5xbf16>
    %cst_135 = arith.constant dense<0.000000e+00> : vector<5x5xf32>
    %306 = tpu.matmul %304, %305, %cst_135 {dimension_numbers = #tpu.dot_dimension_numbers<[1], [0], [0], [1], [0, 0, 1, 1], [], []>} : vector<5x8xbf16>, vector<8x5xbf16>, vector<5x5xf32> -> vector<5x5xf32>
    %cst_136 = arith.constant 0.353553385 : f32
    %307 = vector.broadcast %cst_136 : f32 to vector<5x5xf32>
    %308 = arith.mulf %306, %307 : vector<5x5xf32>
    %cst_137 = arith.constant dense<0xFF800000> : vector<5xf32>
    %309 = vector.multi_reduction <maximumf>, %308, %cst_137 [1] : vector<5x5xf32> to vector<5xf32>
    %310 = vector.shape_cast %309 : vector<5xf32> to vector<5x1xf32>
    %311 = vector.broadcast %310 : vector<5x1xf32> to vector<5x5xf32>
    %312 = arith.subf %308, %311 : vector<5x5xf32>
    %313 = math.exp %312 : vector<5x5xf32>
    %cst_138 = arith.constant dense<0.000000e+00> : vector<5xf32>
    %314 = vector.multi_reduction <add>, %313, %cst_138 [1] : vector<5x5xf32> to vector<5xf32>
    %315 = vector.shape_cast %314 : vector<5xf32> to vector<5x1xf32>
    %316 = tpu.reciprocal %315 {approx = true} : vector<5x1xf32> -> vector<5x1xf32>
    %317 = vector.broadcast %316 : vector<5x1xf32> to vector<5x5xf32>
    %318 = arith.mulf %313, %317 : vector<5x5xf32>
    %319 = arith.truncf %318 : vector<5x5xf32> to vector<5x5xbf16>
    %320 = arith.truncf %302 : vector<5x8xf32> to vector<5x8xbf16>
    %cst_139 = arith.constant dense<0.000000e+00> : vector<5x8xf32>
    %321 = tpu.matmul %319, %320, %cst_139 {dimension_numbers = #tpu.dot_dimension_numbers<[1], [0], [0], [1], [0, 0, 1, 1], [], []>} : vector<5x5xbf16>, vector<5x8xbf16>, vector<5x8xf32> -> vector<5x8xf32>
    %322 = vector.extract_strided_slice %275 {offsets = [0, 16], sizes = [5, 8], strides = [1, 1]} : vector<5x32xf32> to vector<5x8xf32>
    %323 = vector.extract_strided_slice %276 {offsets = [0, 16], sizes = [5, 8], strides = [1, 1]} : vector<5x32xf32> to vector<5x8xf32>
    %324 = vector.extract_strided_slice %277 {offsets = [0, 16], sizes = [5, 8], strides = [1, 1]} : vector<5x32xf32> to vector<5x8xf32>
    %325 = tpu.transpose %323, [1, 0] : vector<5x8xf32> -> vector<8x5xf32>
    %326 = arith.truncf %322 : vector<5x8xf32> to vector<5x8xbf16>
    %327 = arith.truncf %325 : vector<8x5xf32> to vector<8x5xbf16>
    %cst_140 = arith.constant dense<0.000000e+00> : vector<5x5xf32>
    %328 = tpu.matmul %326, %327, %cst_140 {dimension_numbers = #tpu.dot_dimension_numbers<[1], [0], [0], [1], [0, 0, 1, 1], [], []>} : vector<5x8xbf16>, vector<8x5xbf16>, vector<5x5xf32> -> vector<5x5xf32>
    %cst_141 = arith.constant 0.353553385 : f32
    %329 = vector.broadcast %cst_141 : f32 to vector<5x5xf32>
    %330 = arith.mulf %328, %329 : vector<5x5xf32>
    %cst_142 = arith.constant dense<0xFF800000> : vector<5xf32>
    %331 = vector.multi_reduction <maximumf>, %330, %cst_142 [1] : vector<5x5xf32> to vector<5xf32>
    %332 = vector.shape_cast %331 : vector<5xf32> to vector<5x1xf32>
    %333 = vector.broadcast %332 : vector<5x1xf32> to vector<5x5xf32>
    %334 = arith.subf %330, %333 : vector<5x5xf32>
    %335 = math.exp %334 : vector<5x5xf32>
    %cst_143 = arith.constant dense<0.000000e+00> : vector<5xf32>
    %336 = vector.multi_reduction <add>, %335, %cst_143 [1] : vector<5x5xf32> to vector<5xf32>
    %337 = vector.shape_cast %336 : vector<5xf32> to vector<5x1xf32>
    %338 = tpu.reciprocal %337 {approx = true} : vector<5x1xf32> -> vector<5x1xf32>
    %339 = vector.broadcast %338 : vector<5x1xf32> to vector<5x5xf32>
    %340 = arith.mulf %335, %339 : vector<5x5xf32>
    %341 = arith.truncf %340 : vector<5x5xf32> to vector<5x5xbf16>
    %342 = arith.truncf %324 : vector<5x8xf32> to vector<5x8xbf16>
    %cst_144 = arith.constant dense<0.000000e+00> : vector<5x8xf32>
    %343 = tpu.matmul %341, %342, %cst_144 {dimension_numbers = #tpu.dot_dimension_numbers<[1], [0], [0], [1], [0, 0, 1, 1], [], []>} : vector<5x5xbf16>, vector<5x8xbf16>, vector<5x8xf32> -> vector<5x8xf32>
    %344 = vector.extract_strided_slice %275 {offsets = [0, 24], sizes = [5, 8], strides = [1, 1]} : vector<5x32xf32> to vector<5x8xf32>
    %345 = vector.extract_strided_slice %276 {offsets = [0, 24], sizes = [5, 8], strides = [1, 1]} : vector<5x32xf32> to vector<5x8xf32>
    %346 = vector.extract_strided_slice %277 {offsets = [0, 24], sizes = [5, 8], strides = [1, 1]} : vector<5x32xf32> to vector<5x8xf32>
    %347 = tpu.transpose %345, [1, 0] : vector<5x8xf32> -> vector<8x5xf32>
    %348 = arith.truncf %344 : vector<5x8xf32> to vector<5x8xbf16>
    %349 = arith.truncf %347 : vector<8x5xf32> to vector<8x5xbf16>
    %cst_145 = arith.constant dense<0.000000e+00> : vector<5x5xf32>
    %350 = tpu.matmul %348, %349, %cst_145 {dimension_numbers = #tpu.dot_dimension_numbers<[1], [0], [0], [1], [0, 0, 1, 1], [], []>} : vector<5x8xbf16>, vector<8x5xbf16>, vector<5x5xf32> -> vector<5x5xf32>
    %cst_146 = arith.constant 0.353553385 : f32
    %351 = vector.broadcast %cst_146 : f32 to vector<5x5xf32>
    %352 = arith.mulf %350, %351 : vector<5x5xf32>
    %cst_147 = arith.constant dense<0xFF800000> : vector<5xf32>
    %353 = vector.multi_reduction <maximumf>, %352, %cst_147 [1] : vector<5x5xf32> to vector<5xf32>
    %354 = vector.shape_cast %353 : vector<5xf32> to vector<5x1xf32>
    %355 = vector.broadcast %354 : vector<5x1xf32> to vector<5x5xf32>
    %356 = arith.subf %352, %355 : vector<5x5xf32>
    %357 = math.exp %356 : vector<5x5xf32>
    %cst_148 = arith.constant dense<0.000000e+00> : vector<5xf32>
    %358 = vector.multi_reduction <add>, %357, %cst_148 [1] : vector<5x5xf32> to vector<5xf32>
    %359 = vector.shape_cast %358 : vector<5xf32> to vector<5x1xf32>
    %360 = tpu.reciprocal %359 {approx = true} : vector<5x1xf32> -> vector<5x1xf32>
    %361 = vector.broadcast %360 : vector<5x1xf32> to vector<5x5xf32>
    %362 = arith.mulf %357, %361 : vector<5x5xf32>
    %363 = arith.truncf %362 : vector<5x5xf32> to vector<5x5xbf16>
    %364 = arith.truncf %346 : vector<5x8xf32> to vector<5x8xbf16>
    %cst_149 = arith.constant dense<0.000000e+00> : vector<5x8xf32>
    %365 = tpu.matmul %363, %364, %cst_149 {dimension_numbers = #tpu.dot_dimension_numbers<[1], [0], [0], [1], [0, 0, 1, 1], [], []>} : vector<5x5xbf16>, vector<5x8xbf16>, vector<5x8xf32> -> vector<5x8xf32>
    %366 = tpu.concatenate %299, %321, %343, %365 in 1 : vector<5x8xf32>, vector<5x8xf32>, vector<5x8xf32>, vector<5x8xf32> -> vector<5x32xf32>
    %367 = arith.truncf %366 : vector<5x32xf32> to vector<5x32xbf16>
    %368 = arith.truncf %233 : vector<32x32xf32> to vector<32x32xbf16>
    %cst_150 = arith.constant dense<0.000000e+00> : vector<5x32xf32>
    %369 = tpu.matmul %367, %368, %cst_150 {dimension_numbers = #tpu.dot_dimension_numbers<[1], [0], [0], [1], [0, 0, 1, 1], [], []>} : vector<5x32xbf16>, vector<32x32xbf16>, vector<5x32xf32> -> vector<5x32xf32>
    %370 = vector.broadcast %235 : vector<1x32xf32> to vector<5x32xf32>
    %371 = arith.addf %369, %370 : vector<5x32xf32>
    %372 = arith.addf %223, %371 : vector<5x32xf32>
    %cst_151 = arith.constant dense<0.000000e+00> : vector<5xf32>
    %373 = vector.multi_reduction <add>, %372, %cst_151 [1] : vector<5x32xf32> to vector<5xf32>
    %374 = vector.shape_cast %373 : vector<5xf32> to vector<5x1xf32>
    %cst_152 = arith.constant 3.200000e+01 : f32
    %375 = vector.broadcast %cst_152 : f32 to vector<5x1xf32>
    %376 = arith.divf %374, %375 : vector<5x1xf32>
    %377 = vector.broadcast %376 : vector<5x1xf32> to vector<5x32xf32>
    %378 = arith.subf %372, %377 : vector<5x32xf32>
    %379 = arith.mulf %378, %378 : vector<5x32xf32>
    %cst_153 = arith.constant dense<0.000000e+00> : vector<5xf32>
    %380 = vector.multi_reduction <add>, %379, %cst_153 [1] : vector<5x32xf32> to vector<5xf32>
    %381 = vector.shape_cast %380 : vector<5xf32> to vector<5x1xf32>
    %cst_154 = arith.constant 3.200000e+01 : f32
    %382 = vector.broadcast %cst_154 : f32 to vector<5x1xf32>
    %383 = arith.divf %381, %382 : vector<5x1xf32>
    %384 = vector.broadcast %376 : vector<5x1xf32> to vector<5x32xf32>
    %385 = arith.subf %372, %384 : vector<5x32xf32>
    %cst_155 = arith.constant 9.99999974E-6 : f32
    %386 = vector.broadcast %cst_155 : f32 to vector<5x1xf32>
    %387 = arith.addf %383, %386 : vector<5x1xf32>
    %388 = math.rsqrt %387 : vector<5x1xf32>
    %389 = vector.broadcast %388 : vector<5x1xf32> to vector<5x32xf32>
    %390 = arith.mulf %385, %389 : vector<5x32xf32>
    %391 = vector.broadcast %237 : vector<1x32xf32> to vector<5x32xf32>
    %392 = arith.mulf %390, %391 : vector<5x32xf32>
    %393 = vector.broadcast %239 : vector<1x32xf32> to vector<5x32xf32>
    %394 = arith.addf %392, %393 : vector<5x32xf32>
    %395 = arith.truncf %394 : vector<5x32xf32> to vector<5x32xbf16>
    %396 = arith.truncf %241 : vector<32x128xf32> to vector<32x128xbf16>
    %cst_156 = arith.constant dense<0.000000e+00> : vector<5x128xf32>
    %397 = tpu.matmul %395, %396, %cst_156 {dimension_numbers = #tpu.dot_dimension_numbers<[1], [0], [0], [1], [0, 0, 1, 1], [], []>} : vector<5x32xbf16>, vector<32x128xbf16>, vector<5x128xf32> -> vector<5x128xf32>
    %398 = vector.broadcast %243 : vector<1x128xf32> to vector<5x128xf32>
    %399 = arith.addf %397, %398 : vector<5x128xf32>
    %cst_157 = arith.constant 1.702000e+00 : f32
    %400 = vector.broadcast %cst_157 : f32 to vector<5x128xf32>
    %401 = arith.mulf %400, %399 : vector<5x128xf32>
    %402 = arith.negf %401 : vector<5x128xf32>
    %403 = math.exp %402 : vector<5x128xf32>
    %cst_158 = arith.constant 1.000000e+00 : f32
    %404 = vector.broadcast %cst_158 : f32 to vector<5x128xf32>
    %405 = arith.addf %404, %403 : vector<5x128xf32>
    %406 = arith.divf %404, %405 : vector<5x128xf32>
    %407 = arith.mulf %399, %406 : vector<5x128xf32>
    %408 = arith.truncf %407 : vector<5x128xf32> to vector<5x128xbf16>
    %409 = arith.truncf %245 : vector<128x32xf32> to vector<128x32xbf16>
    %cst_159 = arith.constant dense<0.000000e+00> : vector<5x32xf32>
    %410 = tpu.matmul %408, %409, %cst_159 {dimension_numbers = #tpu.dot_dimension_numbers<[1], [0], [0], [1], [0, 0, 1, 1], [], []>} : vector<5x128xbf16>, vector<128x32xbf16>, vector<5x32xf32> -> vector<5x32xf32>
    %411 = vector.broadcast %247 : vector<1x32xf32> to vector<5x32xf32>
    %412 = arith.addf %410, %411 : vector<5x32xf32>
    %413 = arith.addf %372, %412 : vector<5x32xf32>
    %414 = vector.extract_strided_slice %413 {offsets = [0, 0], sizes = [1, 32], strides = [1, 1]} : vector<5x32xf32> to vector<1x32xf32>
    %c0_160 = arith.constant 0 : index
    %c0_161 = arith.constant 0 : index
    %415 = vector.load %arg7[%c0_160, %c0_161] : memref<1x32xf32, #tpu.memory_space<vmem>>, vector<1x32xf32>
    %c0_162 = arith.constant 0 : index
    %c0_163 = arith.constant 0 : index
    %416 = vector.load %arg8[%c0_162, %c0_163] : memref<1x32xf32, #tpu.memory_space<vmem>>, vector<1x32xf32>
    %cst_164 = arith.constant dense<0.000000e+00> : vector<1xf32>
    %417 = vector.multi_reduction <add>, %414, %cst_164 [1] : vector<1x32xf32> to vector<1xf32>
    %418 = vector.shape_cast %417 : vector<1xf32> to vector<1x1xf32>
    %cst_165 = arith.constant 3.200000e+01 : f32
    %419 = vector.broadcast %cst_165 : f32 to vector<1x1xf32>
    %420 = arith.divf %418, %419 : vector<1x1xf32>
    %421 = vector.broadcast %420 : vector<1x1xf32> to vector<1x32xf32>
    %422 = arith.subf %414, %421 : vector<1x32xf32>
    %423 = arith.mulf %422, %422 : vector<1x32xf32>
    %cst_166 = arith.constant dense<0.000000e+00> : vector<1xf32>
    %424 = vector.multi_reduction <add>, %423, %cst_166 [1] : vector<1x32xf32> to vector<1xf32>
    %425 = vector.shape_cast %424 : vector<1xf32> to vector<1x1xf32>
    %cst_167 = arith.constant 3.200000e+01 : f32
    %426 = vector.broadcast %cst_167 : f32 to vector<1x1xf32>
    %427 = arith.divf %425, %426 : vector<1x1xf32>
    %428 = vector.broadcast %420 : vector<1x1xf32> to vector<1x32xf32>
    %429 = arith.subf %414, %428 : vector<1x32xf32>
    %cst_168 = arith.constant 9.99999974E-6 : f32
    %430 = vector.broadcast %cst_168 : f32 to vector<1x1xf32>
    %431 = arith.addf %427, %430 : vector<1x1xf32>
    %432 = math.rsqrt %431 : vector<1x1xf32>
    %433 = vector.broadcast %432 : vector<1x1xf32> to vector<1x32xf32>
    %434 = arith.mulf %429, %433 : vector<1x32xf32>
    %435 = arith.mulf %434, %415 : vector<1x32xf32>
    %436 = arith.addf %435, %416 : vector<1x32xf32>
    %c0_169 = arith.constant 0 : index
    %c0_170 = arith.constant 0 : index
    %437 = vector.load %arg9[%c0_169, %c0_170] : memref<32x32xf32, #tpu.memory_space<vmem>>, vector<32x32xf32>
    %438 = arith.truncf %436 : vector<1x32xf32> to vector<1x32xbf16>
    %439 = arith.truncf %437 : vector<32x32xf32> to vector<32x32xbf16>
    %cst_171 = arith.constant dense<0.000000e+00> : vector<1x32xf32>
    %440 = tpu.matmul %438, %439, %cst_171 {dimension_numbers = #tpu.dot_dimension_numbers<[1], [0], [0], [1], [0, 0, 1, 1], [], []>} : vector<1x32xbf16>, vector<32x32xbf16>, vector<1x32xf32> -> vector<1x32xf32>
    %c0_172 = arith.constant 0 : index
    %c0_173 = arith.constant 0 : index
    %c0_174 = arith.constant 0 : index
    %441 = vector.load %arg22[%c0_172, %c0_173, %c0_174] : memref<1x1x32xf32, #tpu.memory_space<vmem>>, vector<1x1x32xf32>
    %442 = vector.shape_cast %441 : vector<1x1x32xf32> to vector<1x32xf32>
    %443 = vector.shape_cast %440 : vector<1x32xf32> to vector<1x1x32xf32>
    tpu.vector_store %arg22[%c0_172, %c0_173, %c0_174], %443 {strides = array<i32>} : memref<1x1x32xf32, #tpu.memory_space<vmem>>, vector<1x1x32xf32>,
    return
  }
  func.func @transform_0(%arg0: i32) -> (i32, i32, i32) {
    %c0_i32 = arith.constant 0 : i32
    %c0_i32_0 = arith.constant 0 : i32
    %c0_i32_1 = arith.constant 0 : i32
    return %arg0, %c0_i32, %c0_i32_0 : i32, i32, i32
  }
  func.func @transform_1(%arg0: i32) -> (i32, i32) {
    %c0_i32 = arith.constant 0 : i32
    %c0_i32_0 = arith.constant 0 : i32
    %c0_i32_1 = arith.constant 0 : i32
    return %c0_i32, %c0_i32_0 : i32, i32
  }
  func.func @transform_2(%arg0: i32) -> (i32, i32) {
    %c0_i32 = arith.constant 0 : i32
    %c0_i32_0 = arith.constant 0 : i32
    %c0_i32_1 = arith.constant 0 : i32
    return %c0_i32, %c0_i32_0 : i32, i32
  }
  func.func @transform_3(%arg0: i32) -> (i32, i32) {
    %c0_i32 = arith.constant 0 : i32
    %c0_i32_0 = arith.constant 0 : i32
    %c0_i32_1 = arith.constant 0 : i32
    return %c0_i32, %c0_i32_0 : i32, i32
  }
  func.func @transform_4(%arg0: i32) -> (i32, i32) {
    %c0_i32 = arith.constant 0 : i32
    %c0_i32_0 = arith.constant 0 : i32
    %c0_i32_1 = arith.constant 0 : i32
    return %c0_i32, %c0_i32_0 : i32, i32
  }
  func.func @transform_5(%arg0: i32) -> (i32, i32) {
    %c0_i32 = arith.constant 0 : i32
    %c0_i32_0 = arith.constant 0 : i32
    %c0_i32_1 = arith.constant 0 : i32
    return %c0_i32, %c0_i32_0 : i32, i32
  }
  func.func @transform_6(%arg0: i32) -> (i32, i32) {
    %c0_i32 = arith.constant 0 : i32
    %c0_i32_0 = arith.constant 0 : i32
    %c0_i32_1 = arith.constant 0 : i32
    return %c0_i32, %c0_i32_0 : i32, i32
  }
  func.func @transform_7(%arg0: i32) -> (i32, i32) {
    %c0_i32 = arith.constant 0 : i32
    %c0_i32_0 = arith.constant 0 : i32
    %c0_i32_1 = arith.constant 0 : i32
    return %c0_i32, %c0_i32_0 : i32, i32
  }
  func.func @transform_8(%arg0: i32) -> (i32, i32) {
    %c0_i32 = arith.constant 0 : i32
    %c0_i32_0 = arith.constant 0 : i32
    %c0_i32_1 = arith.constant 0 : i32
    return %c0_i32, %c0_i32_0 : i32, i32
  }
  func.func @transform_9(%arg0: i32) -> (i32, i32, i32) {
    %c0_i32 = arith.constant 0 : i32
    %c0_i32_0 = arith.constant 0 : i32
    %c0_i32_1 = arith.constant 0 : i32
    %c0_i32_2 = arith.constant 0 : i32
    return %c0_i32, %c0_i32_0, %c0_i32_1 : i32, i32, i32
  }
  func.func @transform_10(%arg0: i32) -> (i32, i32, i32) {
    %c0_i32 = arith.constant 0 : i32
    %c0_i32_0 = arith.constant 0 : i32
    %c0_i32_1 = arith.constant 0 : i32
    %c0_i32_2 = arith.constant 0 : i32
    return %c0_i32, %c0_i32_0, %c0_i32_1 : i32, i32, i32
  }
  func.func @transform_11(%arg0: i32) -> (i32, i32, i32) {
    %c0_i32 = arith.constant 0 : i32
    %c0_i32_0 = arith.constant 0 : i32
    %c0_i32_1 = arith.constant 0 : i32
    %c0_i32_2 = arith.constant 0 : i32
    return %c0_i32, %c0_i32_0, %c0_i32_1 : i32, i32, i32
  }
  func.func @transform_12(%arg0: i32) -> (i32, i32, i32) {
    %c0_i32 = arith.constant 0 : i32
    %c0_i32_0 = arith.constant 0 : i32
    %c0_i32_1 = arith.constant 0 : i32
    %c0_i32_2 = arith.constant 0 : i32
    return %c0_i32, %c0_i32_0, %c0_i32_1 : i32, i32, i32
  }
  func.func @transform_13(%arg0: i32) -> (i32, i32, i32) {
    %c0_i32 = arith.constant 0 : i32
    %c0_i32_0 = arith.constant 0 : i32
    %c0_i32_1 = arith.constant 0 : i32
    %c0_i32_2 = arith.constant 0 : i32
    return %c0_i32, %c0_i32_0, %c0_i32_1 : i32, i32, i32
  }
  func.func @transform_14(%arg0: i32) -> (i32, i32, i32) {
    %c0_i32 = arith.constant 0 : i32
    %c0_i32_0 = arith.constant 0 : i32
    %c0_i32_1 = arith.constant 0 : i32
    %c0_i32_2 = arith.constant 0 : i32
    return %c0_i32, %c0_i32_0, %c0_i32_1 : i32, i32, i32
  }
  func.func @transform_15(%arg0: i32) -> (i32, i32, i32) {
    %c0_i32 = arith.constant 0 : i32
    %c0_i32_0 = arith.constant 0 : i32
    %c0_i32_1 = arith.constant 0 : i32
    %c0_i32_2 = arith.constant 0 : i32
    return %c0_i32, %c0_i32_0, %c0_i32_1 : i32, i32, i32
  }
  func.func @transform_16(%arg0: i32) -> (i32, i32, i32) {
    %c0_i32 = arith.constant 0 : i32
    %c0_i32_0 = arith.constant 0 : i32
    %c0_i32_1 = arith.constant 0 : i32
    %c0_i32_2 = arith.constant 0 : i32
    return %c0_i32, %c0_i32_0, %c0_i32_1 : i32, i32, i32
  }
  func.func @transform_17(%arg0: i32) -> (i32, i32, i32) {
    %c0_i32 = arith.constant 0 : i32
    %c0_i32_0 = arith.constant 0 : i32
    %c0_i32_1 = arith.constant 0 : i32
    %c0_i32_2 = arith.constant 0 : i32
    return %c0_i32, %c0_i32_0, %c0_i32_1 : i32, i32, i32
  }
  func.func @transform_18(%arg0: i32) -> (i32, i32, i32) {
    %c0_i32 = arith.constant 0 : i32
    %c0_i32_0 = arith.constant 0 : i32
    %c0_i32_1 = arith.constant 0 : i32
    %c0_i32_2 = arith.constant 0 : i32
    return %c0_i32, %c0_i32_0, %c0_i32_1 : i32, i32, i32
  }
  func.func @transform_19(%arg0: i32) -> (i32, i32, i32) {
    %c0_i32 = arith.constant 0 : i32
    %c0_i32_0 = arith.constant 0 : i32
    %c0_i32_1 = arith.constant 0 : i32
    %c0_i32_2 = arith.constant 0 : i32
    return %c0_i32, %c0_i32_0, %c0_i32_1 : i32, i32, i32
  }
  func.func @transform_20(%arg0: i32) -> (i32, i32, i32) {
    %c0_i32 = arith.constant 0 : i32
    %c0_i32_0 = arith.constant 0 : i32
    %c0_i32_1 = arith.constant 0 : i32
    %c0_i32_2 = arith.constant 0 : i32
    return %c0_i32, %c0_i32_0, %c0_i32_1 : i32, i32, i32
  }
  func.func @transform_21(%arg0: i32) -> (i32, i32, i32) {
    %c0_i32 = arith.constant 0 : i32
    %c0_i32_0 = arith.constant 0 : i32
    %c0_i32_1 = arith.constant 0 : i32
    return %arg0, %c0_i32, %c0_i32_0 : i32, i32, i32
  }
}

module attributes {stable_mosaic.version = 11 : i64} {
  func.func @_adapter_norm_kernel(%arg0: i32, %arg1: memref<2x32xf32, #tpu.memory_space<vmem>>, %arg2: memref<2x32xf32, #tpu.memory_space<vmem>>, %arg3: memref<32x32xf32, #tpu.memory_space<vmem>>, %arg4: memref<1x32xf32, #tpu.memory_space<vmem>>, %arg5: memref<32x32xf32, #tpu.memory_space<vmem>>, %arg6: memref<1x32xf32, #tpu.memory_space<vmem>>, %arg7: memref<32x32xf32, #tpu.memory_space<vmem>>, %arg8: memref<1x32xf32, #tpu.memory_space<vmem>>, %arg9: memref<32x32xf32, #tpu.memory_space<vmem>>, %arg10: memref<1x32xf32, #tpu.memory_space<vmem>>, %arg11: memref<1x1xf32, #tpu.memory_space<vmem>>, %arg12: memref<2x32xf32, #tpu.memory_space<vmem>>, %arg13: memref<2x32xf32, #tpu.memory_space<vmem>>) attributes {dimension_semantics = [#tpu.dimension_semantics<arbitrary>], iteration_bounds = array<i64: 1>, scalar_prefetch = 0 : i64, scratch_operands = 0 : i64, tpu.core_type = #tpu.core_type<tc>, window_params = [{pipeline_mode = #tpu.pipeline_mode<synchronous>, transform_indices = @transform_0, window_bounds = array<i64: 2, 32>}, {pipeline_mode = #tpu.pipeline_mode<synchronous>, transform_indices = @transform_1, window_bounds = array<i64: 2, 32>}, {pipeline_mode = #tpu.pipeline_mode<synchronous>, transform_indices = @transform_2, window_bounds = array<i64: 32, 32>}, {pipeline_mode = #tpu.pipeline_mode<synchronous>, transform_indices = @transform_3, window_bounds = array<i64: 1, 32>}, {pipeline_mode = #tpu.pipeline_mode<synchronous>, transform_indices = @transform_4, window_bounds = array<i64: 32, 32>}, {pipeline_mode = #tpu.pipeline_mode<synchronous>, transform_indices = @transform_5, window_bounds = array<i64: 1, 32>}, {pipeline_mode = #tpu.pipeline_mode<synchronous>, transform_indices = @transform_6, window_bounds = array<i64: 32, 32>}, {pipeline_mode = #tpu.pipeline_mode<synchronous>, transform_indices = @transform_7, window_bounds = array<i64: 1, 32>}, {pipeline_mode = #tpu.pipeline_mode<synchronous>, transform_indices = @transform_8, window_bounds = array<i64: 32, 32>}, {pipeline_mode = #tpu.pipeline_mode<synchronous>, transform_indices = @transform_9, window_bounds = array<i64: 1, 32>}, {pipeline_mode = #tpu.pipeline_mode<synchronous>, transform_indices = @transform_10, window_bounds = array<i64: 1, 1>}, {pipeline_mode = #tpu.pipeline_mode<synchronous>, transform_indices = @transform_11, window_bounds = array<i64: 2, 32>}, {pipeline_mode = #tpu.pipeline_mode<synchronous>, transform_indices = @transform_12, window_bounds = array<i64: 2, 32>}]} {
    %c0 = arith.constant 0 : index
    %c0_0 = arith.constant 0 : index
    %0 = vector.load %arg1[%c0, %c0_0] : memref<2x32xf32, #tpu.memory_space<vmem>>, vector<2x32xf32>
    %c0_1 = arith.constant 0 : index
    %c0_2 = arith.constant 0 : index
    %1 = vector.load %arg2[%c0_1, %c0_2] : memref<2x32xf32, #tpu.memory_space<vmem>>, vector<2x32xf32>
    %c0_3 = arith.constant 0 : index
    %c0_4 = arith.constant 0 : index
    %2 = vector.load %arg3[%c0_3, %c0_4] : memref<32x32xf32, #tpu.memory_space<vmem>>, vector<32x32xf32>
    %3 = arith.truncf %0 : vector<2x32xf32> to vector<2x32xbf16>
    %4 = arith.truncf %2 : vector<32x32xf32> to vector<32x32xbf16>
    %cst = arith.constant dense<0.000000e+00> : vector<2x32xf32>
    %5 = tpu.matmul %3, %4, %cst {dimension_numbers = #tpu.dot_dimension_numbers<[1], [0], [0], [1], [0, 0, 1, 1], [], []>} : vector<2x32xbf16>, vector<32x32xbf16>, vector<2x32xf32> -> vector<2x32xf32>
    %c0_5 = arith.constant 0 : index
    %c0_6 = arith.constant 0 : index
    %6 = vector.load %arg4[%c0_5, %c0_6] : memref<1x32xf32, #tpu.memory_space<vmem>>, vector<1x32xf32>
    %7 = vector.broadcast %6 : vector<1x32xf32> to vector<2x32xf32>
    %8 = arith.addf %5, %7 : vector<2x32xf32>
    %cst_7 = arith.constant 1.702000e+00 : f32
    %9 = vector.broadcast %cst_7 : f32 to vector<2x32xf32>
    %10 = arith.mulf %9, %8 : vector<2x32xf32>
    %11 = arith.negf %10 : vector<2x32xf32>
    %12 = math.exp %11 : vector<2x32xf32>
    %cst_8 = arith.constant 1.000000e+00 : f32
    %13 = vector.broadcast %cst_8 : f32 to vector<2x32xf32>
    %14 = arith.addf %13, %12 : vector<2x32xf32>
    %15 = arith.divf %13, %14 : vector<2x32xf32>
    %16 = arith.mulf %8, %15 : vector<2x32xf32>
    %c0_9 = arith.constant 0 : index
    %c0_10 = arith.constant 0 : index
    %17 = vector.load %arg5[%c0_9, %c0_10] : memref<32x32xf32, #tpu.memory_space<vmem>>, vector<32x32xf32>
    %18 = arith.truncf %16 : vector<2x32xf32> to vector<2x32xbf16>
    %19 = arith.truncf %17 : vector<32x32xf32> to vector<32x32xbf16>
    %cst_11 = arith.constant dense<0.000000e+00> : vector<2x32xf32>
    %20 = tpu.matmul %18, %19, %cst_11 {dimension_numbers = #tpu.dot_dimension_numbers<[1], [0], [0], [1], [0, 0, 1, 1], [], []>} : vector<2x32xbf16>, vector<32x32xbf16>, vector<2x32xf32> -> vector<2x32xf32>
    %c0_12 = arith.constant 0 : index
    %c0_13 = arith.constant 0 : index
    %21 = vector.load %arg6[%c0_12, %c0_13] : memref<1x32xf32, #tpu.memory_space<vmem>>, vector<1x32xf32>
    %22 = vector.broadcast %21 : vector<1x32xf32> to vector<2x32xf32>
    %23 = arith.addf %20, %22 : vector<2x32xf32>
    %c0_14 = arith.constant 0 : index
    %c0_15 = arith.constant 0 : index
    %24 = vector.load %arg7[%c0_14, %c0_15] : memref<32x32xf32, #tpu.memory_space<vmem>>, vector<32x32xf32>
    %25 = arith.truncf %1 : vector<2x32xf32> to vector<2x32xbf16>
    %26 = arith.truncf %24 : vector<32x32xf32> to vector<32x32xbf16>
    %cst_16 = arith.constant dense<0.000000e+00> : vector<2x32xf32>
    %27 = tpu.matmul %25, %26, %cst_16 {dimension_numbers = #tpu.dot_dimension_numbers<[1], [0], [0], [1], [0, 0, 1, 1], [], []>} : vector<2x32xbf16>, vector<32x32xbf16>, vector<2x32xf32> -> vector<2x32xf32>
    %c0_17 = arith.constant 0 : index
    %c0_18 = arith.constant 0 : index
    %28 = vector.load %arg8[%c0_17, %c0_18] : memref<1x32xf32, #tpu.memory_space<vmem>>, vector<1x32xf32>
    %29 = vector.broadcast %28 : vector<1x32xf32> to vector<2x32xf32>
    %30 = arith.addf %27, %29 : vector<2x32xf32>
    %cst_19 = arith.constant 1.702000e+00 : f32
    %31 = vector.broadcast %cst_19 : f32 to vector<2x32xf32>
    %32 = arith.mulf %31, %30 : vector<2x32xf32>
    %33 = arith.negf %32 : vector<2x32xf32>
    %34 = math.exp %33 : vector<2x32xf32>
    %cst_20 = arith.constant 1.000000e+00 : f32
    %35 = vector.broadcast %cst_20 : f32 to vector<2x32xf32>
    %36 = arith.addf %35, %34 : vector<2x32xf32>
    %37 = arith.divf %35, %36 : vector<2x32xf32>
    %38 = arith.mulf %30, %37 : vector<2x32xf32>
    %c0_21 = arith.constant 0 : index
    %c0_22 = arith.constant 0 : index
    %39 = vector.load %arg9[%c0_21, %c0_22] : memref<32x32xf32, #tpu.memory_space<vmem>>, vector<32x32xf32>
    %40 = arith.truncf %38 : vector<2x32xf32> to vector<2x32xbf16>
    %41 = arith.truncf %39 : vector<32x32xf32> to vector<32x32xbf16>
    %cst_23 = arith.constant dense<0.000000e+00> : vector<2x32xf32>
    %42 = tpu.matmul %40, %41, %cst_23 {dimension_numbers = #tpu.dot_dimension_numbers<[1], [0], [0], [1], [0, 0, 1, 1], [], []>} : vector<2x32xbf16>, vector<32x32xbf16>, vector<2x32xf32> -> vector<2x32xf32>
    %c0_24 = arith.constant 0 : index
    %c0_25 = arith.constant 0 : index
    %43 = vector.load %arg10[%c0_24, %c0_25] : memref<1x32xf32, #tpu.memory_space<vmem>>, vector<1x32xf32>
    %44 = vector.broadcast %43 : vector<1x32xf32> to vector<2x32xf32>
    %45 = arith.addf %42, %44 : vector<2x32xf32>
    %46 = arith.addf %0, %23 : vector<2x32xf32>
    %47 = arith.addf %1, %45 : vector<2x32xf32>
    %48 = arith.mulf %46, %46 : vector<2x32xf32>
    %cst_26 = arith.constant dense<0.000000e+00> : vector<2xf32>
    %49 = vector.multi_reduction <add>, %48, %cst_26 [1] : vector<2x32xf32> to vector<2xf32>
    %50 = vector.shape_cast %49 : vector<2xf32> to vector<2x1xf32>
    %51 = math.rsqrt %50 : vector<2x1xf32>
    %52 = vector.broadcast %51 : vector<2x1xf32> to vector<2x32xf32>
    %53 = arith.mulf %46, %52 : vector<2x32xf32>
    %54 = arith.mulf %47, %47 : vector<2x32xf32>
    %cst_27 = arith.constant dense<0.000000e+00> : vector<2xf32>
    %55 = vector.multi_reduction <add>, %54, %cst_27 [1] : vector<2x32xf32> to vector<2xf32>
    %56 = vector.shape_cast %55 : vector<2xf32> to vector<2x1xf32>
    %57 = math.rsqrt %56 : vector<2x1xf32>
    %58 = vector.broadcast %57 : vector<2x1xf32> to vector<2x32xf32>
    %59 = arith.mulf %47, %58 : vector<2x32xf32>
    %c0_28 = arith.constant 0 : index
    %c0_29 = arith.constant 0 : index
    %60 = vector.load %arg11[%c0_28, %c0_29] : memref<1x1xf32, #tpu.memory_space<vmem>>, vector<1x1xf32>
    %61 = vector.extract %60[0, 0] : f32 from vector<1x1xf32>
    %62 = math.exp %61 : f32
    %63 = vector.broadcast %62 : f32 to vector<2x32xf32>
    %64 = arith.mulf %63, %53 : vector<2x32xf32>
    %c0_30 = arith.constant 0 : index
    %c0_31 = arith.constant 0 : index
    %65 = vector.load %arg12[%c0_30, %c0_31] : memref<2x32xf32, #tpu.memory_space<vmem>>, vector<2x32xf32>
    tpu.vector_store %arg12[%c0_30, %c0_31], %64 {strides = array<i32>} : memref<2x32xf32, #tpu.memory_space<vmem>>, vector<2x32xf32>,
    %c0_32 = arith.constant 0 : index
    %c0_33 = arith.constant 0 : index
    %66 = vector.load %arg13[%c0_32, %c0_33] : memref<2x32xf32, #tpu.memory_space<vmem>>, vector<2x32xf32>
    tpu.vector_store %arg13[%c0_32, %c0_33], %59 {strides = array<i32>} : memref<2x32xf32, #tpu.memory_space<vmem>>, vector<2x32xf32>,
    return
  }
  func.func @transform_0(%arg0: i32) -> (i32, i32) {
    %c0_i32 = arith.constant 0 : i32
    %c0_i32_0 = arith.constant 0 : i32
    %c0_i32_1 = arith.constant 0 : i32
    return %c0_i32, %c0_i32_0 : i32, i32
  }
  func.func @transform_1(%arg0: i32) -> (i32, i32) {
    %c0_i32 = arith.constant 0 : i32
    %c0_i32_0 = arith.constant 0 : i32
    %c0_i32_1 = arith.constant 0 : i32
    return %c0_i32, %c0_i32_0 : i32, i32
  }
  func.func @transform_2(%arg0: i32) -> (i32, i32) {
    %c0_i32 = arith.constant 0 : i32
    %c0_i32_0 = arith.constant 0 : i32
    %c0_i32_1 = arith.constant 0 : i32
    return %c0_i32, %c0_i32_0 : i32, i32
  }
  func.func @transform_3(%arg0: i32) -> (i32, i32) {
    %c0_i32 = arith.constant 0 : i32
    %c0_i32_0 = arith.constant 0 : i32
    %c0_i32_1 = arith.constant 0 : i32
    return %c0_i32, %c0_i32_0 : i32, i32
  }
  func.func @transform_4(%arg0: i32) -> (i32, i32) {
    %c0_i32 = arith.constant 0 : i32
    %c0_i32_0 = arith.constant 0 : i32
    %c0_i32_1 = arith.constant 0 : i32
    return %c0_i32, %c0_i32_0 : i32, i32
  }
  func.func @transform_5(%arg0: i32) -> (i32, i32) {
    %c0_i32 = arith.constant 0 : i32
    %c0_i32_0 = arith.constant 0 : i32
    %c0_i32_1 = arith.constant 0 : i32
    return %c0_i32, %c0_i32_0 : i32, i32
  }
  func.func @transform_6(%arg0: i32) -> (i32, i32) {
    %c0_i32 = arith.constant 0 : i32
    %c0_i32_0 = arith.constant 0 : i32
    %c0_i32_1 = arith.constant 0 : i32
    return %c0_i32, %c0_i32_0 : i32, i32
  }
  func.func @transform_7(%arg0: i32) -> (i32, i32) {
    %c0_i32 = arith.constant 0 : i32
    %c0_i32_0 = arith.constant 0 : i32
    %c0_i32_1 = arith.constant 0 : i32
    return %c0_i32, %c0_i32_0 : i32, i32
  }
  func.func @transform_8(%arg0: i32) -> (i32, i32) {
    %c0_i32 = arith.constant 0 : i32
    %c0_i32_0 = arith.constant 0 : i32
    %c0_i32_1 = arith.constant 0 : i32
    return %c0_i32, %c0_i32_0 : i32, i32
  }
  func.func @transform_9(%arg0: i32) -> (i32, i32) {
    %c0_i32 = arith.constant 0 : i32
    %c0_i32_0 = arith.constant 0 : i32
    %c0_i32_1 = arith.constant 0 : i32
    return %c0_i32, %c0_i32_0 : i32, i32
  }
  func.func @transform_10(%arg0: i32) -> (i32, i32) {
    %c0_i32 = arith.constant 0 : i32
    %c0_i32_0 = arith.constant 0 : i32
    %c0_i32_1 = arith.constant 0 : i32
    return %c0_i32, %c0_i32_0 : i32, i32
  }
  func.func @transform_11(%arg0: i32) -> (i32, i32) {
    %c0_i32 = arith.constant 0 : i32
    %c0_i32_0 = arith.constant 0 : i32
    %c0_i32_1 = arith.constant 0 : i32
    return %c0_i32, %c0_i32_0 : i32, i32
  }
  func.func @transform_12(%arg0: i32) -> (i32, i32) {
    %c0_i32 = arith.constant 0 : i32
    %c0_i32_0 = arith.constant 0 : i32
    %c0_i32_1 = arith.constant 0 : i32
    return %c0_i32, %c0_i32_0 : i32, i32
  }
}

module attributes {stable_mosaic.version = 11 : i64} {
  func.func @_gpt_tower_kernel(%arg0: i32, %arg1: memref<1x8x32xf32, #tpu.memory_space<vmem>>, %arg2: memref<1x1x8xf32, #tpu.memory_space<vmem>>, %arg3: memref<8x32xf32, #tpu.memory_space<vmem>>, %arg4: memref<1x32xf32, #tpu.memory_space<vmem>>, %arg5: memref<1x32xf32, #tpu.memory_space<vmem>>, %arg6: memref<32x32xf32, #tpu.memory_space<vmem>>, %arg7: memref<2x1x32xf32, #tpu.memory_space<vmem>>, %arg8: memref<2x1x32xf32, #tpu.memory_space<vmem>>, %arg9: memref<2x32x96xf32, #tpu.memory_space<vmem>>, %arg10: memref<2x1x96xf32, #tpu.memory_space<vmem>>, %arg11: memref<2x32x32xf32, #tpu.memory_space<vmem>>, %arg12: memref<2x1x32xf32, #tpu.memory_space<vmem>>, %arg13: memref<2x1x32xf32, #tpu.memory_space<vmem>>, %arg14: memref<2x1x32xf32, #tpu.memory_space<vmem>>, %arg15: memref<2x32x128xf32, #tpu.memory_space<vmem>>, %arg16: memref<2x1x128xf32, #tpu.memory_space<vmem>>, %arg17: memref<2x128x32xf32, #tpu.memory_space<vmem>>, %arg18: memref<2x1x32xf32, #tpu.memory_space<vmem>>, %arg19: memref<1x1x32xf32, #tpu.memory_space<vmem>>) attributes {dimension_semantics = [#tpu.dimension_semantics<parallel>], iteration_bounds = array<i64: 2>, scalar_prefetch = 0 : i64, scratch_operands = 0 : i64, tpu.core_type = #tpu.core_type<tc>, window_params = [{transform_indices = @transform_0, window_bounds = array<i64: 1, 8, 32>}, {transform_indices = @transform_1, window_bounds = array<i64: 1, 1, 8>}, {pipeline_mode = #tpu.pipeline_mode<synchronous>, transform_indices = @transform_2, window_bounds = array<i64: 8, 32>}, {pipeline_mode = #tpu.pipeline_mode<synchronous>, transform_indices = @transform_3, window_bounds = array<i64: 1, 32>}, {pipeline_mode = #tpu.pipeline_mode<synchronous>, transform_indices = @transform_4, window_bounds = array<i64: 1, 32>}, {pipeline_mode = #tpu.pipeline_mode<synchronous>, transform_indices = @transform_5, window_bounds = array<i64: 32, 32>}, {pipeline_mode = #tpu.pipeline_mode<synchronous>, transform_indices = @transform_6, window_bounds = array<i64: 2, 1, 32>}, {pipeline_mode = #tpu.pipeline_mode<synchronous>, transform_indices = @transform_7, window_bounds = array<i64: 2, 1, 32>}, {pipeline_mode = #tpu.pipeline_mode<synchronous>, transform_indices = @transform_8, window_bounds = array<i64: 2, 32, 96>}, {pipeline_mode = #tpu.pipeline_mode<synchronous>, transform_indices = @transform_9, window_bounds = array<i64: 2, 1, 96>}, {pipeline_mode = #tpu.pipeline_mode<synchronous>, transform_indices = @transform_10, window_bounds = array<i64: 2, 32, 32>}, {pipeline_mode = #tpu.pipeline_mode<synchronous>, transform_indices = @transform_11, window_bounds = array<i64: 2, 1, 32>}, {pipeline_mode = #tpu.pipeline_mode<synchronous>, transform_indices = @transform_12, window_bounds = array<i64: 2, 1, 32>}, {pipeline_mode = #tpu.pipeline_mode<synchronous>, transform_indices = @transform_13, window_bounds = array<i64: 2, 1, 32>}, {pipeline_mode = #tpu.pipeline_mode<synchronous>, transform_indices = @transform_14, window_bounds = array<i64: 2, 32, 128>}, {pipeline_mode = #tpu.pipeline_mode<synchronous>, transform_indices = @transform_15, window_bounds = array<i64: 2, 1, 128>}, {pipeline_mode = #tpu.pipeline_mode<synchronous>, transform_indices = @transform_16, window_bounds = array<i64: 2, 128, 32>}, {pipeline_mode = #tpu.pipeline_mode<synchronous>, transform_indices = @transform_17, window_bounds = array<i64: 2, 1, 32>}, {transform_indices = @transform_18, window_bounds = array<i64: 1, 1, 32>}]} {
    %c0 = arith.constant 0 : index
    %c0_0 = arith.constant 0 : index
    %c0_1 = arith.constant 0 : index
    %0 = vector.load %arg1[%c0, %c0_0, %c0_1] : memref<1x8x32xf32, #tpu.memory_space<vmem>>, vector<1x8x32xf32>
    %1 = vector.shape_cast %0 : vector<1x8x32xf32> to vector<8x32xf32>
    %c0_2 = arith.constant 0 : index
    %c0_3 = arith.constant 0 : index
    %2 = vector.load %arg3[%c0_2, %c0_3] : memref<8x32xf32, #tpu.memory_space<vmem>>, vector<8x32xf32>
    %3 = arith.addf %1, %2 : vector<8x32xf32>
    %4 = tpu.iota {dimensions = array<i32: 0>} : vector<8x8xi32>
    %5 = tpu.iota {dimensions = array<i32: 1>} : vector<8x8xi32>
    %6 = arith.cmpi sle, %5, %4 : vector<8x8xi32>
    %c0_4 = arith.constant 0 : index
    %c0_5 = arith.constant 0 : index
    %c0_6 = arith.constant 0 : index
    %7 = vector.load %arg7[%c0_4, %c0_5, %c0_6] : memref<2x1x32xf32, #tpu.memory_space<vmem>>, vector<1x1x32xf32>
    %8 = vector.shape_cast %7 : vector<1x1x32xf32> to vector<1x32xf32>
    %c0_7 = arith.constant 0 : index
    %c0_8 = arith.constant 0 : index
    %c0_9 = arith.constant 0 : index
    %9 = vector.load %arg8[%c0_7, %c0_8, %c0_9] : memref<2x1x32xf32, #tpu.memory_space<vmem>>, vector<1x1x32xf32>
    %10 = vector.shape_cast %9 : vector<1x1x32xf32> to vector<1x32xf32>
    %c0_10 = arith.constant 0 : index
    %c0_11 = arith.constant 0 : index
    %c0_12 = arith.constant 0 : index
    %11 = vector.load %arg9[%c0_10, %c0_11, %c0_12] : memref<2x32x96xf32, #tpu.memory_space<vmem>>, vector<1x32x96xf32>
    %12 = vector.shape_cast %11 : vector<1x32x96xf32> to vector<32x96xf32>
    %c0_13 = arith.constant 0 : index
    %c0_14 = arith.constant 0 : index
    %c0_15 = arith.constant 0 : index
    %13 = vector.load %arg10[%c0_13, %c0_14, %c0_15] : memref<2x1x96xf32, #tpu.memory_space<vmem>>, vector<1x1x96xf32>
    %14 = vector.shape_cast %13 : vector<1x1x96xf32> to vector<1x96xf32>
    %c0_16 = arith.constant 0 : index
    %c0_17 = arith.constant 0 : index
    %c0_18 = arith.constant 0 : index
    %15 = vector.load %arg11[%c0_16, %c0_17, %c0_18] : memref<2x32x32xf32, #tpu.memory_space<vmem>>, vector<1x32x32xf32>
    %16 = vector.shape_cast %15 : vector<1x32x32xf32> to vector<32x32xf32>
    %c0_19 = arith.constant 0 : index
    %c0_20 = arith.constant 0 : index
    %c0_21 = arith.constant 0 : index
    %17 = vector.load %arg12[%c0_19, %c0_20, %c0_21] : memref<2x1x32xf32, #tpu.memory_space<vmem>>, vector<1x1x32xf32>
    %18 = vector.shape_cast %17 : vector<1x1x32xf32> to vector<1x32xf32>
    %c0_22 = arith.constant 0 : index
    %c0_23 = arith.constant 0 : index
    %c0_24 = arith.constant 0 : index
    %19 = vector.load %arg13[%c0_22, %c0_23, %c0_24] : memref<2x1x32xf32, #tpu.memory_space<vmem>>, vector<1x1x32xf32>
    %20 = vector.shape_cast %19 : vector<1x1x32xf32> to vector<1x32xf32>
    %c0_25 = arith.constant 0 : index
    %c0_26 = arith.constant 0 : index
    %c0_27 = arith.constant 0 : index
    %21 = vector.load %arg14[%c0_25, %c0_26, %c0_27] : memref<2x1x32xf32, #tpu.memory_space<vmem>>, vector<1x1x32xf32>
    %22 = vector.shape_cast %21 : vector<1x1x32xf32> to vector<1x32xf32>
    %c0_28 = arith.constant 0 : index
    %c0_29 = arith.constant 0 : index
    %c0_30 = arith.constant 0 : index
    %23 = vector.load %arg15[%c0_28, %c0_29, %c0_30] : memref<2x32x128xf32, #tpu.memory_space<vmem>>, vector<1x32x128xf32>
    %24 = vector.shape_cast %23 : vector<1x32x128xf32> to vector<32x128xf32>
    %c0_31 = arith.constant 0 : index
    %c0_32 = arith.constant 0 : index
    %c0_33 = arith.constant 0 : index
    %25 = vector.load %arg16[%c0_31, %c0_32, %c0_33] : memref<2x1x128xf32, #tpu.memory_space<vmem>>, vector<1x1x128xf32>
    %26 = vector.shape_cast %25 : vector<1x1x128xf32> to vector<1x128xf32>
    %c0_34 = arith.constant 0 : index
    %c0_35 = arith.constant 0 : index
    %c0_36 = arith.constant 0 : index
    %27 = vector.load %arg17[%c0_34, %c0_35, %c0_36] : memref<2x128x32xf32, #tpu.memory_space<vmem>>, vector<1x128x32xf32>
    %28 = vector.shape_cast %27 : vector<1x128x32xf32> to vector<128x32xf32>
    %c0_37 = arith.constant 0 : index
    %c0_38 = arith.constant 0 : index
    %c0_39 = arith.constant 0 : index
    %29 = vector.load %arg18[%c0_37, %c0_38, %c0_39] : memref<2x1x32xf32, #tpu.memory_space<vmem>>, vector<1x1x32xf32>
    %30 = vector.shape_cast %29 : vector<1x1x32xf32> to vector<1x32xf32>
    %cst = arith.constant dense<0.000000e+00> : vector<8xf32>
    %31 = vector.multi_reduction <add>, %3, %cst [1] : vector<8x32xf32> to vector<8xf32>
    %32 = vector.shape_cast %31 : vector<8xf32> to vector<8x1xf32>
    %cst_40 = arith.constant 3.200000e+01 : f32
    %33 = vector.broadcast %cst_40 : f32 to vector<8x1xf32>
    %34 = arith.divf %32, %33 : vector<8x1xf32>
    %35 = vector.broadcast %34 : vector<8x1xf32> to vector<8x32xf32>
    %36 = arith.subf %3, %35 : vector<8x32xf32>
    %37 = arith.mulf %36, %36 : vector<8x32xf32>
    %cst_41 = arith.constant dense<0.000000e+00> : vector<8xf32>
    %38 = vector.multi_reduction <add>, %37, %cst_41 [1] : vector<8x32xf32> to vector<8xf32>
    %39 = vector.shape_cast %38 : vector<8xf32> to vector<8x1xf32>
    %cst_42 = arith.constant 3.200000e+01 : f32
    %40 = vector.broadcast %cst_42 : f32 to vector<8x1xf32>
    %41 = arith.divf %39, %40 : vector<8x1xf32>
    %42 = vector.broadcast %34 : vector<8x1xf32> to vector<8x32xf32>
    %43 = arith.subf %3, %42 : vector<8x32xf32>
    %cst_43 = arith.constant 9.99999974E-6 : f32
    %44 = vector.broadcast %cst_43 : f32 to vector<8x1xf32>
    %45 = arith.addf %41, %44 : vector<8x1xf32>
    %46 = math.rsqrt %45 : vector<8x1xf32>
    %47 = vector.broadcast %46 : vector<8x1xf32> to vector<8x32xf32>
    %48 = arith.mulf %43, %47 : vector<8x32xf32>
    %49 = vector.broadcast %8 : vector<1x32xf32> to vector<8x32xf32>
    %50 = arith.mulf %48, %49 : vector<8x32xf32>
    %51 = vector.broadcast %10 : vector<1x32xf32> to vector<8x32xf32>
    %52 = arith.addf %50, %51 : vector<8x32xf32>
    %53 = arith.truncf %52 : vector<8x32xf32> to vector<8x32xbf16>
    %54 = arith.truncf %12 : vector<32x96xf32> to vector<32x96xbf16>
    %cst_44 = arith.constant dense<0.000000e+00> : vector<8x96xf32>
    %55 = tpu.matmul %53, %54, %cst_44 {dimension_numbers = #tpu.dot_dimension_numbers<[1], [0], [0], [1], [0, 0, 1, 1], [], []>} : vector<8x32xbf16>, vector<32x96xbf16>, vector<8x96xf32> -> vector<8x96xf32>
    %56 = vector.broadcast %14 : vector<1x96xf32> to vector<8x96xf32>
    %57 = arith.addf %55, %56 : vector<8x96xf32>
    %58 = vector.extract_strided_slice %57 {offsets = [0, 0], sizes = [8, 32], strides = [1, 1]} : vector<8x96xf32> to vector<8x32xf32>
    %59 = vector.extract_strided_slice %57 {offsets = [0, 32], sizes = [8, 32], strides = [1, 1]} : vector<8x96xf32> to vector<8x32xf32>
    %60 = vector.extract_strided_slice %57 {offsets = [0, 64], sizes = [8, 32], strides = [1, 1]} : vector<8x96xf32> to vector<8x32xf32>
    %61 = vector.extract_strided_slice %58 {offsets = [0, 0], sizes = [8, 8], strides = [1, 1]} : vector<8x32xf32> to vector<8x8xf32>
    %62 = vector.extract_strided_slice %59 {offsets = [0, 0], sizes = [8, 8], strides = [1, 1]} : vector<8x32xf32> to vector<8x8xf32>
    %63 = vector.extract_strided_slice %60 {offsets = [0, 0], sizes = [8, 8], strides = [1, 1]} : vector<8x32xf32> to vector<8x8xf32>
    %64 = tpu.transpose %62, [1, 0] : vector<8x8xf32> -> vector<8x8xf32>
    %65 = arith.truncf %61 : vector<8x8xf32> to vector<8x8xbf16>
    %66 = arith.truncf %64 : vector<8x8xf32> to vector<8x8xbf16>
    %cst_45 = arith.constant dense<0.000000e+00> : vector<8x8xf32>
    %67 = tpu.matmul %65, %66, %cst_45 {dimension_numbers = #tpu.dot_dimension_numbers<[1], [0], [0], [1], [0, 0, 1, 1], [], []>} : vector<8x8xbf16>, vector<8x8xbf16>, vector<8x8xf32> -> vector<8x8xf32>
    %cst_46 = arith.constant 0.353553385 : f32
    %68 = vector.broadcast %cst_46 : f32 to vector<8x8xf32>
    %69 = arith.mulf %67, %68 : vector<8x8xf32>
    %cst_47 = arith.constant -1.000000e+30 : f32
    %70 = vector.broadcast %cst_47 : f32 to vector<8x8xf32>
    %71 = arith.select %6, %69, %70 : vector<8x8xi1>, vector<8x8xf32>
    %cst_48 = arith.constant dense<0xFF800000> : vector<8xf32>
    %72 = vector.multi_reduction <maximumf>, %71, %cst_48 [1] : vector<8x8xf32> to vector<8xf32>
    %73 = vector.shape_cast %72 : vector<8xf32> to vector<8x1xf32>
    %74 = vector.broadcast %73 : vector<8x1xf32> to vector<8x8xf32>
    %75 = arith.subf %71, %74 : vector<8x8xf32>
    %76 = math.exp %75 : vector<8x8xf32>
    %cst_49 = arith.constant dense<0.000000e+00> : vector<8xf32>
    %77 = vector.multi_reduction <add>, %76, %cst_49 [1] : vector<8x8xf32> to vector<8xf32>
    %78 = vector.shape_cast %77 : vector<8xf32> to vector<8x1xf32>
    %79 = tpu.reciprocal %78 {approx = true} : vector<8x1xf32> -> vector<8x1xf32>
    %80 = vector.broadcast %79 : vector<8x1xf32> to vector<8x8xf32>
    %81 = arith.mulf %76, %80 : vector<8x8xf32>
    %82 = arith.truncf %81 : vector<8x8xf32> to vector<8x8xbf16>
    %83 = arith.truncf %63 : vector<8x8xf32> to vector<8x8xbf16>
    %cst_50 = arith.constant dense<0.000000e+00> : vector<8x8xf32>
    %84 = tpu.matmul %82, %83, %cst_50 {dimension_numbers = #tpu.dot_dimension_numbers<[1], [0], [0], [1], [0, 0, 1, 1], [], []>} : vector<8x8xbf16>, vector<8x8xbf16>, vector<8x8xf32> -> vector<8x8xf32>
    %85 = vector.extract_strided_slice %58 {offsets = [0, 8], sizes = [8, 8], strides = [1, 1]} : vector<8x32xf32> to vector<8x8xf32>
    %86 = vector.extract_strided_slice %59 {offsets = [0, 8], sizes = [8, 8], strides = [1, 1]} : vector<8x32xf32> to vector<8x8xf32>
    %87 = vector.extract_strided_slice %60 {offsets = [0, 8], sizes = [8, 8], strides = [1, 1]} : vector<8x32xf32> to vector<8x8xf32>
    %88 = tpu.transpose %86, [1, 0] : vector<8x8xf32> -> vector<8x8xf32>
    %89 = arith.truncf %85 : vector<8x8xf32> to vector<8x8xbf16>
    %90 = arith.truncf %88 : vector<8x8xf32> to vector<8x8xbf16>
    %cst_51 = arith.constant dense<0.000000e+00> : vector<8x8xf32>
    %91 = tpu.matmul %89, %90, %cst_51 {dimension_numbers = #tpu.dot_dimension_numbers<[1], [0], [0], [1], [0, 0, 1, 1], [], []>} : vector<8x8xbf16>, vector<8x8xbf16>, vector<8x8xf32> -> vector<8x8xf32>
    %cst_52 = arith.constant 0.353553385 : f32
    %92 = vector.broadcast %cst_52 : f32 to vector<8x8xf32>
    %93 = arith.mulf %91, %92 : vector<8x8xf32>
    %cst_53 = arith.constant -1.000000e+30 : f32
    %94 = vector.broadcast %cst_53 : f32 to vector<8x8xf32>
    %95 = arith.select %6, %93, %94 : vector<8x8xi1>, vector<8x8xf32>
    %cst_54 = arith.constant dense<0xFF800000> : vector<8xf32>
    %96 = vector.multi_reduction <maximumf>, %95, %cst_54 [1] : vector<8x8xf32> to vector<8xf32>
    %97 = vector.shape_cast %96 : vector<8xf32> to vector<8x1xf32>
    %98 = vector.broadcast %97 : vector<8x1xf32> to vector<8x8xf32>
    %99 = arith.subf %95, %98 : vector<8x8xf32>
    %100 = math.exp %99 : vector<8x8xf32>
    %cst_55 = arith.constant dense<0.000000e+00> : vector<8xf32>
    %101 = vector.multi_reduction <add>, %100, %cst_55 [1] : vector<8x8xf32> to vector<8xf32>
    %102 = vector.shape_cast %101 : vector<8xf32> to vector<8x1xf32>
    %103 = tpu.reciprocal %102 {approx = true} : vector<8x1xf32> -> vector<8x1xf32>
    %104 = vector.broadcast %103 : vector<8x1xf32> to vector<8x8xf32>
    %105 = arith.mulf %100, %104 : vector<8x8xf32>
    %106 = arith.truncf %105 : vector<8x8xf32> to vector<8x8xbf16>
    %107 = arith.truncf %87 : vector<8x8xf32> to vector<8x8xbf16>
    %cst_56 = arith.constant dense<0.000000e+00> : vector<8x8xf32>
    %108 = tpu.matmul %106, %107, %cst_56 {dimension_numbers = #tpu.dot_dimension_numbers<[1], [0], [0], [1], [0, 0, 1, 1], [], []>} : vector<8x8xbf16>, vector<8x8xbf16>, vector<8x8xf32> -> vector<8x8xf32>
    %109 = vector.extract_strided_slice %58 {offsets = [0, 16], sizes = [8, 8], strides = [1, 1]} : vector<8x32xf32> to vector<8x8xf32>
    %110 = vector.extract_strided_slice %59 {offsets = [0, 16], sizes = [8, 8], strides = [1, 1]} : vector<8x32xf32> to vector<8x8xf32>
    %111 = vector.extract_strided_slice %60 {offsets = [0, 16], sizes = [8, 8], strides = [1, 1]} : vector<8x32xf32> to vector<8x8xf32>
    %112 = tpu.transpose %110, [1, 0] : vector<8x8xf32> -> vector<8x8xf32>
    %113 = arith.truncf %109 : vector<8x8xf32> to vector<8x8xbf16>
    %114 = arith.truncf %112 : vector<8x8xf32> to vector<8x8xbf16>
    %cst_57 = arith.constant dense<0.000000e+00> : vector<8x8xf32>
    %115 = tpu.matmul %113, %114, %cst_57 {dimension_numbers = #tpu.dot_dimension_numbers<[1], [0], [0], [1], [0, 0, 1, 1], [], []>} : vector<8x8xbf16>, vector<8x8xbf16>, vector<8x8xf32> -> vector<8x8xf32>
    %cst_58 = arith.constant 0.353553385 : f32
    %116 = vector.broadcast %cst_58 : f32 to vector<8x8xf32>
    %117 = arith.mulf %115, %116 : vector<8x8xf32>
    %cst_59 = arith.constant -1.000000e+30 : f32
    %118 = vector.broadcast %cst_59 : f32 to vector<8x8xf32>
    %119 = arith.select %6, %117, %118 : vector<8x8xi1>, vector<8x8xf32>
    %cst_60 = arith.constant dense<0xFF800000> : vector<8xf32>
    %120 = vector.multi_reduction <maximumf>, %119, %cst_60 [1] : vector<8x8xf32> to vector<8xf32>
    %121 = vector.shape_cast %120 : vector<8xf32> to vector<8x1xf32>
    %122 = vector.broadcast %121 : vector<8x1xf32> to vector<8x8xf32>
    %123 = arith.subf %119, %122 : vector<8x8xf32>
    %124 = math.exp %123 : vector<8x8xf32>
    %cst_61 = arith.constant dense<0.000000e+00> : vector<8xf32>
    %125 = vector.multi_reduction <add>, %124, %cst_61 [1] : vector<8x8xf32> to vector<8xf32>
    %126 = vector.shape_cast %125 : vector<8xf32> to vector<8x1xf32>
    %127 = tpu.reciprocal %126 {approx = true} : vector<8x1xf32> -> vector<8x1xf32>
    %128 = vector.broadcast %127 : vector<8x1xf32> to vector<8x8xf32>
    %129 = arith.mulf %124, %128 : vector<8x8xf32>
    %130 = arith.truncf %129 : vector<8x8xf32> to vector<8x8xbf16>
    %131 = arith.truncf %111 : vector<8x8xf32> to vector<8x8xbf16>
    %cst_62 = arith.constant dense<0.000000e+00> : vector<8x8xf32>
    %132 = tpu.matmul %130, %131, %cst_62 {dimension_numbers = #tpu.dot_dimension_numbers<[1], [0], [0], [1], [0, 0, 1, 1], [], []>} : vector<8x8xbf16>, vector<8x8xbf16>, vector<8x8xf32> -> vector<8x8xf32>
    %133 = vector.extract_strided_slice %58 {offsets = [0, 24], sizes = [8, 8], strides = [1, 1]} : vector<8x32xf32> to vector<8x8xf32>
    %134 = vector.extract_strided_slice %59 {offsets = [0, 24], sizes = [8, 8], strides = [1, 1]} : vector<8x32xf32> to vector<8x8xf32>
    %135 = vector.extract_strided_slice %60 {offsets = [0, 24], sizes = [8, 8], strides = [1, 1]} : vector<8x32xf32> to vector<8x8xf32>
    %136 = tpu.transpose %134, [1, 0] : vector<8x8xf32> -> vector<8x8xf32>
    %137 = arith.truncf %133 : vector<8x8xf32> to vector<8x8xbf16>
    %138 = arith.truncf %136 : vector<8x8xf32> to vector<8x8xbf16>
    %cst_63 = arith.constant dense<0.000000e+00> : vector<8x8xf32>
    %139 = tpu.matmul %137, %138, %cst_63 {dimension_numbers = #tpu.dot_dimension_numbers<[1], [0], [0], [1], [0, 0, 1, 1], [], []>} : vector<8x8xbf16>, vector<8x8xbf16>, vector<8x8xf32> -> vector<8x8xf32>
    %cst_64 = arith.constant 0.353553385 : f32
    %140 = vector.broadcast %cst_64 : f32 to vector<8x8xf32>
    %141 = arith.mulf %139, %140 : vector<8x8xf32>
    %cst_65 = arith.constant -1.000000e+30 : f32
    %142 = vector.broadcast %cst_65 : f32 to vector<8x8xf32>
    %143 = arith.select %6, %141, %142 : vector<8x8xi1>, vector<8x8xf32>
    %cst_66 = arith.constant dense<0xFF800000> : vector<8xf32>
    %144 = vector.multi_reduction <maximumf>, %143, %cst_66 [1] : vector<8x8xf32> to vector<8xf32>
    %145 = vector.shape_cast %144 : vector<8xf32> to vector<8x1xf32>
    %146 = vector.broadcast %145 : vector<8x1xf32> to vector<8x8xf32>
    %147 = arith.subf %143, %146 : vector<8x8xf32>
    %148 = math.exp %147 : vector<8x8xf32>
    %cst_67 = arith.constant dense<0.000000e+00> : vector<8xf32>
    %149 = vector.multi_reduction <add>, %148, %cst_67 [1] : vector<8x8xf32> to vector<8xf32>
    %150 = vector.shape_cast %149 : vector<8xf32> to vector<8x1xf32>
    %151 = tpu.reciprocal %150 {approx = true} : vector<8x1xf32> -> vector<8x1xf32>
    %152 = vector.broadcast %151 : vector<8x1xf32> to vector<8x8xf32>
    %153 = arith.mulf %148, %152 : vector<8x8xf32>
    %154 = arith.truncf %153 : vector<8x8xf32> to vector<8x8xbf16>
    %155 = arith.truncf %135 : vector<8x8xf32> to vector<8x8xbf16>
    %cst_68 = arith.constant dense<0.000000e+00> : vector<8x8xf32>
    %156 = tpu.matmul %154, %155, %cst_68 {dimension_numbers = #tpu.dot_dimension_numbers<[1], [0], [0], [1], [0, 0, 1, 1], [], []>} : vector<8x8xbf16>, vector<8x8xbf16>, vector<8x8xf32> -> vector<8x8xf32>
    %157 = tpu.concatenate %84, %108, %132, %156 in 1 : vector<8x8xf32>, vector<8x8xf32>, vector<8x8xf32>, vector<8x8xf32> -> vector<8x32xf32>
    %158 = arith.truncf %157 : vector<8x32xf32> to vector<8x32xbf16>
    %159 = arith.truncf %16 : vector<32x32xf32> to vector<32x32xbf16>
    %cst_69 = arith.constant dense<0.000000e+00> : vector<8x32xf32>
    %160 = tpu.matmul %158, %159, %cst_69 {dimension_numbers = #tpu.dot_dimension_numbers<[1], [0], [0], [1], [0, 0, 1, 1], [], []>} : vector<8x32xbf16>, vector<32x32xbf16>, vector<8x32xf32> -> vector<8x32xf32>
    %161 = vector.broadcast %18 : vector<1x32xf32> to vector<8x32xf32>
    %162 = arith.addf %160, %161 : vector<8x32xf32>
    %163 = arith.addf %3, %162 : vector<8x32xf32>
    %cst_70 = arith.constant dense<0.000000e+00> : vector<8xf32>
    %164 = vector.multi_reduction <add>, %163, %cst_70 [1] : vector<8x32xf32> to vector<8xf32>
    %165 = vector.shape_cast %164 : vector<8xf32> to vector<8x1xf32>
    %cst_71 = arith.constant 3.200000e+01 : f32
    %166 = vector.broadcast %cst_71 : f32 to vector<8x1xf32>
    %167 = arith.divf %165, %166 : vector<8x1xf32>
    %168 = vector.broadcast %167 : vector<8x1xf32> to vector<8x32xf32>
    %169 = arith.subf %163, %168 : vector<8x32xf32>
    %170 = arith.mulf %169, %169 : vector<8x32xf32>
    %cst_72 = arith.constant dense<0.000000e+00> : vector<8xf32>
    %171 = vector.multi_reduction <add>, %170, %cst_72 [1] : vector<8x32xf32> to vector<8xf32>
    %172 = vector.shape_cast %171 : vector<8xf32> to vector<8x1xf32>
    %cst_73 = arith.constant 3.200000e+01 : f32
    %173 = vector.broadcast %cst_73 : f32 to vector<8x1xf32>
    %174 = arith.divf %172, %173 : vector<8x1xf32>
    %175 = vector.broadcast %167 : vector<8x1xf32> to vector<8x32xf32>
    %176 = arith.subf %163, %175 : vector<8x32xf32>
    %cst_74 = arith.constant 9.99999974E-6 : f32
    %177 = vector.broadcast %cst_74 : f32 to vector<8x1xf32>
    %178 = arith.addf %174, %177 : vector<8x1xf32>
    %179 = math.rsqrt %178 : vector<8x1xf32>
    %180 = vector.broadcast %179 : vector<8x1xf32> to vector<8x32xf32>
    %181 = arith.mulf %176, %180 : vector<8x32xf32>
    %182 = vector.broadcast %20 : vector<1x32xf32> to vector<8x32xf32>
    %183 = arith.mulf %181, %182 : vector<8x32xf32>
    %184 = vector.broadcast %22 : vector<1x32xf32> to vector<8x32xf32>
    %185 = arith.addf %183, %184 : vector<8x32xf32>
    %186 = arith.truncf %185 : vector<8x32xf32> to vector<8x32xbf16>
    %187 = arith.truncf %24 : vector<32x128xf32> to vector<32x128xbf16>
    %cst_75 = arith.constant dense<0.000000e+00> : vector<8x128xf32>
    %188 = tpu.matmul %186, %187, %cst_75 {dimension_numbers = #tpu.dot_dimension_numbers<[1], [0], [0], [1], [0, 0, 1, 1], [], []>} : vector<8x32xbf16>, vector<32x128xbf16>, vector<8x128xf32> -> vector<8x128xf32>
    %189 = vector.broadcast %26 : vector<1x128xf32> to vector<8x128xf32>
    %190 = arith.addf %188, %189 : vector<8x128xf32>
    %cst_76 = arith.constant 1.702000e+00 : f32
    %191 = vector.broadcast %cst_76 : f32 to vector<8x128xf32>
    %192 = arith.mulf %191, %190 : vector<8x128xf32>
    %193 = arith.negf %192 : vector<8x128xf32>
    %194 = math.exp %193 : vector<8x128xf32>
    %cst_77 = arith.constant 1.000000e+00 : f32
    %195 = vector.broadcast %cst_77 : f32 to vector<8x128xf32>
    %196 = arith.addf %195, %194 : vector<8x128xf32>
    %197 = arith.divf %195, %196 : vector<8x128xf32>
    %198 = arith.mulf %190, %197 : vector<8x128xf32>
    %199 = arith.truncf %198 : vector<8x128xf32> to vector<8x128xbf16>
    %200 = arith.truncf %28 : vector<128x32xf32> to vector<128x32xbf16>
    %cst_78 = arith.constant dense<0.000000e+00> : vector<8x32xf32>
    %201 = tpu.matmul %199, %200, %cst_78 {dimension_numbers = #tpu.dot_dimension_numbers<[1], [0], [0], [1], [0, 0, 1, 1], [], []>} : vector<8x128xbf16>, vector<128x32xbf16>, vector<8x32xf32> -> vector<8x32xf32>
    %202 = vector.broadcast %30 : vector<1x32xf32> to vector<8x32xf32>
    %203 = arith.addf %201, %202 : vector<8x32xf32>
    %204 = arith.addf %163, %203 : vector<8x32xf32>
    %c1 = arith.constant 1 : index
    %c0_79 = arith.constant 0 : index
    %c0_80 = arith.constant 0 : index
    %205 = vector.load %arg7[%c1, %c0_79, %c0_80] : memref<2x1x32xf32, #tpu.memory_space<vmem>>, vector<1x1x32xf32>
    %206 = vector.shape_cast %205 : vector<1x1x32xf32> to vector<1x32xf32>
    %c1_81 = arith.constant 1 : index
    %c0_82 = arith.constant 0 : index
    %c0_83 = arith.constant 0 : index
    %207 = vector.load %arg8[%c1_81, %c0_82, %c0_83] : memref<2x1x32xf32, #tpu.memory_space<vmem>>, vector<1x1x32xf32>
    %208 = vector.shape_cast %207 : vector<1x1x32xf32> to vector<1x32xf32>
    %c1_84 = arith.constant 1 : index
    %c0_85 = arith.constant 0 : index
    %c0_86 = arith.constant 0 : index
    %209 = vector.load %arg9[%c1_84, %c0_85, %c0_86] : memref<2x32x96xf32, #tpu.memory_space<vmem>>, vector<1x32x96xf32>
    %210 = vector.shape_cast %209 : vector<1x32x96xf32> to vector<32x96xf32>
    %c1_87 = arith.constant 1 : index
    %c0_88 = arith.constant 0 : index
    %c0_89 = arith.constant 0 : index
    %211 = vector.load %arg10[%c1_87, %c0_88, %c0_89] : memref<2x1x96xf32, #tpu.memory_space<vmem>>, vector<1x1x96xf32>
    %212 = vector.shape_cast %211 : vector<1x1x96xf32> to vector<1x96xf32>
    %c1_90 = arith.constant 1 : index
    %c0_91 = arith.constant 0 : index
    %c0_92 = arith.constant 0 : index
    %213 = vector.load %arg11[%c1_90, %c0_91, %c0_92] : memref<2x32x32xf32, #tpu.memory_space<vmem>>, vector<1x32x32xf32>
    %214 = vector.shape_cast %213 : vector<1x32x32xf32> to vector<32x32xf32>
    %c1_93 = arith.constant 1 : index
    %c0_94 = arith.constant 0 : index
    %c0_95 = arith.constant 0 : index
    %215 = vector.load %arg12[%c1_93, %c0_94, %c0_95] : memref<2x1x32xf32, #tpu.memory_space<vmem>>, vector<1x1x32xf32>
    %216 = vector.shape_cast %215 : vector<1x1x32xf32> to vector<1x32xf32>
    %c1_96 = arith.constant 1 : index
    %c0_97 = arith.constant 0 : index
    %c0_98 = arith.constant 0 : index
    %217 = vector.load %arg13[%c1_96, %c0_97, %c0_98] : memref<2x1x32xf32, #tpu.memory_space<vmem>>, vector<1x1x32xf32>
    %218 = vector.shape_cast %217 : vector<1x1x32xf32> to vector<1x32xf32>
    %c1_99 = arith.constant 1 : index
    %c0_100 = arith.constant 0 : index
    %c0_101 = arith.constant 0 : index
    %219 = vector.load %arg14[%c1_99, %c0_100, %c0_101] : memref<2x1x32xf32, #tpu.memory_space<vmem>>, vector<1x1x32xf32>
    %220 = vector.shape_cast %219 : vector<1x1x32xf32> to vector<1x32xf32>
    %c1_102 = arith.constant 1 : index
    %c0_103 = arith.constant 0 : index
    %c0_104 = arith.constant 0 : index
    %221 = vector.load %arg15[%c1_102, %c0_103, %c0_104] : memref<2x32x128xf32, #tpu.memory_space<vmem>>, vector<1x32x128xf32>
    %222 = vector.shape_cast %221 : vector<1x32x128xf32> to vector<32x128xf32>
    %c1_105 = arith.constant 1 : index
    %c0_106 = arith.constant 0 : index
    %c0_107 = arith.constant 0 : index
    %223 = vector.load %arg16[%c1_105, %c0_106, %c0_107] : memref<2x1x128xf32, #tpu.memory_space<vmem>>, vector<1x1x128xf32>
    %224 = vector.shape_cast %223 : vector<1x1x128xf32> to vector<1x128xf32>
    %c1_108 = arith.constant 1 : index
    %c0_109 = arith.constant 0 : index
    %c0_110 = arith.constant 0 : index
    %225 = vector.load %arg17[%c1_108, %c0_109, %c0_110] : memref<2x128x32xf32, #tpu.memory_space<vmem>>, vector<1x128x32xf32>
    %226 = vector.shape_cast %225 : vector<1x128x32xf32> to vector<128x32xf32>
    %c1_111 = arith.constant 1 : index
    %c0_112 = arith.constant 0 : index
    %c0_113 = arith.constant 0 : index
    %227 = vector.load %arg18[%c1_111, %c0_112, %c0_113] : memref<2x1x32xf32, #tpu.memory_space<vmem>>, vector<1x1x32xf32>
    %228 = vector.shape_cast %227 : vector<1x1x32xf32> to vector<1x32xf32>
    %cst_114 = arith.constant dense<0.000000e+00> : vector<8xf32>
    %229 = vector.multi_reduction <add>, %204, %cst_114 [1] : vector<8x32xf32> to vector<8xf32>
    %230 = vector.shape_cast %229 : vector<8xf32> to vector<8x1xf32>
    %cst_115 = arith.constant 3.200000e+01 : f32
    %231 = vector.broadcast %cst_115 : f32 to vector<8x1xf32>
    %232 = arith.divf %230, %231 : vector<8x1xf32>
    %233 = vector.broadcast %232 : vector<8x1xf32> to vector<8x32xf32>
    %234 = arith.subf %204, %233 : vector<8x32xf32>
    %235 = arith.mulf %234, %234 : vector<8x32xf32>
    %cst_116 = arith.constant dense<0.000000e+00> : vector<8xf32>
    %236 = vector.multi_reduction <add>, %235, %cst_116 [1] : vector<8x32xf32> to vector<8xf32>
    %237 = vector.shape_cast %236 : vector<8xf32> to vector<8x1xf32>
    %cst_117 = arith.constant 3.200000e+01 : f32
    %238 = vector.broadcast %cst_117 : f32 to vector<8x1xf32>
    %239 = arith.divf %237, %238 : vector<8x1xf32>
    %240 = vector.broadcast %232 : vector<8x1xf32> to vector<8x32xf32>
    %241 = arith.subf %204, %240 : vector<8x32xf32>
    %cst_118 = arith.constant 9.99999974E-6 : f32
    %242 = vector.broadcast %cst_118 : f32 to vector<8x1xf32>
    %243 = arith.addf %239, %242 : vector<8x1xf32>
    %244 = math.rsqrt %243 : vector<8x1xf32>
    %245 = vector.broadcast %244 : vector<8x1xf32> to vector<8x32xf32>
    %246 = arith.mulf %241, %245 : vector<8x32xf32>
    %247 = vector.broadcast %206 : vector<1x32xf32> to vector<8x32xf32>
    %248 = arith.mulf %246, %247 : vector<8x32xf32>
    %249 = vector.broadcast %208 : vector<1x32xf32> to vector<8x32xf32>
    %250 = arith.addf %248, %249 : vector<8x32xf32>
    %251 = arith.truncf %250 : vector<8x32xf32> to vector<8x32xbf16>
    %252 = arith.truncf %210 : vector<32x96xf32> to vector<32x96xbf16>
    %cst_119 = arith.constant dense<0.000000e+00> : vector<8x96xf32>
    %253 = tpu.matmul %251, %252, %cst_119 {dimension_numbers = #tpu.dot_dimension_numbers<[1], [0], [0], [1], [0, 0, 1, 1], [], []>} : vector<8x32xbf16>, vector<32x96xbf16>, vector<8x96xf32> -> vector<8x96xf32>
    %254 = vector.broadcast %212 : vector<1x96xf32> to vector<8x96xf32>
    %255 = arith.addf %253, %254 : vector<8x96xf32>
    %256 = vector.extract_strided_slice %255 {offsets = [0, 0], sizes = [8, 32], strides = [1, 1]} : vector<8x96xf32> to vector<8x32xf32>
    %257 = vector.extract_strided_slice %255 {offsets = [0, 32], sizes = [8, 32], strides = [1, 1]} : vector<8x96xf32> to vector<8x32xf32>
    %258 = vector.extract_strided_slice %255 {offsets = [0, 64], sizes = [8, 32], strides = [1, 1]} : vector<8x96xf32> to vector<8x32xf32>
    %259 = vector.extract_strided_slice %256 {offsets = [0, 0], sizes = [8, 8], strides = [1, 1]} : vector<8x32xf32> to vector<8x8xf32>
    %260 = vector.extract_strided_slice %257 {offsets = [0, 0], sizes = [8, 8], strides = [1, 1]} : vector<8x32xf32> to vector<8x8xf32>
    %261 = vector.extract_strided_slice %258 {offsets = [0, 0], sizes = [8, 8], strides = [1, 1]} : vector<8x32xf32> to vector<8x8xf32>
    %262 = tpu.transpose %260, [1, 0] : vector<8x8xf32> -> vector<8x8xf32>
    %263 = arith.truncf %259 : vector<8x8xf32> to vector<8x8xbf16>
    %264 = arith.truncf %262 : vector<8x8xf32> to vector<8x8xbf16>
    %cst_120 = arith.constant dense<0.000000e+00> : vector<8x8xf32>
    %265 = tpu.matmul %263, %264, %cst_120 {dimension_numbers = #tpu.dot_dimension_numbers<[1], [0], [0], [1], [0, 0, 1, 1], [], []>} : vector<8x8xbf16>, vector<8x8xbf16>, vector<8x8xf32> -> vector<8x8xf32>
    %cst_121 = arith.constant 0.353553385 : f32
    %266 = vector.broadcast %cst_121 : f32 to vector<8x8xf32>
    %267 = arith.mulf %265, %266 : vector<8x8xf32>
    %cst_122 = arith.constant -1.000000e+30 : f32
    %268 = vector.broadcast %cst_122 : f32 to vector<8x8xf32>
    %269 = arith.select %6, %267, %268 : vector<8x8xi1>, vector<8x8xf32>
    %cst_123 = arith.constant dense<0xFF800000> : vector<8xf32>
    %270 = vector.multi_reduction <maximumf>, %269, %cst_123 [1] : vector<8x8xf32> to vector<8xf32>
    %271 = vector.shape_cast %270 : vector<8xf32> to vector<8x1xf32>
    %272 = vector.broadcast %271 : vector<8x1xf32> to vector<8x8xf32>
    %273 = arith.subf %269, %272 : vector<8x8xf32>
    %274 = math.exp %273 : vector<8x8xf32>
    %cst_124 = arith.constant dense<0.000000e+00> : vector<8xf32>
    %275 = vector.multi_reduction <add>, %274, %cst_124 [1] : vector<8x8xf32> to vector<8xf32>
    %276 = vector.shape_cast %275 : vector<8xf32> to vector<8x1xf32>
    %277 = tpu.reciprocal %276 {approx = true} : vector<8x1xf32> -> vector<8x1xf32>
    %278 = vector.broadcast %277 : vector<8x1xf32> to vector<8x8xf32>
    %279 = arith.mulf %274, %278 : vector<8x8xf32>
    %280 = arith.truncf %279 : vector<8x8xf32> to vector<8x8xbf16>
    %281 = arith.truncf %261 : vector<8x8xf32> to vector<8x8xbf16>
    %cst_125 = arith.constant dense<0.000000e+00> : vector<8x8xf32>
    %282 = tpu.matmul %280, %281, %cst_125 {dimension_numbers = #tpu.dot_dimension_numbers<[1], [0], [0], [1], [0, 0, 1, 1], [], []>} : vector<8x8xbf16>, vector<8x8xbf16>, vector<8x8xf32> -> vector<8x8xf32>
    %283 = vector.extract_strided_slice %256 {offsets = [0, 8], sizes = [8, 8], strides = [1, 1]} : vector<8x32xf32> to vector<8x8xf32>
    %284 = vector.extract_strided_slice %257 {offsets = [0, 8], sizes = [8, 8], strides = [1, 1]} : vector<8x32xf32> to vector<8x8xf32>
    %285 = vector.extract_strided_slice %258 {offsets = [0, 8], sizes = [8, 8], strides = [1, 1]} : vector<8x32xf32> to vector<8x8xf32>
    %286 = tpu.transpose %284, [1, 0] : vector<8x8xf32> -> vector<8x8xf32>
    %287 = arith.truncf %283 : vector<8x8xf32> to vector<8x8xbf16>
    %288 = arith.truncf %286 : vector<8x8xf32> to vector<8x8xbf16>
    %cst_126 = arith.constant dense<0.000000e+00> : vector<8x8xf32>
    %289 = tpu.matmul %287, %288, %cst_126 {dimension_numbers = #tpu.dot_dimension_numbers<[1], [0], [0], [1], [0, 0, 1, 1], [], []>} : vector<8x8xbf16>, vector<8x8xbf16>, vector<8x8xf32> -> vector<8x8xf32>
    %cst_127 = arith.constant 0.353553385 : f32
    %290 = vector.broadcast %cst_127 : f32 to vector<8x8xf32>
    %291 = arith.mulf %289, %290 : vector<8x8xf32>
    %cst_128 = arith.constant -1.000000e+30 : f32
    %292 = vector.broadcast %cst_128 : f32 to vector<8x8xf32>
    %293 = arith.select %6, %291, %292 : vector<8x8xi1>, vector<8x8xf32>
    %cst_129 = arith.constant dense<0xFF800000> : vector<8xf32>
    %294 = vector.multi_reduction <maximumf>, %293, %cst_129 [1] : vector<8x8xf32> to vector<8xf32>
    %295 = vector.shape_cast %294 : vector<8xf32> to vector<8x1xf32>
    %296 = vector.broadcast %295 : vector<8x1xf32> to vector<8x8xf32>
    %297 = arith.subf %293, %296 : vector<8x8xf32>
    %298 = math.exp %297 : vector<8x8xf32>
    %cst_130 = arith.constant dense<0.000000e+00> : vector<8xf32>
    %299 = vector.multi_reduction <add>, %298, %cst_130 [1] : vector<8x8xf32> to vector<8xf32>
    %300 = vector.shape_cast %299 : vector<8xf32> to vector<8x1xf32>
    %301 = tpu.reciprocal %300 {approx = true} : vector<8x1xf32> -> vector<8x1xf32>
    %302 = vector.broadcast %301 : vector<8x1xf32> to vector<8x8xf32>
    %303 = arith.mulf %298, %302 : vector<8x8xf32>
    %304 = arith.truncf %303 : vector<8x8xf32> to vector<8x8xbf16>
    %305 = arith.truncf %285 : vector<8x8xf32> to vector<8x8xbf16>
    %cst_131 = arith.constant dense<0.000000e+00> : vector<8x8xf32>
    %306 = tpu.matmul %304, %305, %cst_131 {dimension_numbers = #tpu.dot_dimension_numbers<[1], [0], [0], [1], [0, 0, 1, 1], [], []>} : vector<8x8xbf16>, vector<8x8xbf16>, vector<8x8xf32> -> vector<8x8xf32>
    %307 = vector.extract_strided_slice %256 {offsets = [0, 16], sizes = [8, 8], strides = [1, 1]} : vector<8x32xf32> to vector<8x8xf32>
    %308 = vector.extract_strided_slice %257 {offsets = [0, 16], sizes = [8, 8], strides = [1, 1]} : vector<8x32xf32> to vector<8x8xf32>
    %309 = vector.extract_strided_slice %258 {offsets = [0, 16], sizes = [8, 8], strides = [1, 1]} : vector<8x32xf32> to vector<8x8xf32>
    %310 = tpu.transpose %308, [1, 0] : vector<8x8xf32> -> vector<8x8xf32>
    %311 = arith.truncf %307 : vector<8x8xf32> to vector<8x8xbf16>
    %312 = arith.truncf %310 : vector<8x8xf32> to vector<8x8xbf16>
    %cst_132 = arith.constant dense<0.000000e+00> : vector<8x8xf32>
    %313 = tpu.matmul %311, %312, %cst_132 {dimension_numbers = #tpu.dot_dimension_numbers<[1], [0], [0], [1], [0, 0, 1, 1], [], []>} : vector<8x8xbf16>, vector<8x8xbf16>, vector<8x8xf32> -> vector<8x8xf32>
    %cst_133 = arith.constant 0.353553385 : f32
    %314 = vector.broadcast %cst_133 : f32 to vector<8x8xf32>
    %315 = arith.mulf %313, %314 : vector<8x8xf32>
    %cst_134 = arith.constant -1.000000e+30 : f32
    %316 = vector.broadcast %cst_134 : f32 to vector<8x8xf32>
    %317 = arith.select %6, %315, %316 : vector<8x8xi1>, vector<8x8xf32>
    %cst_135 = arith.constant dense<0xFF800000> : vector<8xf32>
    %318 = vector.multi_reduction <maximumf>, %317, %cst_135 [1] : vector<8x8xf32> to vector<8xf32>
    %319 = vector.shape_cast %318 : vector<8xf32> to vector<8x1xf32>
    %320 = vector.broadcast %319 : vector<8x1xf32> to vector<8x8xf32>
    %321 = arith.subf %317, %320 : vector<8x8xf32>
    %322 = math.exp %321 : vector<8x8xf32>
    %cst_136 = arith.constant dense<0.000000e+00> : vector<8xf32>
    %323 = vector.multi_reduction <add>, %322, %cst_136 [1] : vector<8x8xf32> to vector<8xf32>
    %324 = vector.shape_cast %323 : vector<8xf32> to vector<8x1xf32>
    %325 = tpu.reciprocal %324 {approx = true} : vector<8x1xf32> -> vector<8x1xf32>
    %326 = vector.broadcast %325 : vector<8x1xf32> to vector<8x8xf32>
    %327 = arith.mulf %322, %326 : vector<8x8xf32>
    %328 = arith.truncf %327 : vector<8x8xf32> to vector<8x8xbf16>
    %329 = arith.truncf %309 : vector<8x8xf32> to vector<8x8xbf16>
    %cst_137 = arith.constant dense<0.000000e+00> : vector<8x8xf32>
    %330 = tpu.matmul %328, %329, %cst_137 {dimension_numbers = #tpu.dot_dimension_numbers<[1], [0], [0], [1], [0, 0, 1, 1], [], []>} : vector<8x8xbf16>, vector<8x8xbf16>, vector<8x8xf32> -> vector<8x8xf32>
    %331 = vector.extract_strided_slice %256 {offsets = [0, 24], sizes = [8, 8], strides = [1, 1]} : vector<8x32xf32> to vector<8x8xf32>
    %332 = vector.extract_strided_slice %257 {offsets = [0, 24], sizes = [8, 8], strides = [1, 1]} : vector<8x32xf32> to vector<8x8xf32>
    %333 = vector.extract_strided_slice %258 {offsets = [0, 24], sizes = [8, 8], strides = [1, 1]} : vector<8x32xf32> to vector<8x8xf32>
    %334 = tpu.transpose %332, [1, 0] : vector<8x8xf32> -> vector<8x8xf32>
    %335 = arith.truncf %331 : vector<8x8xf32> to vector<8x8xbf16>
    %336 = arith.truncf %334 : vector<8x8xf32> to vector<8x8xbf16>
    %cst_138 = arith.constant dense<0.000000e+00> : vector<8x8xf32>
    %337 = tpu.matmul %335, %336, %cst_138 {dimension_numbers = #tpu.dot_dimension_numbers<[1], [0], [0], [1], [0, 0, 1, 1], [], []>} : vector<8x8xbf16>, vector<8x8xbf16>, vector<8x8xf32> -> vector<8x8xf32>
    %cst_139 = arith.constant 0.353553385 : f32
    %338 = vector.broadcast %cst_139 : f32 to vector<8x8xf32>
    %339 = arith.mulf %337, %338 : vector<8x8xf32>
    %cst_140 = arith.constant -1.000000e+30 : f32
    %340 = vector.broadcast %cst_140 : f32 to vector<8x8xf32>
    %341 = arith.select %6, %339, %340 : vector<8x8xi1>, vector<8x8xf32>
    %cst_141 = arith.constant dense<0xFF800000> : vector<8xf32>
    %342 = vector.multi_reduction <maximumf>, %341, %cst_141 [1] : vector<8x8xf32> to vector<8xf32>
    %343 = vector.shape_cast %342 : vector<8xf32> to vector<8x1xf32>
    %344 = vector.broadcast %343 : vector<8x1xf32> to vector<8x8xf32>
    %345 = arith.subf %341, %344 : vector<8x8xf32>
    %346 = math.exp %345 : vector<8x8xf32>
    %cst_142 = arith.constant dense<0.000000e+00> : vector<8xf32>
    %347 = vector.multi_reduction <add>, %346, %cst_142 [1] : vector<8x8xf32> to vector<8xf32>
    %348 = vector.shape_cast %347 : vector<8xf32> to vector<8x1xf32>
    %349 = tpu.reciprocal %348 {approx = true} : vector<8x1xf32> -> vector<8x1xf32>
    %350 = vector.broadcast %349 : vector<8x1xf32> to vector<8x8xf32>
    %351 = arith.mulf %346, %350 : vector<8x8xf32>
    %352 = arith.truncf %351 : vector<8x8xf32> to vector<8x8xbf16>
    %353 = arith.truncf %333 : vector<8x8xf32> to vector<8x8xbf16>
    %cst_143 = arith.constant dense<0.000000e+00> : vector<8x8xf32>
    %354 = tpu.matmul %352, %353, %cst_143 {dimension_numbers = #tpu.dot_dimension_numbers<[1], [0], [0], [1], [0, 0, 1, 1], [], []>} : vector<8x8xbf16>, vector<8x8xbf16>, vector<8x8xf32> -> vector<8x8xf32>
    %355 = tpu.concatenate %282, %306, %330, %354 in 1 : vector<8x8xf32>, vector<8x8xf32>, vector<8x8xf32>, vector<8x8xf32> -> vector<8x32xf32>
    %356 = arith.truncf %355 : vector<8x32xf32> to vector<8x32xbf16>
    %357 = arith.truncf %214 : vector<32x32xf32> to vector<32x32xbf16>
    %cst_144 = arith.constant dense<0.000000e+00> : vector<8x32xf32>
    %358 = tpu.matmul %356, %357, %cst_144 {dimension_numbers = #tpu.dot_dimension_numbers<[1], [0], [0], [1], [0, 0, 1, 1], [], []>} : vector<8x32xbf16>, vector<32x32xbf16>, vector<8x32xf32> -> vector<8x32xf32>
    %359 = vector.broadcast %216 : vector<1x32xf32> to vector<8x32xf32>
    %360 = arith.addf %358, %359 : vector<8x32xf32>
    %361 = arith.addf %204, %360 : vector<8x32xf32>
    %cst_145 = arith.constant dense<0.000000e+00> : vector<8xf32>
    %362 = vector.multi_reduction <add>, %361, %cst_145 [1] : vector<8x32xf32> to vector<8xf32>
    %363 = vector.shape_cast %362 : vector<8xf32> to vector<8x1xf32>
    %cst_146 = arith.constant 3.200000e+01 : f32
    %364 = vector.broadcast %cst_146 : f32 to vector<8x1xf32>
    %365 = arith.divf %363, %364 : vector<8x1xf32>
    %366 = vector.broadcast %365 : vector<8x1xf32> to vector<8x32xf32>
    %367 = arith.subf %361, %366 : vector<8x32xf32>
    %368 = arith.mulf %367, %367 : vector<8x32xf32>
    %cst_147 = arith.constant dense<0.000000e+00> : vector<8xf32>
    %369 = vector.multi_reduction <add>, %368, %cst_147 [1] : vector<8x32xf32> to vector<8xf32>
    %370 = vector.shape_cast %369 : vector<8xf32> to vector<8x1xf32>
    %cst_148 = arith.constant 3.200000e+01 : f32
    %371 = vector.broadcast %cst_148 : f32 to vector<8x1xf32>
    %372 = arith.divf %370, %371 : vector<8x1xf32>
    %373 = vector.broadcast %365 : vector<8x1xf32> to vector<8x32xf32>
    %374 = arith.subf %361, %373 : vector<8x32xf32>
    %cst_149 = arith.constant 9.99999974E-6 : f32
    %375 = vector.broadcast %cst_149 : f32 to vector<8x1xf32>
    %376 = arith.addf %372, %375 : vector<8x1xf32>
    %377 = math.rsqrt %376 : vector<8x1xf32>
    %378 = vector.broadcast %377 : vector<8x1xf32> to vector<8x32xf32>
    %379 = arith.mulf %374, %378 : vector<8x32xf32>
    %380 = vector.broadcast %218 : vector<1x32xf32> to vector<8x32xf32>
    %381 = arith.mulf %379, %380 : vector<8x32xf32>
    %382 = vector.broadcast %220 : vector<1x32xf32> to vector<8x32xf32>
    %383 = arith.addf %381, %382 : vector<8x32xf32>
    %384 = arith.truncf %383 : vector<8x32xf32> to vector<8x32xbf16>
    %385 = arith.truncf %222 : vector<32x128xf32> to vector<32x128xbf16>
    %cst_150 = arith.constant dense<0.000000e+00> : vector<8x128xf32>
    %386 = tpu.matmul %384, %385, %cst_150 {dimension_numbers = #tpu.dot_dimension_numbers<[1], [0], [0], [1], [0, 0, 1, 1], [], []>} : vector<8x32xbf16>, vector<32x128xbf16>, vector<8x128xf32> -> vector<8x128xf32>
    %387 = vector.broadcast %224 : vector<1x128xf32> to vector<8x128xf32>
    %388 = arith.addf %386, %387 : vector<8x128xf32>
    %cst_151 = arith.constant 1.702000e+00 : f32
    %389 = vector.broadcast %cst_151 : f32 to vector<8x128xf32>
    %390 = arith.mulf %389, %388 : vector<8x128xf32>
    %391 = arith.negf %390 : vector<8x128xf32>
    %392 = math.exp %391 : vector<8x128xf32>
    %cst_152 = arith.constant 1.000000e+00 : f32
    %393 = vector.broadcast %cst_152 : f32 to vector<8x128xf32>
    %394 = arith.addf %393, %392 : vector<8x128xf32>
    %395 = arith.divf %393, %394 : vector<8x128xf32>
    %396 = arith.mulf %388, %395 : vector<8x128xf32>
    %397 = arith.truncf %396 : vector<8x128xf32> to vector<8x128xbf16>
    %398 = arith.truncf %226 : vector<128x32xf32> to vector<128x32xbf16>
    %cst_153 = arith.constant dense<0.000000e+00> : vector<8x32xf32>
    %399 = tpu.matmul %397, %398, %cst_153 {dimension_numbers = #tpu.dot_dimension_numbers<[1], [0], [0], [1], [0, 0, 1, 1], [], []>} : vector<8x128xbf16>, vector<128x32xbf16>, vector<8x32xf32> -> vector<8x32xf32>
    %400 = vector.broadcast %228 : vector<1x32xf32> to vector<8x32xf32>
    %401 = arith.addf %399, %400 : vector<8x32xf32>
    %402 = arith.addf %361, %401 : vector<8x32xf32>
    %c0_154 = arith.constant 0 : index
    %c0_155 = arith.constant 0 : index
    %403 = vector.load %arg4[%c0_154, %c0_155] : memref<1x32xf32, #tpu.memory_space<vmem>>, vector<1x32xf32>
    %c0_156 = arith.constant 0 : index
    %c0_157 = arith.constant 0 : index
    %404 = vector.load %arg5[%c0_156, %c0_157] : memref<1x32xf32, #tpu.memory_space<vmem>>, vector<1x32xf32>
    %cst_158 = arith.constant dense<0.000000e+00> : vector<8xf32>
    %405 = vector.multi_reduction <add>, %402, %cst_158 [1] : vector<8x32xf32> to vector<8xf32>
    %406 = vector.shape_cast %405 : vector<8xf32> to vector<8x1xf32>
    %cst_159 = arith.constant 3.200000e+01 : f32
    %407 = vector.broadcast %cst_159 : f32 to vector<8x1xf32>
    %408 = arith.divf %406, %407 : vector<8x1xf32>
    %409 = vector.broadcast %408 : vector<8x1xf32> to vector<8x32xf32>
    %410 = arith.subf %402, %409 : vector<8x32xf32>
    %411 = arith.mulf %410, %410 : vector<8x32xf32>
    %cst_160 = arith.constant dense<0.000000e+00> : vector<8xf32>
    %412 = vector.multi_reduction <add>, %411, %cst_160 [1] : vector<8x32xf32> to vector<8xf32>
    %413 = vector.shape_cast %412 : vector<8xf32> to vector<8x1xf32>
    %cst_161 = arith.constant 3.200000e+01 : f32
    %414 = vector.broadcast %cst_161 : f32 to vector<8x1xf32>
    %415 = arith.divf %413, %414 : vector<8x1xf32>
    %416 = vector.broadcast %408 : vector<8x1xf32> to vector<8x32xf32>
    %417 = arith.subf %402, %416 : vector<8x32xf32>
    %cst_162 = arith.constant 9.99999974E-6 : f32
    %418 = vector.broadcast %cst_162 : f32 to vector<8x1xf32>
    %419 = arith.addf %415, %418 : vector<8x1xf32>
    %420 = math.rsqrt %419 : vector<8x1xf32>
    %421 = vector.broadcast %420 : vector<8x1xf32> to vector<8x32xf32>
    %422 = arith.mulf %417, %421 : vector<8x32xf32>
    %423 = vector.broadcast %403 : vector<1x32xf32> to vector<8x32xf32>
    %424 = arith.mulf %422, %423 : vector<8x32xf32>
    %425 = vector.broadcast %404 : vector<1x32xf32> to vector<8x32xf32>
    %426 = arith.addf %424, %425 : vector<8x32xf32>
    %c0_163 = arith.constant 0 : index
    %c0_164 = arith.constant 0 : index
    %c0_165 = arith.constant 0 : index
    %427 = vector.load %arg2[%c0_163, %c0_164, %c0_165] : memref<1x1x8xf32, #tpu.memory_space<vmem>>, vector<1x1x8xf32>
    %428 = vector.shape_cast %427 : vector<1x1x8xf32> to vector<1x8xf32>
    %cst_166 = arith.constant dense<0.000000e+00> : vector<1x32xf32>
    %429 = tpu.matmul %428, %426, %cst_166 {dimension_numbers = #tpu.dot_dimension_numbers<[1], [0], [0], [1], [0, 0, 1, 1], [], []>} : vector<1x8xf32>, vector<8x32xf32>, vector<1x32xf32> -> vector<1x32xf32>
    %c0_167 = arith.constant 0 : index
    %c0_168 = arith.constant 0 : index
    %430 = vector.load %arg6[%c0_167, %c0_168] : memref<32x32xf32, #tpu.memory_space<vmem>>, vector<32x32xf32>
    %431 = arith.truncf %429 : vector<1x32xf32> to vector<1x32xbf16>
    %432 = arith.truncf %430 : vector<32x32xf32> to vector<32x32xbf16>
    %cst_169 = arith.constant dense<0.000000e+00> : vector<1x32xf32>
    %433 = tpu.matmul %431, %432, %cst_169 {dimension_numbers = #tpu.dot_dimension_numbers<[1], [0], [0], [1], [0, 0, 1, 1], [], []>} : vector<1x32xbf16>, vector<32x32xbf16>, vector<1x32xf32> -> vector<1x32xf32>
    %c0_170 = arith.constant 0 : index
    %c0_171 = arith.constant 0 : index
    %c0_172 = arith.constant 0 : index
    %434 = vector.load %arg19[%c0_170, %c0_171, %c0_172] : memref<1x1x32xf32, #tpu.memory_space<vmem>>, vector<1x1x32xf32>
    %435 = vector.shape_cast %434 : vector<1x1x32xf32> to vector<1x32xf32>
    %436 = vector.shape_cast %433 : vector<1x32xf32> to vector<1x1x32xf32>
    tpu.vector_store %arg19[%c0_170, %c0_171, %c0_172], %436 {strides = array<i32>} : memref<1x1x32xf32, #tpu.memory_space<vmem>>, vector<1x1x32xf32>,
    return
  }
  func.func @transform_0(%arg0: i32) -> (i32, i32, i32) {
    %c0_i32 = arith.constant 0 : i32
    %c0_i32_0 = arith.constant 0 : i32
    %c0_i32_1 = arith.constant 0 : i32
    return %arg0, %c0_i32, %c0_i32_0 : i32, i32, i32
  }
  func.func @transform_1(%arg0: i32) -> (i32, i32, i32) {
    %c0_i32 = arith.constant 0 : i32
    %c0_i32_0 = arith.constant 0 : i32
    %c0_i32_1 = arith.constant 0 : i32
    return %arg0, %c0_i32, %c0_i32_0 : i32, i32, i32
  }
  func.func @transform_2(%arg0: i32) -> (i32, i32) {
    %c0_i32 = arith.constant 0 : i32
    %c0_i32_0 = arith.constant 0 : i32
    %c0_i32_1 = arith.constant 0 : i32
    return %c0_i32, %c0_i32_0 : i32, i32
  }
  func.func @transform_3(%arg0: i32) -> (i32, i32) {
    %c0_i32 = arith.constant 0 : i32
    %c0_i32_0 = arith.constant 0 : i32
    %c0_i32_1 = arith.constant 0 : i32
    return %c0_i32, %c0_i32_0 : i32, i32
  }
  func.func @transform_4(%arg0: i32) -> (i32, i32) {
    %c0_i32 = arith.constant 0 : i32
    %c0_i32_0 = arith.constant 0 : i32
    %c0_i32_1 = arith.constant 0 : i32
    return %c0_i32, %c0_i32_0 : i32, i32
  }
  func.func @transform_5(%arg0: i32) -> (i32, i32) {
    %c0_i32 = arith.constant 0 : i32
    %c0_i32_0 = arith.constant 0 : i32
    %c0_i32_1 = arith.constant 0 : i32
    return %c0_i32, %c0_i32_0 : i32, i32
  }
  func.func @transform_6(%arg0: i32) -> (i32, i32, i32) {
    %c0_i32 = arith.constant 0 : i32
    %c0_i32_0 = arith.constant 0 : i32
    %c0_i32_1 = arith.constant 0 : i32
    %c0_i32_2 = arith.constant 0 : i32
    return %c0_i32, %c0_i32_0, %c0_i32_1 : i32, i32, i32
  }
  func.func @transform_7(%arg0: i32) -> (i32, i32, i32) {
    %c0_i32 = arith.constant 0 : i32
    %c0_i32_0 = arith.constant 0 : i32
    %c0_i32_1 = arith.constant 0 : i32
    %c0_i32_2 = arith.constant 0 : i32
    return %c0_i32, %c0_i32_0, %c0_i32_1 : i32, i32, i32
  }
  func.func @transform_8(%arg0: i32) -> (i32, i32, i32) {
    %c0_i32 = arith.constant 0 : i32
    %c0_i32_0 = arith.constant 0 : i32
    %c0_i32_1 = arith.constant 0 : i32
    %c0_i32_2 = arith.constant 0 : i32
    return %c0_i32, %c0_i32_0, %c0_i32_1 : i32, i32, i32
  }
  func.func @transform_9(%arg0: i32) -> (i32, i32, i32) {
    %c0_i32 = arith.constant 0 : i32
    %c0_i32_0 = arith.constant 0 : i32
    %c0_i32_1 = arith.constant 0 : i32
    %c0_i32_2 = arith.constant 0 : i32
    return %c0_i32, %c0_i32_0, %c0_i32_1 : i32, i32, i32
  }
  func.func @transform_10(%arg0: i32) -> (i32, i32, i32) {
    %c0_i32 = arith.constant 0 : i32
    %c0_i32_0 = arith.constant 0 : i32
    %c0_i32_1 = arith.constant 0 : i32
    %c0_i32_2 = arith.constant 0 : i32
    return %c0_i32, %c0_i32_0, %c0_i32_1 : i32, i32, i32
  }
  func.func @transform_11(%arg0: i32) -> (i32, i32, i32) {
    %c0_i32 = arith.constant 0 : i32
    %c0_i32_0 = arith.constant 0 : i32
    %c0_i32_1 = arith.constant 0 : i32
    %c0_i32_2 = arith.constant 0 : i32
    return %c0_i32, %c0_i32_0, %c0_i32_1 : i32, i32, i32
  }
  func.func @transform_12(%arg0: i32) -> (i32, i32, i32) {
    %c0_i32 = arith.constant 0 : i32
    %c0_i32_0 = arith.constant 0 : i32
    %c0_i32_1 = arith.constant 0 : i32
    %c0_i32_2 = arith.constant 0 : i32
    return %c0_i32, %c0_i32_0, %c0_i32_1 : i32, i32, i32
  }
  func.func @transform_13(%arg0: i32) -> (i32, i32, i32) {
    %c0_i32 = arith.constant 0 : i32
    %c0_i32_0 = arith.constant 0 : i32
    %c0_i32_1 = arith.constant 0 : i32
    %c0_i32_2 = arith.constant 0 : i32
    return %c0_i32, %c0_i32_0, %c0_i32_1 : i32, i32, i32
  }
  func.func @transform_14(%arg0: i32) -> (i32, i32, i32) {
    %c0_i32 = arith.constant 0 : i32
    %c0_i32_0 = arith.constant 0 : i32
    %c0_i32_1 = arith.constant 0 : i32
    %c0_i32_2 = arith.constant 0 : i32
    return %c0_i32, %c0_i32_0, %c0_i32_1 : i32, i32, i32
  }
  func.func @transform_15(%arg0: i32) -> (i32, i32, i32) {
    %c0_i32 = arith.constant 0 : i32
    %c0_i32_0 = arith.constant 0 : i32
    %c0_i32_1 = arith.constant 0 : i32
    %c0_i32_2 = arith.constant 0 : i32
    return %c0_i32, %c0_i32_0, %c0_i32_1 : i32, i32, i32
  }
  func.func @transform_16(%arg0: i32) -> (i32, i32, i32) {
    %c0_i32 = arith.constant 0 : i32
    %c0_i32_0 = arith.constant 0 : i32
    %c0_i32_1 = arith.constant 0 : i32
    %c0_i32_2 = arith.constant 0 : i32
    return %c0_i32, %c0_i32_0, %c0_i32_1 : i32, i32, i32
  }
  func.func @transform_17(%arg0: i32) -> (i32, i32, i32) {
    %c0_i32 = arith.constant 0 : i32
    %c0_i32_0 = arith.constant 0 : i32
    %c0_i32_1 = arith.constant 0 : i32
    %c0_i32_2 = arith.constant 0 : i32
    return %c0_i32, %c0_i32_0, %c0_i32_1 : i32, i32, i32
  }
  func.func @transform_18(%arg0: i32) -> (i32, i32, i32) {
    %c0_i32 = arith.constant 0 : i32
    %c0_i32_0 = arith.constant 0 : i32
    %c0_i32_1 = arith.constant 0 : i32
    return %arg0, %c0_i32, %c0_i32_0 : i32, i32, i32
  }
}

</mosaic_0001>

<llo_original>
// kernel: video_clip_forward.7
$region0: #{video_clip_forward.7}
  #allocation0 [shape = 'u32[]', space=smem, size = 0x4, offset = 0x4, fixed_abs, tag = 'smem constant byte address 0x4 - core index']
  #allocation1 [shape = 'u32[144,128]{1,0:T(1,128)}', space=vmem, size = 0x12000, scoped, tag = 'internal scratch']
  #allocation2 [shape = 'f32[1,1]{1,0:T(1,128)S(1)}', space=vmem, size = 0x200, scoped, tag = 'scoped memory for video_clip_forward.7']
  %s0 = inlined_call_operand.vmem [shape: f32[2,32], index: 0, kind: input, shape index: {}]
  %s1 = inlined_call_operand.vmem [shape: f32[2,32], index: 1, kind: input, shape index: {}]
  %s2 = inlined_call_operand.vmem [shape: f32[32,32], index: 2, kind: input, shape index: {}]
  %s3 = inlined_call_operand.vmem [shape: f32[1,32], index: 3, kind: input, shape index: {}]
  %s4 = inlined_call_operand.vmem [shape: f32[32,32], index: 4, kind: input, shape index: {}]
  %s5 = inlined_call_operand.vmem [shape: f32[1,32], index: 5, kind: input, shape index: {}]
  %s6 = inlined_call_operand.vmem [shape: f32[32,32], index: 6, kind: input, shape index: {}]
  %s7 = inlined_call_operand.vmem [shape: f32[1,32], index: 7, kind: input, shape index: {}]
  %s8 = inlined_call_operand.vmem [shape: f32[32,32], index: 8, kind: input, shape index: {}]
  %s9 = inlined_call_operand.vmem [shape: f32[1,32], index: 9, kind: input, shape index: {}]
  %s10 = inlined_call_operand.<no memory space> [shape: f32[1,1], index: 10, kind: input, shape index: {}]
  %s11 = inlined_call_operand.hbm [shape: f32[2,32], index: 11, kind: output, shape index: {0}]
  %s12 = inlined_call_operand.hbm [shape: f32[2,32], index: 12, kind: output, shape index: {1}]
  %13 = xla_tuple %s11, %s12
  %s14 = sld [smem:[#allocation0]]
  $region62: #{video_clip_forward.7} parent=0
    _
  %s16 = ssub.s32 1, %s14
  %s17 = scalar_select 0, %s16, %s14
  %v18 = vstv %s10
  %19 = vst [vmem:[#allocation2] sm:$0x1] %v18
  $region1: #{video_clip_forward.7} parent=0
    #allocation3 [shape = 'u8[1024]{0}', space=vmem, size = 0x400, scoped, tag = 'output window, operand 0, single buffered']
    #allocation4 [shape = 's32[1]{0}', space=sflag, size = 0x4, scoped, tag = 'scoped memory for video_clip_forward.7']
    #allocation5 [shape = 'u8[1024]{0}', space=vmem, size = 0x400, scoped, tag = 'output window, operand 1, single buffered']
    #allocation6 [shape = 's32[1]{0}', space=sflag, size = 0x4, scoped, tag = 'scoped memory for video_clip_forward.7']
    %20 = vsyncpa [#allocation4], 0
    %21 = vsyncpa [#allocation6], 0
    // Predicated region
    $region2: #{video_clip_forward.7} parent=1 // pred_check
      _
    $region3: #{video_clip_forward.7} parent=1 // pred_check_branch
      %23 = sbr.rel (0) target = $region5
    $region4: #{video_clip_forward.7} parent=1 // pred_region
      _
    $region5: #{video_clip_forward.7} parent=1 // pred_fallthru
      _
    // Predicated region
    $region6: #{video_clip_forward.7} parent=1 // pred_check
      _
    $region7: #{video_clip_forward.7} parent=1 // pred_check_branch
      %25 = sbr.rel (0) target = $region9
    $region8: #{video_clip_forward.7} parent=1 // pred_region
      _
    $region9: #{video_clip_forward.7} parent=1 // pred_fallthru
      _
    // Predicated region
    $region10: #{video_clip_forward.7} parent=1 // pred_check
      _
    $region11: #{video_clip_forward.7} parent=1 // pred_check_branch
      %27 = sbr.rel (0) target = $region13
    $region12: #{video_clip_forward.7} parent=1 // pred_region
      _
    $region13: #{video_clip_forward.7} parent=1 // pred_fallthru
      _
    // Predicated region
    $region14: #{video_clip_forward.7} parent=1 // pred_check
      _
    $region15: #{video_clip_forward.7} parent=1 // pred_check_branch
      %29 = sbr.rel (0) target = $region17
    $region16: #{video_clip_forward.7} parent=1 // pred_region
      _
    $region17: #{video_clip_forward.7} parent=1 // pred_fallthru
      _
    // Predicated region
    $region18: #{video_clip_forward.7} parent=1 // pred_check
      _
    $region19: #{video_clip_forward.7} parent=1 // pred_check_branch
      %31 = sbr.rel (0) target = $region21
    $region20: #{video_clip_forward.7} parent=1 // pred_region
      _
    $region21: #{video_clip_forward.7} parent=1 // pred_fallthru
      _
    // Predicated region
    $region22: #{video_clip_forward.7} parent=1 // pred_check
      _
    $region23: #{video_clip_forward.7} parent=1 // pred_check_branch
      %33 = sbr.rel (0) target = $region25
    $region24: #{video_clip_forward.7} parent=1 // pred_region
      _
    $region25: #{video_clip_forward.7} parent=1 // pred_fallthru
      _
    // Predicated region
    $region26: #{video_clip_forward.7} parent=1 // pred_check
      _
    $region27: #{video_clip_forward.7} parent=1 // pred_check_branch
      %35 = sbr.rel (0) target = $region29
    $region28: #{video_clip_forward.7} parent=1 // pred_region
      _
    $region29: #{video_clip_forward.7} parent=1 // pred_fallthru
      _
    // Predicated region
    $region30: #{video_clip_forward.7} parent=1 // pred_check
      _
    $region31: #{video_clip_forward.7} parent=1 // pred_check_branch
      %37 = sbr.rel (0) target = $region33
    $region32: #{video_clip_forward.7} parent=1 // pred_region
      _
    $region33: #{video_clip_forward.7} parent=1 // pred_fallthru
      _
    // Predicated region
    $region34: #{video_clip_forward.7} parent=1 // pred_check
      _
    $region35: #{video_clip_forward.7} parent=1 // pred_check_branch
      %39 = sbr.rel (0) target = $region37
    $region36: #{video_clip_forward.7} parent=1 // pred_region
      _
    $region37: #{video_clip_forward.7} parent=1 // pred_fallthru
      _
    // Predicated region
    $region38: #{video_clip_forward.7} parent=1 // pred_check
      _
    $region39: #{video_clip_forward.7} parent=1 // pred_check_branch
      %41 = sbr.rel (0) target = $region41
    $region40: #{video_clip_forward.7} parent=1 // pred_region
      _
    $region41: #{video_clip_forward.7} parent=1 // pred_fallthru
      _
    // Predicated region
    $region42: #{video_clip_forward.7} parent=1 // pred_check
      _
    $region43: #{video_clip_forward.7} parent=1 // pred_check_branch
      %43 = sbr.rel (0) target = $region45
    $region44: #{video_clip_forward.7} parent=1 // pred_region
      _
    $region45: #{video_clip_forward.7} parent=1 // pred_fallthru
      _
    %v45 = vld [vmem:[%s0] sm:$0x3]
    %v46 = vld [vmem:[%s1] sm:$0x3]
    %v47 = vld [vmem:[%s2] sm:$0xff]
    %v48 = vld [vmem:[%s2 + $0x8] sm:$0xff]
    %v49 = vld [vmem:[%s2 + $0x10] sm:$0xff]
    %v50 = vld [vmem:[%s2 + $0x18] sm:$0xff]
    %v51 = vpack.c.bf16 %v45, %v45
    %v52 = vpack.c.bf16 %v48, %v47
    %v53 = vpack.c.bf16 %v50, %v49
    %v54 = vld [vmem:[%s3] sm:$0x1]
    %v56 = vlaneseq
    %v57 = vshrl.u32 %v56, 7
    %v58 = vsub.s32 0, %v57
    %v59 = vrot.slane %v54, %v58
    %vm61 = vcmask 261120
    %v63 = vsel %vm61, %v51, 0
    %65 = vmatprep.subr.bf16.mxu0 0
    %66 = vmatpush1.bf16.msra.mxu0 %v52
    %67 = vmatprep.subr.bf16.mxu0 0
    %68 = vmatpush1.bf16.msra.mxu0 %v53
    %69 = vmatprep.subr.bf16.mxu0 0
    %70 = vmatpush1.bf16.msra.mxu0 0
    %71 = vmatprep.subr.bf16.mxu0 0
    %72 = vmatpush1.bf16.msra.mxu0 0
    %73 = vmatprep.subr.bf16.mxu0 0
    %74 = vmatpush1.bf16.msra.mxu0 0
    %75 = vmatprep.subr.bf16.mxu0 0
    %76 = vmatpush1.bf16.msra.mxu0 0
    %77 = vmatprep.subr.bf16.mxu0 0
    %78 = vmatpush1.bf16.msra.mxu0 0
    %79 = vmatprep.subr.bf16.mxu0 0
    %80 = vmatpush1.bf16.msra.mxu0 0
    %81 = vmatprep.subr.bf16.mxu0 0
    %82 = vmatpush1.bf16.msra.mxu0 0
    %83 = vmatprep.subr.bf16.mxu0 0
    %84 = vmatpush1.bf16.msra.mxu0 0
    %85 = vmatprep.subr.bf16.mxu0 0
    %86 = vmatpush1.bf16.msra.mxu0 0
    %87 = vmatprep.subr.bf16.mxu0 0
    %88 = vmatpush1.bf16.msra.mxu0 0
    %89 = vmatprep.subr.bf16.mxu0 0
    %90 = vmatpush1.bf16.msra.mxu0 0
    %91 = vmatprep.subr.bf16.mxu0 0
    %92 = vmatpush1.bf16.msra.mxu0 0
    %93 = vmatprep.subr.bf16.mxu0 0
    %94 = vmatpush1.bf16.msra.mxu0 0
    %95 = vmatprep.subr.bf16.mxu0 0
    %96 = vmatpush1.bf16.msra.mxu0 0
    %97 = vmatprep.mubr.bf16.mxu0 0
    %98 = vmatmul.mubr.bf16.gmra.mrb[0].mxu0 %v63
    %v99 = vpop.f32.mrb[0].mxu0
    %v100 = vadd.f32 %v59, %v99
    %v101 = vpop.f32.mrb[0].mxu0
    %v102 = vpop.f32.mrb[0].mxu0
    %v103 = vpop.f32.mrb[0].mxu0
    %104 = vdwg.mxu0
    %v105 = vmul.f32 %v100, 1.702
    %v106 = vxor.u32 %v105, 2147483648
    %v107 = vmul.f32 %v106, 1.442695
    %v108 = vpow.pop %v107
    %v109 = vadd.f32 %v108, 1.0
    %v110 = vrcp.pop %v109
    %v111 = vmul.f32 1.0, %v110
    %v112 = vmul.f32 %v100, %v111
    %v113 = vld [vmem:[%s4] sm:$0xff]
    %v114 = vld [vmem:[%s4 + $0x8] sm:$0xff]
    %v115 = vld [vmem:[%s4 + $0x10] sm:$0xff]
    %v116 = vld [vmem:[%s4 + $0x18] sm:$0xff]
    %v117 = vpack.c.bf16 %v112, %v112
    %v118 = vpack.c.bf16 %v114, %v113
    %v119 = vpack.c.bf16 %v116, %v115
    %v120 = vld [vmem:[%s5] sm:$0x1]
    %v122 = vlaneseq
    %v123 = vshrl.u32 %v122, 7
    %v124 = vsub.s32 0, %v123
    %v125 = vrot.slane %v120, %v124
    %v128 = vsel %vm61, %v117, 0
    %130 = vmatprep.subr.bf16.mxu0 0
    %131 = vmatpush1.bf16.msra.mxu0 %v118
    %132 = vmatprep.subr.bf16.mxu0 0
    %133 = vmatpush1.bf16.msra.mxu0 %v119
    %134 = vmatprep.subr.bf16.mxu0 0
    %135 = vmatpush1.bf16.msra.mxu0 0
    %136 = vmatprep.subr.bf16.mxu0 0
    %137 = vmatpush1.bf16.msra.mxu0 0
    %138 = vmatprep.subr.bf16.mxu0 0
    %139 = vmatpush1.bf16.msra.mxu0 0
    %140 = vmatprep.subr.bf16.mxu0 0
    %141 = vmatpush1.bf16.msra.mxu0 0
    %142 = vmatprep.subr.bf16.mxu0 0
    %143 = vmatpush1.bf16.msra.mxu0 0
    %144 = vmatprep.subr.bf16.mxu0 0
    %145 = vmatpush1.bf16.msra.mxu0 0
    %146 = vmatprep.subr.bf16.mxu0 0
    %147 = vmatpush1.bf16.msra.mxu0 0
    %148 = vmatprep.subr.bf16.mxu0 0
    %149 = vmatpush1.bf16.msra.mxu0 0
    %150 = vmatprep.subr.bf16.mxu0 0
    %151 = vmatpush1.bf16.msra.mxu0 0
    %152 = vmatprep.subr.bf16.mxu0 0
    %153 = vmatpush1.bf16.msra.mxu0 0
    %154 = vmatprep.subr.bf16.mxu0 0
    %155 = vmatpush1.bf16.msra.mxu0 0
    %156 = vmatprep.subr.bf16.mxu0 0
    %157 = vmatpush1.bf16.msra.mxu0 0
    %158 = vmatprep.subr.bf16.mxu0 0
    %159 = vmatpush1.bf16.msra.mxu0 0
    %160 = vmatprep.subr.bf16.mxu0 0
    %161 = vmatpush1.bf16.msra.mxu0 0
    %162 = vmatprep.mubr.bf16.mxu0 0
    %163 = vmatmul.mubr.bf16.gmra.mrb[0].mxu0 %v128
    %v164 = vpop.f32.mrb[0].mxu0
    %v165 = vadd.f32 %v125, %v164
    %v166 = vpop.f32.mrb[0].mxu0
    %v167 = vpop.f32.mrb[0].mxu0
    %v168 = vpop.f32.mrb[0].mxu0
    %169 = vdwg.mxu0
    %v170 = vld [vmem:[%s6] sm:$0xff]
    %v171 = vld [vmem:[%s6 + $0x8] sm:$0xff]
    %v172 = vld [vmem:[%s6 + $0x10] sm:$0xff]
    %v173 = vld [vmem:[%s6 + $0x18] sm:$0xff]
    %v174 = vpack.c.bf16 %v46, %v46
    %v175 = vpack.c.bf16 %v171, %v170
    %v176 = vpack.c.bf16 %v173, %v172
    %v177 = vld [vmem:[%s7] sm:$0x1]
    %v179 = vlaneseq
    %v180 = vshrl.u32 %v179, 7
    %v181 = vsub.s32 0, %v180
    %v182 = vrot.slane %v177, %v181
    %v185 = vsel %vm61, %v174, 0
    %187 = vmatprep.subr.bf16.mxu0 0
    %188 = vmatpush1.bf16.msra.mxu0 %v175
    %189 = vmatprep.subr.bf16.mxu0 0
    %190 = vmatpush1.bf16.msra.mxu0 %v176
    %191 = vmatprep.subr.bf16.mxu0 0
    %192 = vmatpush1.bf16.msra.mxu0 0
    %193 = vmatprep.subr.bf16.mxu0 0
    %194 = vmatpush1.bf16.msra.mxu0 0
    %195 = vmatprep.subr.bf16.mxu0 0
    %196 = vmatpush1.bf16.msra.mxu0 0
    %197 = vmatprep.subr.bf16.mxu0 0
    %198 = vmatpush1.bf16.msra.mxu0 0
    %199 = vmatprep.subr.bf16.mxu0 0
    %200 = vmatpush1.bf16.msra.mxu0 0
    %201 = vmatprep.subr.bf16.mxu0 0
    %202 = vmatpush1.bf16.msra.mxu0 0
    %203 = vmatprep.subr.bf16.mxu0 0
    %204 = vmatpush1.bf16.msra.mxu0 0
    %205 = vmatprep.subr.bf16.mxu0 0
    %206 = vmatpush1.bf16.msra.mxu0 0
    %207 = vmatprep.subr.bf16.mxu0 0
    %208 = vmatpush1.bf16.msra.mxu0 0
    %209 = vmatprep.subr.bf16.mxu0 0
    %210 = vmatpush1.bf16.msra.mxu0 0
    %211 = vmatprep.subr.bf16.mxu0 0
    %212 = vmatpush1.bf16.msra.mxu0 0
    %213 = vmatprep.subr.bf16.mxu0 0
    %214 = vmatpush1.bf16.msra.mxu0 0
    %215 = vmatprep.subr.bf16.mxu0 0
    %216 = vmatpush1.bf16.msra.mxu0 0
    %217 = vmatprep.subr.bf16.mxu0 0
    %218 = vmatpush1.bf16.msra.mxu0 0
    %219 = vmatprep.mubr.bf16.mxu0 0
    %220 = vmatmul.mubr.bf16.gmra.mrb[0].mxu0 %v185
    %v221 = vpop.f32.mrb[0].mxu0
    %v222 = vadd.f32 %v182, %v221
    %v223 = vpop.f32.mrb[0].mxu0
    %v224 = vpop.f32.mrb[0].mxu0
    %v225 = vpop.f32.mrb[0].mxu0
    %226 = vdwg.mxu0
    %v227 = vmul.f32 %v222, 1.702
    %v228 = vxor.u32 %v227, 2147483648
    %v229 = vmul.f32 %v228, 1.442695
    %v230 = vpow.pop %v229
    %v231 = vadd.f32 %v230, 1.0
    %v232 = vrcp.pop %v231
    %v233 = vmul.f32 1.0, %v232
    %v234 = vmul.f32 %v222, %v233
    %v235 = vld [vmem:[%s8] sm:$0xff]
    %v236 = vld [vmem:[%s8 + $0x8] sm:$0xff]
    %v237 = vld [vmem:[%s8 + $0x10] sm:$0xff]
    %v238 = vld [vmem:[%s8 + $0x18] sm:$0xff]
    %v239 = vpack.c.bf16 %v234, %v234
    %v240 = vpack.c.bf16 %v236, %v235
    %v241 = vpack.c.bf16 %v238, %v237
    %v242 = vld [vmem:[%s9] sm:$0x1]
    %v244 = vlaneseq
    %v245 = vshrl.u32 %v244, 7
    %v246 = vsub.s32 0, %v245
    %v247 = vrot.slane %v242, %v246
    %v250 = vsel %vm61, %v239, 0
    %252 = vmatprep.subr.bf16.mxu0 0
    %253 = vmatpush1.bf16.msra.mxu0 %v240
    %254 = vmatprep.subr.bf16.mxu0 0
    %255 = vmatpush1.bf16.msra.mxu0 %v241
    %256 = vmatprep.subr.bf16.mxu0 0
    %257 = vmatpush1.bf16.msra.mxu0 0
    %258 = vmatprep.subr.bf16.mxu0 0
    %259 = vmatpush1.bf16.msra.mxu0 0
    %260 = vmatprep.subr.bf16.mxu0 0
    %261 = vmatpush1.bf16.msra.mxu0 0
    %262 = vmatprep.subr.bf16.mxu0 0
    %263 = vmatpush1.bf16.msra.mxu0 0
    %264 = vmatprep.subr.bf16.mxu0 0
    %265 = vmatpush1.bf16.msra.mxu0 0
    %266 = vmatprep.subr.bf16.mxu0 0
    %267 = vmatpush1.bf16.msra.mxu0 0
    %268 = vmatprep.subr.bf16.mxu0 0
    %269 = vmatpush1.bf16.msra.mxu0 0
    %270 = vmatprep.subr.bf16.mxu0 0
    %271 = vmatpush1.bf16.msra.mxu0 0
    %272 = vmatprep.subr.bf16.mxu0 0
    %273 = vmatpush1.bf16.msra.mxu0 0
    %274 = vmatprep.subr.bf16.mxu0 0
    %275 = vmatpush1.bf16.msra.mxu0 0
    %276 = vmatprep.subr.bf16.mxu0 0
    %277 = vmatpush1.bf16.msra.mxu0 0
    %278 = vmatprep.subr.bf16.mxu0 0
    %279 = vmatpush1.bf16.msra.mxu0 0
    %280 = vmatprep.subr.bf16.mxu0 0
    %281 = vmatpush1.bf16.msra.mxu0 0
    %282 = vmatprep.subr.bf16.mxu0 0
    %283 = vmatpush1.bf16.msra.mxu0 0
    %284 = vmatprep.mubr.bf16.mxu0 0
    %285 = vmatmul.mubr.bf16.gmra.mrb[0].mxu0 %v250
    %v286 = vpop.f32.mrb[0].mxu0
    %v287 = vadd.f32 %v247, %v286
    %v288 = vpop.f32.mrb[0].mxu0
    %v289 = vpop.f32.mrb[0].mxu0
    %v290 = vpop.f32.mrb[0].mxu0
    %291 = vdwg.mxu0
    %v292 = vadd.f32 %v45, %v165
    %v293 = vadd.f32 %v46, %v287
    %v294 = vmul.f32 %v292, %v292
    %vm295 = vcmask 254976
    %v296 = vsel %vm295, %v294, 0.0
    %297 = vadd.xlane.f32.xlu0 %v296
    %v298 = vpop.xlane.xlu0 %297
    %v299 = vrsqrt.pop %v298
    %v300 = vmul.f32 %v292, %v299
    %v301 = vmul.f32 %v293, %v293
    %v302 = vsel %vm295, %v301, 0.0
    %303 = vadd.xlane.f32.xlu0 %v302
    %v304 = vpop.xlane.xlu0 %303
    %v305 = vrsqrt.pop %v304
    %v306 = vmul.f32 %v293, %v305
    %v307 = vld [vmem:[#allocation2] sm:$0x1]
    %s308 = vtos %v307
    %v309 = vstv %s308
    %v310 = vmul.f32 %v309, 1.442695
    %v311 = vpow.pop %v310
    %s312 = vtos %v311
    %v313 = vstv %s312
    %v314 = vmul.f32 %v313, %v300
    %315 = vst.msk [vmem:[#allocation3] sm:$0x3] %vm295, %v314
    %316 = vst.msk [vmem:[#allocation5] sm:$0x3] %vm295, %v306
    // Predicated region
    $region46: #{video_clip_forward.7} parent=1 // pred_check
      _
    $region47: #{video_clip_forward.7} parent=1 // pred_check_branch
      %318 = sbr.rel (0) target = $region49
    $region48: #{video_clip_forward.7} parent=1 // pred_region
      %s320 = ssub.s32 32, 32
      %321 = vsyncadd [#allocation4], %s320
      %s323 = sshll.u32 [#allocation3], 4
      %s324 = int_to_ptr.vmem [resolvable:$true] %s323
      %326 = dma.vmem_to_hbm [thread:$0]  %s324, 32, %s11, [#allocation4]
    $region49: #{video_clip_forward.7} parent=1 // pred_fallthru
      _
    // Predicated region
    $region50: #{video_clip_forward.7} parent=1 // pred_check
      _
    $region51: #{video_clip_forward.7} parent=1 // pred_check_branch
      %328 = sbr.rel (0) target = $region53
    $region52: #{video_clip_forward.7} parent=1 // pred_region
      %s330 = ssub.s32 32, 32
      %331 = vsyncadd [#allocation6], %s330
      %s333 = sshll.u32 [#allocation5], 4
      %s334 = int_to_ptr.vmem [resolvable:$true] %s333
      %336 = dma.vmem_to_hbm [thread:$0]  %s334, 32, %s12, [#allocation6]
    $region53: #{video_clip_forward.7} parent=1 // pred_fallthru
      _
    // Predicated region
    $region54: #{video_clip_forward.7} parent=1 // pred_check
      _
    $region55: #{video_clip_forward.7} parent=1 // pred_check_branch
      %338 = sbr.rel (0) target = $region57
    $region56: #{video_clip_forward.7} parent=1 // pred_region
      %339 = dma.done [#allocation4], 32
    $region57: #{video_clip_forward.7} parent=1 // pred_fallthru
      _
    // Predicated region
    $region58: #{video_clip_forward.7} parent=1 // pred_check
      _
    $region59: #{video_clip_forward.7} parent=1 // pred_check_branch
      %341 = sbr.rel (0) target = $region61
    $region60: #{video_clip_forward.7} parent=1 // pred_region
      %342 = dma.done [#allocation6], 32
    $region61: #{video_clip_forward.7} parent=1 // pred_fallthru
      _
    %343 = vsyncpa [#allocation4], 1
    %344 = vsyncpa [#allocation6], 1

// kernel: video_clip_forward.6
$region0: #{video_clip_forward.6}
  #allocation0 [shape = 'u32[]', space=smem, size = 0x4, offset = 0x4, fixed_abs, tag = 'smem constant byte address 0x4 - core index']
  #allocation1 [shape = 'u32[144,128]{1,0:T(1,128)}', space=vmem, size = 0x12000, scoped, tag = 'internal scratch']
  %s0 = inlined_call_operand.vmem [shape: f32[2,3,32], index: 0, kind: input, shape index: {}]
  %s1 = inlined_call_operand.vmem [shape: f32[1,32], index: 1, kind: input, shape index: {}]
  %s2 = inlined_call_operand.vmem [shape: f32[4,32], index: 2, kind: input, shape index: {}]
  %s3 = inlined_call_operand.vmem [shape: f32[1,32], index: 3, kind: input, shape index: {}]
  %s4 = inlined_call_operand.vmem [shape: f32[1,32], index: 4, kind: input, shape index: {}]
  %s5 = inlined_call_operand.vmem [shape: f32[1,1,32], index: 5, kind: input, shape index: {}]
  %s6 = inlined_call_operand.vmem [shape: f32[1,1,32], index: 6, kind: input, shape index: {}]
  %s7 = inlined_call_operand.vmem [shape: f32[1,32,96], index: 7, kind: input, shape index: {}]
  %s8 = inlined_call_operand.vmem [shape: f32[1,1,96], index: 8, kind: input, shape index: {}]
  %s9 = inlined_call_operand.vmem [shape: f32[1,32,32], index: 9, kind: input, shape index: {}]
  %s10 = inlined_call_operand.vmem [shape: f32[1,1,32], index: 10, kind: input, shape index: {}]
  %s11 = inlined_call_operand.vmem [shape: f32[1,1,32], index: 11, kind: input, shape index: {}]
  %s12 = inlined_call_operand.vmem [shape: f32[1,1,32], index: 12, kind: input, shape index: {}]
  %s13 = inlined_call_operand.vmem [shape: f32[1,32,128], index: 13, kind: input, shape index: {}]
  %s14 = inlined_call_operand.vmem [shape: f32[1,1,128], index: 14, kind: input, shape index: {}]
  %s15 = inlined_call_operand.vmem [shape: f32[1,128,32], index: 15, kind: input, shape index: {}]
  %s16 = inlined_call_operand.vmem [shape: f32[1,1,32], index: 16, kind: input, shape index: {}]
  %s17 = inlined_call_operand.vmem [shape: f32[2,1,32], index: 17, kind: output, shape index: {}]
  %s18 = sld [smem:[#allocation0]]
  $region101: #{video_clip_forward.6} parent=0
    _
  %s20 = ssub.s32 1, %s18
  %s21 = scalar_select 0, %s20, %s18
  loop: start=0, step=1, limit=4
  $region2: #{video_clip_forward.6} parent=0 // loop_pre_header
    _
  $region3: #{video_clip_forward.6} parent=0 // loop_header
    %s23 = sphi 0, %s27
    %p24 = scmp.ge.s32.totalorder %s23, 4
    %s33 = sphi 0, %s35
    %s36 = sphi 0, %s33
    %s37 = sphi 0, %s36
    %s53 = sphi 0, %s37
    %s57 = sphi 0, %s57
    %s59 = sphi 0, %s57
    %s60 = sphi 0, %s59
    %s74 = sphi 0, %s60
    %s78 = sphi 0, %s78
    %s80 = sphi 0, %s78
    %s81 = sphi 0, %s80
    %s95 = sphi 0, %s81
    %s99 = sphi 0, %s99
    %s101 = sphi 0, %s99
    %s102 = sphi 0, %s101
    %s116 = sphi 0, %s102
    %s120 = sphi 0, %s120
    %s122 = sphi 0, %s120
    %s123 = sphi 0, %s122
    %s137 = sphi 0, %s123
    %s141 = sphi 0, %s141
    %s143 = sphi 0, %s141
    %s144 = sphi 0, %s143
    %s158 = sphi 0, %s144
    %s162 = sphi 0, %s162
    %s164 = sphi 0, %s162
    %s165 = sphi 0, %s164
    %s179 = sphi 0, %s165
    %s183 = sphi 0, %s183
    %s185 = sphi 0, %s183
    %s186 = sphi 0, %s185
    %s200 = sphi 0, %s186
    %s204 = sphi 0, %s204
    %s206 = sphi 0, %s204
    %s207 = sphi 0, %s206
    %s221 = sphi 0, %s207
    %s225 = sphi 0, %s225
    %s227 = sphi 0, %s225
    %s228 = sphi 0, %s227
    %s242 = sphi 0, %s228
    %s246 = sphi 0, %s246
    %s248 = sphi 0, %s246
    %s249 = sphi 0, %s248
    %s263 = sphi 0, %s249
    %s267 = sphi 0, %s267
    %s269 = sphi 0, %s267
    %s270 = sphi 0, %s269
    %s284 = sphi 0, %s270
    %s288 = sphi 0, %s288
    %s290 = sphi 0, %s288
    %s291 = sphi 0, %s290
    %s305 = sphi 0, %s291
    %s309 = sphi 0, %s309
    %s311 = sphi 0, %s309
    %s312 = sphi 0, %s311
    %s326 = sphi 0, %s312
    %s330 = sphi 0, %s330
    %s332 = sphi 0, %s330
    %s333 = sphi 0, %s332
    %s347 = sphi 0, %s333
    %s351 = sphi 0, %s351
    %s353 = sphi 0, %s351
    %s354 = sphi 0, %s353
    %s368 = sphi 0, %s354
    %s372 = sphi 0, %s372
    %s374 = sphi 0, %s372
    %s375 = sphi 0, %s374
    %s389 = sphi 0, %s375
    %s395 = sphi 0, %s397
    %s398 = sphi 0, %s395
    %s399 = sphi 0, %s398
    %s415 = sphi 0, %s399
  $region4: #{video_clip_forward.6} parent=0 // loop_header_branch
    %26 = sbr.rel (%p24) target = $region8
  $region5: #{video_clip_forward.6} parent=0 // loop_body
    %s28 = ssub.s32 %s23, 1
    %s29 = ssub.s32 %s23, 2
    %s30 = sadd.s32 %s23, 1
    %s31 = ssub.s32 %s23, %s30
    %p32 = scmp.eq.s32.totalorder %s31, 0
    %s34 = sadd.s32 %s33, 1
    %s35 = scalar_select %p32, %s33, %s34
    %p38 = pneg %p32
    %p39 = scmp.eq.s32.totalorder %s23, 1
    %p40 = por %p38, %p39
    %p41 = scmp.ne.s32.totalorder %s33, %s36
    %p42 = scmp.eq.s32.totalorder %s23, 0
    %p43 = por %p41, %p42
    %p44 = scmp.ne.s32.totalorder %s33, %s36
    %p45 = scmp.eq.s32.totalorder %s28, 1
    %p46 = por %p44, %p45
    %p47 = scmp.ne.s32.totalorder %s36, %s37
    %p48 = scmp.eq.s32.totalorder %s28, 0
    %p49 = por %p47, %p48
    %p50 = scmp.ne.s32.totalorder %s36, %s37
    %p51 = scmp.eq.s32.totalorder %s29, 1
    %p52 = por %p50, %p51
    %p54 = scmp.ne.s32.totalorder %s37, %s53
    %p55 = scmp.eq.s32.totalorder %s29, 0
    %p56 = por %p54, %p55
    %s58 = sadd.s32 %s57, 1
    %p61 = scmp.eq.s32.totalorder %s23, 1
    %p62 = scmp.ne.s32.totalorder %s57, %s59
    %p63 = scmp.eq.s32.totalorder %s23, 0
    %p64 = por %p62, %p63
    %p65 = scmp.ne.s32.totalorder %s57, %s59
    %p66 = scmp.eq.s32.totalorder %s28, 1
    %p67 = por %p65, %p66
    %p68 = scmp.ne.s32.totalorder %s59, %s60
    %p69 = scmp.eq.s32.totalorder %s28, 0
    %p70 = por %p68, %p69
    %p71 = scmp.ne.s32.totalorder %s59, %s60
    %p72 = scmp.eq.s32.totalorder %s29, 1
    %p73 = por %p71, %p72
    %p75 = scmp.ne.s32.totalorder %s60, %s74
    %p76 = scmp.eq.s32.totalorder %s29, 0
    %p77 = por %p75, %p76
    %s79 = sadd.s32 %s78, 1
    %p82 = scmp.eq.s32.totalorder %s23, 1
    %p83 = scmp.ne.s32.totalorder %s78, %s80
    %p84 = scmp.eq.s32.totalorder %s23, 0
    %p85 = por %p83, %p84
    %p86 = scmp.ne.s32.totalorder %s78, %s80
    %p87 = scmp.eq.s32.totalorder %s28, 1
    %p88 = por %p86, %p87
    %p89 = scmp.ne.s32.totalorder %s80, %s81
    %p90 = scmp.eq.s32.totalorder %s28, 0
    %p91 = por %p89, %p90
    %p92 = scmp.ne.s32.totalorder %s80, %s81
    %p93 = scmp.eq.s32.totalorder %s29, 1
    %p94 = por %p92, %p93
    %p96 = scmp.ne.s32.totalorder %s81, %s95
    %p97 = scmp.eq.s32.totalorder %s29, 0
    %p98 = por %p96, %p97
    %s100 = sadd.s32 %s99, 1
    %p103 = scmp.eq.s32.totalorder %s23, 1
    %p104 = scmp.ne.s32.totalorder %s99, %s101
    %p105 = scmp.eq.s32.totalorder %s23, 0
    %p106 = por %p104, %p105
    %p107 = scmp.ne.s32.totalorder %s99, %s101
    %p108 = scmp.eq.s32.totalorder %s28, 1
    %p109 = por %p107, %p108
    %p110 = scmp.ne.s32.totalorder %s101, %s102
    %p111 = scmp.eq.s32.totalorder %s28, 0
    %p112 = por %p110, %p111
    %p113 = scmp.ne.s32.totalorder %s101, %s102
    %p114 = scmp.eq.s32.totalorder %s29, 1
    %p115 = por %p113, %p114
    %p117 = scmp.ne.s32.totalorder %s102, %s116
    %p118 = scmp.eq.s32.totalorder %s29, 0
    %p119 = por %p117, %p118
    %s121 = sadd.s32 %s120, 1
    %p124 = scmp.eq.s32.totalorder %s23, 1
    %p125 = scmp.ne.s32.totalorder %s120, %s122
    %p126 = scmp.eq.s32.totalorder %s23, 0
    %p127 = por %p125, %p126
    %p128 = scmp.ne.s32.totalorder %s120, %s122
    %p129 = scmp.eq.s32.totalorder %s28, 1
    %p130 = por %p128, %p129
    %p131 = scmp.ne.s32.totalorder %s122, %s123
    %p132 = scmp.eq.s32.totalorder %s28, 0
    %p133 = por %p131, %p132
    %p134 = scmp.ne.s32.totalorder %s122, %s123
    %p135 = scmp.eq.s32.totalorder %s29, 1
    %p136 = por %p134, %p135
    %p138 = scmp.ne.s32.totalorder %s123, %s137
    %p139 = scmp.eq.s32.totalorder %s29, 0
    %p140 = por %p138, %p139
    %s142 = sadd.s32 %s141, 1
    %p145 = scmp.eq.s32.totalorder %s23, 1
    %p146 = scmp.ne.s32.totalorder %s141, %s143
    %p147 = scmp.eq.s32.totalorder %s23, 0
    %p148 = por %p146, %p147
    %p149 = scmp.ne.s32.totalorder %s141, %s143
    %p150 = scmp.eq.s32.totalorder %s28, 1
    %p151 = por %p149, %p150
    %p152 = scmp.ne.s32.totalorder %s143, %s144
    %p153 = scmp.eq.s32.totalorder %s28, 0
    %p154 = por %p152, %p153
    %p155 = scmp.ne.s32.totalorder %s143, %s144
    %p156 = scmp.eq.s32.totalorder %s29, 1
    %p157 = por %p155, %p156
    %p159 = scmp.ne.s32.totalorder %s144, %s158
    %p160 = scmp.eq.s32.totalorder %s29, 0
    %p161 = por %p159, %p160
    %s163 = sadd.s32 %s162, 1
    %p166 = scmp.eq.s32.totalorder %s23, 1
    %p167 = scmp.ne.s32.totalorder %s162, %s164
    %p168 = scmp.eq.s32.totalorder %s23, 0
    %p169 = por %p167, %p168
    %p170 = scmp.ne.s32.totalorder %s162, %s164
    %p171 = scmp.eq.s32.totalorder %s28, 1
    %p172 = por %p170, %p171
    %p173 = scmp.ne.s32.totalorder %s164, %s165
    %p174 = scmp.eq.s32.totalorder %s28, 0
    %p175 = por %p173, %p174
    %p176 = scmp.ne.s32.totalorder %s164, %s165
    %p177 = scmp.eq.s32.totalorder %s29, 1
    %p178 = por %p176, %p177
    %p180 = scmp.ne.s32.totalorder %s165, %s179
    %p181 = scmp.eq.s32.totalorder %s29, 0
    %p182 = por %p180, %p181
    %s184 = sadd.s32 %s183, 1
    %p187 = scmp.eq.s32.totalorder %s23, 1
    %p188 = scmp.ne.s32.totalorder %s183, %s185
    %p189 = scmp.eq.s32.totalorder %s23, 0
    %p190 = por %p188, %p189
    %p191 = scmp.ne.s32.totalorder %s183, %s185
    %p192 = scmp.eq.s32.totalorder %s28, 1
    %p193 = por %p191, %p192
    %p194 = scmp.ne.s32.totalorder %s185, %s186
    %p195 = scmp.eq.s32.totalorder %s28, 0
    %p196 = por %p194, %p195
    %p197 = scmp.ne.s32.totalorder %s185, %s186
    %p198 = scmp.eq.s32.totalorder %s29, 1
    %p199 = por %p197, %p198
    %p201 = scmp.ne.s32.totalorder %s186, %s200
    %p202 = scmp.eq.s32.totalorder %s29, 0
    %p203 = por %p201, %p202
    %s205 = sadd.s32 %s204, 1
    %p208 = scmp.eq.s32.totalorder %s23, 1
    %p209 = scmp.ne.s32.totalorder %s204, %s206
    %p210 = scmp.eq.s32.totalorder %s23, 0
    %p211 = por %p209, %p210
    %p212 = scmp.ne.s32.totalorder %s204, %s206
    %p213 = scmp.eq.s32.totalorder %s28, 1
    %p214 = por %p212, %p213
    %p215 = scmp.ne.s32.totalorder %s206, %s207
    %p216 = scmp.eq.s32.totalorder %s28, 0
    %p217 = por %p215, %p216
    %p218 = scmp.ne.s32.totalorder %s206, %s207
    %p219 = scmp.eq.s32.totalorder %s29, 1
    %p220 = por %p218, %p219
    %p222 = scmp.ne.s32.totalorder %s207, %s221
    %p223 = scmp.eq.s32.totalorder %s29, 0
    %p224 = por %p222, %p223
    %s226 = sadd.s32 %s225, 1
    %p229 = scmp.eq.s32.totalorder %s23, 1
    %p230 = scmp.ne.s32.totalorder %s225, %s227
    %p231 = scmp.eq.s32.totalorder %s23, 0
    %p232 = por %p230, %p231
    %p233 = scmp.ne.s32.totalorder %s225, %s227
    %p234 = scmp.eq.s32.totalorder %s28, 1
    %p235 = por %p233, %p234
    %p236 = scmp.ne.s32.totalorder %s227, %s228
    %p237 = scmp.eq.s32.totalorder %s28, 0
    %p238 = por %p236, %p237
    %p239 = scmp.ne.s32.totalorder %s227, %s228
    %p240 = scmp.eq.s32.totalorder %s29, 1
    %p241 = por %p239, %p240
    %p243 = scmp.ne.s32.totalorder %s228, %s242
    %p244 = scmp.eq.s32.totalorder %s29, 0
    %p245 = por %p243, %p244
    %s247 = sadd.s32 %s246, 1
    %p250 = scmp.eq.s32.totalorder %s23, 1
    %p251 = scmp.ne.s32.totalorder %s246, %s248
    %p252 = scmp.eq.s32.totalorder %s23, 0
    %p253 = por %p251, %p252
    %p254 = scmp.ne.s32.totalorder %s246, %s248
    %p255 = scmp.eq.s32.totalorder %s28, 1
    %p256 = por %p254, %p255
    %p257 = scmp.ne.s32.totalorder %s248, %s249
    %p258 = scmp.eq.s32.totalorder %s28, 0
    %p259 = por %p257, %p258
    %p260 = scmp.ne.s32.totalorder %s248, %s249
    %p261 = scmp.eq.s32.totalorder %s29, 1
    %p262 = por %p260, %p261
    %p264 = scmp.ne.s32.totalorder %s249, %s263
    %p265 = scmp.eq.s32.totalorder %s29, 0
    %p266 = por %p264, %p265
    %s268 = sadd.s32 %s267, 1
    %p271 = scmp.eq.s32.totalorder %s23, 1
    %p272 = scmp.ne.s32.totalorder %s267, %s269
    %p273 = scmp.eq.s32.totalorder %s23, 0
    %p274 = por %p272, %p273
    %p275 = scmp.ne.s32.totalorder %s267, %s269
    %p276 = scmp.eq.s32.totalorder %s28, 1
    %p277 = por %p275, %p276
    %p278 = scmp.ne.s32.totalorder %s269, %s270
    %p279 = scmp.eq.s32.totalorder %s28, 0
    %p280 = por %p278, %p279
    %p281 = scmp.ne.s32.totalorder %s269, %s270
    %p282 = scmp.eq.s32.totalorder %s29, 1
    %p283 = por %p281, %p282
    %p285 = scmp.ne.s32.totalorder %s270, %s284
    %p286 = scmp.eq.s32.totalorder %s29, 0
    %p287 = por %p285, %p286
    %s289 = sadd.s32 %s288, 1
    %p292 = scmp.eq.s32.totalorder %s23, 1
    %p293 = scmp.ne.s32.totalorder %s288, %s290
    %p294 = scmp.eq.s32.totalorder %s23, 0
    %p295 = por %p293, %p294
    %p296 = scmp.ne.s32.totalorder %s288, %s290
    %p297 = scmp.eq.s32.totalorder %s28, 1
    %p298 = por %p296, %p297
    %p299 = scmp.ne.s32.totalorder %s290, %s291
    %p300 = scmp.eq.s32.totalorder %s28, 0
    %p301 = por %p299, %p300
    %p302 = scmp.ne.s32.totalorder %s290, %s291
    %p303 = scmp.eq.s32.totalorder %s29, 1
    %p304 = por %p302, %p303
    %p306 = scmp.ne.s32.totalorder %s291, %s305
    %p307 = scmp.eq.s32.totalorder %s29, 0
    %p308 = por %p306, %p307
    %s310 = sadd.s32 %s309, 1
    %p313 = scmp.eq.s32.totalorder %s23, 1
    %p314 = scmp.ne.s32.totalorder %s309, %s311
    %p315 = scmp.eq.s32.totalorder %s23, 0
    %p316 = por %p314, %p315
    %p317 = scmp.ne.s32.totalorder %s309, %s311
    %p318 = scmp.eq.s32.totalorder %s28, 1
    %p319 = por %p317, %p318
    %p320 = scmp.ne.s32.totalorder %s311, %s312
    %p321 = scmp.eq.s32.totalorder %s28, 0
    %p322 = por %p320, %p321
    %p323 = scmp.ne.s32.totalorder %s311, %s312
    %p324 = scmp.eq.s32.totalorder %s29, 1
    %p325 = por %p323, %p324
    %p327 = scmp.ne.s32.totalorder %s312, %s326
    %p328 = scmp.eq.s32.totalorder %s29, 0
    %p329 = por %p327, %p328
    %s331 = sadd.s32 %s330, 1
    %p334 = scmp.eq.s32.totalorder %s23, 1
    %p335 = scmp.ne.s32.totalorder %s330, %s332
    %p336 = scmp.eq.s32.totalorder %s23, 0
    %p337 = por %p335, %p336
    %p338 = scmp.ne.s32.totalorder %s330, %s332
    %p339 = scmp.eq.s32.totalorder %s28, 1
    %p340 = por %p338, %p339
    %p341 = scmp.ne.s32.totalorder %s332, %s333
    %p342 = scmp.eq.s32.totalorder %s28, 0
    %p343 = por %p341, %p342
    %p344 = scmp.ne.s32.totalorder %s332, %s333
    %p345 = scmp.eq.s32.totalorder %s29, 1
    %p346 = por %p344, %p345
    %p348 = scmp.ne.s32.totalorder %s333, %s347
    %p349 = scmp.eq.s32.totalorder %s29, 0
    %p350 = por %p348, %p349
    %s352 = sadd.s32 %s351, 1
    %p355 = scmp.eq.s32.totalorder %s23, 1
    %p356 = scmp.ne.s32.totalorder %s351, %s353
    %p357 = scmp.eq.s32.totalorder %s23, 0
    %p358 = por %p356, %p357
    %p359 = scmp.ne.s32.totalorder %s351, %s353
    %p360 = scmp.eq.s32.totalorder %s28, 1
    %p361 = por %p359, %p360
    %p362 = scmp.ne.s32.totalorder %s353, %s354
    %p363 = scmp.eq.s32.totalorder %s28, 0
    %p364 = por %p362, %p363
    %p365 = scmp.ne.s32.totalorder %s353, %s354
    %p366 = scmp.eq.s32.totalorder %s29, 1
    %p367 = por %p365, %p366
    %p369 = scmp.ne.s32.totalorder %s354, %s368
    %p370 = scmp.eq.s32.totalorder %s29, 0
    %p371 = por %p369, %p370
    %s373 = sadd.s32 %s372, 1
    %p376 = scmp.eq.s32.totalorder %s23, 1
    %p377 = scmp.ne.s32.totalorder %s372, %s374
    %p378 = scmp.eq.s32.totalorder %s23, 0
    %p379 = por %p377, %p378
    %p380 = scmp.ne.s32.totalorder %s372, %s374
    %p381 = scmp.eq.s32.totalorder %s28, 1
    %p382 = por %p380, %p381
    %p383 = scmp.ne.s32.totalorder %s374, %s375
    %p384 = scmp.eq.s32.totalorder %s28, 0
    %p385 = por %p383, %p384
    %p386 = scmp.ne.s32.totalorder %s374, %s375
    %p387 = scmp.eq.s32.totalorder %s29, 1
    %p388 = por %p386, %p387
    %p390 = scmp.ne.s32.totalorder %s375, %s389
    %p391 = scmp.eq.s32.totalorder %s29, 0
    %p392 = por %p390, %p391
    %s393 = ssub.s32 %s23, %s30
    %p394 = scmp.eq.s32.totalorder %s393, 0
    %s396 = sadd.s32 %s395, 1
    %s397 = scalar_select %p394, %s395, %s396
    %p400 = pneg %p394
    %p401 = scmp.eq.s32.totalorder %s23, 1
    %p402 = por %p400, %p401
    %p403 = scmp.ne.s32.totalorder %s395, %s398
    %p404 = scmp.eq.s32.totalorder %s23, 0
    %p405 = por %p403, %p404
    %p406 = scmp.ne.s32.totalorder %s395, %s398
    %p407 = scmp.eq.s32.totalorder %s28, 1
    %p408 = por %p406, %p407
    %p409 = scmp.ne.s32.totalorder %s398, %s399
    %p410 = scmp.eq.s32.totalorder %s28, 0
    %p411 = por %p409, %p410
    %p412 = scmp.ne.s32.totalorder %s398, %s399
    %p413 = scmp.eq.s32.totalorder %s29, 1
    %p414 = por %p412, %p413
    %p416 = scmp.ne.s32.totalorder %s399, %s415
    %p417 = scmp.eq.s32.totalorder %s29, 0
    %p418 = por %p416, %p417
    %p419 = scmp.le.s32.totalorder 1, %s23
    %p420 = scmp.lt.s32.totalorder %s23, 3
    %p421 = pnand %p419, %p420
    %p422 = pneg %p421
    // Predicated region
    $region9: #{video_clip_forward.6} parent=5 // pred_check
      _
    $region10: #{video_clip_forward.6} parent=5 // pred_check_branch
      %424 = sbr.rel (%p421) target = $region12
    $region11: #{video_clip_forward.6} parent=5 // pred_region
      %s425 = ssub.s32 %s23, 1
      // Predicated region
      $region13: #{video_clip_forward.6} parent=11 // pred_check
        %p426 = pneg %p70
      $region14: #{video_clip_forward.6} parent=11 // pred_check_branch
        %428 = sbr.rel (%p426) target = $region16
      $region15: #{video_clip_forward.6} parent=11 // pred_region
        _
      $region16: #{video_clip_forward.6} parent=11 // pred_fallthru
        _
      // Predicated region
      $region17: #{video_clip_forward.6} parent=11 // pred_check
        %p429 = pneg %p91
      $region18: #{video_clip_forward.6} parent=11 // pred_check_branch
        %431 = sbr.rel (%p429) target = $region20
      $region19: #{video_clip_forward.6} parent=11 // pred_region
        _
      $region20: #{video_clip_forward.6} parent=11 // pred_fallthru
        _
      // Predicated region
      $region21: #{video_clip_forward.6} parent=11 // pred_check
        %p432 = pneg %p112
      $region22: #{video_clip_forward.6} parent=11 // pred_check_branch
        %434 = sbr.rel (%p432) target = $region24
      $region23: #{video_clip_forward.6} parent=11 // pred_region
        _
      $region24: #{video_clip_forward.6} parent=11 // pred_fallthru
        _
      // Predicated region
      $region25: #{video_clip_forward.6} parent=11 // pred_check
        %p435 = pneg %p133
      $region26: #{video_clip_forward.6} parent=11 // pred_check_branch
        %437 = sbr.rel (%p435) target = $region28
      $region27: #{video_clip_forward.6} parent=11 // pred_region
        _
      $region28: #{video_clip_forward.6} parent=11 // pred_fallthru
        _
      // Predicated region
      $region29: #{video_clip_forward.6} parent=11 // pred_check
        %p438 = pneg %p154
      $region30: #{video_clip_forward.6} parent=11 // pred_check_branch
        %440 = sbr.rel (%p438) target = $region32
      $region31: #{video_clip_forward.6} parent=11 // pred_region
        _
      $region32: #{video_clip_forward.6} parent=11 // pred_fallthru
        _
      // Predicated region
      $region33: #{video_clip_forward.6} parent=11 // pred_check
        %p441 = pneg %p175
      $region34: #{video_clip_forward.6} parent=11 // pred_check_branch
        %443 = sbr.rel (%p441) target = $region36
      $region35: #{video_clip_forward.6} parent=11 // pred_region
        _
      $region36: #{video_clip_forward.6} parent=11 // pred_fallthru
        _
      // Predicated region
      $region37: #{video_clip_forward.6} parent=11 // pred_check
        %p444 = pneg %p196
      $region38: #{video_clip_forward.6} parent=11 // pred_check_branch
        %446 = sbr.rel (%p444) target = $region40
      $region39: #{video_clip_forward.6} parent=11 // pred_region
        _
      $region40: #{video_clip_forward.6} parent=11 // pred_fallthru
        _
      // Predicated region
      $region41: #{video_clip_forward.6} parent=11 // pred_check
        %p447 = pneg %p217
      $region42: #{video_clip_forward.6} parent=11 // pred_check_branch
        %449 = sbr.rel (%p447) target = $region44
      $region43: #{video_clip_forward.6} parent=11 // pred_region
        _
      $region44: #{video_clip_forward.6} parent=11 // pred_fallthru
        _
      // Predicated region
      $region45: #{video_clip_forward.6} parent=11 // pred_check
        %p450 = pneg %p238
      $region46: #{video_clip_forward.6} parent=11 // pred_check_branch
        %452 = sbr.rel (%p450) target = $region48
      $region47: #{video_clip_forward.6} parent=11 // pred_region
        _
      $region48: #{video_clip_forward.6} parent=11 // pred_fallthru
        _
      // Predicated region
      $region49: #{video_clip_forward.6} parent=11 // pred_check
        %p453 = pneg %p259
      $region50: #{video_clip_forward.6} parent=11 // pred_check_branch
        %455 = sbr.rel (%p453) target = $region52
      $region51: #{video_clip_forward.6} parent=11 // pred_region
        _
      $region52: #{video_clip_forward.6} parent=11 // pred_fallthru
        _
      // Predicated region
      $region53: #{video_clip_forward.6} parent=11 // pred_check
        %p456 = pneg %p280
      $region54: #{video_clip_forward.6} parent=11 // pred_check_branch
        %458 = sbr.rel (%p456) target = $region56
      $region55: #{video_clip_forward.6} parent=11 // pred_region
        _
      $region56: #{video_clip_forward.6} parent=11 // pred_fallthru
        _
      // Predicated region
      $region57: #{video_clip_forward.6} parent=11 // pred_check
        %p459 = pneg %p301
      $region58: #{video_clip_forward.6} parent=11 // pred_check_branch
        %461 = sbr.rel (%p459) target = $region60
      $region59: #{video_clip_forward.6} parent=11 // pred_region
        _
      $region60: #{video_clip_forward.6} parent=11 // pred_fallthru
        _
      // Predicated region
      $region61: #{video_clip_forward.6} parent=11 // pred_check
        %p462 = pneg %p322
      $region62: #{video_clip_forward.6} parent=11 // pred_check_branch
        %464 = sbr.rel (%p462) target = $region64
      $region63: #{video_clip_forward.6} parent=11 // pred_region
        _
      $region64: #{video_clip_forward.6} parent=11 // pred_fallthru
        _
      // Predicated region
      $region65: #{video_clip_forward.6} parent=11 // pred_check
        %p465 = pneg %p343
      $region66: #{video_clip_forward.6} parent=11 // pred_check_branch
        %467 = sbr.rel (%p465) target = $region68
      $region67: #{video_clip_forward.6} parent=11 // pred_region
        _
      $region68: #{video_clip_forward.6} parent=11 // pred_fallthru
        _
      // Predicated region
      $region69: #{video_clip_forward.6} parent=11 // pred_check
        %p468 = pneg %p364
      $region70: #{video_clip_forward.6} parent=11 // pred_check_branch
        %470 = sbr.rel (%p468) target = $region72
      $region71: #{video_clip_forward.6} parent=11 // pred_region
        _
      $region72: #{video_clip_forward.6} parent=11 // pred_fallthru
        _
      // Predicated region
      $region73: #{video_clip_forward.6} parent=11 // pred_check
        %p471 = pneg %p385
      $region74: #{video_clip_forward.6} parent=11 // pred_check_branch
        %473 = sbr.rel (%p471) target = $region76
      $region75: #{video_clip_forward.6} parent=11 // pred_region
        _
      $region76: #{video_clip_forward.6} parent=11 // pred_fallthru
        _
    $region12: #{video_clip_forward.6} parent=5 // pred_fallthru
      _
    %p474 = scmp.lt.s32.totalorder %s23, 2
    // Predicated region
    $region77: #{video_clip_forward.6} parent=5 // pred_check
      %p475 = pneg %p474
    $region78: #{video_clip_forward.6} parent=5 // pred_check_branch
      %477 = sbr.rel (%p475) target = $region80
    $region79: #{video_clip_forward.6} parent=5 // pred_region
      // Predicated region
      $region81: #{video_clip_forward.6} parent=79 // pred_check
        %p478 = pneg %p43
      $region82: #{video_clip_forward.6} parent=79 // pred_check_branch
        %480 = sbr.rel (%p478) target = $region84
      $region83: #{video_clip_forward.6} parent=79 // pred_region
        %p481 = scmp.lt.s32.totalorder %s23, 1
        %s482 = scalar_select %p481, %s23, 1
        %s483 = smul.addr %s482, 4
        %s484 = scalar_lea.vmem %s0, %s483
      $region84: #{video_clip_forward.6} parent=79 // pred_fallthru
        _
    $region80: #{video_clip_forward.6} parent=5 // pred_fallthru
      _
    %p485 = scmp.le.s32.totalorder 1, %s23
    %p486 = scmp.lt.s32.totalorder %s23, 3
    %p487 = pnand %p485, %p486
    %p488 = pneg %p487
    // Predicated region
    $region85: #{video_clip_forward.6} parent=5 // pred_check
      _
    $region86: #{video_clip_forward.6} parent=5 // pred_check_branch
      %490 = sbr.rel (%p487) target = $region88
    $region87: #{video_clip_forward.6} parent=5 // pred_region
      %s491 = ssub.s32 %s23, 1
      %p492 = scmp.lt.s32.totalorder %s28, 1
      %s493 = scalar_select %p492, %s28, 1
      %s494 = smul.addr %s493, 4
      %s495 = scalar_lea.vmem %s0, %s494
      %p496 = pneg %p49
      %p497 = pneg %p46
      %p498 = pneg %p70
      %p499 = pneg %p67
      %p500 = pneg %p91
      %p501 = pneg %p88
      %p502 = pneg %p112
      %p503 = pneg %p109
      %p504 = pneg %p133
      %p505 = pneg %p130
      %p506 = pneg %p154
      %p507 = pneg %p151
      %p508 = pneg %p175
      %p509 = pneg %p172
      %p510 = pneg %p196
      %p511 = pneg %p193
      %p512 = pneg %p217
      %p513 = pneg %p214
      %p514 = pneg %p238
      %p515 = pneg %p235
      %p516 = pneg %p259
      %p517 = pneg %p256
      %p518 = pneg %p280
      %p519 = pneg %p277
      %p520 = pneg %p301
      %p521 = pneg %p298
      %p522 = pneg %p322
      %p523 = pneg %p319
      %p524 = pneg %p343
      %p525 = pneg %p340
      %p526 = pneg %p364
      %p527 = pneg %p361
      %p528 = pneg %p385
      %p529 = pneg %p382
      %p530 = pneg %p411
      %p531 = pneg %p408
      %p532 = scmp.lt.s32.totalorder %s28, 1
      %s533 = scalar_select %p532, %s28, 1
      %s534 = scalar_lea.vmem %s17, %s533
      %p535 = scmp.lt.s32.totalorder %s28, 1
      %s536 = scalar_select %p535, %s28, 1
      %s537 = smul.addr %s536, 4
      %s538 = scalar_lea.vmem %s0, %s537
      %p539 = scmp.lt.s32.totalorder %s28, 1
      %s540 = scalar_select %p539, %s28, 1
      %s541 = scalar_lea.vmem %s17, %s540
      %v543 = vld [vmem:[%s1] sm:$0x1]
      %v544 = vld [vmem:[%s538] sm:$0x7]
      %v546 = vrot.slane %v544, 7
      %vm548 = vcmask 1040384
      %v549 = vsel %vm548, %v543, %v546
      %v550 = vld [vmem:[%s2] sm:$0xf]
      %v551 = vadd.f32 %v549, %v550
      %v552 = vld [vmem:[%s5] sm:$0x1]
      %v553 = vld [vmem:[%s6] sm:$0x1]
      %v554 = vld [vmem:[%s7] sm:$0xff]
      %v555 = vld [vmem:[%s7 + $0x8] sm:$0xff]
      %v556 = vld [vmem:[%s7 + $0x10] sm:$0xff]
      %v557 = vld [vmem:[%s7 + $0x18] sm:$0xff]
      %v558 = vld [vmem:[%s8] sm:$0x1]
      %v559 = vld [vmem:[%s9] sm:$0xff]
      %v560 = vld [vmem:[%s9 + $0x8] sm:$0xff]
      %v561 = vld [vmem:[%s9 + $0x10] sm:$0xff]
      %v562 = vld [vmem:[%s9 + $0x18] sm:$0xff]
      %v563 = vld [vmem:[%s10] sm:$0x1]
      %v564 = vld [vmem:[%s11] sm:$0x1]
      %v565 = vld [vmem:[%s12] sm:$0x1]
      %v566 = vld [vmem:[%s13] sm:$0xff]
      %v567 = vld [vmem:[%s13 + $0x8] sm:$0xff]
      %v568 = vld [vmem:[%s13 + $0x10] sm:$0xff]
      %v569 = vld [vmem:[%s13 + $0x18] sm:$0xff]
      %v570 = vld [vmem:[%s14] sm:$0x1]
      %v571 = vld [vmem:[%s15] sm:$0xff]
      %v572 = vld [vmem:[%s15 + $0x8] sm:$0xff]
      %v573 = vld [vmem:[%s15 + $0x10] sm:$0xff]
      %v574 = vld [vmem:[%s15 + $0x18] sm:$0xff]
      %v575 = vld [vmem:[%s15 + $0x20] sm:$0xff]
      %v576 = vld [vmem:[%s15 + $0x28] sm:$0xff]
      %v577 = vld [vmem:[%s15 + $0x30] sm:$0xff]
      %v578 = vld [vmem:[%s15 + $0x38] sm:$0xff]
      %v579 = vld [vmem:[%s15 + $0x40] sm:$0xff]
      %v580 = vld [vmem:[%s15 + $0x48] sm:$0xff]
      %v581 = vld [vmem:[%s15 + $0x50] sm:$0xff]
      %v582 = vld [vmem:[%s15 + $0x58] sm:$0xff]
      %v583 = vld [vmem:[%s15 + $0x60] sm:$0xff]
      %v584 = vld [vmem:[%s15 + $0x68] sm:$0xff]
      %v585 = vld [vmem:[%s15 + $0x70] sm:$0xff]
      %v586 = vld [vmem:[%s15 + $0x78] sm:$0xff]
      %v587 = vld [vmem:[%s16] sm:$0x1]
      %vm588 = vcmask 257024
      %v589 = vsel %vm588, %v551, 0.0
      %590 = vadd.xlane.f32.xlu0 %v589
      %v591 = vpop.xlane.xlu0 %590
      %v592 = vrcp.pop 32.0
      %v593 = vmul.f32 %v591, %v592
      %v594 = vsub.f32 %v551, %v593
      %v595 = vmul.f32 %v594, %v594
      %v596 = vsel %vm588, %v595, 0.0
      %597 = vadd.xlane.f32.xlu0 %v596
      %v598 = vpop.xlane.xlu0 %597
      %v599 = vmul.f32 %v598, %v592
      %v600 = vadd.f32 %v599, 1e-05
      %v601 = vrsqrt.pop %v600
      %v602 = vmul.f32 %v594, %v601
      %v604 = vlaneseq
      %v605 = vshrl.u32 %v604, 7
      %v606 = vsub.s32 0, %v605
      %v607 = vrot.slane %v552, %v606
      %v609 = vmul.f32 %v602, %v607
      %v611 = vlaneseq
      %v612 = vshrl.u32 %v611, 7
      %v613 = vsub.s32 0, %v612
      %v614 = vrot.slane %v553, %v613
      %v616 = vadd.f32 %v609, %v614
      %v617 = vpack.c.bf16 %v616, %v616
      %v618 = vpack.c.bf16 %v555, %v554
      %v619 = vpack.c.bf16 %v557, %v556
      %v621 = vlaneseq
      %v622 = vshrl.u32 %v621, 7
      %v623 = vsub.s32 0, %v622
      %v624 = vrot.slane %v558, %v623
      %vm626 = vcmask 261120
      %v628 = vsel %vm626, %v617, 0
      %630 = vmatprep.subr.bf16.mxu0 0
      %631 = vmatpush1.bf16.msra.mxu0 %v618
      %632 = vmatprep.subr.bf16.mxu0 0
      %633 = vmatpush1.bf16.msra.mxu0 %v619
      %634 = vmatprep.subr.bf16.mxu0 0
      %635 = vmatpush1.bf16.msra.mxu0 0
      %636 = vmatprep.subr.bf16.mxu0 0
      %637 = vmatpush1.bf16.msra.mxu0 0
      %638 = vmatprep.subr.bf16.mxu0 0
      %639 = vmatpush1.bf16.msra.mxu0 0
      %640 = vmatprep.subr.bf16.mxu0 0
      %641 = vmatpush1.bf16.msra.mxu0 0
      %642 = vmatprep.subr.bf16.mxu0 0
      %643 = vmatpush1.bf16.msra.mxu0 0
      %644 = vmatprep.subr.bf16.mxu0 0
      %645 = vmatpush1.bf16.msra.mxu0 0
      %646 = vmatprep.subr.bf16.mxu0 0
      %647 = vmatpush1.bf16.msra.mxu0 0
      %648 = vmatprep.subr.bf16.mxu0 0
      %649 = vmatpush1.bf16.msra.mxu0 0
      %650 = vmatprep.subr.bf16.mxu0 0
      %651 = vmatpush1.bf16.msra.mxu0 0
      %652 = vmatprep.subr.bf16.mxu0 0
      %653 = vmatpush1.bf16.msra.mxu0 0
      %654 = vmatprep.subr.bf16.mxu0 0
      %655 = vmatpush1.bf16.msra.mxu0 0
      %656 = vmatprep.subr.bf16.mxu0 0
      %657 = vmatpush1.bf16.msra.mxu0 0
      %658 = vmatprep.subr.bf16.mxu0 0
      %659 = vmatpush1.bf16.msra.mxu0 0
      %660 = vmatprep.subr.bf16.mxu0 0
      %661 = vmatpush1.bf16.msra.mxu0 0
      %662 = vmatprep.mubr.bf16.mxu0 0
      %663 = vmatmul.mubr.bf16.gmra.mrb[0].mxu0 %v628
      %v664 = vpop.f32.mrb[0].mxu0
      %v665 = vadd.f32 %v624, %v664
      %v666 = vpop.f32.mrb[0].mxu0
      %v667 = vpop.f32.mrb[0].mxu0
      %v668 = vpop.f32.mrb[0].mxu0
      %669 = vdwg.mxu0
      %671 = vrot.lane.b32.xlu0 %v665, 96
      %v672 = vpop.permute.xlu0 %671
      %674 = vxpose.xlu0.b32.start [1/16] %v672, 128
      %675 = vxpose.xlu0.b32.cont [2/16] 0.0, 128
      %676 = vxpose.xlu0.b32.cont [3/16] 0.0, 128
      %677 = vxpose.xlu0.b32.cont [4/16] 0.0, 128
      %678 = vxpose.xlu0.b32.cont [5/16] 0.0, 128
      %679 = vxpose.xlu0.b32.cont [6/16] 0.0, 128
      %680 = vxpose.xlu0.b32.cont [7/16] 0.0, 128
      %681 = vxpose.xlu0.b32.cont [8/16] 0.0, 128
      %682 = vxpose.xlu0.b32.cont [9/16] 0.0, 128
      %683 = vxpose.xlu0.b32.cont [10/16] 0.0, 128
      %684 = vxpose.xlu0.b32.cont [11/16] 0.0, 128
      %685 = vxpose.xlu0.b32.cont [12/16] 0.0, 128
      %686 = vxpose.xlu0.b32.cont [13/16] 0.0, 128
      %687 = vxpose.xlu0.b32.cont [14/16] 0.0, 128
      %688 = vxpose.xlu0.b32.cont [15/16] 0.0, 128
      %689 = vxpose.xlu0.b32.end [16/16] 0.0, 128
      %v690 = vpop.trf.xlu0
      %v691 = vpop.trf.xlu0
      %v692 = vpop.trf.xlu0
      %v693 = vpop.trf.xlu0
      %v694 = vpop.trf.xlu0
      %v695 = vpop.trf.xlu0
      %v696 = vpop.trf.xlu0
      %v697 = vpop.trf.xlu0
      %v698 = vpop.trf.xlu0
      %v699 = vpop.trf.xlu0
      %v700 = vpop.trf.xlu0
      %v701 = vpop.trf.xlu0
      %v702 = vpop.trf.xlu0
      %v703 = vpop.trf.xlu0
      %v704 = vpop.trf.xlu0
      %v705 = vpop.trf.xlu0
      %v706 = vpack.c.bf16 %v665, %v665
      %v707 = vpack.c.bf16 %v690, %v690
      %vm708 = vcmask 64512
      %v710 = vsel %vm708, %v706, 0
      %vm712 = vcmask 1043456
      %v714 = vsel %vm712, %v707, 0
      %716 = vmatprep.subr.bf16.mxu0 0
      %717 = vmatpush1.bf16.msra.mxu0 %v714
      %718 = vmatprep.subr.bf16.mxu0 0
      %719 = vmatpush1.bf16.msra.mxu0 0
      %720 = vmatprep.subr.bf16.mxu0 0
      %721 = vmatpush1.bf16.msra.mxu0 0
      %722 = vmatprep.subr.bf16.mxu0 0
      %723 = vmatpush1.bf16.msra.mxu0 0
      %724 = vmatprep.subr.bf16.mxu0 0
      %725 = vmatpush1.bf16.msra.mxu0 0
      %726 = vmatprep.subr.bf16.mxu0 0
      %727 = vmatpush1.bf16.msra.mxu0 0
      %728 = vmatprep.subr.bf16.mxu0 0
      %729 = vmatpush1.bf16.msra.mxu0 0
      %730 = vmatprep.subr.bf16.mxu0 0
      %731 = vmatpush1.bf16.msra.mxu0 0
      %732 = vmatprep.subr.bf16.mxu0 0
      %733 = vmatpush1.bf16.msra.mxu0 0
      %734 = vmatprep.subr.bf16.mxu0 0
      %735 = vmatpush1.bf16.msra.mxu0 0
      %736 = vmatprep.subr.bf16.mxu0 0
      %737 = vmatpush1.bf16.msra.mxu0 0
      %738 = vmatprep.subr.bf16.mxu0 0
      %739 = vmatpush1.bf16.msra.mxu0 0
      %740 = vmatprep.subr.bf16.mxu0 0
      %741 = vmatpush1.bf16.msra.mxu0 0
      %742 = vmatprep.subr.bf16.mxu0 0
      %743 = vmatpush1.bf16.msra.mxu0 0
      %744 = vmatprep.subr.bf16.mxu0 0
      %745 = vmatpush1.bf16.msra.mxu0 0
      %746 = vmatprep.subr.bf16.mxu0 0
      %747 = vmatpush1.bf16.msra.mxu0 0
      %748 = vmatprep.mubr.bf16.mxu0 0
      %749 = vmatmul.mubr.bf16.gmra.mrb[0].mxu0 %v710
      %v750 = vpop.f32.mrb[0].mxu0
      %v751 = vadd.f32 0.0, %v750
      %v752 = vpop.f32.mrb[0].mxu0
      %v753 = vpop.f32.mrb[0].mxu0
      %v754 = vpop.f32.mrb[0].mxu0
      %755 = vdwg.mxu0
      %v756 = vmul.f32 %v751, 0.35355338
      %vm757 = vcmask 27648
      %v758 = vsel %vm757, %v756, -inf
      %759 = vmax.xlane.f32.xlu0 %v758
      %v760 = vpop.xlane.xlu0 %759
      %v761 = vsub.f32 %v756, %v760
      %v762 = vmul.f32 %v761, 1.442695
      %v763 = vpow.pop %v762
      %v764 = vsel %vm757, %v763, 0.0
      %765 = vadd.xlane.f32.xlu0 %v764
      %v766 = vpop.xlane.xlu0 %765
      %v767 = vrcp.pop %v766
      %v768 = vmul.f32 %v763, %v767
      %v769 = vpack.c.bf16 %v768, %v768
      %771 = vrot.lane.b32.xlu0 %v706, 64
      %v772 = vpop.permute.xlu0 %771
      %vm773 = vcmask 31744
      %v775 = vsel %vm773, %v769, 0
      %vm777 = vcmask 1041408
      %v779 = vsel %vm777, %v772, 0
      %781 = vmatprep.subr.bf16.mxu0 0
      %782 = vmatpush1.bf16.msra.mxu0 %v779
      %783 = vmatprep.subr.bf16.mxu0 0
      %784 = vmatpush1.bf16.msra.mxu0 0
      %785 = vmatprep.subr.bf16.mxu0 0
      %786 = vmatpush1.bf16.msra.mxu0 0
      %787 = vmatprep.subr.bf16.mxu0 0
      %788 = vmatpush1.bf16.msra.mxu0 0
      %789 = vmatprep.subr.bf16.mxu0 0
      %790 = vmatpush1.bf16.msra.mxu0 0
      %791 = vmatprep.subr.bf16.mxu0 0
      %792 = vmatpush1.bf16.msra.mxu0 0
      %793 = vmatprep.subr.bf16.mxu0 0
      %794 = vmatpush1.bf16.msra.mxu0 0
      %795 = vmatprep.subr.bf16.mxu0 0
      %796 = vmatpush1.bf16.msra.mxu0 0
      %797 = vmatprep.subr.bf16.mxu0 0
      %798 = vmatpush1.bf16.msra.mxu0 0
      %799 = vmatprep.subr.bf16.mxu0 0
      %800 = vmatpush1.bf16.msra.mxu0 0
      %801 = vmatprep.subr.bf16.mxu0 0
      %802 = vmatpush1.bf16.msra.mxu0 0
      %803 = vmatprep.subr.bf16.mxu0 0
      %804 = vmatpush1.bf16.msra.mxu0 0
      %805 = vmatprep.subr.bf16.mxu0 0
      %806 = vmatpush1.bf16.msra.mxu0 0
      %807 = vmatprep.subr.bf16.mxu0 0
      %808 = vmatpush1.bf16.msra.mxu0 0
      %809 = vmatprep.subr.bf16.mxu0 0
      %810 = vmatpush1.bf16.msra.mxu0 0
      %811 = vmatprep.subr.bf16.mxu0 0
      %812 = vmatpush1.bf16.msra.mxu0 0
      %813 = vmatprep.mubr.bf16.mxu0 0
      %814 = vmatmul.mubr.bf16.gmra.mrb[0].mxu0 %v775
      %v815 = vpop.f32.mrb[0].mxu0
      %v816 = vadd.f32 0.0, %v815
      %v817 = vpop.f32.mrb[0].mxu0
      %v818 = vpop.f32.mrb[0].mxu0
      %v819 = vpop.f32.mrb[0].mxu0
      %820 = vdwg.mxu0
      %821 = vrot.lane.b32.xlu0 %v665, 88
      %v822 = vpop.permute.xlu0 %821
      %824 = vxpose.xlu0.b32.start [1/16] %v822, 128
      %825 = vxpose.xlu0.b32.cont [2/16] 0.0, 128
      %826 = vxpose.xlu0.b32.cont [3/16] 0.0, 128
      %827 = vxpose.xlu0.b32.cont [4/16] 0.0, 128
      %828 = vxpose.xlu0.b32.cont [5/16] 0.0, 128
      %829 = vxpose.xlu0.b32.cont [6/16] 0.0, 128
      %830 = vxpose.xlu0.b32.cont [7/16] 0.0, 128
      %831 = vxpose.xlu0.b32.cont [8/16] 0.0, 128
      %832 = vxpose.xlu0.b32.cont [9/16] 0.0, 128
      %833 = vxpose.xlu0.b32.cont [10/16] 0.0, 128
      %834 = vxpose.xlu0.b32.cont [11/16] 0.0, 128
      %835 = vxpose.xlu0.b32.cont [12/16] 0.0, 128
      %836 = vxpose.xlu0.b32.cont [13/16] 0.0, 128
      %837 = vxpose.xlu0.b32.cont [14/16] 0.0, 128
      %838 = vxpose.xlu0.b32.cont [15/16] 0.0, 128
      %839 = vxpose.xlu0.b32.end [16/16] 0.0, 128
      %v840 = vpop.trf.xlu0
      %v841 = vpop.trf.xlu0
      %v842 = vpop.trf.xlu0
      %v843 = vpop.trf.xlu0
      %v844 = vpop.trf.xlu0
      %v845 = vpop.trf.xlu0
      %v846 = vpop.trf.xlu0
      %v847 = vpop.trf.xlu0
      %v848 = vpop.trf.xlu0
      %v849 = vpop.trf.xlu0
      %v850 = vpop.trf.xlu0
      %v851 = vpop.trf.xlu0
      %v852 = vpop.trf.xlu0
      %v853 = vpop.trf.xlu0
      %v854 = vpop.trf.xlu0
      %v855 = vpop.trf.xlu0
      %v856 = vpack.c.bf16 %v840, %v840
      %857 = vrot.lane.b32.xlu0 %v706, 120
      %v858 = vpop.permute.xlu0 %857
      %v860 = vsel %vm708, %v858, 0
      %v863 = vsel %vm712, %v856, 0
      %865 = vmatprep.subr.bf16.mxu0 0
      %866 = vmatpush1.bf16.msra.mxu0 %v863
      %867 = vmatprep.subr.bf16.mxu0 0
      %868 = vmatpush1.bf16.msra.mxu0 0
      %869 = vmatprep.subr.bf16.mxu0 0
      %870 = vmatpush1.bf16.msra.mxu0 0
      %871 = vmatprep.subr.bf16.mxu0 0
      %872 = vmatpush1.bf16.msra.mxu0 0
      %873 = vmatprep.subr.bf16.mxu0 0
      %874 = vmatpush1.bf16.msra.mxu0 0
      %875 = vmatprep.subr.bf16.mxu0 0
      %876 = vmatpush1.bf16.msra.mxu0 0
      %877 = vmatprep.subr.bf16.mxu0 0
      %878 = vmatpush1.bf16.msra.mxu0 0
      %879 = vmatprep.subr.bf16.mxu0 0
      %880 = vmatpush1.bf16.msra.mxu0 0
      %881 = vmatprep.subr.bf16.mxu0 0
      %882 = vmatpush1.bf16.msra.mxu0 0
      %883 = vmatprep.subr.bf16.mxu0 0
      %884 = vmatpush1.bf16.msra.mxu0 0
      %885 = vmatprep.subr.bf16.mxu0 0
      %886 = vmatpush1.bf16.msra.mxu0 0
      %887 = vmatprep.subr.bf16.mxu0 0
      %888 = vmatpush1.bf16.msra.mxu0 0
      %889 = vmatprep.subr.bf16.mxu0 0
      %890 = vmatpush1.bf16.msra.mxu0 0
      %891 = vmatprep.subr.bf16.mxu0 0
      %892 = vmatpush1.bf16.msra.mxu0 0
      %893 = vmatprep.subr.bf16.mxu0 0
      %894 = vmatpush1.bf16.msra.mxu0 0
      %895 = vmatprep.subr.bf16.mxu0 0
      %896 = vmatpush1.bf16.msra.mxu0 0
      %897 = vmatprep.mubr.bf16.mxu0 0
      %898 = vmatmul.mubr.bf16.gmra.mrb[0].mxu0 %v860
      %v899 = vpop.f32.mrb[0].mxu0
      %v900 = vadd.f32 0.0, %v899
      %v901 = vpop.f32.mrb[0].mxu0
      %v902 = vpop.f32.mrb[0].mxu0
      %v903 = vpop.f32.mrb[0].mxu0
      %904 = vdwg.mxu0
      %v905 = vmul.f32 %v900, 0.35355338
      %v906 = vsel %vm757, %v905, -inf
      %907 = vmax.xlane.f32.xlu0 %v906
      %v908 = vpop.xlane.xlu0 %907
      %v909 = vsub.f32 %v905, %v908
      %v910 = vmul.f32 %v909, 1.442695
      %v911 = vpow.pop %v910
      %v912 = vsel %vm757, %v911, 0.0
      %913 = vadd.xlane.f32.xlu0 %v912
      %v914 = vpop.xlane.xlu0 %913
      %v915 = vrcp.pop %v914
      %v916 = vmul.f32 %v911, %v915
      %v917 = vpack.c.bf16 %v916, %v916
      %918 = vrot.lane.b32.xlu0 %v706, 56
      %v919 = vpop.permute.xlu0 %918
      %v921 = vsel %vm773, %v917, 0
      %v924 = vsel %vm777, %v919, 0
      %926 = vmatprep.subr.bf16.mxu0 0
      %927 = vmatpush1.bf16.msra.mxu0 %v924
      %928 = vmatprep.subr.bf16.mxu0 0
      %929 = vmatpush1.bf16.msra.mxu0 0
      %930 = vmatprep.subr.bf16.mxu0 0
      %931 = vmatpush1.bf16.msra.mxu0 0
      %932 = vmatprep.subr.bf16.mxu0 0
      %933 = vmatpush1.bf16.msra.mxu0 0
      %934 = vmatprep.subr.bf16.mxu0 0
      %935 = vmatpush1.bf16.msra.mxu0 0
      %936 = vmatprep.subr.bf16.mxu0 0
      %937 = vmatpush1.bf16.msra.mxu0 0
      %938 = vmatprep.subr.bf16.mxu0 0
      %939 = vmatpush1.bf16.msra.mxu0 0
      %940 = vmatprep.subr.bf16.mxu0 0
      %941 = vmatpush1.bf16.msra.mxu0 0
      %942 = vmatprep.subr.bf16.mxu0 0
      %943 = vmatpush1.bf16.msra.mxu0 0
      %944 = vmatprep.subr.bf16.mxu0 0
      %945 = vmatpush1.bf16.msra.mxu0 0
      %946 = vmatprep.subr.bf16.mxu0 0
      %947 = vmatpush1.bf16.msra.mxu0 0
      %948 = vmatprep.subr.bf16.mxu0 0
      %949 = vmatpush1.bf16.msra.mxu0 0
      %950 = vmatprep.subr.bf16.mxu0 0
      %951 = vmatpush1.bf16.msra.mxu0 0
      %952 = vmatprep.subr.bf16.mxu0 0
      %953 = vmatpush1.bf16.msra.mxu0 0
      %954 = vmatprep.subr.bf16.mxu0 0
      %955 = vmatpush1.bf16.msra.mxu0 0
      %956 = vmatprep.subr.bf16.mxu0 0
      %957 = vmatpush1.bf16.msra.mxu0 0
      %958 = vmatprep.mubr.bf16.mxu0 0
      %959 = vmatmul.mubr.bf16.gmra.mrb[0].mxu0 %v921
      %v960 = vpop.f32.mrb[0].mxu0
      %v961 = vadd.f32 0.0, %v960
      %v962 = vpop.f32.mrb[0].mxu0
      %v963 = vpop.f32.mrb[0].mxu0
      %v964 = vpop.f32.mrb[0].mxu0
      %965 = vdwg.mxu0
      %966 = vrot.lane.b32.xlu0 %v665, 80
      %v967 = vpop.permute.xlu0 %966
      %969 = vxpose.xlu0.b32.start [1/16] %v967, 128
      %970 = vxpose.xlu0.b32.cont [2/16] 0.0, 128
      %971 = vxpose.xlu0.b32.cont [3/16] 0.0, 128
      %972 = vxpose.xlu0.b32.cont [4/16] 0.0, 128
      %973 = vxpose.xlu0.b32.cont [5/16] 0.0, 128
      %974 = vxpose.xlu0.b32.cont [6/16] 0.0, 128
      %975 = vxpose.xlu0.b32.cont [7/16] 0.0, 128
      %976 = vxpose.xlu0.b32.cont [8/16] 0.0, 128
      %977 = vxpose.xlu0.b32.cont [9/16] 0.0, 128
      %978 = vxpose.xlu0.b32.cont [10/16] 0.0, 128
      %979 = vxpose.xlu0.b32.cont [11/16] 0.0, 128
      %980 = vxpose.xlu0.b32.cont [12/16] 0.0, 128
      %981 = vxpose.xlu0.b32.cont [13/16] 0.0, 128
      %982 = vxpose.xlu0.b32.cont [14/16] 0.0, 128
      %983 = vxpose.xlu0.b32.cont [15/16] 0.0, 128
      %984 = vxpose.xlu0.b32.end [16/16] 0.0, 128
      %v985 = vpop.trf.xlu0
      %v986 = vpop.trf.xlu0
      %v987 = vpop.trf.xlu0
      %v988 = vpop.trf.xlu0
      %v989 = vpop.trf.xlu0
      %v990 = vpop.trf.xlu0
      %v991 = vpop.trf.xlu0
      %v992 = vpop.trf.xlu0
      %v993 = vpop.trf.xlu0
      %v994 = vpop.trf.xlu0
      %v995 = vpop.trf.xlu0
      %v996 = vpop.trf.xlu0
      %v997 = vpop.trf.xlu0
      %v998 = vpop.trf.xlu0
      %v999 = vpop.trf.xlu0
      %v1000 = vpop.trf.xlu0
      %v1001 = vpack.c.bf16 %v985, %v985
      %1002 = vrot.lane.b32.xlu0 %v706, 112
      %v1003 = vpop.permute.xlu0 %1002
      %v1005 = vsel %vm708, %v1003, 0
      %v1008 = vsel %vm712, %v1001, 0
      %1010 = vmatprep.subr.bf16.mxu0 0
      %1011 = vmatpush1.bf16.msra.mxu0 %v1008
      %1012 = vmatprep.subr.bf16.mxu0 0
      %1013 = vmatpush1.bf16.msra.mxu0 0
      %1014 = vmatprep.subr.bf16.mxu0 0
      %1015 = vmatpush1.bf16.msra.mxu0 0
      %1016 = vmatprep.subr.bf16.mxu0 0
      %1017 = vmatpush1.bf16.msra.mxu0 0
      %1018 = vmatprep.subr.bf16.mxu0 0
      %1019 = vmatpush1.bf16.msra.mxu0 0
      %1020 = vmatprep.subr.bf16.mxu0 0
      %1021 = vmatpush1.bf16.msra.mxu0 0
      %1022 = vmatprep.subr.bf16.mxu0 0
      %1023 = vmatpush1.bf16.msra.mxu0 0
      %1024 = vmatprep.subr.bf16.mxu0 0
      %1025 = vmatpush1.bf16.msra.mxu0 0
      %1026 = vmatprep.subr.bf16.mxu0 0
      %1027 = vmatpush1.bf16.msra.mxu0 0
      %1028 = vmatprep.subr.bf16.mxu0 0
      %1029 = vmatpush1.bf16.msra.mxu0 0
      %1030 = vmatprep.subr.bf16.mxu0 0
      %1031 = vmatpush1.bf16.msra.mxu0 0
      %1032 = vmatprep.subr.bf16.mxu0 0
      %1033 = vmatpush1.bf16.msra.mxu0 0
      %1034 = vmatprep.subr.bf16.mxu0 0
      %1035 = vmatpush1.bf16.msra.mxu0 0
      %1036 = vmatprep.subr.bf16.mxu0 0
      %1037 = vmatpush1.bf16.msra.mxu0 0
      %1038 = vmatprep.subr.bf16.mxu0 0
      %1039 = vmatpush1.bf16.msra.mxu0 0
      %1040 = vmatprep.subr.bf16.mxu0 0
      %1041 = vmatpush1.bf16.msra.mxu0 0
      %1042 = vmatprep.mubr.bf16.mxu0 0
      %1043 = vmatmul.mubr.bf16.gmra.mrb[0].mxu0 %v1005
      %v1044 = vpop.f32.mrb[0].mxu0
      %v1045 = vadd.f32 0.0, %v1044
      %v1046 = vpop.f32.mrb[0].mxu0
      %v1047 = vpop.f32.mrb[0].mxu0
      %v1048 = vpop.f32.mrb[0].mxu0
      %1049 = vdwg.mxu0
      %v1050 = vmul.f32 %v1045, 0.35355338
      %v1051 = vsel %vm757, %v1050, -inf
      %1052 = vmax.xlane.f32.xlu0 %v1051
      %v1053 = vpop.xlane.xlu0 %1052
      %v1054 = vsub.f32 %v1050, %v1053
      %v1055 = vmul.f32 %v1054, 1.442695
      %v1056 = vpow.pop %v1055
      %v1057 = vsel %vm757, %v1056, 0.0
      %1058 = vadd.xlane.f32.xlu0 %v1057
      %v1059 = vpop.xlane.xlu0 %1058
      %v1060 = vrcp.pop %v1059
      %v1061 = vmul.f32 %v1056, %v1060
      %v1062 = vpack.c.bf16 %v1061, %v1061
      %1063 = vrot.lane.b32.xlu0 %v706, 48
      %v1064 = vpop.permute.xlu0 %1063
      %v1066 = vsel %vm773, %v1062, 0
      %v1069 = vsel %vm777, %v1064, 0
      %1071 = vmatprep.subr.bf16.mxu0 0
      %1072 = vmatpush1.bf16.msra.mxu0 %v1069
      %1073 = vmatprep.subr.bf16.mxu0 0
      %1074 = vmatpush1.bf16.msra.mxu0 0
      %1075 = vmatprep.subr.bf16.mxu0 0
      %1076 = vmatpush1.bf16.msra.mxu0 0
      %1077 = vmatprep.subr.bf16.mxu0 0
      %1078 = vmatpush1.bf16.msra.mxu0 0
      %1079 = vmatprep.subr.bf16.mxu0 0
      %1080 = vmatpush1.bf16.msra.mxu0 0
      %1081 = vmatprep.subr.bf16.mxu0 0
      %1082 = vmatpush1.bf16.msra.mxu0 0
      %1083 = vmatprep.subr.bf16.mxu0 0
      %1084 = vmatpush1.bf16.msra.mxu0 0
      %1085 = vmatprep.subr.bf16.mxu0 0
      %1086 = vmatpush1.bf16.msra.mxu0 0
      %1087 = vmatprep.subr.bf16.mxu0 0
      %1088 = vmatpush1.bf16.msra.mxu0 0
      %1089 = vmatprep.subr.bf16.mxu0 0
      %1090 = vmatpush1.bf16.msra.mxu0 0
      %1091 = vmatprep.subr.bf16.mxu0 0
      %1092 = vmatpush1.bf16.msra.mxu0 0
      %1093 = vmatprep.subr.bf16.mxu0 0
      %1094 = vmatpush1.bf16.msra.mxu0 0
      %1095 = vmatprep.subr.bf16.mxu0 0
      %1096 = vmatpush1.bf16.msra.mxu0 0
      %1097 = vmatprep.subr.bf16.mxu0 0
      %1098 = vmatpush1.bf16.msra.mxu0 0
      %1099 = vmatprep.subr.bf16.mxu0 0
      %1100 = vmatpush1.bf16.msra.mxu0 0
      %1101 = vmatprep.subr.bf16.mxu0 0
      %1102 = vmatpush1.bf16.msra.mxu0 0
      %1103 = vmatprep.mubr.bf16.mxu0 0
      %1104 = vmatmul.mubr.bf16.gmra.mrb[0].mxu0 %v1066
      %v1105 = vpop.f32.mrb[0].mxu0
      %v1106 = vadd.f32 0.0, %v1105
      %v1107 = vpop.f32.mrb[0].mxu0
      %v1108 = vpop.f32.mrb[0].mxu0
      %v1109 = vpop.f32.mrb[0].mxu0
      %1110 = vdwg.mxu0
      %1111 = vrot.lane.b32.xlu0 %v665, 72
      %v1112 = vpop.permute.xlu0 %1111
      %1114 = vxpose.xlu0.b32.start [1/16] %v1112, 128
      %1115 = vxpose.xlu0.b32.cont [2/16] 0.0, 128
      %1116 = vxpose.xlu0.b32.cont [3/16] 0.0, 128
      %1117 = vxpose.xlu0.b32.cont [4/16] 0.0, 128
      %1118 = vxpose.xlu0.b32.cont [5/16] 0.0, 128
      %1119 = vxpose.xlu0.b32.cont [6/16] 0.0, 128
      %1120 = vxpose.xlu0.b32.cont [7/16] 0.0, 128
      %1121 = vxpose.xlu0.b32.cont [8/16] 0.0, 128
      %1122 = vxpose.xlu0.b32.cont [9/16] 0.0, 128
      %1123 = vxpose.xlu0.b32.cont [10/16] 0.0, 128
      %1124 = vxpose.xlu0.b32.cont [11/16] 0.0, 128
      %1125 = vxpose.xlu0.b32.cont [12/16] 0.0, 128
      %1126 = vxpose.xlu0.b32.cont [13/16] 0.0, 128
      %1127 = vxpose.xlu0.b32.cont [14/16] 0.0, 128
      %1128 = vxpose.xlu0.b32.cont [15/16] 0.0, 128
      %1129 = vxpose.xlu0.b32.end [16/16] 0.0, 128
      %v1130 = vpop.trf.xlu0
      %v1131 = vpop.trf.xlu0
      %v1132 = vpop.trf.xlu0
      %v1133 = vpop.trf.xlu0
      %v1134 = vpop.trf.xlu0
      %v1135 = vpop.trf.xlu0
      %v1136 = vpop.trf.xlu0
      %v1137 = vpop.trf.xlu0
      %v1138 = vpop.trf.xlu0
      %v1139 = vpop.trf.xlu0
      %v1140 = vpop.trf.xlu0
      %v1141 = vpop.trf.xlu0
      %v1142 = vpop.trf.xlu0
      %v1143 = vpop.trf.xlu0
      %v1144 = vpop.trf.xlu0
      %v1145 = vpop.trf.xlu0
      %v1146 = vpack.c.bf16 %v1130, %v1130
      %1147 = vrot.lane.b32.xlu0 %v706, 104
      %v1148 = vpop.permute.xlu0 %1147
      %v1150 = vsel %vm708, %v1148, 0
      %v1153 = vsel %vm712, %v1146, 0
      %1155 = vmatprep.subr.bf16.mxu0 0
      %1156 = vmatpush1.bf16.msra.mxu0 %v1153
      %1157 = vmatprep.subr.bf16.mxu0 0
      %1158 = vmatpush1.bf16.msra.mxu0 0
      %1159 = vmatprep.subr.bf16.mxu0 0
      %1160 = vmatpush1.bf16.msra.mxu0 0
      %1161 = vmatprep.subr.bf16.mxu0 0
      %1162 = vmatpush1.bf16.msra.mxu0 0
      %1163 = vmatprep.subr.bf16.mxu0 0
      %1164 = vmatpush1.bf16.msra.mxu0 0
      %1165 = vmatprep.subr.bf16.mxu0 0
      %1166 = vmatpush1.bf16.msra.mxu0 0
      %1167 = vmatprep.subr.bf16.mxu0 0
      %1168 = vmatpush1.bf16.msra.mxu0 0
      %1169 = vmatprep.subr.bf16.mxu0 0
      %1170 = vmatpush1.bf16.msra.mxu0 0
      %1171 = vmatprep.subr.bf16.mxu0 0
      %1172 = vmatpush1.bf16.msra.mxu0 0
      %1173 = vmatprep.subr.bf16.mxu0 0
      %1174 = vmatpush1.bf16.msra.mxu0 0
      %1175 = vmatprep.subr.bf16.mxu0 0
      %1176 = vmatpush1.bf16.msra.mxu0 0
      %1177 = vmatprep.subr.bf16.mxu0 0
      %1178 = vmatpush1.bf16.msra.mxu0 0
      %1179 = vmatprep.subr.bf16.mxu0 0
      %1180 = vmatpush1.bf16.msra.mxu0 0
      %1181 = vmatprep.subr.bf16.mxu0 0
      %1182 = vmatpush1.bf16.msra.mxu0 0
      %1183 = vmatprep.subr.bf16.mxu0 0
      %1184 = vmatpush1.bf16.msra.mxu0 0
      %1185 = vmatprep.subr.bf16.mxu0 0
      %1186 = vmatpush1.bf16.msra.mxu0 0
      %1187 = vmatprep.mubr.bf16.mxu0 0
      %1188 = vmatmul.mubr.bf16.gmra.mrb[0].mxu0 %v1150
      %v1189 = vpop.f32.mrb[0].mxu0
      %v1190 = vadd.f32 0.0, %v1189
      %v1191 = vpop.f32.mrb[0].mxu0
      %v1192 = vpop.f32.mrb[0].mxu0
      %v1193 = vpop.f32.mrb[0].mxu0
      %1194 = vdwg.mxu0
      %v1195 = vmul.f32 %v1190, 0.35355338
      %v1196 = vsel %vm757, %v1195, -inf
      %1197 = vmax.xlane.f32.xlu0 %v1196
      %v1198 = vpop.xlane.xlu0 %1197
      %v1199 = vsub.f32 %v1195, %v1198
      %v1200 = vmul.f32 %v1199, 1.442695
      %v1201 = vpow.pop %v1200
      %v1202 = vsel %vm757, %v1201, 0.0
      %1203 = vadd.xlane.f32.xlu0 %v1202
      %v1204 = vpop.xlane.xlu0 %1203
      %v1205 = vrcp.pop %v1204
      %v1206 = vmul.f32 %v1201, %v1205
      %v1207 = vpack.c.bf16 %v1206, %v1206
      %1208 = vrot.lane.b32.xlu0 %v706, 40
      %v1209 = vpop.permute.xlu0 %1208
      %v1211 = vsel %vm773, %v1207, 0
      %v1214 = vsel %vm777, %v1209, 0
      %1216 = vmatprep.subr.bf16.mxu0 0
      %1217 = vmatpush1.bf16.msra.mxu0 %v1214
      %1218 = vmatprep.subr.bf16.mxu0 0
      %1219 = vmatpush1.bf16.msra.mxu0 0
      %1220 = vmatprep.subr.bf16.mxu0 0
      %1221 = vmatpush1.bf16.msra.mxu0 0
      %1222 = vmatprep.subr.bf16.mxu0 0
      %1223 = vmatpush1.bf16.msra.mxu0 0
      %1224 = vmatprep.subr.bf16.mxu0 0
      %1225 = vmatpush1.bf16.msra.mxu0 0
      %1226 = vmatprep.subr.bf16.mxu0 0
      %1227 = vmatpush1.bf16.msra.mxu0 0
      %1228 = vmatprep.subr.bf16.mxu0 0
      %1229 = vmatpush1.bf16.msra.mxu0 0
      %1230 = vmatprep.subr.bf16.mxu0 0
      %1231 = vmatpush1.bf16.msra.mxu0 0
      %1232 = vmatprep.subr.bf16.mxu0 0
      %1233 = vmatpush1.bf16.msra.mxu0 0
      %1234 = vmatprep.subr.bf16.mxu0 0
      %1235 = vmatpush1.bf16.msra.mxu0 0
      %1236 = vmatprep.subr.bf16.mxu0 0
      %1237 = vmatpush1.bf16.msra.mxu0 0
      %1238 = vmatprep.subr.bf16.mxu0 0
      %1239 = vmatpush1.bf16.msra.mxu0 0
      %1240 = vmatprep.subr.bf16.mxu0 0
      %1241 = vmatpush1.bf16.msra.mxu0 0
      %1242 = vmatprep.subr.bf16.mxu0 0
      %1243 = vmatpush1.bf16.msra.mxu0 0
      %1244 = vmatprep.subr.bf16.mxu0 0
      %1245 = vmatpush1.bf16.msra.mxu0 0
      %1246 = vmatprep.subr.bf16.mxu0 0
      %1247 = vmatpush1.bf16.msra.mxu0 0
      %1248 = vmatprep.mubr.bf16.mxu0 0
      %1249 = vmatmul.mubr.bf16.gmra.mrb[0].mxu0 %v1211
      %v1250 = vpop.f32.mrb[0].mxu0
      %v1251 = vadd.f32 0.0, %v1250
      %v1252 = vpop.f32.mrb[0].mxu0
      %v1253 = vpop.f32.mrb[0].mxu0
      %v1254 = vpop.f32.mrb[0].mxu0
      %1255 = vdwg.mxu0
      %1257 = vrot.lane.b32.xlu0 %v961, 8
      %v1258 = vpop.permute.xlu0 %1257
      %1261 = vrot.lane.b32.xlu0 %v1106, 16
      %v1262 = vpop.permute.xlu0 %1261
      %1265 = vrot.lane.b32.xlu0 %v1251, 24
      %v1266 = vpop.permute.xlu0 %1265
      %v1268 = vsel %vm708, %v816, %v1258
      %vm1269 = vcmask 130048
      %v1270 = vsel %vm1269, %v1268, %v1262
      %vm1271 = vcmask 195584
      %v1272 = vsel %vm1271, %v1270, %v1266
      %v1273 = vpack.c.bf16 %v1272, %v1272
      %v1274 = vpack.c.bf16 %v560, %v559
      %v1275 = vpack.c.bf16 %v562, %v561
      %v1277 = vlaneseq
      %v1278 = vshrl.u32 %v1277, 7
      %v1279 = vsub.s32 0, %v1278
      %v1280 = vrot.slane %v563, %v1279
      %v1283 = vsel %vm626, %v1273, 0
      %1285 = vmatprep.subr.bf16.mxu0 0
      %1286 = vmatpush1.bf16.msra.mxu0 %v1274
      %1287 = vmatprep.subr.bf16.mxu0 0
      %1288 = vmatpush1.bf16.msra.mxu0 %v1275
      %1289 = vmatprep.subr.bf16.mxu0 0
      %1290 = vmatpush1.bf16.msra.mxu0 0
      %1291 = vmatprep.subr.bf16.mxu0 0
      %1292 = vmatpush1.bf16.msra.mxu0 0
      %1293 = vmatprep.subr.bf16.mxu0 0
      %1294 = vmatpush1.bf16.msra.mxu0 0
      %1295 = vmatprep.subr.bf16.mxu0 0
      %1296 = vmatpush1.bf16.msra.mxu0 0
      %1297 = vmatprep.subr.bf16.mxu0 0
      %1298 = vmatpush1.bf16.msra.mxu0 0
      %1299 = vmatprep.subr.bf16.mxu0 0
      %1300 = vmatpush1.bf16.msra.mxu0 0
      %1301 = vmatprep.subr.bf16.mxu0 0
      %1302 = vmatpush1.bf16.msra.mxu0 0
      %1303 = vmatprep.subr.bf16.mxu0 0
      %1304 = vmatpush1.bf16.msra.mxu0 0
      %1305 = vmatprep.subr.bf16.mxu0 0
      %1306 = vmatpush1.bf16.msra.mxu0 0
      %1307 = vmatprep.subr.bf16.mxu0 0
      %1308 = vmatpush1.bf16.msra.mxu0 0
      %1309 = vmatprep.subr.bf16.mxu0 0
      %1310 = vmatpush1.bf16.msra.mxu0 0
      %1311 = vmatprep.subr.bf16.mxu0 0
      %1312 = vmatpush1.bf16.msra.mxu0 0
      %1313 = vmatprep.subr.bf16.mxu0 0
      %1314 = vmatpush1.bf16.msra.mxu0 0
      %1315 = vmatprep.subr.bf16.mxu0 0
      %1316 = vmatpush1.bf16.msra.mxu0 0
      %1317 = vmatprep.mubr.bf16.mxu0 0
      %1318 = vmatmul.mubr.bf16.gmra.mrb[0].mxu0 %v1283
      %v1319 = vpop.f32.mrb[0].mxu0
      %v1320 = vadd.f32 %v1280, %v1319
      %v1321 = vpop.f32.mrb[0].mxu0
      %v1322 = vpop.f32.mrb[0].mxu0
      %v1323 = vpop.f32.mrb[0].mxu0
      %1324 = vdwg.mxu0
      %v1325 = vadd.f32 %v551, %v1320
      %v1326 = vsel %vm588, %v1325, 0.0
      %1327 = vadd.xlane.f32.xlu0 %v1326
      %v1328 = vpop.xlane.xlu0 %1327
      %v1329 = vmul.f32 %v1328, %v592
      %v1330 = vsub.f32 %v1325, %v1329
      %v1331 = vmul.f32 %v1330, %v1330
      %v1332 = vsel %vm588, %v1331, 0.0
      %1333 = vadd.xlane.f32.xlu0 %v1332
      %v1334 = vpop.xlane.xlu0 %1333
      %v1335 = vmul.f32 %v1334, %v592
      %v1336 = vadd.f32 %v1335, 1e-05
      %v1337 = vrsqrt.pop %v1336
      %v1338 = vmul.f32 %v1330, %v1337
      %v1340 = vlaneseq
      %v1341 = vshrl.u32 %v1340, 7
      %v1342 = vsub.s32 0, %v1341
      %v1343 = vrot.slane %v564, %v1342
      %v1345 = vmul.f32 %v1338, %v1343
      %v1347 = vlaneseq
      %v1348 = vshrl.u32 %v1347, 7
      %v1349 = vsub.s32 0, %v1348
      %v1350 = vrot.slane %v565, %v1349
      %v1352 = vadd.f32 %v1345, %v1350
      %v1353 = vpack.c.bf16 %v1352, %v1352
      %v1354 = vpack.c.bf16 %v567, %v566
      %v1355 = vpack.c.bf16 %v569, %v568
      %v1357 = vlaneseq
      %v1358 = vshrl.u32 %v1357, 7
      %v1359 = vsub.s32 0, %v1358
      %v1360 = vrot.slane %v570, %v1359
      %v1363 = vsel %vm626, %v1353, 0
      %1365 = vmatprep.subr.bf16.mxu0 0
      %1366 = vmatpush1.bf16.msra.mxu0 %v1354
      %1367 = vmatprep.subr.bf16.mxu0 0
      %1368 = vmatpush1.bf16.msra.mxu0 %v1355
      %1369 = vmatprep.subr.bf16.mxu0 0
      %1370 = vmatpush1.bf16.msra.mxu0 0
      %1371 = vmatprep.subr.bf16.mxu0 0
      %1372 = vmatpush1.bf16.msra.mxu0 0
      %1373 = vmatprep.subr.bf16.mxu0 0
      %1374 = vmatpush1.bf16.msra.mxu0 0
      %1375 = vmatprep.subr.bf16.mxu0 0
      %1376 = vmatpush1.bf16.msra.mxu0 0
      %1377 = vmatprep.subr.bf16.mxu0 0
      %1378 = vmatpush1.bf16.msra.mxu0 0
      %1379 = vmatprep.subr.bf16.mxu0 0
      %1380 = vmatpush1.bf16.msra.mxu0 0
      %1381 = vmatprep.subr.bf16.mxu0 0
      %1382 = vmatpush1.bf16.msra.mxu0 0
      %1383 = vmatprep.subr.bf16.mxu0 0
      %1384 = vmatpush1.bf16.msra.mxu0 0
      %1385 = vmatprep.subr.bf16.mxu0 0
      %1386 = vmatpush1.bf16.msra.mxu0 0
      %1387 = vmatprep.subr.bf16.mxu0 0
      %1388 = vmatpush1.bf16.msra.mxu0 0
      %1389 = vmatprep.subr.bf16.mxu0 0
      %1390 = vmatpush1.bf16.msra.mxu0 0
      %1391 = vmatprep.subr.bf16.mxu0 0
      %1392 = vmatpush1.bf16.msra.mxu0 0
      %1393 = vmatprep.subr.bf16.mxu0 0
      %1394 = vmatpush1.bf16.msra.mxu0 0
      %1395 = vmatprep.subr.bf16.mxu0 0
      %1396 = vmatpush1.bf16.msra.mxu0 0
      %1397 = vmatprep.mubr.bf16.mxu0 0
      %1398 = vmatmul.mubr.bf16.gmra.mrb[0].mxu0 %v1363
      %v1399 = vpop.f32.mrb[0].mxu0
      %v1400 = vadd.f32 %v1360, %v1399
      %v1401 = vpop.f32.mrb[0].mxu0
      %v1402 = vpop.f32.mrb[0].mxu0
      %v1403 = vpop.f32.mrb[0].mxu0
      %1404 = vdwg.mxu0
      %v1405 = vmul.f32 %v1400, 1.702
      %v1406 = vxor.u32 %v1405, 2147483648
      %v1407 = vmul.f32 %v1406, 1.442695
      %v1408 = vpow.pop %v1407
      %v1409 = vadd.f32 %v1408, 1.0
      %v1410 = vrcp.pop %v1409
      %v1411 = vmul.f32 1.0, %v1410
      %v1412 = vmul.f32 %v1400, %v1411
      %v1413 = vpack.c.bf16 %v1412, %v1412
      %v1414 = vpack.c.bf16 %v572, %v571
      %v1415 = vpack.c.bf16 %v574, %v573
      %v1416 = vpack.c.bf16 %v576, %v575
      %v1417 = vpack.c.bf16 %v578, %v577
      %v1418 = vpack.c.bf16 %v580, %v579
      %v1419 = vpack.c.bf16 %v582, %v581
      %v1420 = vpack.c.bf16 %v584, %v583
      %v1421 = vpack.c.bf16 %v586, %v585
      %v1423 = vlaneseq
      %v1424 = vshrl.u32 %v1423, 7
      %v1425 = vsub.s32 0, %v1424
      %v1426 = vrot.slane %v587, %v1425
      %1428 = vmatprep.subr.bf16.mxu0 0
      %1429 = vmatpush1.bf16.msra.mxu0 %v1414
      %1430 = vmatprep.subr.bf16.mxu0 0
      %1431 = vmatpush1.bf16.msra.mxu0 %v1415
      %1432 = vmatprep.subr.bf16.mxu0 0
      %1433 = vmatpush1.bf16.msra.mxu0 %v1416
      %1434 = vmatprep.subr.bf16.mxu0 0
      %1435 = vmatpush1.bf16.msra.mxu0 %v1417
      %1436 = vmatprep.subr.bf16.mxu0 0
      %1437 = vmatpush1.bf16.msra.mxu0 %v1418
      %1438 = vmatprep.subr.bf16.mxu0 0
      %1439 = vmatpush1.bf16.msra.mxu0 %v1419
      %1440 = vmatprep.subr.bf16.mxu0 0
      %1441 = vmatpush1.bf16.msra.mxu0 %v1420
      %1442 = vmatprep.subr.bf16.mxu0 0
      %1443 = vmatpush1.bf16.msra.mxu0 %v1421
      %1444 = vmatprep.subr.bf16.mxu0 0
      %1445 = vmatpush1.bf16.msra.mxu0 0
      %1446 = vmatprep.subr.bf16.mxu0 0
      %1447 = vmatpush1.bf16.msra.mxu0 0
      %1448 = vmatprep.subr.bf16.mxu0 0
      %1449 = vmatpush1.bf16.msra.mxu0 0
      %1450 = vmatprep.subr.bf16.mxu0 0
      %1451 = vmatpush1.bf16.msra.mxu0 0
      %1452 = vmatprep.subr.bf16.mxu0 0
      %1453 = vmatpush1.bf16.msra.mxu0 0
      %1454 = vmatprep.subr.bf16.mxu0 0
      %1455 = vmatpush1.bf16.msra.mxu0 0
      %1456 = vmatprep.subr.bf16.mxu0 0
      %1457 = vmatpush1.bf16.msra.mxu0 0
      %1458 = vmatprep.subr.bf16.mxu0 0
      %1459 = vmatpush1.bf16.msra.mxu0 0
      %1460 = vmatprep.mubr.bf16.mxu0 0
      %1461 = vmatmul.mubr.bf16.gmra.mrb[0].mxu0 %v1413
      %v1462 = vpop.f32.mrb[0].mxu0
      %v1463 = vadd.f32 %v1426, %v1462
      %v1464 = vpop.f32.mrb[0].mxu0
      %v1465 = vpop.f32.mrb[0].mxu0
      %v1466 = vpop.f32.mrb[0].mxu0
      %1467 = vdwg.mxu0
      %v1468 = vadd.f32 %v1325, %v1463
      %v1469 = vld [vmem:[%s3] sm:$0x1]
      %v1470 = vld [vmem:[%s4] sm:$0x1]
      %vm1471 = vcmask 253952
      %v1472 = vsel %vm1471, %v1468, 0.0
      %1473 = vadd.xlane.f32.xlu0 %v1472
      %v1474 = vpop.xlane.xlu0 %1473
      %v1475 = vmul.f32 %v1474, %v592
      %v1476 = vsub.f32 %v1468, %v1475
      %v1477 = vmul.f32 %v1476, %v1476
      %v1478 = vsel %vm1471, %v1477, 0.0
      %1479 = vadd.xlane.f32.xlu0 %v1478
      %v1480 = vpop.xlane.xlu0 %1479
      %v1481 = vmul.f32 %v1480, %v592
      %v1482 = vadd.f32 %v1481, 1e-05
      %v1483 = vrsqrt.pop %v1482
      %v1484 = vmul.f32 %v1476, %v1483
      %v1485 = vmul.f32 %v1484, %v1469
      %v1486 = vadd.f32 %v1485, %v1470
      %1487 = vst.msk [vmem:[%s541] sm:$0x1] %vm1471, %v1486
      %p1488 = scmp.lt.s32.totalorder %s28, 1
      %s1489 = scalar_select %p1488, %s28, 1
      %s1490 = scalar_lea.vmem %s17, %s1489
      // Predicated region
      $region89: #{video_clip_forward.6} parent=87 // pred_check
        %p1491 = pneg %p408
      $region90: #{video_clip_forward.6} parent=87 // pred_check_branch
        %1493 = sbr.rel (%p1491) target = $region92
      $region91: #{video_clip_forward.6} parent=87 // pred_region
        _
      $region92: #{video_clip_forward.6} parent=87 // pred_fallthru
        _
    $region88: #{video_clip_forward.6} parent=5 // pred_fallthru
      _
    %p1494 = scmp.le.s32.totalorder 2, %s23
    // Predicated region
    $region93: #{video_clip_forward.6} parent=5 // pred_check
      %p1495 = pneg %p1494
    $region94: #{video_clip_forward.6} parent=5 // pred_check_branch
      %1497 = sbr.rel (%p1495) target = $region96
    $region95: #{video_clip_forward.6} parent=5 // pred_region
      %s1498 = ssub.s32 %s23, 2
      // Predicated region
      $region97: #{video_clip_forward.6} parent=95 // pred_check
        %p1499 = pneg %p414
      $region98: #{video_clip_forward.6} parent=95 // pred_check_branch
        %1501 = sbr.rel (%p1499) target = $region100
      $region99: #{video_clip_forward.6} parent=95 // pred_region
        %p1502 = scmp.lt.s32.totalorder %s29, 1
        %s1503 = scalar_select %p1502, %s29, 1
        %s1504 = scalar_lea.vmem %s17, %s1503
      $region100: #{video_clip_forward.6} parent=95 // pred_fallthru
        _
    $region96: #{video_clip_forward.6} parent=5 // pred_fallthru
      _
  $region6: #{video_clip_forward.6} parent=0 // loop_footer
    %s27 = sadd.s32 1, %s23
  $region7: #{video_clip_forward.6} parent=0 // loop_footer_branch
    %22 = sbr.rel target = $region3
  $region8: #{video_clip_forward.6} parent=0 // loop_exit
    _

// kernel: video_clip_forward.4
$region0: #{video_clip_forward.4}
  #allocation0 [shape = 'u32[]', space=smem, size = 0x4, offset = 0x4, fixed_abs, tag = 'smem constant byte address 0x4 - core index']
  #allocation1 [shape = 'u32[144,128]{1,0:T(1,128)}', space=vmem, size = 0x12000, scoped, tag = 'internal scratch']
  %s0 = inlined_call_operand.vmem [shape: f32[6,4,192], index: 0, kind: input, shape index: {}]
  %s1 = inlined_call_operand.vmem [shape: f32[192,32], index: 1, kind: input, shape index: {}]
  %s2 = inlined_call_operand.vmem [shape: f32[1,32], index: 2, kind: input, shape index: {}]
  %s3 = inlined_call_operand.vmem [shape: f32[5,32], index: 3, kind: input, shape index: {}]
  %s4 = inlined_call_operand.vmem [shape: f32[1,32], index: 4, kind: input, shape index: {}]
  %s5 = inlined_call_operand.vmem [shape: f32[1,32], index: 5, kind: input, shape index: {}]
  %s6 = inlined_call_operand.vmem [shape: f32[1,32], index: 6, kind: input, shape index: {}]
  %s7 = inlined_call_operand.vmem [shape: f32[1,32], index: 7, kind: input, shape index: {}]
  %s8 = inlined_call_operand.vmem [shape: f32[32,32], index: 8, kind: input, shape index: {}]
  %s9 = inlined_call_operand.vmem [shape: f32[2,1,32], index: 9, kind: input, shape index: {}]
  %s10 = inlined_call_operand.vmem [shape: f32[2,1,32], index: 10, kind: input, shape index: {}]
  %s11 = inlined_call_operand.vmem [shape: f32[2,32,96], index: 11, kind: input, shape index: {}]
  %s12 = inlined_call_operand.vmem [shape: f32[2,1,96], index: 12, kind: input, shape index: {}]
  %s13 = inlined_call_operand.vmem [shape: f32[2,32,32], index: 13, kind: input, shape index: {}]
  %s14 = inlined_call_operand.vmem [shape: f32[2,1,32], index: 14, kind: input, shape index: {}]
  %s15 = inlined_call_operand.vmem [shape: f32[2,1,32], index: 15, kind: input, shape index: {}]
  %s16 = inlined_call_operand.vmem [shape: f32[2,1,32], index: 16, kind: input, shape index: {}]
  %s17 = inlined_call_operand.vmem [shape: f32[2,32,128], index: 17, kind: input, shape index: {}]
  %s18 = inlined_call_operand.vmem [shape: f32[2,1,128], index: 18, kind: input, shape index: {}]
  %s19 = inlined_call_operand.vmem [shape: f32[2,128,32], index: 19, kind: input, shape index: {}]
  %s20 = inlined_call_operand.vmem [shape: f32[2,1,32], index: 20, kind: input, shape index: {}]
  %s21 = inlined_call_operand.vmem [shape: f32[6,1,32], index: 21, kind: output, shape index: {}]
  %s22 = sld [smem:[#allocation0]]
  $region117: #{video_clip_forward.4} parent=0
    _
  %s24 = ssub.s32 1, %s22
  %s25 = scalar_select 0, %s24, %s22
  loop: start=0, step=1, limit=8
  $region2: #{video_clip_forward.4} parent=0 // loop_pre_header
    _
  $region3: #{video_clip_forward.4} parent=0 // loop_header
    %s27 = sphi 0, %s31
    %p28 = scmp.ge.s32.totalorder %s27, 8
    %s37 = sphi 0, %s39
    %s40 = sphi 0, %s37
    %s41 = sphi 0, %s40
    %s57 = sphi 0, %s41
    %s61 = sphi 0, %s61
    %s63 = sphi 0, %s61
    %s64 = sphi 0, %s63
    %s78 = sphi 0, %s64
    %s82 = sphi 0, %s82
    %s84 = sphi 0, %s82
    %s85 = sphi 0, %s84
    %s99 = sphi 0, %s85
    %s103 = sphi 0, %s103
    %s105 = sphi 0, %s103
    %s106 = sphi 0, %s105
    %s120 = sphi 0, %s106
    %s124 = sphi 0, %s124
    %s126 = sphi 0, %s124
    %s127 = sphi 0, %s126
    %s141 = sphi 0, %s127
    %s145 = sphi 0, %s145
    %s147 = sphi 0, %s145
    %s148 = sphi 0, %s147
    %s162 = sphi 0, %s148
    %s166 = sphi 0, %s166
    %s168 = sphi 0, %s166
    %s169 = sphi 0, %s168
    %s183 = sphi 0, %s169
    %s187 = sphi 0, %s187
    %s189 = sphi 0, %s187
    %s190 = sphi 0, %s189
    %s204 = sphi 0, %s190
    %s208 = sphi 0, %s208
    %s210 = sphi 0, %s208
    %s211 = sphi 0, %s210
    %s225 = sphi 0, %s211
    %s229 = sphi 0, %s229
    %s231 = sphi 0, %s229
    %s232 = sphi 0, %s231
    %s246 = sphi 0, %s232
    %s250 = sphi 0, %s250
    %s252 = sphi 0, %s250
    %s253 = sphi 0, %s252
    %s267 = sphi 0, %s253
    %s271 = sphi 0, %s271
    %s273 = sphi 0, %s271
    %s274 = sphi 0, %s273
    %s288 = sphi 0, %s274
    %s292 = sphi 0, %s292
    %s294 = sphi 0, %s292
    %s295 = sphi 0, %s294
    %s309 = sphi 0, %s295
    %s313 = sphi 0, %s313
    %s315 = sphi 0, %s313
    %s316 = sphi 0, %s315
    %s330 = sphi 0, %s316
    %s334 = sphi 0, %s334
    %s336 = sphi 0, %s334
    %s337 = sphi 0, %s336
    %s351 = sphi 0, %s337
    %s355 = sphi 0, %s355
    %s357 = sphi 0, %s355
    %s358 = sphi 0, %s357
    %s372 = sphi 0, %s358
    %s376 = sphi 0, %s376
    %s378 = sphi 0, %s376
    %s379 = sphi 0, %s378
    %s393 = sphi 0, %s379
    %s397 = sphi 0, %s397
    %s399 = sphi 0, %s397
    %s400 = sphi 0, %s399
    %s414 = sphi 0, %s400
    %s418 = sphi 0, %s418
    %s420 = sphi 0, %s418
    %s421 = sphi 0, %s420
    %s435 = sphi 0, %s421
    %s439 = sphi 0, %s439
    %s441 = sphi 0, %s439
    %s442 = sphi 0, %s441
    %s456 = sphi 0, %s442
    %s460 = sphi 0, %s460
    %s462 = sphi 0, %s460
    %s463 = sphi 0, %s462
    %s477 = sphi 0, %s463
    %s483 = sphi 0, %s485
    %s486 = sphi 0, %s483
    %s487 = sphi 0, %s486
    %s503 = sphi 0, %s487
  $region4: #{video_clip_forward.4} parent=0 // loop_header_branch
    %30 = sbr.rel (%p28) target = $region8
  $region5: #{video_clip_forward.4} parent=0 // loop_body
    %s32 = ssub.s32 %s27, 1
    %s33 = ssub.s32 %s27, 2
    %s34 = sadd.s32 %s27, 1
    %s35 = ssub.s32 %s27, %s34
    %p36 = scmp.eq.s32.totalorder %s35, 0
    %s38 = sadd.s32 %s37, 1
    %s39 = scalar_select %p36, %s37, %s38
    %p42 = pneg %p36
    %p43 = scmp.eq.s32.totalorder %s27, 5
    %p44 = por %p42, %p43
    %p45 = scmp.ne.s32.totalorder %s37, %s40
    %p46 = scmp.eq.s32.totalorder %s27, 0
    %p47 = por %p45, %p46
    %p48 = scmp.ne.s32.totalorder %s37, %s40
    %p49 = scmp.eq.s32.totalorder %s32, 5
    %p50 = por %p48, %p49
    %p51 = scmp.ne.s32.totalorder %s40, %s41
    %p52 = scmp.eq.s32.totalorder %s32, 0
    %p53 = por %p51, %p52
    %p54 = scmp.ne.s32.totalorder %s40, %s41
    %p55 = scmp.eq.s32.totalorder %s33, 5
    %p56 = por %p54, %p55
    %p58 = scmp.ne.s32.totalorder %s41, %s57
    %p59 = scmp.eq.s32.totalorder %s33, 0
    %p60 = por %p58, %p59
    %s62 = sadd.s32 %s61, 1
    %p65 = scmp.eq.s32.totalorder %s27, 5
    %p66 = scmp.ne.s32.totalorder %s61, %s63
    %p67 = scmp.eq.s32.totalorder %s27, 0
    %p68 = por %p66, %p67
    %p69 = scmp.ne.s32.totalorder %s61, %s63
    %p70 = scmp.eq.s32.totalorder %s32, 5
    %p71 = por %p69, %p70
    %p72 = scmp.ne.s32.totalorder %s63, %s64
    %p73 = scmp.eq.s32.totalorder %s32, 0
    %p74 = por %p72, %p73
    %p75 = scmp.ne.s32.totalorder %s63, %s64
    %p76 = scmp.eq.s32.totalorder %s33, 5
    %p77 = por %p75, %p76
    %p79 = scmp.ne.s32.totalorder %s64, %s78
    %p80 = scmp.eq.s32.totalorder %s33, 0
    %p81 = por %p79, %p80
    %s83 = sadd.s32 %s82, 1
    %p86 = scmp.eq.s32.totalorder %s27, 5
    %p87 = scmp.ne.s32.totalorder %s82, %s84
    %p88 = scmp.eq.s32.totalorder %s27, 0
    %p89 = por %p87, %p88
    %p90 = scmp.ne.s32.totalorder %s82, %s84
    %p91 = scmp.eq.s32.totalorder %s32, 5
    %p92 = por %p90, %p91
    %p93 = scmp.ne.s32.totalorder %s84, %s85
    %p94 = scmp.eq.s32.totalorder %s32, 0
    %p95 = por %p93, %p94
    %p96 = scmp.ne.s32.totalorder %s84, %s85
    %p97 = scmp.eq.s32.totalorder %s33, 5
    %p98 = por %p96, %p97
    %p100 = scmp.ne.s32.totalorder %s85, %s99
    %p101 = scmp.eq.s32.totalorder %s33, 0
    %p102 = por %p100, %p101
    %s104 = sadd.s32 %s103, 1
    %p107 = scmp.eq.s32.totalorder %s27, 5
    %p108 = scmp.ne.s32.totalorder %s103, %s105
    %p109 = scmp.eq.s32.totalorder %s27, 0
    %p110 = por %p108, %p109
    %p111 = scmp.ne.s32.totalorder %s103, %s105
    %p112 = scmp.eq.s32.totalorder %s32, 5
    %p113 = por %p111, %p112
    %p114 = scmp.ne.s32.totalorder %s105, %s106
    %p115 = scmp.eq.s32.totalorder %s32, 0
    %p116 = por %p114, %p115
    %p117 = scmp.ne.s32.totalorder %s105, %s106
    %p118 = scmp.eq.s32.totalorder %s33, 5
    %p119 = por %p117, %p118
    %p121 = scmp.ne.s32.totalorder %s106, %s120
    %p122 = scmp.eq.s32.totalorder %s33, 0
    %p123 = por %p121, %p122
    %s125 = sadd.s32 %s124, 1
    %p128 = scmp.eq.s32.totalorder %s27, 5
    %p129 = scmp.ne.s32.totalorder %s124, %s126
    %p130 = scmp.eq.s32.totalorder %s27, 0
    %p131 = por %p129, %p130
    %p132 = scmp.ne.s32.totalorder %s124, %s126
    %p133 = scmp.eq.s32.totalorder %s32, 5
    %p134 = por %p132, %p133
    %p135 = scmp.ne.s32.totalorder %s126, %s127
    %p136 = scmp.eq.s32.totalorder %s32, 0
    %p137 = por %p135, %p136
    %p138 = scmp.ne.s32.totalorder %s126, %s127
    %p139 = scmp.eq.s32.totalorder %s33, 5
    %p140 = por %p138, %p139
    %p142 = scmp.ne.s32.totalorder %s127, %s141
    %p143 = scmp.eq.s32.totalorder %s33, 0
    %p144 = por %p142, %p143
    %s146 = sadd.s32 %s145, 1
    %p149 = scmp.eq.s32.totalorder %s27, 5
    %p150 = scmp.ne.s32.totalorder %s145, %s147
    %p151 = scmp.eq.s32.totalorder %s27, 0
    %p152 = por %p150, %p151
    %p153 = scmp.ne.s32.totalorder %s145, %s147
    %p154 = scmp.eq.s32.totalorder %s32, 5
    %p155 = por %p153, %p154
    %p156 = scmp.ne.s32.totalorder %s147, %s148
    %p157 = scmp.eq.s32.totalorder %s32, 0
    %p158 = por %p156, %p157
    %p159 = scmp.ne.s32.totalorder %s147, %s148
    %p160 = scmp.eq.s32.totalorder %s33, 5
    %p161 = por %p159, %p160
    %p163 = scmp.ne.s32.totalorder %s148, %s162
    %p164 = scmp.eq.s32.totalorder %s33, 0
    %p165 = por %p163, %p164
    %s167 = sadd.s32 %s166, 1
    %p170 = scmp.eq.s32.totalorder %s27, 5
    %p171 = scmp.ne.s32.totalorder %s166, %s168
    %p172 = scmp.eq.s32.totalorder %s27, 0
    %p173 = por %p171, %p172
    %p174 = scmp.ne.s32.totalorder %s166, %s168
    %p175 = scmp.eq.s32.totalorder %s32, 5
    %p176 = por %p174, %p175
    %p177 = scmp.ne.s32.totalorder %s168, %s169
    %p178 = scmp.eq.s32.totalorder %s32, 0
    %p179 = por %p177, %p178
    %p180 = scmp.ne.s32.totalorder %s168, %s169
    %p181 = scmp.eq.s32.totalorder %s33, 5
    %p182 = por %p180, %p181
    %p184 = scmp.ne.s32.totalorder %s169, %s183
    %p185 = scmp.eq.s32.totalorder %s33, 0
    %p186 = por %p184, %p185
    %s188 = sadd.s32 %s187, 1
    %p191 = scmp.eq.s32.totalorder %s27, 5
    %p192 = scmp.ne.s32.totalorder %s187, %s189
    %p193 = scmp.eq.s32.totalorder %s27, 0
    %p194 = por %p192, %p193
    %p195 = scmp.ne.s32.totalorder %s187, %s189
    %p196 = scmp.eq.s32.totalorder %s32, 5
    %p197 = por %p195, %p196
    %p198 = scmp.ne.s32.totalorder %s189, %s190
    %p199 = scmp.eq.s32.totalorder %s32, 0
    %p200 = por %p198, %p199
    %p201 = scmp.ne.s32.totalorder %s189, %s190
    %p202 = scmp.eq.s32.totalorder %s33, 5
    %p203 = por %p201, %p202
    %p205 = scmp.ne.s32.totalorder %s190, %s204
    %p206 = scmp.eq.s32.totalorder %s33, 0
    %p207 = por %p205, %p206
    %s209 = sadd.s32 %s208, 1
    %p212 = scmp.eq.s32.totalorder %s27, 5
    %p213 = scmp.ne.s32.totalorder %s208, %s210
    %p214 = scmp.eq.s32.totalorder %s27, 0
    %p215 = por %p213, %p214
    %p216 = scmp.ne.s32.totalorder %s208, %s210
    %p217 = scmp.eq.s32.totalorder %s32, 5
    %p218 = por %p216, %p217
    %p219 = scmp.ne.s32.totalorder %s210, %s211
    %p220 = scmp.eq.s32.totalorder %s32, 0
    %p221 = por %p219, %p220
    %p222 = scmp.ne.s32.totalorder %s210, %s211
    %p223 = scmp.eq.s32.totalorder %s33, 5
    %p224 = por %p222, %p223
    %p226 = scmp.ne.s32.totalorder %s211, %s225
    %p227 = scmp.eq.s32.totalorder %s33, 0
    %p228 = por %p226, %p227
    %s230 = sadd.s32 %s229, 1
    %p233 = scmp.eq.s32.totalorder %s27, 5
    %p234 = scmp.ne.s32.totalorder %s229, %s231
    %p235 = scmp.eq.s32.totalorder %s27, 0
    %p236 = por %p234, %p235
    %p237 = scmp.ne.s32.totalorder %s229, %s231
    %p238 = scmp.eq.s32.totalorder %s32, 5
    %p239 = por %p237, %p238
    %p240 = scmp.ne.s32.totalorder %s231, %s232
    %p241 = scmp.eq.s32.totalorder %s32, 0
    %p242 = por %p240, %p241
    %p243 = scmp.ne.s32.totalorder %s231, %s232
    %p244 = scmp.eq.s32.totalorder %s33, 5
    %p245 = por %p243, %p244
    %p247 = scmp.ne.s32.totalorder %s232, %s246
    %p248 = scmp.eq.s32.totalorder %s33, 0
    %p249 = por %p247, %p248
    %s251 = sadd.s32 %s250, 1
    %p254 = scmp.eq.s32.totalorder %s27, 5
    %p255 = scmp.ne.s32.totalorder %s250, %s252
    %p256 = scmp.eq.s32.totalorder %s27, 0
    %p257 = por %p255, %p256
    %p258 = scmp.ne.s32.totalorder %s250, %s252
    %p259 = scmp.eq.s32.totalorder %s32, 5
    %p260 = por %p258, %p259
    %p261 = scmp.ne.s32.totalorder %s252, %s253
    %p262 = scmp.eq.s32.totalorder %s32, 0
    %p263 = por %p261, %p262
    %p264 = scmp.ne.s32.totalorder %s252, %s253
    %p265 = scmp.eq.s32.totalorder %s33, 5
    %p266 = por %p264, %p265
    %p268 = scmp.ne.s32.totalorder %s253, %s267
    %p269 = scmp.eq.s32.totalorder %s33, 0
    %p270 = por %p268, %p269
    %s272 = sadd.s32 %s271, 1
    %p275 = scmp.eq.s32.totalorder %s27, 5
    %p276 = scmp.ne.s32.totalorder %s271, %s273
    %p277 = scmp.eq.s32.totalorder %s27, 0
    %p278 = por %p276, %p277
    %p279 = scmp.ne.s32.totalorder %s271, %s273
    %p280 = scmp.eq.s32.totalorder %s32, 5
    %p281 = por %p279, %p280
    %p282 = scmp.ne.s32.totalorder %s273, %s274
    %p283 = scmp.eq.s32.totalorder %s32, 0
    %p284 = por %p282, %p283
    %p285 = scmp.ne.s32.totalorder %s273, %s274
    %p286 = scmp.eq.s32.totalorder %s33, 5
    %p287 = por %p285, %p286
    %p289 = scmp.ne.s32.totalorder %s274, %s288
    %p290 = scmp.eq.s32.totalorder %s33, 0
    %p291 = por %p289, %p290
    %s293 = sadd.s32 %s292, 1
    %p296 = scmp.eq.s32.totalorder %s27, 5
    %p297 = scmp.ne.s32.totalorder %s292, %s294
    %p298 = scmp.eq.s32.totalorder %s27, 0
    %p299 = por %p297, %p298
    %p300 = scmp.ne.s32.totalorder %s292, %s294
    %p301 = scmp.eq.s32.totalorder %s32, 5
    %p302 = por %p300, %p301
    %p303 = scmp.ne.s32.totalorder %s294, %s295
    %p304 = scmp.eq.s32.totalorder %s32, 0
    %p305 = por %p303, %p304
    %p306 = scmp.ne.s32.totalorder %s294, %s295
    %p307 = scmp.eq.s32.totalorder %s33, 5
    %p308 = por %p306, %p307
    %p310 = scmp.ne.s32.totalorder %s295, %s309
    %p311 = scmp.eq.s32.totalorder %s33, 0
    %p312 = por %p310, %p311
    %s314 = sadd.s32 %s313, 1
    %p317 = scmp.eq.s32.totalorder %s27, 5
    %p318 = scmp.ne.s32.totalorder %s313, %s315
    %p319 = scmp.eq.s32.totalorder %s27, 0
    %p320 = por %p318, %p319
    %p321 = scmp.ne.s32.totalorder %s313, %s315
    %p322 = scmp.eq.s32.totalorder %s32, 5
    %p323 = por %p321, %p322
    %p324 = scmp.ne.s32.totalorder %s315, %s316
    %p325 = scmp.eq.s32.totalorder %s32, 0
    %p326 = por %p324, %p325
    %p327 = scmp.ne.s32.totalorder %s315, %s316
    %p328 = scmp.eq.s32.totalorder %s33, 5
    %p329 = por %p327, %p328
    %p331 = scmp.ne.s32.totalorder %s316, %s330
    %p332 = scmp.eq.s32.totalorder %s33, 0
    %p333 = por %p331, %p332
    %s335 = sadd.s32 %s334, 1
    %p338 = scmp.eq.s32.totalorder %s27, 5
    %p339 = scmp.ne.s32.totalorder %s334, %s336
    %p340 = scmp.eq.s32.totalorder %s27, 0
    %p341 = por %p339, %p340
    %p342 = scmp.ne.s32.totalorder %s334, %s336
    %p343 = scmp.eq.s32.totalorder %s32, 5
    %p344 = por %p342, %p343
    %p345 = scmp.ne.s32.totalorder %s336, %s337
    %p346 = scmp.eq.s32.totalorder %s32, 0
    %p347 = por %p345, %p346
    %p348 = scmp.ne.s32.totalorder %s336, %s337
    %p349 = scmp.eq.s32.totalorder %s33, 5
    %p350 = por %p348, %p349
    %p352 = scmp.ne.s32.totalorder %s337, %s351
    %p353 = scmp.eq.s32.totalorder %s33, 0
    %p354 = por %p352, %p353
    %s356 = sadd.s32 %s355, 1
    %p359 = scmp.eq.s32.totalorder %s27, 5
    %p360 = scmp.ne.s32.totalorder %s355, %s357
    %p361 = scmp.eq.s32.totalorder %s27, 0
    %p362 = por %p360, %p361
    %p363 = scmp.ne.s32.totalorder %s355, %s357
    %p364 = scmp.eq.s32.totalorder %s32, 5
    %p365 = por %p363, %p364
    %p366 = scmp.ne.s32.totalorder %s357, %s358
    %p367 = scmp.eq.s32.totalorder %s32, 0
    %p368 = por %p366, %p367
    %p369 = scmp.ne.s32.totalorder %s357, %s358
    %p370 = scmp.eq.s32.totalorder %s33, 5
    %p371 = por %p369, %p370
    %p373 = scmp.ne.s32.totalorder %s358, %s372
    %p374 = scmp.eq.s32.totalorder %s33, 0
    %p375 = por %p373, %p374
    %s377 = sadd.s32 %s376, 1
    %p380 = scmp.eq.s32.totalorder %s27, 5
    %p381 = scmp.ne.s32.totalorder %s376, %s378
    %p382 = scmp.eq.s32.totalorder %s27, 0
    %p383 = por %p381, %p382
    %p384 = scmp.ne.s32.totalorder %s376, %s378
    %p385 = scmp.eq.s32.totalorder %s32, 5
    %p386 = por %p384, %p385
    %p387 = scmp.ne.s32.totalorder %s378, %s379
    %p388 = scmp.eq.s32.totalorder %s32, 0
    %p389 = por %p387, %p388
    %p390 = scmp.ne.s32.totalorder %s378, %s379
    %p391 = scmp.eq.s32.totalorder %s33, 5
    %p392 = por %p390, %p391
    %p394 = scmp.ne.s32.totalorder %s379, %s393
    %p395 = scmp.eq.s32.totalorder %s33, 0
    %p396 = por %p394, %p395
    %s398 = sadd.s32 %s397, 1
    %p401 = scmp.eq.s32.totalorder %s27, 5
    %p402 = scmp.ne.s32.totalorder %s397, %s399
    %p403 = scmp.eq.s32.totalorder %s27, 0
    %p404 = por %p402, %p403
    %p405 = scmp.ne.s32.totalorder %s397, %s399
    %p406 = scmp.eq.s32.totalorder %s32, 5
    %p407 = por %p405, %p406
    %p408 = scmp.ne.s32.totalorder %s399, %s400
    %p409 = scmp.eq.s32.totalorder %s32, 0
    %p410 = por %p408, %p409
    %p411 = scmp.ne.s32.totalorder %s399, %s400
    %p412 = scmp.eq.s32.totalorder %s33, 5
    %p413 = por %p411, %p412
    %p415 = scmp.ne.s32.totalorder %s400, %s414
    %p416 = scmp.eq.s32.totalorder %s33, 0
    %p417 = por %p415, %p416
    %s419 = sadd.s32 %s418, 1
    %p422 = scmp.eq.s32.totalorder %s27, 5
    %p423 = scmp.ne.s32.totalorder %s418, %s420
    %p424 = scmp.eq.s32.totalorder %s27, 0
    %p425 = por %p423, %p424
    %p426 = scmp.ne.s32.totalorder %s418, %s420
    %p427 = scmp.eq.s32.totalorder %s32, 5
    %p428 = por %p426, %p427
    %p429 = scmp.ne.s32.totalorder %s420, %s421
    %p430 = scmp.eq.s32.totalorder %s32, 0
    %p431 = por %p429, %p430
    %p432 = scmp.ne.s32.totalorder %s420, %s421
    %p433 = scmp.eq.s32.totalorder %s33, 5
    %p434 = por %p432, %p433
    %p436 = scmp.ne.s32.totalorder %s421, %s435
    %p437 = scmp.eq.s32.totalorder %s33, 0
    %p438 = por %p436, %p437
    %s440 = sadd.s32 %s439, 1
    %p443 = scmp.eq.s32.totalorder %s27, 5
    %p444 = scmp.ne.s32.totalorder %s439, %s441
    %p445 = scmp.eq.s32.totalorder %s27, 0
    %p446 = por %p444, %p445
    %p447 = scmp.ne.s32.totalorder %s439, %s441
    %p448 = scmp.eq.s32.totalorder %s32, 5
    %p449 = por %p447, %p448
    %p450 = scmp.ne.s32.totalorder %s441, %s442
    %p451 = scmp.eq.s32.totalorder %s32, 0
    %p452 = por %p450, %p451
    %p453 = scmp.ne.s32.totalorder %s441, %s442
    %p454 = scmp.eq.s32.totalorder %s33, 5
    %p455 = por %p453, %p454
    %p457 = scmp.ne.s32.totalorder %s442, %s456
    %p458 = scmp.eq.s32.totalorder %s33, 0
    %p459 = por %p457, %p458
    %s461 = sadd.s32 %s460, 1
    %p464 = scmp.eq.s32.totalorder %s27, 5
    %p465 = scmp.ne.s32.totalorder %s460, %s462
    %p466 = scmp.eq.s32.totalorder %s27, 0
    %p467 = por %p465, %p466
    %p468 = scmp.ne.s32.totalorder %s460, %s462
    %p469 = scmp.eq.s32.totalorder %s32, 5
    %p470 = por %p468, %p469
    %p471 = scmp.ne.s32.totalorder %s462, %s463
    %p472 = scmp.eq.s32.totalorder %s32, 0
    %p473 = por %p471, %p472
    %p474 = scmp.ne.s32.totalorder %s462, %s463
    %p475 = scmp.eq.s32.totalorder %s33, 5
    %p476 = por %p474, %p475
    %p478 = scmp.ne.s32.totalorder %s463, %s477
    %p479 = scmp.eq.s32.totalorder %s33, 0
    %p480 = por %p478, %p479
    %s481 = ssub.s32 %s27, %s34
    %p482 = scmp.eq.s32.totalorder %s481, 0
    %s484 = sadd.s32 %s483, 1
    %s485 = scalar_select %p482, %s483, %s484
    %p488 = pneg %p482
    %p489 = scmp.eq.s32.totalorder %s27, 5
    %p490 = por %p488, %p489
    %p491 = scmp.ne.s32.totalorder %s483, %s486
    %p492 = scmp.eq.s32.totalorder %s27, 0
    %p493 = por %p491, %p492
    %p494 = scmp.ne.s32.totalorder %s483, %s486
    %p495 = scmp.eq.s32.totalorder %s32, 5
    %p496 = por %p494, %p495
    %p497 = scmp.ne.s32.totalorder %s486, %s487
    %p498 = scmp.eq.s32.totalorder %s32, 0
    %p499 = por %p497, %p498
    %p500 = scmp.ne.s32.totalorder %s486, %s487
    %p501 = scmp.eq.s32.totalorder %s33, 5
    %p502 = por %p500, %p501
    %p504 = scmp.ne.s32.totalorder %s487, %s503
    %p505 = scmp.eq.s32.totalorder %s33, 0
    %p506 = por %p504, %p505
    %p507 = scmp.le.s32.totalorder 1, %s27
    %p508 = scmp.lt.s32.totalorder %s27, 7
    %p509 = pnand %p507, %p508
    %p510 = pneg %p509
    // Predicated region
    $region9: #{video_clip_forward.4} parent=5 // pred_check
      _
    $region10: #{video_clip_forward.4} parent=5 // pred_check_branch
      %512 = sbr.rel (%p509) target = $region12
    $region11: #{video_clip_forward.4} parent=5 // pred_region
      %s513 = ssub.s32 %s27, 1
      // Predicated region
      $region13: #{video_clip_forward.4} parent=11 // pred_check
        %p514 = pneg %p74
      $region14: #{video_clip_forward.4} parent=11 // pred_check_branch
        %516 = sbr.rel (%p514) target = $region16
      $region15: #{video_clip_forward.4} parent=11 // pred_region
        _
      $region16: #{video_clip_forward.4} parent=11 // pred_fallthru
        _
      // Predicated region
      $region17: #{video_clip_forward.4} parent=11 // pred_check
        %p517 = pneg %p95
      $region18: #{video_clip_forward.4} parent=11 // pred_check_branch
        %519 = sbr.rel (%p517) target = $region20
      $region19: #{video_clip_forward.4} parent=11 // pred_region
        _
      $region20: #{video_clip_forward.4} parent=11 // pred_fallthru
        _
      // Predicated region
      $region21: #{video_clip_forward.4} parent=11 // pred_check
        %p520 = pneg %p116
      $region22: #{video_clip_forward.4} parent=11 // pred_check_branch
        %522 = sbr.rel (%p520) target = $region24
      $region23: #{video_clip_forward.4} parent=11 // pred_region
        _
      $region24: #{video_clip_forward.4} parent=11 // pred_fallthru
        _
      // Predicated region
      $region25: #{video_clip_forward.4} parent=11 // pred_check
        %p523 = pneg %p137
      $region26: #{video_clip_forward.4} parent=11 // pred_check_branch
        %525 = sbr.rel (%p523) target = $region28
      $region27: #{video_clip_forward.4} parent=11 // pred_region
        _
      $region28: #{video_clip_forward.4} parent=11 // pred_fallthru
        _
      // Predicated region
      $region29: #{video_clip_forward.4} parent=11 // pred_check
        %p526 = pneg %p158
      $region30: #{video_clip_forward.4} parent=11 // pred_check_branch
        %528 = sbr.rel (%p526) target = $region32
      $region31: #{video_clip_forward.4} parent=11 // pred_region
        _
      $region32: #{video_clip_forward.4} parent=11 // pred_fallthru
        _
      // Predicated region
      $region33: #{video_clip_forward.4} parent=11 // pred_check
        %p529 = pneg %p179
      $region34: #{video_clip_forward.4} parent=11 // pred_check_branch
        %531 = sbr.rel (%p529) target = $region36
      $region35: #{video_clip_forward.4} parent=11 // pred_region
        _
      $region36: #{video_clip_forward.4} parent=11 // pred_fallthru
        _
      // Predicated region
      $region37: #{video_clip_forward.4} parent=11 // pred_check
        %p532 = pneg %p200
      $region38: #{video_clip_forward.4} parent=11 // pred_check_branch
        %534 = sbr.rel (%p532) target = $region40
      $region39: #{video_clip_forward.4} parent=11 // pred_region
        _
      $region40: #{video_clip_forward.4} parent=11 // pred_fallthru
        _
      // Predicated region
      $region41: #{video_clip_forward.4} parent=11 // pred_check
        %p535 = pneg %p221
      $region42: #{video_clip_forward.4} parent=11 // pred_check_branch
        %537 = sbr.rel (%p535) target = $region44
      $region43: #{video_clip_forward.4} parent=11 // pred_region
        _
      $region44: #{video_clip_forward.4} parent=11 // pred_fallthru
        _
      // Predicated region
      $region45: #{video_clip_forward.4} parent=11 // pred_check
        %p538 = pneg %p242
      $region46: #{video_clip_forward.4} parent=11 // pred_check_branch
        %540 = sbr.rel (%p538) target = $region48
      $region47: #{video_clip_forward.4} parent=11 // pred_region
        _
      $region48: #{video_clip_forward.4} parent=11 // pred_fallthru
        _
      // Predicated region
      $region49: #{video_clip_forward.4} parent=11 // pred_check
        %p541 = pneg %p263
      $region50: #{video_clip_forward.4} parent=11 // pred_check_branch
        %543 = sbr.rel (%p541) target = $region52
      $region51: #{video_clip_forward.4} parent=11 // pred_region
        _
      $region52: #{video_clip_forward.4} parent=11 // pred_fallthru
        _
      // Predicated region
      $region53: #{video_clip_forward.4} parent=11 // pred_check
        %p544 = pneg %p284
      $region54: #{video_clip_forward.4} parent=11 // pred_check_branch
        %546 = sbr.rel (%p544) target = $region56
      $region55: #{video_clip_forward.4} parent=11 // pred_region
        _
      $region56: #{video_clip_forward.4} parent=11 // pred_fallthru
        _
      // Predicated region
      $region57: #{video_clip_forward.4} parent=11 // pred_check
        %p547 = pneg %p305
      $region58: #{video_clip_forward.4} parent=11 // pred_check_branch
        %549 = sbr.rel (%p547) target = $region60
      $region59: #{video_clip_forward.4} parent=11 // pred_region
        _
      $region60: #{video_clip_forward.4} parent=11 // pred_fallthru
        _
      // Predicated region
      $region61: #{video_clip_forward.4} parent=11 // pred_check
        %p550 = pneg %p326
      $region62: #{video_clip_forward.4} parent=11 // pred_check_branch
        %552 = sbr.rel (%p550) target = $region64
      $region63: #{video_clip_forward.4} parent=11 // pred_region
        _
      $region64: #{video_clip_forward.4} parent=11 // pred_fallthru
        _
      // Predicated region
      $region65: #{video_clip_forward.4} parent=11 // pred_check
        %p553 = pneg %p347
      $region66: #{video_clip_forward.4} parent=11 // pred_check_branch
        %555 = sbr.rel (%p553) target = $region68
      $region67: #{video_clip_forward.4} parent=11 // pred_region
        _
      $region68: #{video_clip_forward.4} parent=11 // pred_fallthru
        _
      // Predicated region
      $region69: #{video_clip_forward.4} parent=11 // pred_check
        %p556 = pneg %p368
      $region70: #{video_clip_forward.4} parent=11 // pred_check_branch
        %558 = sbr.rel (%p556) target = $region72
      $region71: #{video_clip_forward.4} parent=11 // pred_region
        _
      $region72: #{video_clip_forward.4} parent=11 // pred_fallthru
        _
      // Predicated region
      $region73: #{video_clip_forward.4} parent=11 // pred_check
        %p559 = pneg %p389
      $region74: #{video_clip_forward.4} parent=11 // pred_check_branch
        %561 = sbr.rel (%p559) target = $region76
      $region75: #{video_clip_forward.4} parent=11 // pred_region
        _
      $region76: #{video_clip_forward.4} parent=11 // pred_fallthru
        _
      // Predicated region
      $region77: #{video_clip_forward.4} parent=11 // pred_check
        %p562 = pneg %p410
      $region78: #{video_clip_forward.4} parent=11 // pred_check_branch
        %564 = sbr.rel (%p562) target = $region80
      $region79: #{video_clip_forward.4} parent=11 // pred_region
        _
      $region80: #{video_clip_forward.4} parent=11 // pred_fallthru
        _
      // Predicated region
      $region81: #{video_clip_forward.4} parent=11 // pred_check
        %p565 = pneg %p431
      $region82: #{video_clip_forward.4} parent=11 // pred_check_branch
        %567 = sbr.rel (%p565) target = $region84
      $region83: #{video_clip_forward.4} parent=11 // pred_region
        _
      $region84: #{video_clip_forward.4} parent=11 // pred_fallthru
        _
      // Predicated region
      $region85: #{video_clip_forward.4} parent=11 // pred_check
        %p568 = pneg %p452
      $region86: #{video_clip_forward.4} parent=11 // pred_check_branch
        %570 = sbr.rel (%p568) target = $region88
      $region87: #{video_clip_forward.4} parent=11 // pred_region
        _
      $region88: #{video_clip_forward.4} parent=11 // pred_fallthru
        _
      // Predicated region
      $region89: #{video_clip_forward.4} parent=11 // pred_check
        %p571 = pneg %p473
      $region90: #{video_clip_forward.4} parent=11 // pred_check_branch
        %573 = sbr.rel (%p571) target = $region92
      $region91: #{video_clip_forward.4} parent=11 // pred_region
        _
      $region92: #{video_clip_forward.4} parent=11 // pred_fallthru
        _
    $region12: #{video_clip_forward.4} parent=5 // pred_fallthru
      _
    %p574 = scmp.lt.s32.totalorder %s27, 6
    // Predicated region
    $region93: #{video_clip_forward.4} parent=5 // pred_check
      %p575 = pneg %p574
    $region94: #{video_clip_forward.4} parent=5 // pred_check_branch
      %577 = sbr.rel (%p575) target = $region96
    $region95: #{video_clip_forward.4} parent=5 // pred_region
      // Predicated region
      $region97: #{video_clip_forward.4} parent=95 // pred_check
        %p578 = pneg %p47
      $region98: #{video_clip_forward.4} parent=95 // pred_check_branch
        %580 = sbr.rel (%p578) target = $region100
      $region99: #{video_clip_forward.4} parent=95 // pred_region
        %p581 = scmp.lt.s32.totalorder %s27, 5
        %s582 = scalar_select %p581, %s27, 5
        %s583 = smul.addr %s582, 2
        %s584 = smul.addr %s583, 4
        %s585 = scalar_lea.vmem %s0, %s584
      $region100: #{video_clip_forward.4} parent=95 // pred_fallthru
        _
    $region96: #{video_clip_forward.4} parent=5 // pred_fallthru
      _
    %p586 = scmp.le.s32.totalorder 1, %s27
    %p587 = scmp.lt.s32.totalorder %s27, 7
    %p588 = pnand %p586, %p587
    %p589 = pneg %p588
    // Predicated region
    $region101: #{video_clip_forward.4} parent=5 // pred_check
      _
    $region102: #{video_clip_forward.4} parent=5 // pred_check_branch
      %591 = sbr.rel (%p588) target = $region104
    $region103: #{video_clip_forward.4} parent=5 // pred_region
      %s592 = ssub.s32 %s27, 1
      %p593 = scmp.lt.s32.totalorder %s32, 5
      %s594 = scalar_select %p593, %s32, 5
      %s595 = smul.addr %s594, 2
      %s596 = smul.addr %s595, 4
      %s597 = scalar_lea.vmem %s0, %s596
      %p598 = pneg %p53
      %p599 = pneg %p50
      %p600 = pneg %p74
      %p601 = pneg %p71
      %p602 = pneg %p95
      %p603 = pneg %p92
      %p604 = pneg %p116
      %p605 = pneg %p113
      %p606 = pneg %p137
      %p607 = pneg %p134
      %p608 = pneg %p158
      %p609 = pneg %p155
      %p610 = pneg %p179
      %p611 = pneg %p176
      %p612 = pneg %p200
      %p613 = pneg %p197
      %p614 = pneg %p221
      %p615 = pneg %p218
      %p616 = pneg %p242
      %p617 = pneg %p239
      %p618 = pneg %p263
      %p619 = pneg %p260
      %p620 = pneg %p284
      %p621 = pneg %p281
      %p622 = pneg %p305
      %p623 = pneg %p302
      %p624 = pneg %p326
      %p625 = pneg %p323
      %p626 = pneg %p347
      %p627 = pneg %p344
      %p628 = pneg %p368
      %p629 = pneg %p365
      %p630 = pneg %p389
      %p631 = pneg %p386
      %p632 = pneg %p410
      %p633 = pneg %p407
      %p634 = pneg %p431
      %p635 = pneg %p428
      %p636 = pneg %p452
      %p637 = pneg %p449
      %p638 = pneg %p473
      %p639 = pneg %p470
      %p640 = pneg %p499
      %p641 = pneg %p496
      %p642 = scmp.lt.s32.totalorder %s32, 5
      %s643 = scalar_select %p642, %s32, 5
      %s644 = scalar_lea.vmem %s21, %s643
      %p645 = scmp.lt.s32.totalorder %s32, 5
      %s646 = scalar_select %p645, %s32, 5
      %s647 = smul.addr %s646, 2
      %s648 = smul.addr %s647, 4
      %s649 = scalar_lea.vmem %s0, %s648
      %p650 = scmp.lt.s32.totalorder %s32, 5
      %s651 = scalar_select %p650, %s32, 5
      %s652 = scalar_lea.vmem %s21, %s651
      %v654 = vld [vmem:[%s649] sm:$0xff]
      %v655 = vld [vmem:[%s1] sm:$0xff]
      %v656 = vld [vmem:[%s1 + $0x8] sm:$0xff]
      %v657 = vld [vmem:[%s1 + $0x10] sm:$0xff]
      %v658 = vld [vmem:[%s1 + $0x18] sm:$0xff]
      %v659 = vld [vmem:[%s1 + $0x20] sm:$0xff]
      %v660 = vld [vmem:[%s1 + $0x28] sm:$0xff]
      %v661 = vld [vmem:[%s1 + $0x30] sm:$0xff]
      %v662 = vld [vmem:[%s1 + $0x38] sm:$0xff]
      %v663 = vld [vmem:[%s1 + $0x40] sm:$0xff]
      %v664 = vld [vmem:[%s1 + $0x48] sm:$0xff]
      %v665 = vld [vmem:[%s1 + $0x50] sm:$0xff]
      %v666 = vld [vmem:[%s1 + $0x58] sm:$0xff]
      %v667 = vld [vmem:[%s1 + $0x60] sm:$0xff]
      %v668 = vld [vmem:[%s1 + $0x68] sm:$0xff]
      %v669 = vld [vmem:[%s1 + $0x70] sm:$0xff]
      %v670 = vld [vmem:[%s1 + $0x78] sm:$0xff]
      %v671 = vld [vmem:[%s1 + $0x80] sm:$0xff]
      %v672 = vld [vmem:[%s1 + $0x88] sm:$0xff]
      %v673 = vld [vmem:[%s1 + $0x90] sm:$0xff]
      %v674 = vld [vmem:[%s1 + $0x98] sm:$0xff]
      %v675 = vld [vmem:[%s1 + $0xa0] sm:$0xff]
      %v676 = vld [vmem:[%s1 + $0xa8] sm:$0xff]
      %v677 = vld [vmem:[%s1 + $0xb0] sm:$0xff]
      %v678 = vld [vmem:[%s1 + $0xb8] sm:$0xff]
      %v680 = vcombine.high %v654, %v654
      %v682 = vpack.c.bf16 %v654, %v654
      %v683 = vpack.c.bf16 %v680, %v680
      %v684 = vpack.c.bf16 %v656, %v655
      %v685 = vpack.c.bf16 %v658, %v657
      %v686 = vpack.c.bf16 %v660, %v659
      %v687 = vpack.c.bf16 %v662, %v661
      %v688 = vpack.c.bf16 %v664, %v663
      %v689 = vpack.c.bf16 %v666, %v665
      %v690 = vpack.c.bf16 %v668, %v667
      %v691 = vpack.c.bf16 %v670, %v669
      %v692 = vpack.c.bf16 %v672, %v671
      %v693 = vpack.c.bf16 %v674, %v673
      %v694 = vpack.c.bf16 %v676, %v675
      %v695 = vpack.c.bf16 %v678, %v677
      %vm696 = vcmask 523264
      %v698 = vsel %vm696, %v683, 0
      %700 = vmatprep.subr.bf16.mxu0 0
      %701 = vmatpush1.bf16.msra.mxu0 %v684
      %702 = vmatprep.subr.bf16.mxu0 0
      %703 = vmatpush1.bf16.msra.mxu0 %v685
      %704 = vmatprep.subr.bf16.mxu0 0
      %705 = vmatpush1.bf16.msra.mxu0 %v686
      %706 = vmatprep.subr.bf16.mxu0 0
      %707 = vmatpush1.bf16.msra.mxu0 %v687
      %708 = vmatprep.subr.bf16.mxu0 0
      %709 = vmatpush1.bf16.msra.mxu0 %v688
      %710 = vmatprep.subr.bf16.mxu0 0
      %711 = vmatpush1.bf16.msra.mxu0 %v689
      %712 = vmatprep.subr.bf16.mxu0 0
      %713 = vmatpush1.bf16.msra.mxu0 %v690
      %714 = vmatprep.subr.bf16.mxu0 0
      %715 = vmatpush1.bf16.msra.mxu0 %v691
      %716 = vmatprep.subr.bf16.mxu0 0
      %717 = vmatpush1.bf16.msra.mxu0 %v692
      %718 = vmatprep.subr.bf16.mxu0 0
      %719 = vmatpush1.bf16.msra.mxu0 %v693
      %720 = vmatprep.subr.bf16.mxu0 0
      %721 = vmatpush1.bf16.msra.mxu0 %v694
      %722 = vmatprep.subr.bf16.mxu0 0
      %723 = vmatpush1.bf16.msra.mxu0 %v695
      %724 = vmatprep.subr.bf16.mxu0 0
      %725 = vmatpush1.bf16.msra.mxu0 0
      %726 = vmatprep.subr.bf16.mxu0 0
      %727 = vmatpush1.bf16.msra.mxu0 0
      %728 = vmatprep.subr.bf16.mxu0 0
      %729 = vmatpush1.bf16.msra.mxu0 0
      %730 = vmatprep.subr.bf16.mxu0 0
      %731 = vmatpush1.bf16.msra.mxu0 0
      %732 = vmatprep.mubr.bf16.mxu0 %v698
      %733 = vmatmul.mubr.bf16.gmra.mrb[0].mxu0 %v682
      %v734 = vpop.f32.mrb[0].mxu0
      %v735 = vadd.f32 0.0, %v734
      %v736 = vpop.f32.mrb[0].mxu0
      %v737 = vpop.f32.mrb[0].mxu0
      %v738 = vpop.f32.mrb[0].mxu0
      %739 = vdwg.mxu0
      %v740 = vld [vmem:[%s2] sm:$0x1]
      %v742 = vrot.slane %v735, 7
      %vm744 = vcmask 1040384
      %v745 = vsel %vm744, %v740, %v742
      %v746 = vld [vmem:[%s3] sm:$0x1f]
      %v747 = vadd.f32 %v745, %v746
      %v748 = vld [vmem:[%s4] sm:$0x1]
      %v749 = vld [vmem:[%s5] sm:$0x1]
      %vm750 = vcmask 258048
      %v751 = vsel %vm750, %v747, 0.0
      %752 = vadd.xlane.f32.xlu0 %v751
      %v753 = vpop.xlane.xlu0 %752
      %v754 = vrcp.pop 32.0
      %v755 = vmul.f32 %v753, %v754
      %v756 = vsub.f32 %v747, %v755
      %v757 = vmul.f32 %v756, %v756
      %v758 = vsel %vm750, %v757, 0.0
      %759 = vadd.xlane.f32.xlu0 %v758
      %v760 = vpop.xlane.xlu0 %759
      %v761 = vmul.f32 %v760, %v754
      %v762 = vadd.f32 %v761, 1e-05
      %v763 = vrsqrt.pop %v762
      %v764 = vmul.f32 %v756, %v763
      %v766 = vlaneseq
      %v767 = vshrl.u32 %v766, 7
      %v768 = vsub.s32 0, %v767
      %v769 = vrot.slane %v748, %v768
      %v771 = vmul.f32 %v764, %v769
      %v773 = vlaneseq
      %v774 = vshrl.u32 %v773, 7
      %v775 = vsub.s32 0, %v774
      %v776 = vrot.slane %v749, %v775
      %v778 = vadd.f32 %v771, %v776
      %v779 = vld [vmem:[%s9] sm:$0x1]
      %v780 = vld [vmem:[%s10] sm:$0x1]
      %v781 = vld [vmem:[%s11] sm:$0xff]
      %v782 = vld [vmem:[%s11 + $0x8] sm:$0xff]
      %v783 = vld [vmem:[%s11 + $0x10] sm:$0xff]
      %v784 = vld [vmem:[%s11 + $0x18] sm:$0xff]
      %v785 = vld [vmem:[%s12] sm:$0x1]
      %v786 = vld [vmem:[%s13] sm:$0xff]
      %v787 = vld [vmem:[%s13 + $0x8] sm:$0xff]
      %v788 = vld [vmem:[%s13 + $0x10] sm:$0xff]
      %v789 = vld [vmem:[%s13 + $0x18] sm:$0xff]
      %v790 = vld [vmem:[%s14] sm:$0x1]
      %v791 = vld [vmem:[%s15] sm:$0x1]
      %v792 = vld [vmem:[%s16] sm:$0x1]
      %v793 = vld [vmem:[%s17] sm:$0xff]
      %v794 = vld [vmem:[%s17 + $0x8] sm:$0xff]
      %v795 = vld [vmem:[%s17 + $0x10] sm:$0xff]
      %v796 = vld [vmem:[%s17 + $0x18] sm:$0xff]
      %v797 = vld [vmem:[%s18] sm:$0x1]
      %v798 = vld [vmem:[%s19] sm:$0xff]
      %v799 = vld [vmem:[%s19 + $0x8] sm:$0xff]
      %v800 = vld [vmem:[%s19 + $0x10] sm:$0xff]
      %v801 = vld [vmem:[%s19 + $0x18] sm:$0xff]
      %v802 = vld [vmem:[%s19 + $0x20] sm:$0xff]
      %v803 = vld [vmem:[%s19 + $0x28] sm:$0xff]
      %v804 = vld [vmem:[%s19 + $0x30] sm:$0xff]
      %v805 = vld [vmem:[%s19 + $0x38] sm:$0xff]
      %v806 = vld [vmem:[%s19 + $0x40] sm:$0xff]
      %v807 = vld [vmem:[%s19 + $0x48] sm:$0xff]
      %v808 = vld [vmem:[%s19 + $0x50] sm:$0xff]
      %v809 = vld [vmem:[%s19 + $0x58] sm:$0xff]
      %v810 = vld [vmem:[%s19 + $0x60] sm:$0xff]
      %v811 = vld [vmem:[%s19 + $0x68] sm:$0xff]
      %v812 = vld [vmem:[%s19 + $0x70] sm:$0xff]
      %v813 = vld [vmem:[%s19 + $0x78] sm:$0xff]
      %v814 = vld [vmem:[%s20] sm:$0x1]
      %v815 = vsel %vm750, %v778, 0.0
      %816 = vadd.xlane.f32.xlu0 %v815
      %v817 = vpop.xlane.xlu0 %816
      %v818 = vmul.f32 %v817, %v754
      %v819 = vsub.f32 %v778, %v818
      %v820 = vmul.f32 %v819, %v819
      %v821 = vsel %vm750, %v820, 0.0
      %822 = vadd.xlane.f32.xlu0 %v821
      %v823 = vpop.xlane.xlu0 %822
      %v824 = vmul.f32 %v823, %v754
      %v825 = vadd.f32 %v824, 1e-05
      %v826 = vrsqrt.pop %v825
      %v827 = vmul.f32 %v819, %v826
      %v829 = vlaneseq
      %v830 = vshrl.u32 %v829, 7
      %v831 = vsub.s32 0, %v830
      %v832 = vrot.slane %v779, %v831
      %v834 = vmul.f32 %v827, %v832
      %v836 = vlaneseq
      %v837 = vshrl.u32 %v836, 7
      %v838 = vsub.s32 0, %v837
      %v839 = vrot.slane %v780, %v838
      %v841 = vadd.f32 %v834, %v839
      %v842 = vpack.c.bf16 %v841, %v841
      %v843 = vpack.c.bf16 %v782, %v781
      %v844 = vpack.c.bf16 %v784, %v783
      %v846 = vlaneseq
      %v847 = vshrl.u32 %v846, 7
      %v848 = vsub.s32 0, %v847
      %v849 = vrot.slane %v785, %v848
      %vm851 = vcmask 261120
      %v853 = vsel %vm851, %v842, 0
      %855 = vmatprep.subr.bf16.mxu0 0
      %856 = vmatpush1.bf16.msra.mxu0 %v843
      %857 = vmatprep.subr.bf16.mxu0 0
      %858 = vmatpush1.bf16.msra.mxu0 %v844
      %859 = vmatprep.subr.bf16.mxu0 0
      %860 = vmatpush1.bf16.msra.mxu0 0
      %861 = vmatprep.subr.bf16.mxu0 0
      %862 = vmatpush1.bf16.msra.mxu0 0
      %863 = vmatprep.subr.bf16.mxu0 0
      %864 = vmatpush1.bf16.msra.mxu0 0
      %865 = vmatprep.subr.bf16.mxu0 0
      %866 = vmatpush1.bf16.msra.mxu0 0
      %867 = vmatprep.subr.bf16.mxu0 0
      %868 = vmatpush1.bf16.msra.mxu0 0
      %869 = vmatprep.subr.bf16.mxu0 0
      %870 = vmatpush1.bf16.msra.mxu0 0
      %871 = vmatprep.subr.bf16.mxu0 0
      %872 = vmatpush1.bf16.msra.mxu0 0
      %873 = vmatprep.subr.bf16.mxu0 0
      %874 = vmatpush1.bf16.msra.mxu0 0
      %875 = vmatprep.subr.bf16.mxu0 0
      %876 = vmatpush1.bf16.msra.mxu0 0
      %877 = vmatprep.subr.bf16.mxu0 0
      %878 = vmatpush1.bf16.msra.mxu0 0
      %879 = vmatprep.subr.bf16.mxu0 0
      %880 = vmatpush1.bf16.msra.mxu0 0
      %881 = vmatprep.subr.bf16.mxu0 0
      %882 = vmatpush1.bf16.msra.mxu0 0
      %883 = vmatprep.subr.bf16.mxu0 0
      %884 = vmatpush1.bf16.msra.mxu0 0
      %885 = vmatprep.subr.bf16.mxu0 0
      %886 = vmatpush1.bf16.msra.mxu0 0
      %887 = vmatprep.mubr.bf16.mxu0 0
      %888 = vmatmul.mubr.bf16.gmra.mrb[0].mxu0 %v853
      %v889 = vpop.f32.mrb[0].mxu0
      %v890 = vadd.f32 %v849, %v889
      %v891 = vpop.f32.mrb[0].mxu0
      %v892 = vpop.f32.mrb[0].mxu0
      %v893 = vpop.f32.mrb[0].mxu0
      %894 = vdwg.mxu0
      %896 = vrot.lane.b32.xlu0 %v890, 96
      %v897 = vpop.permute.xlu0 %896
      %899 = vxpose.xlu0.b32.start [1/16] %v897, 128
      %900 = vxpose.xlu0.b32.cont [2/16] 0.0, 128
      %901 = vxpose.xlu0.b32.cont [3/16] 0.0, 128
      %902 = vxpose.xlu0.b32.cont [4/16] 0.0, 128
      %903 = vxpose.xlu0.b32.cont [5/16] 0.0, 128
      %904 = vxpose.xlu0.b32.cont [6/16] 0.0, 128
      %905 = vxpose.xlu0.b32.cont [7/16] 0.0, 128
      %906 = vxpose.xlu0.b32.cont [8/16] 0.0, 128
      %907 = vxpose.xlu0.b32.cont [9/16] 0.0, 128
      %908 = vxpose.xlu0.b32.cont [10/16] 0.0, 128
      %909 = vxpose.xlu0.b32.cont [11/16] 0.0, 128
      %910 = vxpose.xlu0.b32.cont [12/16] 0.0, 128
      %911 = vxpose.xlu0.b32.cont [13/16] 0.0, 128
      %912 = vxpose.xlu0.b32.cont [14/16] 0.0, 128
      %913 = vxpose.xlu0.b32.cont [15/16] 0.0, 128
      %914 = vxpose.xlu0.b32.end [16/16] 0.0, 128
      %v915 = vpop.trf.xlu0
      %v916 = vpop.trf.xlu0
      %v917 = vpop.trf.xlu0
      %v918 = vpop.trf.xlu0
      %v919 = vpop.trf.xlu0
      %v920 = vpop.trf.xlu0
      %v921 = vpop.trf.xlu0
      %v922 = vpop.trf.xlu0
      %v923 = vpop.trf.xlu0
      %v924 = vpop.trf.xlu0
      %v925 = vpop.trf.xlu0
      %v926 = vpop.trf.xlu0
      %v927 = vpop.trf.xlu0
      %v928 = vpop.trf.xlu0
      %v929 = vpop.trf.xlu0
      %v930 = vpop.trf.xlu0
      %v931 = vpack.c.bf16 %v890, %v890
      %v932 = vpack.c.bf16 %v915, %v915
      %vm933 = vcmask 64512
      %v935 = vsel %vm933, %v931, 0
      %vm937 = vcmask 1043456
      %v939 = vsel %vm937, %v932, 0
      %941 = vmatprep.subr.bf16.mxu0 0
      %942 = vmatpush1.bf16.msra.mxu0 %v939
      %943 = vmatprep.subr.bf16.mxu0 0
      %944 = vmatpush1.bf16.msra.mxu0 0
      %945 = vmatprep.subr.bf16.mxu0 0
      %946 = vmatpush1.bf16.msra.mxu0 0
      %947 = vmatprep.subr.bf16.mxu0 0
      %948 = vmatpush1.bf16.msra.mxu0 0
      %949 = vmatprep.subr.bf16.mxu0 0
      %950 = vmatpush1.bf16.msra.mxu0 0
      %951 = vmatprep.subr.bf16.mxu0 0
      %952 = vmatpush1.bf16.msra.mxu0 0
      %953 = vmatprep.subr.bf16.mxu0 0
      %954 = vmatpush1.bf16.msra.mxu0 0
      %955 = vmatprep.subr.bf16.mxu0 0
      %956 = vmatpush1.bf16.msra.mxu0 0
      %957 = vmatprep.subr.bf16.mxu0 0
      %958 = vmatpush1.bf16.msra.mxu0 0
      %959 = vmatprep.subr.bf16.mxu0 0
      %960 = vmatpush1.bf16.msra.mxu0 0
      %961 = vmatprep.subr.bf16.mxu0 0
      %962 = vmatpush1.bf16.msra.mxu0 0
      %963 = vmatprep.subr.bf16.mxu0 0
      %964 = vmatpush1.bf16.msra.mxu0 0
      %965 = vmatprep.subr.bf16.mxu0 0
      %966 = vmatpush1.bf16.msra.mxu0 0
      %967 = vmatprep.subr.bf16.mxu0 0
      %968 = vmatpush1.bf16.msra.mxu0 0
      %969 = vmatprep.subr.bf16.mxu0 0
      %970 = vmatpush1.bf16.msra.mxu0 0
      %971 = vmatprep.subr.bf16.mxu0 0
      %972 = vmatpush1.bf16.msra.mxu0 0
      %973 = vmatprep.mubr.bf16.mxu0 0
      %974 = vmatmul.mubr.bf16.gmra.mrb[0].mxu0 %v935
      %v975 = vpop.f32.mrb[0].mxu0
      %v976 = vadd.f32 0.0, %v975
      %v977 = vpop.f32.mrb[0].mxu0
      %v978 = vpop.f32.mrb[0].mxu0
      %v979 = vpop.f32.mrb[0].mxu0
      %980 = vdwg.mxu0
      %v981 = vmul.f32 %v976, 0.35355338
      %vm982 = vcmask 36864
      %v983 = vsel %vm982, %v981, -inf
      %984 = vmax.xlane.f32.xlu0 %v983
      %v985 = vpop.xlane.xlu0 %984
      %v986 = vsub.f32 %v981, %v985
      %v987 = vmul.f32 %v986, 1.442695
      %v988 = vpow.pop %v987
      %v989 = vsel %vm982, %v988, 0.0
      %990 = vadd.xlane.f32.xlu0 %v989
      %v991 = vpop.xlane.xlu0 %990
      %v992 = vrcp.pop %v991
      %v993 = vmul.f32 %v988, %v992
      %v994 = vpack.c.bf16 %v993, %v993
      %996 = vrot.lane.b32.xlu0 %v931, 64
      %v997 = vpop.permute.xlu0 %996
      %vm998 = vcmask 39936
      %v1000 = vsel %vm998, %v994, 0
      %vm1002 = vcmask 1041408
      %vm1003 = vcmask 1042432
      %v1004 = vsel %vm1002, 4294967295, 65535
      %v1005 = vsel %vm1003, %v1004, 0
      %v1007 = vand.u32 %v997, %v1005
      %1009 = vmatprep.subr.bf16.mxu0 0
      %1010 = vmatpush1.bf16.msra.mxu0 %v1007
      %1011 = vmatprep.subr.bf16.mxu0 0
      %1012 = vmatpush1.bf16.msra.mxu0 0
      %1013 = vmatprep.subr.bf16.mxu0 0
      %1014 = vmatpush1.bf16.msra.mxu0 0
      %1015 = vmatprep.subr.bf16.mxu0 0
      %1016 = vmatpush1.bf16.msra.mxu0 0
      %1017 = vmatprep.subr.bf16.mxu0 0
      %1018 = vmatpush1.bf16.msra.mxu0 0
      %1019 = vmatprep.subr.bf16.mxu0 0
      %1020 = vmatpush1.bf16.msra.mxu0 0
      %1021 = vmatprep.subr.bf16.mxu0 0
      %1022 = vmatpush1.bf16.msra.mxu0 0
      %1023 = vmatprep.subr.bf16.mxu0 0
      %1024 = vmatpush1.bf16.msra.mxu0 0
      %1025 = vmatprep.subr.bf16.mxu0 0
      %1026 = vmatpush1.bf16.msra.mxu0 0
      %1027 = vmatprep.subr.bf16.mxu0 0
      %1028 = vmatpush1.bf16.msra.mxu0 0
      %1029 = vmatprep.subr.bf16.mxu0 0
      %1030 = vmatpush1.bf16.msra.mxu0 0
      %1031 = vmatprep.subr.bf16.mxu0 0
      %1032 = vmatpush1.bf16.msra.mxu0 0
      %1033 = vmatprep.subr.bf16.mxu0 0
      %1034 = vmatpush1.bf16.msra.mxu0 0
      %1035 = vmatprep.subr.bf16.mxu0 0
      %1036 = vmatpush1.bf16.msra.mxu0 0
      %1037 = vmatprep.subr.bf16.mxu0 0
      %1038 = vmatpush1.bf16.msra.mxu0 0
      %1039 = vmatprep.subr.bf16.mxu0 0
      %1040 = vmatpush1.bf16.msra.mxu0 0
      %1041 = vmatprep.mubr.bf16.mxu0 0
      %1042 = vmatmul.mubr.bf16.gmra.mrb[0].mxu0 %v1000
      %v1043 = vpop.f32.mrb[0].mxu0
      %v1044 = vadd.f32 0.0, %v1043
      %v1045 = vpop.f32.mrb[0].mxu0
      %v1046 = vpop.f32.mrb[0].mxu0
      %v1047 = vpop.f32.mrb[0].mxu0
      %1048 = vdwg.mxu0
      %1049 = vrot.lane.b32.xlu0 %v890, 88
      %v1050 = vpop.permute.xlu0 %1049
      %1052 = vxpose.xlu0.b32.start [1/16] %v1050, 128
      %1053 = vxpose.xlu0.b32.cont [2/16] 0.0, 128
      %1054 = vxpose.xlu0.b32.cont [3/16] 0.0, 128
      %1055 = vxpose.xlu0.b32.cont [4/16] 0.0, 128
      %1056 = vxpose.xlu0.b32.cont [5/16] 0.0, 128
      %1057 = vxpose.xlu0.b32.cont [6/16] 0.0, 128
      %1058 = vxpose.xlu0.b32.cont [7/16] 0.0, 128
      %1059 = vxpose.xlu0.b32.cont [8/16] 0.0, 128
      %1060 = vxpose.xlu0.b32.cont [9/16] 0.0, 128
      %1061 = vxpose.xlu0.b32.cont [10/16] 0.0, 128
      %1062 = vxpose.xlu0.b32.cont [11/16] 0.0, 128
      %1063 = vxpose.xlu0.b32.cont [12/16] 0.0, 128
      %1064 = vxpose.xlu0.b32.cont [13/16] 0.0, 128
      %1065 = vxpose.xlu0.b32.cont [14/16] 0.0, 128
      %1066 = vxpose.xlu0.b32.cont [15/16] 0.0, 128
      %1067 = vxpose.xlu0.b32.end [16/16] 0.0, 128
      %v1068 = vpop.trf.xlu0
      %v1069 = vpop.trf.xlu0
      %v1070 = vpop.trf.xlu0
      %v1071 = vpop.trf.xlu0
      %v1072 = vpop.trf.xlu0
      %v1073 = vpop.trf.xlu0
      %v1074 = vpop.trf.xlu0
      %v1075 = vpop.trf.xlu0
      %v1076 = vpop.trf.xlu0
      %v1077 = vpop.trf.xlu0
      %v1078 = vpop.trf.xlu0
      %v1079 = vpop.trf.xlu0
      %v1080 = vpop.trf.xlu0
      %v1081 = vpop.trf.xlu0
      %v1082 = vpop.trf.xlu0
      %v1083 = vpop.trf.xlu0
      %v1084 = vpack.c.bf16 %v1068, %v1068
      %1085 = vrot.lane.b32.xlu0 %v931, 120
      %v1086 = vpop.permute.xlu0 %1085
      %v1088 = vsel %vm933, %v1086, 0
      %v1091 = vsel %vm937, %v1084, 0
      %1093 = vmatprep.subr.bf16.mxu0 0
      %1094 = vmatpush1.bf16.msra.mxu0 %v1091
      %1095 = vmatprep.subr.bf16.mxu0 0
      %1096 = vmatpush1.bf16.msra.mxu0 0
      %1097 = vmatprep.subr.bf16.mxu0 0
      %1098 = vmatpush1.bf16.msra.mxu0 0
      %1099 = vmatprep.subr.bf16.mxu0 0
      %1100 = vmatpush1.bf16.msra.mxu0 0
      %1101 = vmatprep.subr.bf16.mxu0 0
      %1102 = vmatpush1.bf16.msra.mxu0 0
      %1103 = vmatprep.subr.bf16.mxu0 0
      %1104 = vmatpush1.bf16.msra.mxu0 0
      %1105 = vmatprep.subr.bf16.mxu0 0
      %1106 = vmatpush1.bf16.msra.mxu0 0
      %1107 = vmatprep.subr.bf16.mxu0 0
      %1108 = vmatpush1.bf16.msra.mxu0 0
      %1109 = vmatprep.subr.bf16.mxu0 0
      %1110 = vmatpush1.bf16.msra.mxu0 0
      %1111 = vmatprep.subr.bf16.mxu0 0
      %1112 = vmatpush1.bf16.msra.mxu0 0
      %1113 = vmatprep.subr.bf16.mxu0 0
      %1114 = vmatpush1.bf16.msra.mxu0 0
      %1115 = vmatprep.subr.bf16.mxu0 0
      %1116 = vmatpush1.bf16.msra.mxu0 0
      %1117 = vmatprep.subr.bf16.mxu0 0
      %1118 = vmatpush1.bf16.msra.mxu0 0
      %1119 = vmatprep.subr.bf16.mxu0 0
      %1120 = vmatpush1.bf16.msra.mxu0 0
      %1121 = vmatprep.subr.bf16.mxu0 0
      %1122 = vmatpush1.bf16.msra.mxu0 0
      %1123 = vmatprep.subr.bf16.mxu0 0
      %1124 = vmatpush1.bf16.msra.mxu0 0
      %1125 = vmatprep.mubr.bf16.mxu0 0
      %1126 = vmatmul.mubr.bf16.gmra.mrb[0].mxu0 %v1088
      %v1127 = vpop.f32.mrb[0].mxu0
      %v1128 = vadd.f32 0.0, %v1127
      %v1129 = vpop.f32.mrb[0].mxu0
      %v1130 = vpop.f32.mrb[0].mxu0
      %v1131 = vpop.f32.mrb[0].mxu0
      %1132 = vdwg.mxu0
      %v1133 = vmul.f32 %v1128, 0.35355338
      %v1134 = vsel %vm982, %v1133, -inf
      %1135 = vmax.xlane.f32.xlu0 %v1134
      %v1136 = vpop.xlane.xlu0 %1135
      %v1137 = vsub.f32 %v1133, %v1136
      %v1138 = vmul.f32 %v1137, 1.442695
      %v1139 = vpow.pop %v1138
      %v1140 = vsel %vm982, %v1139, 0.0
      %1141 = vadd.xlane.f32.xlu0 %v1140
      %v1142 = vpop.xlane.xlu0 %1141
      %v1143 = vrcp.pop %v1142
      %v1144 = vmul.f32 %v1139, %v1143
      %v1145 = vpack.c.bf16 %v1144, %v1144
      %1146 = vrot.lane.b32.xlu0 %v931, 56
      %v1147 = vpop.permute.xlu0 %1146
      %v1149 = vsel %vm998, %v1145, 0
      %v1152 = vand.u32 %v1147, %v1005
      %1154 = vmatprep.subr.bf16.mxu0 0
      %1155 = vmatpush1.bf16.msra.mxu0 %v1152
      %1156 = vmatprep.subr.bf16.mxu0 0
      %1157 = vmatpush1.bf16.msra.mxu0 0
      %1158 = vmatprep.subr.bf16.mxu0 0
      %1159 = vmatpush1.bf16.msra.mxu0 0
      %1160 = vmatprep.subr.bf16.mxu0 0
      %1161 = vmatpush1.bf16.msra.mxu0 0
      %1162 = vmatprep.subr.bf16.mxu0 0
      %1163 = vmatpush1.bf16.msra.mxu0 0
      %1164 = vmatprep.subr.bf16.mxu0 0
      %1165 = vmatpush1.bf16.msra.mxu0 0
      %1166 = vmatprep.subr.bf16.mxu0 0
      %1167 = vmatpush1.bf16.msra.mxu0 0
      %1168 = vmatprep.subr.bf16.mxu0 0
      %1169 = vmatpush1.bf16.msra.mxu0 0
      %1170 = vmatprep.subr.bf16.mxu0 0
      %1171 = vmatpush1.bf16.msra.mxu0 0
      %1172 = vmatprep.subr.bf16.mxu0 0
      %1173 = vmatpush1.bf16.msra.mxu0 0
      %1174 = vmatprep.subr.bf16.mxu0 0
      %1175 = vmatpush1.bf16.msra.mxu0 0
      %1176 = vmatprep.subr.bf16.mxu0 0
      %1177 = vmatpush1.bf16.msra.mxu0 0
      %1178 = vmatprep.subr.bf16.mxu0 0
      %1179 = vmatpush1.bf16.msra.mxu0 0
      %1180 = vmatprep.subr.bf16.mxu0 0
      %1181 = vmatpush1.bf16.msra.mxu0 0
      %1182 = vmatprep.subr.bf16.mxu0 0
      %1183 = vmatpush1.bf16.msra.mxu0 0
      %1184 = vmatprep.subr.bf16.mxu0 0
      %1185 = vmatpush1.bf16.msra.mxu0 0
      %1186 = vmatprep.mubr.bf16.mxu0 0
      %1187 = vmatmul.mubr.bf16.gmra.mrb[0].mxu0 %v1149
      %v1188 = vpop.f32.mrb[0].mxu0
      %v1189 = vadd.f32 0.0, %v1188
      %v1190 = vpop.f32.mrb[0].mxu0
      %v1191 = vpop.f32.mrb[0].mxu0
      %v1192 = vpop.f32.mrb[0].mxu0
      %1193 = vdwg.mxu0
      %1194 = vrot.lane.b32.xlu0 %v890, 80
      %v1195 = vpop.permute.xlu0 %1194
      %1197 = vxpose.xlu0.b32.start [1/16] %v1195, 128
      %1198 = vxpose.xlu0.b32.cont [2/16] 0.0, 128
      %1199 = vxpose.xlu0.b32.cont [3/16] 0.0, 128
      %1200 = vxpose.xlu0.b32.cont [4/16] 0.0, 128
      %1201 = vxpose.xlu0.b32.cont [5/16] 0.0, 128
      %1202 = vxpose.xlu0.b32.cont [6/16] 0.0, 128
      %1203 = vxpose.xlu0.b32.cont [7/16] 0.0, 128
      %1204 = vxpose.xlu0.b32.cont [8/16] 0.0, 128
      %1205 = vxpose.xlu0.b32.cont [9/16] 0.0, 128
      %1206 = vxpose.xlu0.b32.cont [10/16] 0.0, 128
      %1207 = vxpose.xlu0.b32.cont [11/16] 0.0, 128
      %1208 = vxpose.xlu0.b32.cont [12/16] 0.0, 128
      %1209 = vxpose.xlu0.b32.cont [13/16] 0.0, 128
      %1210 = vxpose.xlu0.b32.cont [14/16] 0.0, 128
      %1211 = vxpose.xlu0.b32.cont [15/16] 0.0, 128
      %1212 = vxpose.xlu0.b32.end [16/16] 0.0, 128
      %v1213 = vpop.trf.xlu0
      %v1214 = vpop.trf.xlu0
      %v1215 = vpop.trf.xlu0
      %v1216 = vpop.trf.xlu0
      %v1217 = vpop.trf.xlu0
      %v1218 = vpop.trf.xlu0
      %v1219 = vpop.trf.xlu0
      %v1220 = vpop.trf.xlu0
      %v1221 = vpop.trf.xlu0
      %v1222 = vpop.trf.xlu0
      %v1223 = vpop.trf.xlu0
      %v1224 = vpop.trf.xlu0
      %v1225 = vpop.trf.xlu0
      %v1226 = vpop.trf.xlu0
      %v1227 = vpop.trf.xlu0
      %v1228 = vpop.trf.xlu0
      %v1229 = vpack.c.bf16 %v1213, %v1213
      %1230 = vrot.lane.b32.xlu0 %v931, 112
      %v1231 = vpop.permute.xlu0 %1230
      %v1233 = vsel %vm933, %v1231, 0
      %v1236 = vsel %vm937, %v1229, 0
      %1238 = vmatprep.subr.bf16.mxu0 0
      %1239 = vmatpush1.bf16.msra.mxu0 %v1236
      %1240 = vmatprep.subr.bf16.mxu0 0
      %1241 = vmatpush1.bf16.msra.mxu0 0
      %1242 = vmatprep.subr.bf16.mxu0 0
      %1243 = vmatpush1.bf16.msra.mxu0 0
      %1244 = vmatprep.subr.bf16.mxu0 0
      %1245 = vmatpush1.bf16.msra.mxu0 0
      %1246 = vmatprep.subr.bf16.mxu0 0
      %1247 = vmatpush1.bf16.msra.mxu0 0
      %1248 = vmatprep.subr.bf16.mxu0 0
      %1249 = vmatpush1.bf16.msra.mxu0 0
      %1250 = vmatprep.subr.bf16.mxu0 0
      %1251 = vmatpush1.bf16.msra.mxu0 0
      %1252 = vmatprep.subr.bf16.mxu0 0
      %1253 = vmatpush1.bf16.msra.mxu0 0
      %1254 = vmatprep.subr.bf16.mxu0 0
      %1255 = vmatpush1.bf16.msra.mxu0 0
      %1256 = vmatprep.subr.bf16.mxu0 0
      %1257 = vmatpush1.bf16.msra.mxu0 0
      %1258 = vmatprep.subr.bf16.mxu0 0
      %1259 = vmatpush1.bf16.msra.mxu0 0
      %1260 = vmatprep.subr.bf16.mxu0 0
      %1261 = vmatpush1.bf16.msra.mxu0 0
      %1262 = vmatprep.subr.bf16.mxu0 0
      %1263 = vmatpush1.bf16.msra.mxu0 0
      %1264 = vmatprep.subr.bf16.mxu0 0
      %1265 = vmatpush1.bf16.msra.mxu0 0
      %1266 = vmatprep.subr.bf16.mxu0 0
      %1267 = vmatpush1.bf16.msra.mxu0 0
      %1268 = vmatprep.subr.bf16.mxu0 0
      %1269 = vmatpush1.bf16.msra.mxu0 0
      %1270 = vmatprep.mubr.bf16.mxu0 0
      %1271 = vmatmul.mubr.bf16.gmra.mrb[0].mxu0 %v1233
      %v1272 = vpop.f32.mrb[0].mxu0
      %v1273 = vadd.f32 0.0, %v1272
      %v1274 = vpop.f32.mrb[0].mxu0
      %v1275 = vpop.f32.mrb[0].mxu0
      %v1276 = vpop.f32.mrb[0].mxu0
      %1277 = vdwg.mxu0
      %v1278 = vmul.f32 %v1273, 0.35355338
      %v1279 = vsel %vm982, %v1278, -inf
      %1280 = vmax.xlane.f32.xlu0 %v1279
      %v1281 = vpop.xlane.xlu0 %1280
      %v1282 = vsub.f32 %v1278, %v1281
      %v1283 = vmul.f32 %v1282, 1.442695
      %v1284 = vpow.pop %v1283
      %v1285 = vsel %vm982, %v1284, 0.0
      %1286 = vadd.xlane.f32.xlu0 %v1285
      %v1287 = vpop.xlane.xlu0 %1286
      %v1288 = vrcp.pop %v1287
      %v1289 = vmul.f32 %v1284, %v1288
      %v1290 = vpack.c.bf16 %v1289, %v1289
      %1291 = vrot.lane.b32.xlu0 %v931, 48
      %v1292 = vpop.permute.xlu0 %1291
      %v1294 = vsel %vm998, %v1290, 0
      %v1297 = vand.u32 %v1292, %v1005
      %1299 = vmatprep.subr.bf16.mxu0 0
      %1300 = vmatpush1.bf16.msra.mxu0 %v1297
      %1301 = vmatprep.subr.bf16.mxu0 0
      %1302 = vmatpush1.bf16.msra.mxu0 0
      %1303 = vmatprep.subr.bf16.mxu0 0
      %1304 = vmatpush1.bf16.msra.mxu0 0
      %1305 = vmatprep.subr.bf16.mxu0 0
      %1306 = vmatpush1.bf16.msra.mxu0 0
      %1307 = vmatprep.subr.bf16.mxu0 0
      %1308 = vmatpush1.bf16.msra.mxu0 0
      %1309 = vmatprep.subr.bf16.mxu0 0
      %1310 = vmatpush1.bf16.msra.mxu0 0
      %1311 = vmatprep.subr.bf16.mxu0 0
      %1312 = vmatpush1.bf16.msra.mxu0 0
      %1313 = vmatprep.subr.bf16.mxu0 0
      %1314 = vmatpush1.bf16.msra.mxu0 0
      %1315 = vmatprep.subr.bf16.mxu0 0
      %1316 = vmatpush1.bf16.msra.mxu0 0
      %1317 = vmatprep.subr.bf16.mxu0 0
      %1318 = vmatpush1.bf16.msra.mxu0 0
      %1319 = vmatprep.subr.bf16.mxu0 0
      %1320 = vmatpush1.bf16.msra.mxu0 0
      %1321 = vmatprep.subr.bf16.mxu0 0
      %1322 = vmatpush1.bf16.msra.mxu0 0
      %1323 = vmatprep.subr.bf16.mxu0 0
      %1324 = vmatpush1.bf16.msra.mxu0 0
      %1325 = vmatprep.subr.bf16.mxu0 0
      %1326 = vmatpush1.bf16.msra.mxu0 0
      %1327 = vmatprep.subr.bf16.mxu0 0
      %1328 = vmatpush1.bf16.msra.mxu0 0
      %1329 = vmatprep.subr.bf16.mxu0 0
      %1330 = vmatpush1.bf16.msra.mxu0 0
      %1331 = vmatprep.mubr.bf16.mxu0 0
      %1332 = vmatmul.mubr.bf16.gmra.mrb[0].mxu0 %v1294
      %v1333 = vpop.f32.mrb[0].mxu0
      %v1334 = vadd.f32 0.0, %v1333
      %v1335 = vpop.f32.mrb[0].mxu0
      %v1336 = vpop.f32.mrb[0].mxu0
      %v1337 = vpop.f32.mrb[0].mxu0
      %1338 = vdwg.mxu0
      %1339 = vrot.lane.b32.xlu0 %v890, 72
      %v1340 = vpop.permute.xlu0 %1339
      %1342 = vxpose.xlu0.b32.start [1/16] %v1340, 128
      %1343 = vxpose.xlu0.b32.cont [2/16] 0.0, 128
      %1344 = vxpose.xlu0.b32.cont [3/16] 0.0, 128
      %1345 = vxpose.xlu0.b32.cont [4/16] 0.0, 128
      %1346 = vxpose.xlu0.b32.cont [5/16] 0.0, 128
      %1347 = vxpose.xlu0.b32.cont [6/16] 0.0, 128
      %1348 = vxpose.xlu0.b32.cont [7/16] 0.0, 128
      %1349 = vxpose.xlu0.b32.cont [8/16] 0.0, 128
      %1350 = vxpose.xlu0.b32.cont [9/16] 0.0, 128
      %1351 = vxpose.xlu0.b32.cont [10/16] 0.0, 128
      %1352 = vxpose.xlu0.b32.cont [11/16] 0.0, 128
      %1353 = vxpose.xlu0.b32.cont [12/16] 0.0, 128
      %1354 = vxpose.xlu0.b32.cont [13/16] 0.0, 128
      %1355 = vxpose.xlu0.b32.cont [14/16] 0.0, 128
      %1356 = vxpose.xlu0.b32.cont [15/16] 0.0, 128
      %1357 = vxpose.xlu0.b32.end [16/16] 0.0, 128
      %v1358 = vpop.trf.xlu0
      %v1359 = vpop.trf.xlu0
      %v1360 = vpop.trf.xlu0
      %v1361 = vpop.trf.xlu0
      %v1362 = vpop.trf.xlu0
      %v1363 = vpop.trf.xlu0
      %v1364 = vpop.trf.xlu0
      %v1365 = vpop.trf.xlu0
      %v1366 = vpop.trf.xlu0
      %v1367 = vpop.trf.xlu0
      %v1368 = vpop.trf.xlu0
      %v1369 = vpop.trf.xlu0
      %v1370 = vpop.trf.xlu0
      %v1371 = vpop.trf.xlu0
      %v1372 = vpop.trf.xlu0
      %v1373 = vpop.trf.xlu0
      %v1374 = vpack.c.bf16 %v1358, %v1358
      %1375 = vrot.lane.b32.xlu0 %v931, 104
      %v1376 = vpop.permute.xlu0 %1375
      %v1378 = vsel %vm933, %v1376, 0
      %v1381 = vsel %vm937, %v1374, 0
      %1383 = vmatprep.subr.bf16.mxu0 0
      %1384 = vmatpush1.bf16.msra.mxu0 %v1381
      %1385 = vmatprep.subr.bf16.mxu0 0
      %1386 = vmatpush1.bf16.msra.mxu0 0
      %1387 = vmatprep.subr.bf16.mxu0 0
      %1388 = vmatpush1.bf16.msra.mxu0 0
      %1389 = vmatprep.subr.bf16.mxu0 0
      %1390 = vmatpush1.bf16.msra.mxu0 0
      %1391 = vmatprep.subr.bf16.mxu0 0
      %1392 = vmatpush1.bf16.msra.mxu0 0
      %1393 = vmatprep.subr.bf16.mxu0 0
      %1394 = vmatpush1.bf16.msra.mxu0 0
      %1395 = vmatprep.subr.bf16.mxu0 0
      %1396 = vmatpush1.bf16.msra.mxu0 0
      %1397 = vmatprep.subr.bf16.mxu0 0
      %1398 = vmatpush1.bf16.msra.mxu0 0
      %1399 = vmatprep.subr.bf16.mxu0 0
      %1400 = vmatpush1.bf16.msra.mxu0 0
      %1401 = vmatprep.subr.bf16.mxu0 0
      %1402 = vmatpush1.bf16.msra.mxu0 0
      %1403 = vmatprep.subr.bf16.mxu0 0
      %1404 = vmatpush1.bf16.msra.mxu0 0
      %1405 = vmatprep.subr.bf16.mxu0 0
      %1406 = vmatpush1.bf16.msra.mxu0 0
      %1407 = vmatprep.subr.bf16.mxu0 0
      %1408 = vmatpush1.bf16.msra.mxu0 0
      %1409 = vmatprep.subr.bf16.mxu0 0
      %1410 = vmatpush1.bf16.msra.mxu0 0
      %1411 = vmatprep.subr.bf16.mxu0 0
      %1412 = vmatpush1.bf16.msra.mxu0 0
      %1413 = vmatprep.subr.bf16.mxu0 0
      %1414 = vmatpush1.bf16.msra.mxu0 0
      %1415 = vmatprep.mubr.bf16.mxu0 0
      %1416 = vmatmul.mubr.bf16.gmra.mrb[0].mxu0 %v1378
      %v1417 = vpop.f32.mrb[0].mxu0
      %v1418 = vadd.f32 0.0, %v1417
      %v1419 = vpop.f32.mrb[0].mxu0
      %v1420 = vpop.f32.mrb[0].mxu0
      %v1421 = vpop.f32.mrb[0].mxu0
      %1422 = vdwg.mxu0
      %v1423 = vmul.f32 %v1418, 0.35355338
      %v1424 = vsel %vm982, %v1423, -inf
      %1425 = vmax.xlane.f32.xlu0 %v1424
      %v1426 = vpop.xlane.xlu0 %1425
      %v1427 = vsub.f32 %v1423, %v1426
      %v1428 = vmul.f32 %v1427, 1.442695
      %v1429 = vpow.pop %v1428
      %v1430 = vsel %vm982, %v1429, 0.0
      %1431 = vadd.xlane.f32.xlu0 %v1430
      %v1432 = vpop.xlane.xlu0 %1431
      %v1433 = vrcp.pop %v1432
      %v1434 = vmul.f32 %v1429, %v1433
      %v1435 = vpack.c.bf16 %v1434, %v1434
      %1436 = vrot.lane.b32.xlu0 %v931, 40
      %v1437 = vpop.permute.xlu0 %1436
      %v1439 = vsel %vm998, %v1435, 0
      %v1442 = vand.u32 %v1437, %v1005
      %1444 = vmatprep.subr.bf16.mxu0 0
      %1445 = vmatpush1.bf16.msra.mxu0 %v1442
      %1446 = vmatprep.subr.bf16.mxu0 0
      %1447 = vmatpush1.bf16.msra.mxu0 0
      %1448 = vmatprep.subr.bf16.mxu0 0
      %1449 = vmatpush1.bf16.msra.mxu0 0
      %1450 = vmatprep.subr.bf16.mxu0 0
      %1451 = vmatpush1.bf16.msra.mxu0 0
      %1452 = vmatprep.subr.bf16.mxu0 0
      %1453 = vmatpush1.bf16.msra.mxu0 0
      %1454 = vmatprep.subr.bf16.mxu0 0
      %1455 = vmatpush1.bf16.msra.mxu0 0
      %1456 = vmatprep.subr.bf16.mxu0 0
      %1457 = vmatpush1.bf16.msra.mxu0 0
      %1458 = vmatprep.subr.bf16.mxu0 0
      %1459 = vmatpush1.bf16.msra.mxu0 0
      %1460 = vmatprep.subr.bf16.mxu0 0
      %1461 = vmatpush1.bf16.msra.mxu0 0
      %1462 = vmatprep.subr.bf16.mxu0 0
      %1463 = vmatpush1.bf16.msra.mxu0 0
      %1464 = vmatprep.subr.bf16.mxu0 0
      %1465 = vmatpush1.bf16.msra.mxu0 0
      %1466 = vmatprep.subr.bf16.mxu0 0
      %1467 = vmatpush1.bf16.msra.mxu0 0
      %1468 = vmatprep.subr.bf16.mxu0 0
      %1469 = vmatpush1.bf16.msra.mxu0 0
      %1470 = vmatprep.subr.bf16.mxu0 0
      %1471 = vmatpush1.bf16.msra.mxu0 0
      %1472 = vmatprep.subr.bf16.mxu0 0
      %1473 = vmatpush1.bf16.msra.mxu0 0
      %1474 = vmatprep.subr.bf16.mxu0 0
      %1475 = vmatpush1.bf16.msra.mxu0 0
      %1476 = vmatprep.mubr.bf16.mxu0 0
      %1477 = vmatmul.mubr.bf16.gmra.mrb[0].mxu0 %v1439
      %v1478 = vpop.f32.mrb[0].mxu0
      %v1479 = vadd.f32 0.0, %v1478
      %v1480 = vpop.f32.mrb[0].mxu0
      %v1481 = vpop.f32.mrb[0].mxu0
      %v1482 = vpop.f32.mrb[0].mxu0
      %1483 = vdwg.mxu0
      %1485 = vrot.lane.b32.xlu0 %v1189, 8
      %v1486 = vpop.permute.xlu0 %1485
      %1489 = vrot.lane.b32.xlu0 %v1334, 16
      %v1490 = vpop.permute.xlu0 %1489
      %1493 = vrot.lane.b32.xlu0 %v1479, 24
      %v1494 = vpop.permute.xlu0 %1493
      %v1496 = vsel %vm933, %v1044, %v1486
      %vm1497 = vcmask 130048
      %v1498 = vsel %vm1497, %v1496, %v1490
      %vm1499 = vcmask 195584
      %v1500 = vsel %vm1499, %v1498, %v1494
      %v1501 = vpack.c.bf16 %v1500, %v1500
      %v1502 = vpack.c.bf16 %v787, %v786
      %v1503 = vpack.c.bf16 %v789, %v788
      %v1505 = vlaneseq
      %v1506 = vshrl.u32 %v1505, 7
      %v1507 = vsub.s32 0, %v1506
      %v1508 = vrot.slane %v790, %v1507
      %v1511 = vsel %vm851, %v1501, 0
      %1513 = vmatprep.subr.bf16.mxu0 0
      %1514 = vmatpush1.bf16.msra.mxu0 %v1502
      %1515 = vmatprep.subr.bf16.mxu0 0
      %1516 = vmatpush1.bf16.msra.mxu0 %v1503
      %1517 = vmatprep.subr.bf16.mxu0 0
      %1518 = vmatpush1.bf16.msra.mxu0 0
      %1519 = vmatprep.subr.bf16.mxu0 0
      %1520 = vmatpush1.bf16.msra.mxu0 0
      %1521 = vmatprep.subr.bf16.mxu0 0
      %1522 = vmatpush1.bf16.msra.mxu0 0
      %1523 = vmatprep.subr.bf16.mxu0 0
      %1524 = vmatpush1.bf16.msra.mxu0 0
      %1525 = vmatprep.subr.bf16.mxu0 0
      %1526 = vmatpush1.bf16.msra.mxu0 0
      %1527 = vmatprep.subr.bf16.mxu0 0
      %1528 = vmatpush1.bf16.msra.mxu0 0
      %1529 = vmatprep.subr.bf16.mxu0 0
      %1530 = vmatpush1.bf16.msra.mxu0 0
      %1531 = vmatprep.subr.bf16.mxu0 0
      %1532 = vmatpush1.bf16.msra.mxu0 0
      %1533 = vmatprep.subr.bf16.mxu0 0
      %1534 = vmatpush1.bf16.msra.mxu0 0
      %1535 = vmatprep.subr.bf16.mxu0 0
      %1536 = vmatpush1.bf16.msra.mxu0 0
      %1537 = vmatprep.subr.bf16.mxu0 0
      %1538 = vmatpush1.bf16.msra.mxu0 0
      %1539 = vmatprep.subr.bf16.mxu0 0
      %1540 = vmatpush1.bf16.msra.mxu0 0
      %1541 = vmatprep.subr.bf16.mxu0 0
      %1542 = vmatpush1.bf16.msra.mxu0 0
      %1543 = vmatprep.subr.bf16.mxu0 0
      %1544 = vmatpush1.bf16.msra.mxu0 0
      %1545 = vmatprep.mubr.bf16.mxu0 0
      %1546 = vmatmul.mubr.bf16.gmra.mrb[0].mxu0 %v1511
      %v1547 = vpop.f32.mrb[0].mxu0
      %v1548 = vadd.f32 %v1508, %v1547
      %v1549 = vpop.f32.mrb[0].mxu0
      %v1550 = vpop.f32.mrb[0].mxu0
      %v1551 = vpop.f32.mrb[0].mxu0
      %1552 = vdwg.mxu0
      %v1553 = vadd.f32 %v778, %v1548
      %v1554 = vsel %vm750, %v1553, 0.0
      %1555 = vadd.xlane.f32.xlu0 %v1554
      %v1556 = vpop.xlane.xlu0 %1555
      %v1557 = vmul.f32 %v1556, %v754
      %v1558 = vsub.f32 %v1553, %v1557
      %v1559 = vmul.f32 %v1558, %v1558
      %v1560 = vsel %vm750, %v1559, 0.0
      %1561 = vadd.xlane.f32.xlu0 %v1560
      %v1562 = vpop.xlane.xlu0 %1561
      %v1563 = vmul.f32 %v1562, %v754
      %v1564 = vadd.f32 %v1563, 1e-05
      %v1565 = vrsqrt.pop %v1564
      %v1566 = vmul.f32 %v1558, %v1565
      %v1568 = vlaneseq
      %v1569 = vshrl.u32 %v1568, 7
      %v1570 = vsub.s32 0, %v1569
      %v1571 = vrot.slane %v791, %v1570
      %v1573 = vmul.f32 %v1566, %v1571
      %v1575 = vlaneseq
      %v1576 = vshrl.u32 %v1575, 7
      %v1577 = vsub.s32 0, %v1576
      %v1578 = vrot.slane %v792, %v1577
      %v1580 = vadd.f32 %v1573, %v1578
      %v1581 = vpack.c.bf16 %v1580, %v1580
      %v1582 = vpack.c.bf16 %v794, %v793
      %v1583 = vpack.c.bf16 %v796, %v795
      %v1585 = vlaneseq
      %v1586 = vshrl.u32 %v1585, 7
      %v1587 = vsub.s32 0, %v1586
      %v1588 = vrot.slane %v797, %v1587
      %v1591 = vsel %vm851, %v1581, 0
      %1593 = vmatprep.subr.bf16.mxu0 0
      %1594 = vmatpush1.bf16.msra.mxu0 %v1582
      %1595 = vmatprep.subr.bf16.mxu0 0
      %1596 = vmatpush1.bf16.msra.mxu0 %v1583
      %1597 = vmatprep.subr.bf16.mxu0 0
      %1598 = vmatpush1.bf16.msra.mxu0 0
      %1599 = vmatprep.subr.bf16.mxu0 0
      %1600 = vmatpush1.bf16.msra.mxu0 0
      %1601 = vmatprep.subr.bf16.mxu0 0
      %1602 = vmatpush1.bf16.msra.mxu0 0
      %1603 = vmatprep.subr.bf16.mxu0 0
      %1604 = vmatpush1.bf16.msra.mxu0 0
      %1605 = vmatprep.subr.bf16.mxu0 0
      %1606 = vmatpush1.bf16.msra.mxu0 0
      %1607 = vmatprep.subr.bf16.mxu0 0
      %1608 = vmatpush1.bf16.msra.mxu0 0
      %1609 = vmatprep.subr.bf16.mxu0 0
      %1610 = vmatpush1.bf16.msra.mxu0 0
      %1611 = vmatprep.subr.bf16.mxu0 0
      %1612 = vmatpush1.bf16.msra.mxu0 0
      %1613 = vmatprep.subr.bf16.mxu0 0
      %1614 = vmatpush1.bf16.msra.mxu0 0
      %1615 = vmatprep.subr.bf16.mxu0 0
      %1616 = vmatpush1.bf16.msra.mxu0 0
      %1617 = vmatprep.subr.bf16.mxu0 0
      %1618 = vmatpush1.bf16.msra.mxu0 0
      %1619 = vmatprep.subr.bf16.mxu0 0
      %1620 = vmatpush1.bf16.msra.mxu0 0
      %1621 = vmatprep.subr.bf16.mxu0 0
      %1622 = vmatpush1.bf16.msra.mxu0 0
      %1623 = vmatprep.subr.bf16.mxu0 0
      %1624 = vmatpush1.bf16.msra.mxu0 0
      %1625 = vmatprep.mubr.bf16.mxu0 0
      %1626 = vmatmul.mubr.bf16.gmra.mrb[0].mxu0 %v1591
      %v1627 = vpop.f32.mrb[0].mxu0
      %v1628 = vadd.f32 %v1588, %v1627
      %v1629 = vpop.f32.mrb[0].mxu0
      %v1630 = vpop.f32.mrb[0].mxu0
      %v1631 = vpop.f32.mrb[0].mxu0
      %1632 = vdwg.mxu0
      %v1633 = vmul.f32 %v1628, 1.702
      %v1634 = vxor.u32 %v1633, 2147483648
      %v1635 = vmul.f32 %v1634, 1.442695
      %v1636 = vpow.pop %v1635
      %v1637 = vadd.f32 %v1636, 1.0
      %v1638 = vrcp.pop %v1637
      %v1639 = vmul.f32 1.0, %v1638
      %v1640 = vmul.f32 %v1628, %v1639
      %v1641 = vpack.c.bf16 %v1640, %v1640
      %v1642 = vpack.c.bf16 %v799, %v798
      %v1643 = vpack.c.bf16 %v801, %v800
      %v1644 = vpack.c.bf16 %v803, %v802
      %v1645 = vpack.c.bf16 %v805, %v804
      %v1646 = vpack.c.bf16 %v807, %v806
      %v1647 = vpack.c.bf16 %v809, %v808
      %v1648 = vpack.c.bf16 %v811, %v810
      %v1649 = vpack.c.bf16 %v813, %v812
      %v1651 = vlaneseq
      %v1652 = vshrl.u32 %v1651, 7
      %v1653 = vsub.s32 0, %v1652
      %v1654 = vrot.slane %v814, %v1653
      %1656 = vmatprep.subr.bf16.mxu0 0
      %1657 = vmatpush1.bf16.msra.mxu0 %v1642
      %1658 = vmatprep.subr.bf16.mxu0 0
      %1659 = vmatpush1.bf16.msra.mxu0 %v1643
      %1660 = vmatprep.subr.bf16.mxu0 0
      %1661 = vmatpush1.bf16.msra.mxu0 %v1644
      %1662 = vmatprep.subr.bf16.mxu0 0
      %1663 = vmatpush1.bf16.msra.mxu0 %v1645
      %1664 = vmatprep.subr.bf16.mxu0 0
      %1665 = vmatpush1.bf16.msra.mxu0 %v1646
      %1666 = vmatprep.subr.bf16.mxu0 0
      %1667 = vmatpush1.bf16.msra.mxu0 %v1647
      %1668 = vmatprep.subr.bf16.mxu0 0
      %1669 = vmatpush1.bf16.msra.mxu0 %v1648
      %1670 = vmatprep.subr.bf16.mxu0 0
      %1671 = vmatpush1.bf16.msra.mxu0 %v1649
      %1672 = vmatprep.subr.bf16.mxu0 0
      %1673 = vmatpush1.bf16.msra.mxu0 0
      %1674 = vmatprep.subr.bf16.mxu0 0
      %1675 = vmatpush1.bf16.msra.mxu0 0
      %1676 = vmatprep.subr.bf16.mxu0 0
      %1677 = vmatpush1.bf16.msra.mxu0 0
      %1678 = vmatprep.subr.bf16.mxu0 0
      %1679 = vmatpush1.bf16.msra.mxu0 0
      %1680 = vmatprep.subr.bf16.mxu0 0
      %1681 = vmatpush1.bf16.msra.mxu0 0
      %1682 = vmatprep.subr.bf16.mxu0 0
      %1683 = vmatpush1.bf16.msra.mxu0 0
      %1684 = vmatprep.subr.bf16.mxu0 0
      %1685 = vmatpush1.bf16.msra.mxu0 0
      %1686 = vmatprep.subr.bf16.mxu0 0
      %1687 = vmatpush1.bf16.msra.mxu0 0
      %1688 = vmatprep.mubr.bf16.mxu0 0
      %1689 = vmatmul.mubr.bf16.gmra.mrb[0].mxu0 %v1641
      %v1690 = vpop.f32.mrb[0].mxu0
      %v1691 = vadd.f32 %v1654, %v1690
      %v1692 = vpop.f32.mrb[0].mxu0
      %v1693 = vpop.f32.mrb[0].mxu0
      %v1694 = vpop.f32.mrb[0].mxu0
      %1695 = vdwg.mxu0
      %v1696 = vadd.f32 %v1553, %v1691
      %s1697 = scalar_lea.vmem %s9, 1
      %v1698 = vld [vmem:[%s1697] sm:$0x1]
      %s1699 = scalar_lea.vmem %s10, 1
      %v1700 = vld [vmem:[%s1699] sm:$0x1]
      %s1701 = scalar_lea.vmem %s11, 32
      %v1702 = vld [vmem:[%s1701] sm:$0xff]
      %v1703 = vld [vmem:[%s1701 + $0x8] sm:$0xff]
      %v1704 = vld [vmem:[%s1701 + $0x10] sm:$0xff]
      %v1705 = vld [vmem:[%s1701 + $0x18] sm:$0xff]
      %s1706 = scalar_lea.vmem %s12, 1
      %v1707 = vld [vmem:[%s1706] sm:$0x1]
      %s1708 = scalar_lea.vmem %s13, 32
      %v1709 = vld [vmem:[%s1708] sm:$0xff]
      %v1710 = vld [vmem:[%s1708 + $0x8] sm:$0xff]
      %v1711 = vld [vmem:[%s1708 + $0x10] sm:$0xff]
      %v1712 = vld [vmem:[%s1708 + $0x18] sm:$0xff]
      %s1713 = scalar_lea.vmem %s14, 1
      %v1714 = vld [vmem:[%s1713] sm:$0x1]
      %s1715 = scalar_lea.vmem %s15, 1
      %v1716 = vld [vmem:[%s1715] sm:$0x1]
      %s1717 = scalar_lea.vmem %s16, 1
      %v1718 = vld [vmem:[%s1717] sm:$0x1]
      %s1719 = scalar_lea.vmem %s17, 32
      %v1720 = vld [vmem:[%s1719] sm:$0xff]
      %v1721 = vld [vmem:[%s1719 + $0x8] sm:$0xff]
      %v1722 = vld [vmem:[%s1719 + $0x10] sm:$0xff]
      %v1723 = vld [vmem:[%s1719 + $0x18] sm:$0xff]
      %s1724 = scalar_lea.vmem %s18, 1
      %v1725 = vld [vmem:[%s1724] sm:$0x1]
      %s1726 = scalar_lea.vmem %s19, 128
      %v1727 = vld [vmem:[%s1726] sm:$0xff]
      %v1728 = vld [vmem:[%s1726 + $0x8] sm:$0xff]
      %v1729 = vld [vmem:[%s1726 + $0x10] sm:$0xff]
      %v1730 = vld [vmem:[%s1726 + $0x18] sm:$0xff]
      %v1731 = vld [vmem:[%s1726 + $0x20] sm:$0xff]
      %v1732 = vld [vmem:[%s1726 + $0x28] sm:$0xff]
      %v1733 = vld [vmem:[%s1726 + $0x30] sm:$0xff]
      %v1734 = vld [vmem:[%s1726 + $0x38] sm:$0xff]
      %v1735 = vld [vmem:[%s1726 + $0x40] sm:$0xff]
      %v1736 = vld [vmem:[%s1726 + $0x48] sm:$0xff]
      %v1737 = vld [vmem:[%s1726 + $0x50] sm:$0xff]
      %v1738 = vld [vmem:[%s1726 + $0x58] sm:$0xff]
      %v1739 = vld [vmem:[%s1726 + $0x60] sm:$0xff]
      %v1740 = vld [vmem:[%s1726 + $0x68] sm:$0xff]
      %v1741 = vld [vmem:[%s1726 + $0x70] sm:$0xff]
      %v1742 = vld [vmem:[%s1726 + $0x78] sm:$0xff]
      %s1743 = scalar_lea.vmem %s20, 1
      %v1744 = vld [vmem:[%s1743] sm:$0x1]
      %v1745 = vsel %vm750, %v1696, 0.0
      %1746 = vadd.xlane.f32.xlu0 %v1745
      %v1747 = vpop.xlane.xlu0 %1746
      %v1748 = vmul.f32 %v1747, %v754
      %v1749 = vsub.f32 %v1696, %v1748
      %v1750 = vmul.f32 %v1749, %v1749
      %v1751 = vsel %vm750, %v1750, 0.0
      %1752 = vadd.xlane.f32.xlu0 %v1751
      %v1753 = vpop.xlane.xlu0 %1752
      %v1754 = vmul.f32 %v1753, %v754
      %v1755 = vadd.f32 %v1754, 1e-05
      %v1756 = vrsqrt.pop %v1755
      %v1757 = vmul.f32 %v1749, %v1756
      %v1759 = vlaneseq
      %v1760 = vshrl.u32 %v1759, 7
      %v1761 = vsub.s32 0, %v1760
      %v1762 = vrot.slane %v1698, %v1761
      %v1764 = vmul.f32 %v1757, %v1762
      %v1766 = vlaneseq
      %v1767 = vshrl.u32 %v1766, 7
      %v1768 = vsub.s32 0, %v1767
      %v1769 = vrot.slane %v1700, %v1768
      %v1771 = vadd.f32 %v1764, %v1769
      %v1772 = vpack.c.bf16 %v1771, %v1771
      %v1773 = vpack.c.bf16 %v1703, %v1702
      %v1774 = vpack.c.bf16 %v1705, %v1704
      %v1776 = vlaneseq
      %v1777 = vshrl.u32 %v1776, 7
      %v1778 = vsub.s32 0, %v1777
      %v1779 = vrot.slane %v1707, %v1778
      %v1782 = vsel %vm851, %v1772, 0
      %1784 = vmatprep.subr.bf16.mxu0 0
      %1785 = vmatpush1.bf16.msra.mxu0 %v1773
      %1786 = vmatprep.subr.bf16.mxu0 0
      %1787 = vmatpush1.bf16.msra.mxu0 %v1774
      %1788 = vmatprep.subr.bf16.mxu0 0
      %1789 = vmatpush1.bf16.msra.mxu0 0
      %1790 = vmatprep.subr.bf16.mxu0 0
      %1791 = vmatpush1.bf16.msra.mxu0 0
      %1792 = vmatprep.subr.bf16.mxu0 0
      %1793 = vmatpush1.bf16.msra.mxu0 0
      %1794 = vmatprep.subr.bf16.mxu0 0
      %1795 = vmatpush1.bf16.msra.mxu0 0
      %1796 = vmatprep.subr.bf16.mxu0 0
      %1797 = vmatpush1.bf16.msra.mxu0 0
      %1798 = vmatprep.subr.bf16.mxu0 0
      %1799 = vmatpush1.bf16.msra.mxu0 0
      %1800 = vmatprep.subr.bf16.mxu0 0
      %1801 = vmatpush1.bf16.msra.mxu0 0
      %1802 = vmatprep.subr.bf16.mxu0 0
      %1803 = vmatpush1.bf16.msra.mxu0 0
      %1804 = vmatprep.subr.bf16.mxu0 0
      %1805 = vmatpush1.bf16.msra.mxu0 0
      %1806 = vmatprep.subr.bf16.mxu0 0
      %1807 = vmatpush1.bf16.msra.mxu0 0
      %1808 = vmatprep.subr.bf16.mxu0 0
      %1809 = vmatpush1.bf16.msra.mxu0 0
      %1810 = vmatprep.subr.bf16.mxu0 0
      %1811 = vmatpush1.bf16.msra.mxu0 0
      %1812 = vmatprep.subr.bf16.mxu0 0
      %1813 = vmatpush1.bf16.msra.mxu0 0
      %1814 = vmatprep.subr.bf16.mxu0 0
      %1815 = vmatpush1.bf16.msra.mxu0 0
      %1816 = vmatprep.mubr.bf16.mxu0 0
      %1817 = vmatmul.mubr.bf16.gmra.mrb[0].mxu0 %v1782
      %v1818 = vpop.f32.mrb[0].mxu0
      %v1819 = vadd.f32 %v1779, %v1818
      %v1820 = vpop.f32.mrb[0].mxu0
      %v1821 = vpop.f32.mrb[0].mxu0
      %v1822 = vpop.f32.mrb[0].mxu0
      %1823 = vdwg.mxu0
      %1825 = vrot.lane.b32.xlu0 %v1819, 96
      %v1826 = vpop.permute.xlu0 %1825
      %1828 = vxpose.xlu0.b32.start [1/16] %v1826, 128
      %1829 = vxpose.xlu0.b32.cont [2/16] 0.0, 128
      %1830 = vxpose.xlu0.b32.cont [3/16] 0.0, 128
      %1831 = vxpose.xlu0.b32.cont [4/16] 0.0, 128
      %1832 = vxpose.xlu0.b32.cont [5/16] 0.0, 128
      %1833 = vxpose.xlu0.b32.cont [6/16] 0.0, 128
      %1834 = vxpose.xlu0.b32.cont [7/16] 0.0, 128
      %1835 = vxpose.xlu0.b32.cont [8/16] 0.0, 128
      %1836 = vxpose.xlu0.b32.cont [9/16] 0.0, 128
      %1837 = vxpose.xlu0.b32.cont [10/16] 0.0, 128
      %1838 = vxpose.xlu0.b32.cont [11/16] 0.0, 128
      %1839 = vxpose.xlu0.b32.cont [12/16] 0.0, 128
      %1840 = vxpose.xlu0.b32.cont [13/16] 0.0, 128
      %1841 = vxpose.xlu0.b32.cont [14/16] 0.0, 128
      %1842 = vxpose.xlu0.b32.cont [15/16] 0.0, 128
      %1843 = vxpose.xlu0.b32.end [16/16] 0.0, 128
      %v1844 = vpop.trf.xlu0
      %v1845 = vpop.trf.xlu0
      %v1846 = vpop.trf.xlu0
      %v1847 = vpop.trf.xlu0
      %v1848 = vpop.trf.xlu0
      %v1849 = vpop.trf.xlu0
      %v1850 = vpop.trf.xlu0
      %v1851 = vpop.trf.xlu0
      %v1852 = vpop.trf.xlu0
      %v1853 = vpop.trf.xlu0
      %v1854 = vpop.trf.xlu0
      %v1855 = vpop.trf.xlu0
      %v1856 = vpop.trf.xlu0
      %v1857 = vpop.trf.xlu0
      %v1858 = vpop.trf.xlu0
      %v1859 = vpop.trf.xlu0
      %v1860 = vpack.c.bf16 %v1819, %v1819
      %v1861 = vpack.c.bf16 %v1844, %v1844
      %v1863 = vsel %vm933, %v1860, 0
      %v1866 = vsel %vm937, %v1861, 0
      %1868 = vmatprep.subr.bf16.mxu0 0
      %1869 = vmatpush1.bf16.msra.mxu0 %v1866
      %1870 = vmatprep.subr.bf16.mxu0 0
      %1871 = vmatpush1.bf16.msra.mxu0 0
      %1872 = vmatprep.subr.bf16.mxu0 0
      %1873 = vmatpush1.bf16.msra.mxu0 0
      %1874 = vmatprep.subr.bf16.mxu0 0
      %1875 = vmatpush1.bf16.msra.mxu0 0
      %1876 = vmatprep.subr.bf16.mxu0 0
      %1877 = vmatpush1.bf16.msra.mxu0 0
      %1878 = vmatprep.subr.bf16.mxu0 0
      %1879 = vmatpush1.bf16.msra.mxu0 0
      %1880 = vmatprep.subr.bf16.mxu0 0
      %1881 = vmatpush1.bf16.msra.mxu0 0
      %1882 = vmatprep.subr.bf16.mxu0 0
      %1883 = vmatpush1.bf16.msra.mxu0 0
      %1884 = vmatprep.subr.bf16.mxu0 0
      %1885 = vmatpush1.bf16.msra.mxu0 0
      %1886 = vmatprep.subr.bf16.mxu0 0
      %1887 = vmatpush1.bf16.msra.mxu0 0
      %1888 = vmatprep.subr.bf16.mxu0 0
      %1889 = vmatpush1.bf16.msra.mxu0 0
      %1890 = vmatprep.subr.bf16.mxu0 0
      %1891 = vmatpush1.bf16.msra.mxu0 0
      %1892 = vmatprep.subr.bf16.mxu0 0
      %1893 = vmatpush1.bf16.msra.mxu0 0
      %1894 = vmatprep.subr.bf16.mxu0 0
      %1895 = vmatpush1.bf16.msra.mxu0 0
      %1896 = vmatprep.subr.bf16.mxu0 0
      %1897 = vmatpush1.bf16.msra.mxu0 0
      %1898 = vmatprep.subr.bf16.mxu0 0
      %1899 = vmatpush1.bf16.msra.mxu0 0
      %1900 = vmatprep.mubr.bf16.mxu0 0
      %1901 = vmatmul.mubr.bf16.gmra.mrb[0].mxu0 %v1863
      %v1902 = vpop.f32.mrb[0].mxu0
      %v1903 = vadd.f32 0.0, %v1902
      %v1904 = vpop.f32.mrb[0].mxu0
      %v1905 = vpop.f32.mrb[0].mxu0
      %v1906 = vpop.f32.mrb[0].mxu0
      %1907 = vdwg.mxu0
      %v1908 = vmul.f32 %v1903, 0.35355338
      %v1909 = vsel %vm982, %v1908, -inf
      %1910 = vmax.xlane.f32.xlu0 %v1909
      %v1911 = vpop.xlane.xlu0 %1910
      %v1912 = vsub.f32 %v1908, %v1911
      %v1913 = vmul.f32 %v1912, 1.442695
      %v1914 = vpow.pop %v1913
      %v1915 = vsel %vm982, %v1914, 0.0
      %1916 = vadd.xlane.f32.xlu0 %v1915
      %v1917 = vpop.xlane.xlu0 %1916
      %v1918 = vrcp.pop %v1917
      %v1919 = vmul.f32 %v1914, %v1918
      %v1920 = vpack.c.bf16 %v1919, %v1919
      %1922 = vrot.lane.b32.xlu0 %v1860, 64
      %v1923 = vpop.permute.xlu0 %1922
      %v1925 = vsel %vm998, %v1920, 0
      %v1928 = vand.u32 %v1923, %v1005
      %1930 = vmatprep.subr.bf16.mxu0 0
      %1931 = vmatpush1.bf16.msra.mxu0 %v1928
      %1932 = vmatprep.subr.bf16.mxu0 0
      %1933 = vmatpush1.bf16.msra.mxu0 0
      %1934 = vmatprep.subr.bf16.mxu0 0
      %1935 = vmatpush1.bf16.msra.mxu0 0
      %1936 = vmatprep.subr.bf16.mxu0 0
      %1937 = vmatpush1.bf16.msra.mxu0 0
      %1938 = vmatprep.subr.bf16.mxu0 0
      %1939 = vmatpush1.bf16.msra.mxu0 0
      %1940 = vmatprep.subr.bf16.mxu0 0
      %1941 = vmatpush1.bf16.msra.mxu0 0
      %1942 = vmatprep.subr.bf16.mxu0 0
      %1943 = vmatpush1.bf16.msra.mxu0 0
      %1944 = vmatprep.subr.bf16.mxu0 0
      %1945 = vmatpush1.bf16.msra.mxu0 0
      %1946 = vmatprep.subr.bf16.mxu0 0
      %1947 = vmatpush1.bf16.msra.mxu0 0
      %1948 = vmatprep.subr.bf16.mxu0 0
      %1949 = vmatpush1.bf16.msra.mxu0 0
      %1950 = vmatprep.subr.bf16.mxu0 0
      %1951 = vmatpush1.bf16.msra.mxu0 0
      %1952 = vmatprep.subr.bf16.mxu0 0
      %1953 = vmatpush1.bf16.msra.mxu0 0
      %1954 = vmatprep.subr.bf16.mxu0 0
      %1955 = vmatpush1.bf16.msra.mxu0 0
      %1956 = vmatprep.subr.bf16.mxu0 0
      %1957 = vmatpush1.bf16.msra.mxu0 0
      %1958 = vmatprep.subr.bf16.mxu0 0
      %1959 = vmatpush1.bf16.msra.mxu0 0
      %1960 = vmatprep.subr.bf16.mxu0 0
      %1961 = vmatpush1.bf16.msra.mxu0 0
      %1962 = vmatprep.mubr.bf16.mxu0 0
      %1963 = vmatmul.mubr.bf16.gmra.mrb[0].mxu0 %v1925
      %v1964 = vpop.f32.mrb[0].mxu0
      %v1965 = vadd.f32 0.0, %v1964
      %v1966 = vpop.f32.mrb[0].mxu0
      %v1967 = vpop.f32.mrb[0].mxu0
      %v1968 = vpop.f32.mrb[0].mxu0
      %1969 = vdwg.mxu0
      %1970 = vrot.lane.b32.xlu0 %v1819, 88
      %v1971 = vpop.permute.xlu0 %1970
      %1973 = vxpose.xlu0.b32.start [1/16] %v1971, 128
      %1974 = vxpose.xlu0.b32.cont [2/16] 0.0, 128
      %1975 = vxpose.xlu0.b32.cont [3/16] 0.0, 128
      %1976 = vxpose.xlu0.b32.cont [4/16] 0.0, 128
      %1977 = vxpose.xlu0.b32.cont [5/16] 0.0, 128
      %1978 = vxpose.xlu0.b32.cont [6/16] 0.0, 128
      %1979 = vxpose.xlu0.b32.cont [7/16] 0.0, 128
      %1980 = vxpose.xlu0.b32.cont [8/16] 0.0, 128
      %1981 = vxpose.xlu0.b32.cont [9/16] 0.0, 128
      %1982 = vxpose.xlu0.b32.cont [10/16] 0.0, 128
      %1983 = vxpose.xlu0.b32.cont [11/16] 0.0, 128
      %1984 = vxpose.xlu0.b32.cont [12/16] 0.0, 128
      %1985 = vxpose.xlu0.b32.cont [13/16] 0.0, 128
      %1986 = vxpose.xlu0.b32.cont [14/16] 0.0, 128
      %1987 = vxpose.xlu0.b32.cont [15/16] 0.0, 128
      %1988 = vxpose.xlu0.b32.end [16/16] 0.0, 128
      %v1989 = vpop.trf.xlu0
      %v1990 = vpop.trf.xlu0
      %v1991 = vpop.trf.xlu0
      %v1992 = vpop.trf.xlu0
      %v1993 = vpop.trf.xlu0
      %v1994 = vpop.trf.xlu0
      %v1995 = vpop.trf.xlu0
      %v1996 = vpop.trf.xlu0
      %v1997 = vpop.trf.xlu0
      %v1998 = vpop.trf.xlu0
      %v1999 = vpop.trf.xlu0
      %v2000 = vpop.trf.xlu0
      %v2001 = vpop.trf.xlu0
      %v2002 = vpop.trf.xlu0
      %v2003 = vpop.trf.xlu0
      %v2004 = vpop.trf.xlu0
      %v2005 = vpack.c.bf16 %v1989, %v1989
      %2006 = vrot.lane.b32.xlu0 %v1860, 120
      %v2007 = vpop.permute.xlu0 %2006
      %v2009 = vsel %vm933, %v2007, 0
      %v2012 = vsel %vm937, %v2005, 0
      %2014 = vmatprep.subr.bf16.mxu0 0
      %2015 = vmatpush1.bf16.msra.mxu0 %v2012
      %2016 = vmatprep.subr.bf16.mxu0 0
      %2017 = vmatpush1.bf16.msra.mxu0 0
      %2018 = vmatprep.subr.bf16.mxu0 0
      %2019 = vmatpush1.bf16.msra.mxu0 0
      %2020 = vmatprep.subr.bf16.mxu0 0
      %2021 = vmatpush1.bf16.msra.mxu0 0
      %2022 = vmatprep.subr.bf16.mxu0 0
      %2023 = vmatpush1.bf16.msra.mxu0 0
      %2024 = vmatprep.subr.bf16.mxu0 0
      %2025 = vmatpush1.bf16.msra.mxu0 0
      %2026 = vmatprep.subr.bf16.mxu0 0
      %2027 = vmatpush1.bf16.msra.mxu0 0
      %2028 = vmatprep.subr.bf16.mxu0 0
      %2029 = vmatpush1.bf16.msra.mxu0 0
      %2030 = vmatprep.subr.bf16.mxu0 0
      %2031 = vmatpush1.bf16.msra.mxu0 0
      %2032 = vmatprep.subr.bf16.mxu0 0
      %2033 = vmatpush1.bf16.msra.mxu0 0
      %2034 = vmatprep.subr.bf16.mxu0 0
      %2035 = vmatpush1.bf16.msra.mxu0 0
      %2036 = vmatprep.subr.bf16.mxu0 0
      %2037 = vmatpush1.bf16.msra.mxu0 0
      %2038 = vmatprep.subr.bf16.mxu0 0
      %2039 = vmatpush1.bf16.msra.mxu0 0
      %2040 = vmatprep.subr.bf16.mxu0 0
      %2041 = vmatpush1.bf16.msra.mxu0 0
      %2042 = vmatprep.subr.bf16.mxu0 0
      %2043 = vmatpush1.bf16.msra.mxu0 0
      %2044 = vmatprep.subr.bf16.mxu0 0
      %2045 = vmatpush1.bf16.msra.mxu0 0
      %2046 = vmatprep.mubr.bf16.mxu0 0
      %2047 = vmatmul.mubr.bf16.gmra.mrb[0].mxu0 %v2009
      %v2048 = vpop.f32.mrb[0].mxu0
      %v2049 = vadd.f32 0.0, %v2048
      %v2050 = vpop.f32.mrb[0].mxu0
      %v2051 = vpop.f32.mrb[0].mxu0
      %v2052 = vpop.f32.mrb[0].mxu0
      %2053 = vdwg.mxu0
      %v2054 = vmul.f32 %v2049, 0.35355338
      %v2055 = vsel %vm982, %v2054, -inf
      %2056 = vmax.xlane.f32.xlu0 %v2055
      %v2057 = vpop.xlane.xlu0 %2056
      %v2058 = vsub.f32 %v2054, %v2057
      %v2059 = vmul.f32 %v2058, 1.442695
      %v2060 = vpow.pop %v2059
      %v2061 = vsel %vm982, %v2060, 0.0
      %2062 = vadd.xlane.f32.xlu0 %v2061
      %v2063 = vpop.xlane.xlu0 %2062
      %v2064 = vrcp.pop %v2063
      %v2065 = vmul.f32 %v2060, %v2064
      %v2066 = vpack.c.bf16 %v2065, %v2065
      %2067 = vrot.lane.b32.xlu0 %v1860, 56
      %v2068 = vpop.permute.xlu0 %2067
      %v2070 = vsel %vm998, %v2066, 0
      %v2073 = vand.u32 %v2068, %v1005
      %2075 = vmatprep.subr.bf16.mxu0 0
      %2076 = vmatpush1.bf16.msra.mxu0 %v2073
      %2077 = vmatprep.subr.bf16.mxu0 0
      %2078 = vmatpush1.bf16.msra.mxu0 0
      %2079 = vmatprep.subr.bf16.mxu0 0
      %2080 = vmatpush1.bf16.msra.mxu0 0
      %2081 = vmatprep.subr.bf16.mxu0 0
      %2082 = vmatpush1.bf16.msra.mxu0 0
      %2083 = vmatprep.subr.bf16.mxu0 0
      %2084 = vmatpush1.bf16.msra.mxu0 0
      %2085 = vmatprep.subr.bf16.mxu0 0
      %2086 = vmatpush1.bf16.msra.mxu0 0
      %2087 = vmatprep.subr.bf16.mxu0 0
      %2088 = vmatpush1.bf16.msra.mxu0 0
      %2089 = vmatprep.subr.bf16.mxu0 0
      %2090 = vmatpush1.bf16.msra.mxu0 0
      %2091 = vmatprep.subr.bf16.mxu0 0
      %2092 = vmatpush1.bf16.msra.mxu0 0
      %2093 = vmatprep.subr.bf16.mxu0 0
      %2094 = vmatpush1.bf16.msra.mxu0 0
      %2095 = vmatprep.subr.bf16.mxu0 0
      %2096 = vmatpush1.bf16.msra.mxu0 0
      %2097 = vmatprep.subr.bf16.mxu0 0
      %2098 = vmatpush1.bf16.msra.mxu0 0
      %2099 = vmatprep.subr.bf16.mxu0 0
      %2100 = vmatpush1.bf16.msra.mxu0 0
      %2101 = vmatprep.subr.bf16.mxu0 0
      %2102 = vmatpush1.bf16.msra.mxu0 0
      %2103 = vmatprep.subr.bf16.mxu0 0
      %2104 = vmatpush1.bf16.msra.mxu0 0
      %2105 = vmatprep.subr.bf16.mxu0 0
      %2106 = vmatpush1.bf16.msra.mxu0 0
      %2107 = vmatprep.mubr.bf16.mxu0 0
      %2108 = vmatmul.mubr.bf16.gmra.mrb[0].mxu0 %v2070
      %v2109 = vpop.f32.mrb[0].mxu0
      %v2110 = vadd.f32 0.0, %v2109
      %v2111 = vpop.f32.mrb[0].mxu0
      %v2112 = vpop.f32.mrb[0].mxu0
      %v2113 = vpop.f32.mrb[0].mxu0
      %2114 = vdwg.mxu0
      %2115 = vrot.lane.b32.xlu0 %v1819, 80
      %v2116 = vpop.permute.xlu0 %2115
      %2118 = vxpose.xlu0.b32.start [1/16] %v2116, 128
      %2119 = vxpose.xlu0.b32.cont [2/16] 0.0, 128
      %2120 = vxpose.xlu0.b32.cont [3/16] 0.0, 128
      %2121 = vxpose.xlu0.b32.cont [4/16] 0.0, 128
      %2122 = vxpose.xlu0.b32.cont [5/16] 0.0, 128
      %2123 = vxpose.xlu0.b32.cont [6/16] 0.0, 128
      %2124 = vxpose.xlu0.b32.cont [7/16] 0.0, 128
      %2125 = vxpose.xlu0.b32.cont [8/16] 0.0, 128
      %2126 = vxpose.xlu0.b32.cont [9/16] 0.0, 128
      %2127 = vxpose.xlu0.b32.cont [10/16] 0.0, 128
      %2128 = vxpose.xlu0.b32.cont [11/16] 0.0, 128
      %2129 = vxpose.xlu0.b32.cont [12/16] 0.0, 128
      %2130 = vxpose.xlu0.b32.cont [13/16] 0.0, 128
      %2131 = vxpose.xlu0.b32.cont [14/16] 0.0, 128
      %2132 = vxpose.xlu0.b32.cont [15/16] 0.0, 128
      %2133 = vxpose.xlu0.b32.end [16/16] 0.0, 128
      %v2134 = vpop.trf.xlu0
      %v2135 = vpop.trf.xlu0
      %v2136 = vpop.trf.xlu0
      %v2137 = vpop.trf.xlu0
      %v2138 = vpop.trf.xlu0
      %v2139 = vpop.trf.xlu0
      %v2140 = vpop.trf.xlu0
      %v2141 = vpop.trf.xlu0
      %v2142 = vpop.trf.xlu0
      %v2143 = vpop.trf.xlu0
      %v2144 = vpop.trf.xlu0
      %v2145 = vpop.trf.xlu0
      %v2146 = vpop.trf.xlu0
      %v2147 = vpop.trf.xlu0
      %v2148 = vpop.trf.xlu0
      %v2149 = vpop.trf.xlu0
      %v2150 = vpack.c.bf16 %v2134, %v2134
      %2151 = vrot.lane.b32.xlu0 %v1860, 112
      %v2152 = vpop.permute.xlu0 %2151
      %v2154 = vsel %vm933, %v2152, 0
      %v2157 = vsel %vm937, %v2150, 0
      %2159 = vmatprep.subr.bf16.mxu0 0
      %2160 = vmatpush1.bf16.msra.mxu0 %v2157
      %2161 = vmatprep.subr.bf16.mxu0 0
      %2162 = vmatpush1.bf16.msra.mxu0 0
      %2163 = vmatprep.subr.bf16.mxu0 0
      %2164 = vmatpush1.bf16.msra.mxu0 0
      %2165 = vmatprep.subr.bf16.mxu0 0
      %2166 = vmatpush1.bf16.msra.mxu0 0
      %2167 = vmatprep.subr.bf16.mxu0 0
      %2168 = vmatpush1.bf16.msra.mxu0 0
      %2169 = vmatprep.subr.bf16.mxu0 0
      %2170 = vmatpush1.bf16.msra.mxu0 0
      %2171 = vmatprep.subr.bf16.mxu0 0
      %2172 = vmatpush1.bf16.msra.mxu0 0
      %2173 = vmatprep.subr.bf16.mxu0 0
      %2174 = vmatpush1.bf16.msra.mxu0 0
      %2175 = vmatprep.subr.bf16.mxu0 0
      %2176 = vmatpush1.bf16.msra.mxu0 0
      %2177 = vmatprep.subr.bf16.mxu0 0
      %2178 = vmatpush1.bf16.msra.mxu0 0
      %2179 = vmatprep.subr.bf16.mxu0 0
      %2180 = vmatpush1.bf16.msra.mxu0 0
      %2181 = vmatprep.subr.bf16.mxu0 0
      %2182 = vmatpush1.bf16.msra.mxu0 0
      %2183 = vmatprep.subr.bf16.mxu0 0
      %2184 = vmatpush1.bf16.msra.mxu0 0
      %2185 = vmatprep.subr.bf16.mxu0 0
      %2186 = vmatpush1.bf16.msra.mxu0 0
      %2187 = vmatprep.subr.bf16.mxu0 0
      %2188 = vmatpush1.bf16.msra.mxu0 0
      %2189 = vmatprep.subr.bf16.mxu0 0
      %2190 = vmatpush1.bf16.msra.mxu0 0
      %2191 = vmatprep.mubr.bf16.mxu0 0
      %2192 = vmatmul.mubr.bf16.gmra.mrb[0].mxu0 %v2154
      %v2193 = vpop.f32.mrb[0].mxu0
      %v2194 = vadd.f32 0.0, %v2193
      %v2195 = vpop.f32.mrb[0].mxu0
      %v2196 = vpop.f32.mrb[0].mxu0
      %v2197 = vpop.f32.mrb[0].mxu0
      %2198 = vdwg.mxu0
      %v2199 = vmul.f32 %v2194, 0.35355338
      %v2200 = vsel %vm982, %v2199, -inf
      %2201 = vmax.xlane.f32.xlu0 %v2200
      %v2202 = vpop.xlane.xlu0 %2201
      %v2203 = vsub.f32 %v2199, %v2202
      %v2204 = vmul.f32 %v2203, 1.442695
      %v2205 = vpow.pop %v2204
      %v2206 = vsel %vm982, %v2205, 0.0
      %2207 = vadd.xlane.f32.xlu0 %v2206
      %v2208 = vpop.xlane.xlu0 %2207
      %v2209 = vrcp.pop %v2208
      %v2210 = vmul.f32 %v2205, %v2209
      %v2211 = vpack.c.bf16 %v2210, %v2210
      %2212 = vrot.lane.b32.xlu0 %v1860, 48
      %v2213 = vpop.permute.xlu0 %2212
      %v2215 = vsel %vm998, %v2211, 0
      %v2218 = vand.u32 %v2213, %v1005
      %2220 = vmatprep.subr.bf16.mxu0 0
      %2221 = vmatpush1.bf16.msra.mxu0 %v2218
      %2222 = vmatprep.subr.bf16.mxu0 0
      %2223 = vmatpush1.bf16.msra.mxu0 0
      %2224 = vmatprep.subr.bf16.mxu0 0
      %2225 = vmatpush1.bf16.msra.mxu0 0
      %2226 = vmatprep.subr.bf16.mxu0 0
      %2227 = vmatpush1.bf16.msra.mxu0 0
      %2228 = vmatprep.subr.bf16.mxu0 0
      %2229 = vmatpush1.bf16.msra.mxu0 0
      %2230 = vmatprep.subr.bf16.mxu0 0
      %2231 = vmatpush1.bf16.msra.mxu0 0
      %2232 = vmatprep.subr.bf16.mxu0 0
      %2233 = vmatpush1.bf16.msra.mxu0 0
      %2234 = vmatprep.subr.bf16.mxu0 0
      %2235 = vmatpush1.bf16.msra.mxu0 0
      %2236 = vmatprep.subr.bf16.mxu0 0
      %2237 = vmatpush1.bf16.msra.mxu0 0
      %2238 = vmatprep.subr.bf16.mxu0 0
      %2239 = vmatpush1.bf16.msra.mxu0 0
      %2240 = vmatprep.subr.bf16.mxu0 0
      %2241 = vmatpush1.bf16.msra.mxu0 0
      %2242 = vmatprep.subr.bf16.mxu0 0
      %2243 = vmatpush1.bf16.msra.mxu0 0
      %2244 = vmatprep.subr.bf16.mxu0 0
      %2245 = vmatpush1.bf16.msra.mxu0 0
      %2246 = vmatprep.subr.bf16.mxu0 0
      %2247 = vmatpush1.bf16.msra.mxu0 0
      %2248 = vmatprep.subr.bf16.mxu0 0
      %2249 = vmatpush1.bf16.msra.mxu0 0
      %2250 = vmatprep.subr.bf16.mxu0 0
      %2251 = vmatpush1.bf16.msra.mxu0 0
      %2252 = vmatprep.mubr.bf16.mxu0 0
      %2253 = vmatmul.mubr.bf16.gmra.mrb[0].mxu0 %v2215
      %v2254 = vpop.f32.mrb[0].mxu0
      %v2255 = vadd.f32 0.0, %v2254
      %v2256 = vpop.f32.mrb[0].mxu0
      %v2257 = vpop.f32.mrb[0].mxu0
      %v2258 = vpop.f32.mrb[0].mxu0
      %2259 = vdwg.mxu0
      %2260 = vrot.lane.b32.xlu0 %v1819, 72
      %v2261 = vpop.permute.xlu0 %2260
      %2263 = vxpose.xlu0.b32.start [1/16] %v2261, 128
      %2264 = vxpose.xlu0.b32.cont [2/16] 0.0, 128
      %2265 = vxpose.xlu0.b32.cont [3/16] 0.0, 128
      %2266 = vxpose.xlu0.b32.cont [4/16] 0.0, 128
      %2267 = vxpose.xlu0.b32.cont [5/16] 0.0, 128
      %2268 = vxpose.xlu0.b32.cont [6/16] 0.0, 128
      %2269 = vxpose.xlu0.b32.cont [7/16] 0.0, 128
      %2270 = vxpose.xlu0.b32.cont [8/16] 0.0, 128
      %2271 = vxpose.xlu0.b32.cont [9/16] 0.0, 128
      %2272 = vxpose.xlu0.b32.cont [10/16] 0.0, 128
      %2273 = vxpose.xlu0.b32.cont [11/16] 0.0, 128
      %2274 = vxpose.xlu0.b32.cont [12/16] 0.0, 128
      %2275 = vxpose.xlu0.b32.cont [13/16] 0.0, 128
      %2276 = vxpose.xlu0.b32.cont [14/16] 0.0, 128
      %2277 = vxpose.xlu0.b32.cont [15/16] 0.0, 128
      %2278 = vxpose.xlu0.b32.end [16/16] 0.0, 128
      %v2279 = vpop.trf.xlu0
      %v2280 = vpop.trf.xlu0
      %v2281 = vpop.trf.xlu0
      %v2282 = vpop.trf.xlu0
      %v2283 = vpop.trf.xlu0
      %v2284 = vpop.trf.xlu0
      %v2285 = vpop.trf.xlu0
      %v2286 = vpop.trf.xlu0
      %v2287 = vpop.trf.xlu0
      %v2288 = vpop.trf.xlu0
      %v2289 = vpop.trf.xlu0
      %v2290 = vpop.trf.xlu0
      %v2291 = vpop.trf.xlu0
      %v2292 = vpop.trf.xlu0
      %v2293 = vpop.trf.xlu0
      %v2294 = vpop.trf.xlu0
      %v2295 = vpack.c.bf16 %v2279, %v2279
      %2296 = vrot.lane.b32.xlu0 %v1860, 104
      %v2297 = vpop.permute.xlu0 %2296
      %v2299 = vsel %vm933, %v2297, 0
      %v2302 = vsel %vm937, %v2295, 0
      %2304 = vmatprep.subr.bf16.mxu0 0
      %2305 = vmatpush1.bf16.msra.mxu0 %v2302
      %2306 = vmatprep.subr.bf16.mxu0 0
      %2307 = vmatpush1.bf16.msra.mxu0 0
      %2308 = vmatprep.subr.bf16.mxu0 0
      %2309 = vmatpush1.bf16.msra.mxu0 0
      %2310 = vmatprep.subr.bf16.mxu0 0
      %2311 = vmatpush1.bf16.msra.mxu0 0
      %2312 = vmatprep.subr.bf16.mxu0 0
      %2313 = vmatpush1.bf16.msra.mxu0 0
      %2314 = vmatprep.subr.bf16.mxu0 0
      %2315 = vmatpush1.bf16.msra.mxu0 0
      %2316 = vmatprep.subr.bf16.mxu0 0
      %2317 = vmatpush1.bf16.msra.mxu0 0
      %2318 = vmatprep.subr.bf16.mxu0 0
      %2319 = vmatpush1.bf16.msra.mxu0 0
      %2320 = vmatprep.subr.bf16.mxu0 0
      %2321 = vmatpush1.bf16.msra.mxu0 0
      %2322 = vmatprep.subr.bf16.mxu0 0
      %2323 = vmatpush1.bf16.msra.mxu0 0
      %2324 = vmatprep.subr.bf16.mxu0 0
      %2325 = vmatpush1.bf16.msra.mxu0 0
      %2326 = vmatprep.subr.bf16.mxu0 0
      %2327 = vmatpush1.bf16.msra.mxu0 0
      %2328 = vmatprep.subr.bf16.mxu0 0
      %2329 = vmatpush1.bf16.msra.mxu0 0
      %2330 = vmatprep.subr.bf16.mxu0 0
      %2331 = vmatpush1.bf16.msra.mxu0 0
      %2332 = vmatprep.subr.bf16.mxu0 0
      %2333 = vmatpush1.bf16.msra.mxu0 0
      %2334 = vmatprep.subr.bf16.mxu0 0
      %2335 = vmatpush1.bf16.msra.mxu0 0
      %2336 = vmatprep.mubr.bf16.mxu0 0
      %2337 = vmatmul.mubr.bf16.gmra.mrb[0].mxu0 %v2299
      %v2338 = vpop.f32.mrb[0].mxu0
      %v2339 = vadd.f32 0.0, %v2338
      %v2340 = vpop.f32.mrb[0].mxu0
      %v2341 = vpop.f32.mrb[0].mxu0
      %v2342 = vpop.f32.mrb[0].mxu0
      %2343 = vdwg.mxu0
      %v2344 = vmul.f32 %v2339, 0.35355338
      %v2345 = vsel %vm982, %v2344, -inf
      %2346 = vmax.xlane.f32.xlu0 %v2345
      %v2347 = vpop.xlane.xlu0 %2346
      %v2348 = vsub.f32 %v2344, %v2347
      %v2349 = vmul.f32 %v2348, 1.442695
      %v2350 = vpow.pop %v2349
      %v2351 = vsel %vm982, %v2350, 0.0
      %2352 = vadd.xlane.f32.xlu0 %v2351
      %v2353 = vpop.xlane.xlu0 %2352
      %v2354 = vrcp.pop %v2353
      %v2355 = vmul.f32 %v2350, %v2354
      %v2356 = vpack.c.bf16 %v2355, %v2355
      %2357 = vrot.lane.b32.xlu0 %v1860, 40
      %v2358 = vpop.permute.xlu0 %2357
      %v2360 = vsel %vm998, %v2356, 0
      %v2363 = vand.u32 %v2358, %v1005
      %2365 = vmatprep.subr.bf16.mxu0 0
      %2366 = vmatpush1.bf16.msra.mxu0 %v2363
      %2367 = vmatprep.subr.bf16.mxu0 0
      %2368 = vmatpush1.bf16.msra.mxu0 0
      %2369 = vmatprep.subr.bf16.mxu0 0
      %2370 = vmatpush1.bf16.msra.mxu0 0
      %2371 = vmatprep.subr.bf16.mxu0 0
      %2372 = vmatpush1.bf16.msra.mxu0 0
      %2373 = vmatprep.subr.bf16.mxu0 0
      %2374 = vmatpush1.bf16.msra.mxu0 0
      %2375 = vmatprep.subr.bf16.mxu0 0
      %2376 = vmatpush1.bf16.msra.mxu0 0
      %2377 = vmatprep.subr.bf16.mxu0 0
      %2378 = vmatpush1.bf16.msra.mxu0 0
      %2379 = vmatprep.subr.bf16.mxu0 0
      %2380 = vmatpush1.bf16.msra.mxu0 0
      %2381 = vmatprep.subr.bf16.mxu0 0
      %2382 = vmatpush1.bf16.msra.mxu0 0
      %2383 = vmatprep.subr.bf16.mxu0 0
      %2384 = vmatpush1.bf16.msra.mxu0 0
      %2385 = vmatprep.subr.bf16.mxu0 0
      %2386 = vmatpush1.bf16.msra.mxu0 0
      %2387 = vmatprep.subr.bf16.mxu0 0
      %2388 = vmatpush1.bf16.msra.mxu0 0
      %2389 = vmatprep.subr.bf16.mxu0 0
      %2390 = vmatpush1.bf16.msra.mxu0 0
      %2391 = vmatprep.subr.bf16.mxu0 0
      %2392 = vmatpush1.bf16.msra.mxu0 0
      %2393 = vmatprep.subr.bf16.mxu0 0
      %2394 = vmatpush1.bf16.msra.mxu0 0
      %2395 = vmatprep.subr.bf16.mxu0 0
      %2396 = vmatpush1.bf16.msra.mxu0 0
      %2397 = vmatprep.mubr.bf16.mxu0 0
      %2398 = vmatmul.mubr.bf16.gmra.mrb[0].mxu0 %v2360
      %v2399 = vpop.f32.mrb[0].mxu0
      %v2400 = vadd.f32 0.0, %v2399
      %v2401 = vpop.f32.mrb[0].mxu0
      %v2402 = vpop.f32.mrb[0].mxu0
      %v2403 = vpop.f32.mrb[0].mxu0
      %2404 = vdwg.mxu0
      %2406 = vrot.lane.b32.xlu0 %v2110, 8
      %v2407 = vpop.permute.xlu0 %2406
      %2410 = vrot.lane.b32.xlu0 %v2255, 16
      %v2411 = vpop.permute.xlu0 %2410
      %2414 = vrot.lane.b32.xlu0 %v2400, 24
      %v2415 = vpop.permute.xlu0 %2414
      %v2417 = vsel %vm933, %v1965, %v2407
      %v2418 = vsel %vm1497, %v2417, %v2411
      %v2419 = vsel %vm1499, %v2418, %v2415
      %v2420 = vpack.c.bf16 %v2419, %v2419
      %v2421 = vpack.c.bf16 %v1710, %v1709
      %v2422 = vpack.c.bf16 %v1712, %v1711
      %v2424 = vlaneseq
      %v2425 = vshrl.u32 %v2424, 7
      %v2426 = vsub.s32 0, %v2425
      %v2427 = vrot.slane %v1714, %v2426
      %v2430 = vsel %vm851, %v2420, 0
      %2432 = vmatprep.subr.bf16.mxu0 0
      %2433 = vmatpush1.bf16.msra.mxu0 %v2421
      %2434 = vmatprep.subr.bf16.mxu0 0
      %2435 = vmatpush1.bf16.msra.mxu0 %v2422
      %2436 = vmatprep.subr.bf16.mxu0 0
      %2437 = vmatpush1.bf16.msra.mxu0 0
      %2438 = vmatprep.subr.bf16.mxu0 0
      %2439 = vmatpush1.bf16.msra.mxu0 0
      %2440 = vmatprep.subr.bf16.mxu0 0
      %2441 = vmatpush1.bf16.msra.mxu0 0
      %2442 = vmatprep.subr.bf16.mxu0 0
      %2443 = vmatpush1.bf16.msra.mxu0 0
      %2444 = vmatprep.subr.bf16.mxu0 0
      %2445 = vmatpush1.bf16.msra.mxu0 0
      %2446 = vmatprep.subr.bf16.mxu0 0
      %2447 = vmatpush1.bf16.msra.mxu0 0
      %2448 = vmatprep.subr.bf16.mxu0 0
      %2449 = vmatpush1.bf16.msra.mxu0 0
      %2450 = vmatprep.subr.bf16.mxu0 0
      %2451 = vmatpush1.bf16.msra.mxu0 0
      %2452 = vmatprep.subr.bf16.mxu0 0
      %2453 = vmatpush1.bf16.msra.mxu0 0
      %2454 = vmatprep.subr.bf16.mxu0 0
      %2455 = vmatpush1.bf16.msra.mxu0 0
      %2456 = vmatprep.subr.bf16.mxu0 0
      %2457 = vmatpush1.bf16.msra.mxu0 0
      %2458 = vmatprep.subr.bf16.mxu0 0
      %2459 = vmatpush1.bf16.msra.mxu0 0
      %2460 = vmatprep.subr.bf16.mxu0 0
      %2461 = vmatpush1.bf16.msra.mxu0 0
      %2462 = vmatprep.subr.bf16.mxu0 0
      %2463 = vmatpush1.bf16.msra.mxu0 0
      %2464 = vmatprep.mubr.bf16.mxu0 0
      %2465 = vmatmul.mubr.bf16.gmra.mrb[0].mxu0 %v2430
      %v2466 = vpop.f32.mrb[0].mxu0
      %v2467 = vadd.f32 %v2427, %v2466
      %v2468 = vpop.f32.mrb[0].mxu0
      %v2469 = vpop.f32.mrb[0].mxu0
      %v2470 = vpop.f32.mrb[0].mxu0
      %2471 = vdwg.mxu0
      %v2472 = vadd.f32 %v1696, %v2467
      %v2473 = vsel %vm750, %v2472, 0.0
      %2474 = vadd.xlane.f32.xlu0 %v2473
      %v2475 = vpop.xlane.xlu0 %2474
      %v2476 = vmul.f32 %v2475, %v754
      %v2477 = vsub.f32 %v2472, %v2476
      %v2478 = vmul.f32 %v2477, %v2477
      %v2479 = vsel %vm750, %v2478, 0.0
      %2480 = vadd.xlane.f32.xlu0 %v2479
      %v2481 = vpop.xlane.xlu0 %2480
      %v2482 = vmul.f32 %v2481, %v754
      %v2483 = vadd.f32 %v2482, 1e-05
      %v2484 = vrsqrt.pop %v2483
      %v2485 = vmul.f32 %v2477, %v2484
      %v2487 = vlaneseq
      %v2488 = vshrl.u32 %v2487, 7
      %v2489 = vsub.s32 0, %v2488
      %v2490 = vrot.slane %v1716, %v2489
      %v2492 = vmul.f32 %v2485, %v2490
      %v2494 = vlaneseq
      %v2495 = vshrl.u32 %v2494, 7
      %v2496 = vsub.s32 0, %v2495
      %v2497 = vrot.slane %v1718, %v2496
      %v2499 = vadd.f32 %v2492, %v2497
      %v2500 = vpack.c.bf16 %v2499, %v2499
      %v2501 = vpack.c.bf16 %v1721, %v1720
      %v2502 = vpack.c.bf16 %v1723, %v1722
      %v2504 = vlaneseq
      %v2505 = vshrl.u32 %v2504, 7
      %v2506 = vsub.s32 0, %v2505
      %v2507 = vrot.slane %v1725, %v2506
      %v2510 = vsel %vm851, %v2500, 0
      %2512 = vmatprep.subr.bf16.mxu0 0
      %2513 = vmatpush1.bf16.msra.mxu0 %v2501
      %2514 = vmatprep.subr.bf16.mxu0 0
      %2515 = vmatpush1.bf16.msra.mxu0 %v2502
      %2516 = vmatprep.subr.bf16.mxu0 0
      %2517 = vmatpush1.bf16.msra.mxu0 0
      %2518 = vmatprep.subr.bf16.mxu0 0
      %2519 = vmatpush1.bf16.msra.mxu0 0
      %2520 = vmatprep.subr.bf16.mxu0 0
      %2521 = vmatpush1.bf16.msra.mxu0 0
      %2522 = vmatprep.subr.bf16.mxu0 0
      %2523 = vmatpush1.bf16.msra.mxu0 0
      %2524 = vmatprep.subr.bf16.mxu0 0
      %2525 = vmatpush1.bf16.msra.mxu0 0
      %2526 = vmatprep.subr.bf16.mxu0 0
      %2527 = vmatpush1.bf16.msra.mxu0 0
      %2528 = vmatprep.subr.bf16.mxu0 0
      %2529 = vmatpush1.bf16.msra.mxu0 0
      %2530 = vmatprep.subr.bf16.mxu0 0
      %2531 = vmatpush1.bf16.msra.mxu0 0
      %2532 = vmatprep.subr.bf16.mxu0 0
      %2533 = vmatpush1.bf16.msra.mxu0 0
      %2534 = vmatprep.subr.bf16.mxu0 0
      %2535 = vmatpush1.bf16.msra.mxu0 0
      %2536 = vmatprep.subr.bf16.mxu0 0
      %2537 = vmatpush1.bf16.msra.mxu0 0
      %2538 = vmatprep.subr.bf16.mxu0 0
      %2539 = vmatpush1.bf16.msra.mxu0 0
      %2540 = vmatprep.subr.bf16.mxu0 0
      %2541 = vmatpush1.bf16.msra.mxu0 0
      %2542 = vmatprep.subr.bf16.mxu0 0
      %2543 = vmatpush1.bf16.msra.mxu0 0
      %2544 = vmatprep.mubr.bf16.mxu0 0
      %2545 = vmatmul.mubr.bf16.gmra.mrb[0].mxu0 %v2510
      %v2546 = vpop.f32.mrb[0].mxu0
      %v2547 = vadd.f32 %v2507, %v2546
      %v2548 = vpop.f32.mrb[0].mxu0
      %v2549 = vpop.f32.mrb[0].mxu0
      %v2550 = vpop.f32.mrb[0].mxu0
      %2551 = vdwg.mxu0
      %v2552 = vmul.f32 %v2547, 1.702
      %v2553 = vxor.u32 %v2552, 2147483648
      %v2554 = vmul.f32 %v2553, 1.442695
      %v2555 = vpow.pop %v2554
      %v2556 = vadd.f32 %v2555, 1.0
      %v2557 = vrcp.pop %v2556
      %v2558 = vmul.f32 1.0, %v2557
      %v2559 = vmul.f32 %v2547, %v2558
      %v2560 = vpack.c.bf16 %v2559, %v2559
      %v2561 = vpack.c.bf16 %v1728, %v1727
      %v2562 = vpack.c.bf16 %v1730, %v1729
      %v2563 = vpack.c.bf16 %v1732, %v1731
      %v2564 = vpack.c.bf16 %v1734, %v1733
      %v2565 = vpack.c.bf16 %v1736, %v1735
      %v2566 = vpack.c.bf16 %v1738, %v1737
      %v2567 = vpack.c.bf16 %v1740, %v1739
      %v2568 = vpack.c.bf16 %v1742, %v1741
      %v2570 = vlaneseq
      %v2571 = vshrl.u32 %v2570, 7
      %v2572 = vsub.s32 0, %v2571
      %v2573 = vrot.slane %v1744, %v2572
      %2575 = vmatprep.subr.bf16.mxu0 0
      %2576 = vmatpush1.bf16.msra.mxu0 %v2561
      %2577 = vmatprep.subr.bf16.mxu0 0
      %2578 = vmatpush1.bf16.msra.mxu0 %v2562
      %2579 = vmatprep.subr.bf16.mxu0 0
      %2580 = vmatpush1.bf16.msra.mxu0 %v2563
      %2581 = vmatprep.subr.bf16.mxu0 0
      %2582 = vmatpush1.bf16.msra.mxu0 %v2564
      %2583 = vmatprep.subr.bf16.mxu0 0
      %2584 = vmatpush1.bf16.msra.mxu0 %v2565
      %2585 = vmatprep.subr.bf16.mxu0 0
      %2586 = vmatpush1.bf16.msra.mxu0 %v2566
      %2587 = vmatprep.subr.bf16.mxu0 0
      %2588 = vmatpush1.bf16.msra.mxu0 %v2567
      %2589 = vmatprep.subr.bf16.mxu0 0
      %2590 = vmatpush1.bf16.msra.mxu0 %v2568
      %2591 = vmatprep.subr.bf16.mxu0 0
      %2592 = vmatpush1.bf16.msra.mxu0 0
      %2593 = vmatprep.subr.bf16.mxu0 0
      %2594 = vmatpush1.bf16.msra.mxu0 0
      %2595 = vmatprep.subr.bf16.mxu0 0
      %2596 = vmatpush1.bf16.msra.mxu0 0
      %2597 = vmatprep.subr.bf16.mxu0 0
      %2598 = vmatpush1.bf16.msra.mxu0 0
      %2599 = vmatprep.subr.bf16.mxu0 0
      %2600 = vmatpush1.bf16.msra.mxu0 0
      %2601 = vmatprep.subr.bf16.mxu0 0
      %2602 = vmatpush1.bf16.msra.mxu0 0
      %2603 = vmatprep.subr.bf16.mxu0 0
      %2604 = vmatpush1.bf16.msra.mxu0 0
      %2605 = vmatprep.subr.bf16.mxu0 0
      %2606 = vmatpush1.bf16.msra.mxu0 0
      %2607 = vmatprep.mubr.bf16.mxu0 0
      %2608 = vmatmul.mubr.bf16.gmra.mrb[0].mxu0 %v2560
      %v2609 = vpop.f32.mrb[0].mxu0
      %v2610 = vadd.f32 %v2573, %v2609
      %v2611 = vpop.f32.mrb[0].mxu0
      %v2612 = vpop.f32.mrb[0].mxu0
      %v2613 = vpop.f32.mrb[0].mxu0
      %2614 = vdwg.mxu0
      %v2615 = vadd.f32 %v2472, %v2610
      %v2616 = vld [vmem:[%s6] sm:$0x1]
      %v2617 = vld [vmem:[%s7] sm:$0x1]
      %vm2618 = vcmask 253952
      %v2619 = vsel %vm2618, %v2615, 0.0
      %2620 = vadd.xlane.f32.xlu0 %v2619
      %v2621 = vpop.xlane.xlu0 %2620
      %v2622 = vmul.f32 %v2621, %v754
      %v2623 = vsub.f32 %v2615, %v2622
      %v2624 = vmul.f32 %v2623, %v2623
      %v2625 = vsel %vm2618, %v2624, 0.0
      %2626 = vadd.xlane.f32.xlu0 %v2625
      %v2627 = vpop.xlane.xlu0 %2626
      %v2628 = vmul.f32 %v2627, %v754
      %v2629 = vadd.f32 %v2628, 1e-05
      %v2630 = vrsqrt.pop %v2629
      %v2631 = vmul.f32 %v2623, %v2630
      %v2632 = vmul.f32 %v2631, %v2616
      %v2633 = vadd.f32 %v2632, %v2617
      %v2634 = vld [vmem:[%s8] sm:$0xff]
      %v2635 = vld [vmem:[%s8 + $0x8] sm:$0xff]
      %v2636 = vld [vmem:[%s8 + $0x10] sm:$0xff]
      %v2637 = vld [vmem:[%s8 + $0x18] sm:$0xff]
      %v2638 = vpack.c.bf16 %v2633, %v2633
      %v2639 = vpack.c.bf16 %v2635, %v2634
      %v2640 = vpack.c.bf16 %v2637, %v2636
      %v2642 = vsel %vm851, %v2638, 0
      %2644 = vmatprep.subr.bf16.mxu0 0
      %2645 = vmatpush1.bf16.msra.mxu0 %v2639
      %2646 = vmatprep.subr.bf16.mxu0 0
      %2647 = vmatpush1.bf16.msra.mxu0 %v2640
      %2648 = vmatprep.subr.bf16.mxu0 0
      %2649 = vmatpush1.bf16.msra.mxu0 0
      %2650 = vmatprep.subr.bf16.mxu0 0
      %2651 = vmatpush1.bf16.msra.mxu0 0
      %2652 = vmatprep.subr.bf16.mxu0 0
      %2653 = vmatpush1.bf16.msra.mxu0 0
      %2654 = vmatprep.subr.bf16.mxu0 0
      %2655 = vmatpush1.bf16.msra.mxu0 0
      %2656 = vmatprep.subr.bf16.mxu0 0
      %2657 = vmatpush1.bf16.msra.mxu0 0
      %2658 = vmatprep.subr.bf16.mxu0 0
      %2659 = vmatpush1.bf16.msra.mxu0 0
      %2660 = vmatprep.subr.bf16.mxu0 0
      %2661 = vmatpush1.bf16.msra.mxu0 0
      %2662 = vmatprep.subr.bf16.mxu0 0
      %2663 = vmatpush1.bf16.msra.mxu0 0
      %2664 = vmatprep.subr.bf16.mxu0 0
      %2665 = vmatpush1.bf16.msra.mxu0 0
      %2666 = vmatprep.subr.bf16.mxu0 0
      %2667 = vmatpush1.bf16.msra.mxu0 0
      %2668 = vmatprep.subr.bf16.mxu0 0
      %2669 = vmatpush1.bf16.msra.mxu0 0
      %2670 = vmatprep.subr.bf16.mxu0 0
      %2671 = vmatpush1.bf16.msra.mxu0 0
      %2672 = vmatprep.subr.bf16.mxu0 0
      %2673 = vmatpush1.bf16.msra.mxu0 0
      %2674 = vmatprep.subr.bf16.mxu0 0
      %2675 = vmatpush1.bf16.msra.mxu0 0
      %2676 = vmatprep.mubr.bf16.mxu0 0
      %2677 = vmatmul.mubr.bf16.gmra.mrb[0].mxu0 %v2642
      %v2678 = vpop.f32.mrb[0].mxu0
      %v2679 = vadd.f32 0.0, %v2678
      %v2680 = vpop.f32.mrb[0].mxu0
      %v2681 = vpop.f32.mrb[0].mxu0
      %v2682 = vpop.f32.mrb[0].mxu0
      %2683 = vdwg.mxu0
      %2684 = vst.msk [vmem:[%s652] sm:$0x1] %vm2618, %v2679
      %p2685 = scmp.lt.s32.totalorder %s32, 5
      %s2686 = scalar_select %p2685, %s32, 5
      %s2687 = scalar_lea.vmem %s21, %s2686
      // Predicated region
      $region105: #{video_clip_forward.4} parent=103 // pred_check
        %p2688 = pneg %p496
      $region106: #{video_clip_forward.4} parent=103 // pred_check_branch
        %2690 = sbr.rel (%p2688) target = $region108
      $region107: #{video_clip_forward.4} parent=103 // pred_region
        _
      $region108: #{video_clip_forward.4} parent=103 // pred_fallthru
        _
    $region104: #{video_clip_forward.4} parent=5 // pred_fallthru
      _
    %p2691 = scmp.le.s32.totalorder 2, %s27
    // Predicated region
    $region109: #{video_clip_forward.4} parent=5 // pred_check
      %p2692 = pneg %p2691
    $region110: #{video_clip_forward.4} parent=5 // pred_check_branch
      %2694 = sbr.rel (%p2692) target = $region112
    $region111: #{video_clip_forward.4} parent=5 // pred_region
      %s2695 = ssub.s32 %s27, 2
      // Predicated region
      $region113: #{video_clip_forward.4} parent=111 // pred_check
        %p2696 = pneg %p502
      $region114: #{video_clip_forward.4} parent=111 // pred_check_branch
        %2698 = sbr.rel (%p2696) target = $region116
      $region115: #{video_clip_forward.4} parent=111 // pred_region
        %p2699 = scmp.lt.s32.totalorder %s33, 5
        %s2700 = scalar_select %p2699, %s33, 5
        %s2701 = scalar_lea.vmem %s21, %s2700
      $region116: #{video_clip_forward.4} parent=111 // pred_fallthru
        _
    $region112: #{video_clip_forward.4} parent=5 // pred_fallthru
      _
  $region6: #{video_clip_forward.4} parent=0 // loop_footer
    %s31 = sadd.s32 1, %s27
  $region7: #{video_clip_forward.4} parent=0 // loop_footer_branch
    %26 = sbr.rel target = $region3
  $region8: #{video_clip_forward.4} parent=0 // loop_exit
    _

// kernel: video_clip_forward.5
$region0: #{video_clip_forward.5}
  #allocation0 [shape = 'u32[]', space=smem, size = 0x4, offset = 0x4, fixed_abs, tag = 'smem constant byte address 0x4 - core index']
  #allocation1 [shape = 'u32[144,128]{1,0:T(1,128)}', space=vmem, size = 0x12000, scoped, tag = 'internal scratch']
  %s0 = inlined_call_operand.vmem [shape: f32[2,8,32], index: 0, kind: input, shape index: {}]
  %s1 = inlined_call_operand.vmem [shape: f32[2,1,8], index: 1, kind: input, shape index: {}]
  %s2 = inlined_call_operand.vmem [shape: f32[8,32], index: 2, kind: input, shape index: {}]
  %s3 = inlined_call_operand.vmem [shape: f32[1,32], index: 3, kind: input, shape index: {}]
  %s4 = inlined_call_operand.vmem [shape: f32[1,32], index: 4, kind: input, shape index: {}]
  %s5 = inlined_call_operand.vmem [shape: f32[32,32], index: 5, kind: input, shape index: {}]
  %s6 = inlined_call_operand.vmem [shape: f32[2,1,32], index: 6, kind: input, shape index: {}]
  %s7 = inlined_call_operand.vmem [shape: f32[2,1,32], index: 7, kind: input, shape index: {}]
  %s8 = inlined_call_operand.vmem [shape: f32[2,32,96], index: 8, kind: input, shape index: {}]
  %s9 = inlined_call_operand.vmem [shape: f32[2,1,96], index: 9, kind: input, shape index: {}]
  %s10 = inlined_call_operand.vmem [shape: f32[2,32,32], index: 10, kind: input, shape index: {}]
  %s11 = inlined_call_operand.vmem [shape: f32[2,1,32], index: 11, kind: input, shape index: {}]
  %s12 = inlined_call_operand.vmem [shape: f32[2,1,32], index: 12, kind: input, shape index: {}]
  %s13 = inlined_call_operand.vmem [shape: f32[2,1,32], index: 13, kind: input, shape index: {}]
  %s14 = inlined_call_operand.vmem [shape: f32[2,32,128], index: 14, kind: input, shape index: {}]
  %s15 = inlined_call_operand.vmem [shape: f32[2,1,128], index: 15, kind: input, shape index: {}]
  %s16 = inlined_call_operand.vmem [shape: f32[2,128,32], index: 16, kind: input, shape index: {}]
  %s17 = inlined_call_operand.vmem [shape: f32[2,1,32], index: 17, kind: input, shape index: {}]
  %s18 = inlined_call_operand.vmem [shape: f32[2,1,32], index: 18, kind: output, shape index: {}]
  %s19 = sld [smem:[#allocation0]]
  $region105: #{video_clip_forward.5} parent=0
    _
  %s21 = ssub.s32 1, %s19
  %s22 = scalar_select 0, %s21, %s19
  loop: start=0, step=1, limit=4
  $region2: #{video_clip_forward.5} parent=0 // loop_pre_header
    _
  $region3: #{video_clip_forward.5} parent=0 // loop_header
    %s24 = sphi 0, %s28
    %p25 = scmp.ge.s32.totalorder %s24, 4
    %s34 = sphi 0, %s36
    %s37 = sphi 0, %s34
    %s38 = sphi 0, %s37
    %s54 = sphi 0, %s38
    %s60 = sphi 0, %s62
    %s63 = sphi 0, %s60
    %s64 = sphi 0, %s63
    %s80 = sphi 0, %s64
    %s84 = sphi 0, %s84
    %s86 = sphi 0, %s84
    %s87 = sphi 0, %s86
    %s101 = sphi 0, %s87
    %s105 = sphi 0, %s105
    %s107 = sphi 0, %s105
    %s108 = sphi 0, %s107
    %s122 = sphi 0, %s108
    %s126 = sphi 0, %s126
    %s128 = sphi 0, %s126
    %s129 = sphi 0, %s128
    %s143 = sphi 0, %s129
    %s147 = sphi 0, %s147
    %s149 = sphi 0, %s147
    %s150 = sphi 0, %s149
    %s164 = sphi 0, %s150
    %s168 = sphi 0, %s168
    %s170 = sphi 0, %s168
    %s171 = sphi 0, %s170
    %s185 = sphi 0, %s171
    %s189 = sphi 0, %s189
    %s191 = sphi 0, %s189
    %s192 = sphi 0, %s191
    %s206 = sphi 0, %s192
    %s210 = sphi 0, %s210
    %s212 = sphi 0, %s210
    %s213 = sphi 0, %s212
    %s227 = sphi 0, %s213
    %s231 = sphi 0, %s231
    %s233 = sphi 0, %s231
    %s234 = sphi 0, %s233
    %s248 = sphi 0, %s234
    %s252 = sphi 0, %s252
    %s254 = sphi 0, %s252
    %s255 = sphi 0, %s254
    %s269 = sphi 0, %s255
    %s273 = sphi 0, %s273
    %s275 = sphi 0, %s273
    %s276 = sphi 0, %s275
    %s290 = sphi 0, %s276
    %s294 = sphi 0, %s294
    %s296 = sphi 0, %s294
    %s297 = sphi 0, %s296
    %s311 = sphi 0, %s297
    %s315 = sphi 0, %s315
    %s317 = sphi 0, %s315
    %s318 = sphi 0, %s317
    %s332 = sphi 0, %s318
    %s336 = sphi 0, %s336
    %s338 = sphi 0, %s336
    %s339 = sphi 0, %s338
    %s353 = sphi 0, %s339
    %s357 = sphi 0, %s357
    %s359 = sphi 0, %s357
    %s360 = sphi 0, %s359
    %s374 = sphi 0, %s360
    %s378 = sphi 0, %s378
    %s380 = sphi 0, %s378
    %s381 = sphi 0, %s380
    %s395 = sphi 0, %s381
    %s399 = sphi 0, %s399
    %s401 = sphi 0, %s399
    %s402 = sphi 0, %s401
    %s416 = sphi 0, %s402
    %s422 = sphi 0, %s424
    %s425 = sphi 0, %s422
    %s426 = sphi 0, %s425
    %s442 = sphi 0, %s426
  $region4: #{video_clip_forward.5} parent=0 // loop_header_branch
    %27 = sbr.rel (%p25) target = $region8
  $region5: #{video_clip_forward.5} parent=0 // loop_body
    %s29 = ssub.s32 %s24, 1
    %s30 = ssub.s32 %s24, 2
    %s31 = sadd.s32 %s24, 1
    %s32 = ssub.s32 %s24, %s31
    %p33 = scmp.eq.s32.totalorder %s32, 0
    %s35 = sadd.s32 %s34, 1
    %s36 = scalar_select %p33, %s34, %s35
    %p39 = pneg %p33
    %p40 = scmp.eq.s32.totalorder %s24, 1
    %p41 = por %p39, %p40
    %p42 = scmp.ne.s32.totalorder %s34, %s37
    %p43 = scmp.eq.s32.totalorder %s24, 0
    %p44 = por %p42, %p43
    %p45 = scmp.ne.s32.totalorder %s34, %s37
    %p46 = scmp.eq.s32.totalorder %s29, 1
    %p47 = por %p45, %p46
    %p48 = scmp.ne.s32.totalorder %s37, %s38
    %p49 = scmp.eq.s32.totalorder %s29, 0
    %p50 = por %p48, %p49
    %p51 = scmp.ne.s32.totalorder %s37, %s38
    %p52 = scmp.eq.s32.totalorder %s30, 1
    %p53 = por %p51, %p52
    %p55 = scmp.ne.s32.totalorder %s38, %s54
    %p56 = scmp.eq.s32.totalorder %s30, 0
    %p57 = por %p55, %p56
    %s58 = ssub.s32 %s24, %s31
    %p59 = scmp.eq.s32.totalorder %s58, 0
    %s61 = sadd.s32 %s60, 1
    %s62 = scalar_select %p59, %s60, %s61
    %p65 = pneg %p59
    %p66 = scmp.eq.s32.totalorder %s24, 1
    %p67 = por %p65, %p66
    %p68 = scmp.ne.s32.totalorder %s60, %s63
    %p69 = scmp.eq.s32.totalorder %s24, 0
    %p70 = por %p68, %p69
    %p71 = scmp.ne.s32.totalorder %s60, %s63
    %p72 = scmp.eq.s32.totalorder %s29, 1
    %p73 = por %p71, %p72
    %p74 = scmp.ne.s32.totalorder %s63, %s64
    %p75 = scmp.eq.s32.totalorder %s29, 0
    %p76 = por %p74, %p75
    %p77 = scmp.ne.s32.totalorder %s63, %s64
    %p78 = scmp.eq.s32.totalorder %s30, 1
    %p79 = por %p77, %p78
    %p81 = scmp.ne.s32.totalorder %s64, %s80
    %p82 = scmp.eq.s32.totalorder %s30, 0
    %p83 = por %p81, %p82
    %s85 = sadd.s32 %s84, 1
    %p88 = scmp.eq.s32.totalorder %s24, 1
    %p89 = scmp.ne.s32.totalorder %s84, %s86
    %p90 = scmp.eq.s32.totalorder %s24, 0
    %p91 = por %p89, %p90
    %p92 = scmp.ne.s32.totalorder %s84, %s86
    %p93 = scmp.eq.s32.totalorder %s29, 1
    %p94 = por %p92, %p93
    %p95 = scmp.ne.s32.totalorder %s86, %s87
    %p96 = scmp.eq.s32.totalorder %s29, 0
    %p97 = por %p95, %p96
    %p98 = scmp.ne.s32.totalorder %s86, %s87
    %p99 = scmp.eq.s32.totalorder %s30, 1
    %p100 = por %p98, %p99
    %p102 = scmp.ne.s32.totalorder %s87, %s101
    %p103 = scmp.eq.s32.totalorder %s30, 0
    %p104 = por %p102, %p103
    %s106 = sadd.s32 %s105, 1
    %p109 = scmp.eq.s32.totalorder %s24, 1
    %p110 = scmp.ne.s32.totalorder %s105, %s107
    %p111 = scmp.eq.s32.totalorder %s24, 0
    %p112 = por %p110, %p111
    %p113 = scmp.ne.s32.totalorder %s105, %s107
    %p114 = scmp.eq.s32.totalorder %s29, 1
    %p115 = por %p113, %p114
    %p116 = scmp.ne.s32.totalorder %s107, %s108
    %p117 = scmp.eq.s32.totalorder %s29, 0
    %p118 = por %p116, %p117
    %p119 = scmp.ne.s32.totalorder %s107, %s108
    %p120 = scmp.eq.s32.totalorder %s30, 1
    %p121 = por %p119, %p120
    %p123 = scmp.ne.s32.totalorder %s108, %s122
    %p124 = scmp.eq.s32.totalorder %s30, 0
    %p125 = por %p123, %p124
    %s127 = sadd.s32 %s126, 1
    %p130 = scmp.eq.s32.totalorder %s24, 1
    %p131 = scmp.ne.s32.totalorder %s126, %s128
    %p132 = scmp.eq.s32.totalorder %s24, 0
    %p133 = por %p131, %p132
    %p134 = scmp.ne.s32.totalorder %s126, %s128
    %p135 = scmp.eq.s32.totalorder %s29, 1
    %p136 = por %p134, %p135
    %p137 = scmp.ne.s32.totalorder %s128, %s129
    %p138 = scmp.eq.s32.totalorder %s29, 0
    %p139 = por %p137, %p138
    %p140 = scmp.ne.s32.totalorder %s128, %s129
    %p141 = scmp.eq.s32.totalorder %s30, 1
    %p142 = por %p140, %p141
    %p144 = scmp.ne.s32.totalorder %s129, %s143
    %p145 = scmp.eq.s32.totalorder %s30, 0
    %p146 = por %p144, %p145
    %s148 = sadd.s32 %s147, 1
    %p151 = scmp.eq.s32.totalorder %s24, 1
    %p152 = scmp.ne.s32.totalorder %s147, %s149
    %p153 = scmp.eq.s32.totalorder %s24, 0
    %p154 = por %p152, %p153
    %p155 = scmp.ne.s32.totalorder %s147, %s149
    %p156 = scmp.eq.s32.totalorder %s29, 1
    %p157 = por %p155, %p156
    %p158 = scmp.ne.s32.totalorder %s149, %s150
    %p159 = scmp.eq.s32.totalorder %s29, 0
    %p160 = por %p158, %p159
    %p161 = scmp.ne.s32.totalorder %s149, %s150
    %p162 = scmp.eq.s32.totalorder %s30, 1
    %p163 = por %p161, %p162
    %p165 = scmp.ne.s32.totalorder %s150, %s164
    %p166 = scmp.eq.s32.totalorder %s30, 0
    %p167 = por %p165, %p166
    %s169 = sadd.s32 %s168, 1
    %p172 = scmp.eq.s32.totalorder %s24, 1
    %p173 = scmp.ne.s32.totalorder %s168, %s170
    %p174 = scmp.eq.s32.totalorder %s24, 0
    %p175 = por %p173, %p174
    %p176 = scmp.ne.s32.totalorder %s168, %s170
    %p177 = scmp.eq.s32.totalorder %s29, 1
    %p178 = por %p176, %p177
    %p179 = scmp.ne.s32.totalorder %s170, %s171
    %p180 = scmp.eq.s32.totalorder %s29, 0
    %p181 = por %p179, %p180
    %p182 = scmp.ne.s32.totalorder %s170, %s171
    %p183 = scmp.eq.s32.totalorder %s30, 1
    %p184 = por %p182, %p183
    %p186 = scmp.ne.s32.totalorder %s171, %s185
    %p187 = scmp.eq.s32.totalorder %s30, 0
    %p188 = por %p186, %p187
    %s190 = sadd.s32 %s189, 1
    %p193 = scmp.eq.s32.totalorder %s24, 1
    %p194 = scmp.ne.s32.totalorder %s189, %s191
    %p195 = scmp.eq.s32.totalorder %s24, 0
    %p196 = por %p194, %p195
    %p197 = scmp.ne.s32.totalorder %s189, %s191
    %p198 = scmp.eq.s32.totalorder %s29, 1
    %p199 = por %p197, %p198
    %p200 = scmp.ne.s32.totalorder %s191, %s192
    %p201 = scmp.eq.s32.totalorder %s29, 0
    %p202 = por %p200, %p201
    %p203 = scmp.ne.s32.totalorder %s191, %s192
    %p204 = scmp.eq.s32.totalorder %s30, 1
    %p205 = por %p203, %p204
    %p207 = scmp.ne.s32.totalorder %s192, %s206
    %p208 = scmp.eq.s32.totalorder %s30, 0
    %p209 = por %p207, %p208
    %s211 = sadd.s32 %s210, 1
    %p214 = scmp.eq.s32.totalorder %s24, 1
    %p215 = scmp.ne.s32.totalorder %s210, %s212
    %p216 = scmp.eq.s32.totalorder %s24, 0
    %p217 = por %p215, %p216
    %p218 = scmp.ne.s32.totalorder %s210, %s212
    %p219 = scmp.eq.s32.totalorder %s29, 1
    %p220 = por %p218, %p219
    %p221 = scmp.ne.s32.totalorder %s212, %s213
    %p222 = scmp.eq.s32.totalorder %s29, 0
    %p223 = por %p221, %p222
    %p224 = scmp.ne.s32.totalorder %s212, %s213
    %p225 = scmp.eq.s32.totalorder %s30, 1
    %p226 = por %p224, %p225
    %p228 = scmp.ne.s32.totalorder %s213, %s227
    %p229 = scmp.eq.s32.totalorder %s30, 0
    %p230 = por %p228, %p229
    %s232 = sadd.s32 %s231, 1
    %p235 = scmp.eq.s32.totalorder %s24, 1
    %p236 = scmp.ne.s32.totalorder %s231, %s233
    %p237 = scmp.eq.s32.totalorder %s24, 0
    %p238 = por %p236, %p237
    %p239 = scmp.ne.s32.totalorder %s231, %s233
    %p240 = scmp.eq.s32.totalorder %s29, 1
    %p241 = por %p239, %p240
    %p242 = scmp.ne.s32.totalorder %s233, %s234
    %p243 = scmp.eq.s32.totalorder %s29, 0
    %p244 = por %p242, %p243
    %p245 = scmp.ne.s32.totalorder %s233, %s234
    %p246 = scmp.eq.s32.totalorder %s30, 1
    %p247 = por %p245, %p246
    %p249 = scmp.ne.s32.totalorder %s234, %s248
    %p250 = scmp.eq.s32.totalorder %s30, 0
    %p251 = por %p249, %p250
    %s253 = sadd.s32 %s252, 1
    %p256 = scmp.eq.s32.totalorder %s24, 1
    %p257 = scmp.ne.s32.totalorder %s252, %s254
    %p258 = scmp.eq.s32.totalorder %s24, 0
    %p259 = por %p257, %p258
    %p260 = scmp.ne.s32.totalorder %s252, %s254
    %p261 = scmp.eq.s32.totalorder %s29, 1
    %p262 = por %p260, %p261
    %p263 = scmp.ne.s32.totalorder %s254, %s255
    %p264 = scmp.eq.s32.totalorder %s29, 0
    %p265 = por %p263, %p264
    %p266 = scmp.ne.s32.totalorder %s254, %s255
    %p267 = scmp.eq.s32.totalorder %s30, 1
    %p268 = por %p266, %p267
    %p270 = scmp.ne.s32.totalorder %s255, %s269
    %p271 = scmp.eq.s32.totalorder %s30, 0
    %p272 = por %p270, %p271
    %s274 = sadd.s32 %s273, 1
    %p277 = scmp.eq.s32.totalorder %s24, 1
    %p278 = scmp.ne.s32.totalorder %s273, %s275
    %p279 = scmp.eq.s32.totalorder %s24, 0
    %p280 = por %p278, %p279
    %p281 = scmp.ne.s32.totalorder %s273, %s275
    %p282 = scmp.eq.s32.totalorder %s29, 1
    %p283 = por %p281, %p282
    %p284 = scmp.ne.s32.totalorder %s275, %s276
    %p285 = scmp.eq.s32.totalorder %s29, 0
    %p286 = por %p284, %p285
    %p287 = scmp.ne.s32.totalorder %s275, %s276
    %p288 = scmp.eq.s32.totalorder %s30, 1
    %p289 = por %p287, %p288
    %p291 = scmp.ne.s32.totalorder %s276, %s290
    %p292 = scmp.eq.s32.totalorder %s30, 0
    %p293 = por %p291, %p292
    %s295 = sadd.s32 %s294, 1
    %p298 = scmp.eq.s32.totalorder %s24, 1
    %p299 = scmp.ne.s32.totalorder %s294, %s296
    %p300 = scmp.eq.s32.totalorder %s24, 0
    %p301 = por %p299, %p300
    %p302 = scmp.ne.s32.totalorder %s294, %s296
    %p303 = scmp.eq.s32.totalorder %s29, 1
    %p304 = por %p302, %p303
    %p305 = scmp.ne.s32.totalorder %s296, %s297
    %p306 = scmp.eq.s32.totalorder %s29, 0
    %p307 = por %p305, %p306
    %p308 = scmp.ne.s32.totalorder %s296, %s297
    %p309 = scmp.eq.s32.totalorder %s30, 1
    %p310 = por %p308, %p309
    %p312 = scmp.ne.s32.totalorder %s297, %s311
    %p313 = scmp.eq.s32.totalorder %s30, 0
    %p314 = por %p312, %p313
    %s316 = sadd.s32 %s315, 1
    %p319 = scmp.eq.s32.totalorder %s24, 1
    %p320 = scmp.ne.s32.totalorder %s315, %s317
    %p321 = scmp.eq.s32.totalorder %s24, 0
    %p322 = por %p320, %p321
    %p323 = scmp.ne.s32.totalorder %s315, %s317
    %p324 = scmp.eq.s32.totalorder %s29, 1
    %p325 = por %p323, %p324
    %p326 = scmp.ne.s32.totalorder %s317, %s318
    %p327 = scmp.eq.s32.totalorder %s29, 0
    %p328 = por %p326, %p327
    %p329 = scmp.ne.s32.totalorder %s317, %s318
    %p330 = scmp.eq.s32.totalorder %s30, 1
    %p331 = por %p329, %p330
    %p333 = scmp.ne.s32.totalorder %s318, %s332
    %p334 = scmp.eq.s32.totalorder %s30, 0
    %p335 = por %p333, %p334
    %s337 = sadd.s32 %s336, 1
    %p340 = scmp.eq.s32.totalorder %s24, 1
    %p341 = scmp.ne.s32.totalorder %s336, %s338
    %p342 = scmp.eq.s32.totalorder %s24, 0
    %p343 = por %p341, %p342
    %p344 = scmp.ne.s32.totalorder %s336, %s338
    %p345 = scmp.eq.s32.totalorder %s29, 1
    %p346 = por %p344, %p345
    %p347 = scmp.ne.s32.totalorder %s338, %s339
    %p348 = scmp.eq.s32.totalorder %s29, 0
    %p349 = por %p347, %p348
    %p350 = scmp.ne.s32.totalorder %s338, %s339
    %p351 = scmp.eq.s32.totalorder %s30, 1
    %p352 = por %p350, %p351
    %p354 = scmp.ne.s32.totalorder %s339, %s353
    %p355 = scmp.eq.s32.totalorder %s30, 0
    %p356 = por %p354, %p355
    %s358 = sadd.s32 %s357, 1
    %p361 = scmp.eq.s32.totalorder %s24, 1
    %p362 = scmp.ne.s32.totalorder %s357, %s359
    %p363 = scmp.eq.s32.totalorder %s24, 0
    %p364 = por %p362, %p363
    %p365 = scmp.ne.s32.totalorder %s357, %s359
    %p366 = scmp.eq.s32.totalorder %s29, 1
    %p367 = por %p365, %p366
    %p368 = scmp.ne.s32.totalorder %s359, %s360
    %p369 = scmp.eq.s32.totalorder %s29, 0
    %p370 = por %p368, %p369
    %p371 = scmp.ne.s32.totalorder %s359, %s360
    %p372 = scmp.eq.s32.totalorder %s30, 1
    %p373 = por %p371, %p372
    %p375 = scmp.ne.s32.totalorder %s360, %s374
    %p376 = scmp.eq.s32.totalorder %s30, 0
    %p377 = por %p375, %p376
    %s379 = sadd.s32 %s378, 1
    %p382 = scmp.eq.s32.totalorder %s24, 1
    %p383 = scmp.ne.s32.totalorder %s378, %s380
    %p384 = scmp.eq.s32.totalorder %s24, 0
    %p385 = por %p383, %p384
    %p386 = scmp.ne.s32.totalorder %s378, %s380
    %p387 = scmp.eq.s32.totalorder %s29, 1
    %p388 = por %p386, %p387
    %p389 = scmp.ne.s32.totalorder %s380, %s381
    %p390 = scmp.eq.s32.totalorder %s29, 0
    %p391 = por %p389, %p390
    %p392 = scmp.ne.s32.totalorder %s380, %s381
    %p393 = scmp.eq.s32.totalorder %s30, 1
    %p394 = por %p392, %p393
    %p396 = scmp.ne.s32.totalorder %s381, %s395
    %p397 = scmp.eq.s32.totalorder %s30, 0
    %p398 = por %p396, %p397
    %s400 = sadd.s32 %s399, 1
    %p403 = scmp.eq.s32.totalorder %s24, 1
    %p404 = scmp.ne.s32.totalorder %s399, %s401
    %p405 = scmp.eq.s32.totalorder %s24, 0
    %p406 = por %p404, %p405
    %p407 = scmp.ne.s32.totalorder %s399, %s401
    %p408 = scmp.eq.s32.totalorder %s29, 1
    %p409 = por %p407, %p408
    %p410 = scmp.ne.s32.totalorder %s401, %s402
    %p411 = scmp.eq.s32.totalorder %s29, 0
    %p412 = por %p410, %p411
    %p413 = scmp.ne.s32.totalorder %s401, %s402
    %p414 = scmp.eq.s32.totalorder %s30, 1
    %p415 = por %p413, %p414
    %p417 = scmp.ne.s32.totalorder %s402, %s416
    %p418 = scmp.eq.s32.totalorder %s30, 0
    %p419 = por %p417, %p418
    %s420 = ssub.s32 %s24, %s31
    %p421 = scmp.eq.s32.totalorder %s420, 0
    %s423 = sadd.s32 %s422, 1
    %s424 = scalar_select %p421, %s422, %s423
    %p427 = pneg %p421
    %p428 = scmp.eq.s32.totalorder %s24, 1
    %p429 = por %p427, %p428
    %p430 = scmp.ne.s32.totalorder %s422, %s425
    %p431 = scmp.eq.s32.totalorder %s24, 0
    %p432 = por %p430, %p431
    %p433 = scmp.ne.s32.totalorder %s422, %s425
    %p434 = scmp.eq.s32.totalorder %s29, 1
    %p435 = por %p433, %p434
    %p436 = scmp.ne.s32.totalorder %s425, %s426
    %p437 = scmp.eq.s32.totalorder %s29, 0
    %p438 = por %p436, %p437
    %p439 = scmp.ne.s32.totalorder %s425, %s426
    %p440 = scmp.eq.s32.totalorder %s30, 1
    %p441 = por %p439, %p440
    %p443 = scmp.ne.s32.totalorder %s426, %s442
    %p444 = scmp.eq.s32.totalorder %s30, 0
    %p445 = por %p443, %p444
    %p446 = scmp.le.s32.totalorder 1, %s24
    %p447 = scmp.lt.s32.totalorder %s24, 3
    %p448 = pnand %p446, %p447
    %p449 = pneg %p448
    // Predicated region
    $region9: #{video_clip_forward.5} parent=5 // pred_check
      _
    $region10: #{video_clip_forward.5} parent=5 // pred_check_branch
      %451 = sbr.rel (%p448) target = $region12
    $region11: #{video_clip_forward.5} parent=5 // pred_region
      %s452 = ssub.s32 %s24, 1
      // Predicated region
      $region13: #{video_clip_forward.5} parent=11 // pred_check
        %p453 = pneg %p97
      $region14: #{video_clip_forward.5} parent=11 // pred_check_branch
        %455 = sbr.rel (%p453) target = $region16
      $region15: #{video_clip_forward.5} parent=11 // pred_region
        _
      $region16: #{video_clip_forward.5} parent=11 // pred_fallthru
        _
      // Predicated region
      $region17: #{video_clip_forward.5} parent=11 // pred_check
        %p456 = pneg %p118
      $region18: #{video_clip_forward.5} parent=11 // pred_check_branch
        %458 = sbr.rel (%p456) target = $region20
      $region19: #{video_clip_forward.5} parent=11 // pred_region
        _
      $region20: #{video_clip_forward.5} parent=11 // pred_fallthru
        _
      // Predicated region
      $region21: #{video_clip_forward.5} parent=11 // pred_check
        %p459 = pneg %p139
      $region22: #{video_clip_forward.5} parent=11 // pred_check_branch
        %461 = sbr.rel (%p459) target = $region24
      $region23: #{video_clip_forward.5} parent=11 // pred_region
        _
      $region24: #{video_clip_forward.5} parent=11 // pred_fallthru
        _
      // Predicated region
      $region25: #{video_clip_forward.5} parent=11 // pred_check
        %p462 = pneg %p160
      $region26: #{video_clip_forward.5} parent=11 // pred_check_branch
        %464 = sbr.rel (%p462) target = $region28
      $region27: #{video_clip_forward.5} parent=11 // pred_region
        _
      $region28: #{video_clip_forward.5} parent=11 // pred_fallthru
        _
      // Predicated region
      $region29: #{video_clip_forward.5} parent=11 // pred_check
        %p465 = pneg %p181
      $region30: #{video_clip_forward.5} parent=11 // pred_check_branch
        %467 = sbr.rel (%p465) target = $region32
      $region31: #{video_clip_forward.5} parent=11 // pred_region
        _
      $region32: #{video_clip_forward.5} parent=11 // pred_fallthru
        _
      // Predicated region
      $region33: #{video_clip_forward.5} parent=11 // pred_check
        %p468 = pneg %p202
      $region34: #{video_clip_forward.5} parent=11 // pred_check_branch
        %470 = sbr.rel (%p468) target = $region36
      $region35: #{video_clip_forward.5} parent=11 // pred_region
        _
      $region36: #{video_clip_forward.5} parent=11 // pred_fallthru
        _
      // Predicated region
      $region37: #{video_clip_forward.5} parent=11 // pred_check
        %p471 = pneg %p223
      $region38: #{video_clip_forward.5} parent=11 // pred_check_branch
        %473 = sbr.rel (%p471) target = $region40
      $region39: #{video_clip_forward.5} parent=11 // pred_region
        _
      $region40: #{video_clip_forward.5} parent=11 // pred_fallthru
        _
      // Predicated region
      $region41: #{video_clip_forward.5} parent=11 // pred_check
        %p474 = pneg %p244
      $region42: #{video_clip_forward.5} parent=11 // pred_check_branch
        %476 = sbr.rel (%p474) target = $region44
      $region43: #{video_clip_forward.5} parent=11 // pred_region
        _
      $region44: #{video_clip_forward.5} parent=11 // pred_fallthru
        _
      // Predicated region
      $region45: #{video_clip_forward.5} parent=11 // pred_check
        %p477 = pneg %p265
      $region46: #{video_clip_forward.5} parent=11 // pred_check_branch
        %479 = sbr.rel (%p477) target = $region48
      $region47: #{video_clip_forward.5} parent=11 // pred_region
        _
      $region48: #{video_clip_forward.5} parent=11 // pred_fallthru
        _
      // Predicated region
      $region49: #{video_clip_forward.5} parent=11 // pred_check
        %p480 = pneg %p286
      $region50: #{video_clip_forward.5} parent=11 // pred_check_branch
        %482 = sbr.rel (%p480) target = $region52
      $region51: #{video_clip_forward.5} parent=11 // pred_region
        _
      $region52: #{video_clip_forward.5} parent=11 // pred_fallthru
        _
      // Predicated region
      $region53: #{video_clip_forward.5} parent=11 // pred_check
        %p483 = pneg %p307
      $region54: #{video_clip_forward.5} parent=11 // pred_check_branch
        %485 = sbr.rel (%p483) target = $region56
      $region55: #{video_clip_forward.5} parent=11 // pred_region
        _
      $region56: #{video_clip_forward.5} parent=11 // pred_fallthru
        _
      // Predicated region
      $region57: #{video_clip_forward.5} parent=11 // pred_check
        %p486 = pneg %p328
      $region58: #{video_clip_forward.5} parent=11 // pred_check_branch
        %488 = sbr.rel (%p486) target = $region60
      $region59: #{video_clip_forward.5} parent=11 // pred_region
        _
      $region60: #{video_clip_forward.5} parent=11 // pred_fallthru
        _
      // Predicated region
      $region61: #{video_clip_forward.5} parent=11 // pred_check
        %p489 = pneg %p349
      $region62: #{video_clip_forward.5} parent=11 // pred_check_branch
        %491 = sbr.rel (%p489) target = $region64
      $region63: #{video_clip_forward.5} parent=11 // pred_region
        _
      $region64: #{video_clip_forward.5} parent=11 // pred_fallthru
        _
      // Predicated region
      $region65: #{video_clip_forward.5} parent=11 // pred_check
        %p492 = pneg %p370
      $region66: #{video_clip_forward.5} parent=11 // pred_check_branch
        %494 = sbr.rel (%p492) target = $region68
      $region67: #{video_clip_forward.5} parent=11 // pred_region
        _
      $region68: #{video_clip_forward.5} parent=11 // pred_fallthru
        _
      // Predicated region
      $region69: #{video_clip_forward.5} parent=11 // pred_check
        %p495 = pneg %p391
      $region70: #{video_clip_forward.5} parent=11 // pred_check_branch
        %497 = sbr.rel (%p495) target = $region72
      $region71: #{video_clip_forward.5} parent=11 // pred_region
        _
      $region72: #{video_clip_forward.5} parent=11 // pred_fallthru
        _
      // Predicated region
      $region73: #{video_clip_forward.5} parent=11 // pred_check
        %p498 = pneg %p412
      $region74: #{video_clip_forward.5} parent=11 // pred_check_branch
        %500 = sbr.rel (%p498) target = $region76
      $region75: #{video_clip_forward.5} parent=11 // pred_region
        _
      $region76: #{video_clip_forward.5} parent=11 // pred_fallthru
        _
    $region12: #{video_clip_forward.5} parent=5 // pred_fallthru
      _
    %p501 = scmp.lt.s32.totalorder %s24, 2
    // Predicated region
    $region77: #{video_clip_forward.5} parent=5 // pred_check
      %p502 = pneg %p501
    $region78: #{video_clip_forward.5} parent=5 // pred_check_branch
      %504 = sbr.rel (%p502) target = $region80
    $region79: #{video_clip_forward.5} parent=5 // pred_region
      // Predicated region
      $region81: #{video_clip_forward.5} parent=79 // pred_check
        %p505 = pneg %p44
      $region82: #{video_clip_forward.5} parent=79 // pred_check_branch
        %507 = sbr.rel (%p505) target = $region84
      $region83: #{video_clip_forward.5} parent=79 // pred_region
        %p508 = scmp.lt.s32.totalorder %s24, 1
        %s509 = scalar_select %p508, %s24, 1
        %s510 = smul.addr %s509, 8
        %s511 = scalar_lea.vmem %s0, %s510
      $region84: #{video_clip_forward.5} parent=79 // pred_fallthru
        _
      // Predicated region
      $region85: #{video_clip_forward.5} parent=79 // pred_check
        %p512 = pneg %p70
      $region86: #{video_clip_forward.5} parent=79 // pred_check_branch
        %514 = sbr.rel (%p512) target = $region88
      $region87: #{video_clip_forward.5} parent=79 // pred_region
        %p515 = scmp.lt.s32.totalorder %s24, 1
        %s516 = scalar_select %p515, %s24, 1
        %s517 = scalar_lea.vmem %s1, %s516
      $region88: #{video_clip_forward.5} parent=79 // pred_fallthru
        _
    $region80: #{video_clip_forward.5} parent=5 // pred_fallthru
      _
    %p518 = scmp.le.s32.totalorder 1, %s24
    %p519 = scmp.lt.s32.totalorder %s24, 3
    %p520 = pnand %p518, %p519
    %p521 = pneg %p520
    // Predicated region
    $region89: #{video_clip_forward.5} parent=5 // pred_check
      _
    $region90: #{video_clip_forward.5} parent=5 // pred_check_branch
      %523 = sbr.rel (%p520) target = $region92
    $region91: #{video_clip_forward.5} parent=5 // pred_region
      %s524 = ssub.s32 %s24, 1
      %p525 = scmp.lt.s32.totalorder %s29, 1
      %s526 = scalar_select %p525, %s29, 1
      %s527 = smul.addr %s526, 8
      %s528 = scalar_lea.vmem %s0, %s527
      %p529 = pneg %p50
      %p530 = pneg %p47
      %p531 = scmp.lt.s32.totalorder %s29, 1
      %s532 = scalar_select %p531, %s29, 1
      %s533 = scalar_lea.vmem %s1, %s532
      %p534 = pneg %p76
      %p535 = pneg %p73
      %p536 = pneg %p97
      %p537 = pneg %p94
      %p538 = pneg %p118
      %p539 = pneg %p115
      %p540 = pneg %p139
      %p541 = pneg %p136
      %p542 = pneg %p160
      %p543 = pneg %p157
      %p544 = pneg %p181
      %p545 = pneg %p178
      %p546 = pneg %p202
      %p547 = pneg %p199
      %p548 = pneg %p223
      %p549 = pneg %p220
      %p550 = pneg %p244
      %p551 = pneg %p241
      %p552 = pneg %p265
      %p553 = pneg %p262
      %p554 = pneg %p286
      %p555 = pneg %p283
      %p556 = pneg %p307
      %p557 = pneg %p304
      %p558 = pneg %p328
      %p559 = pneg %p325
      %p560 = pneg %p349
      %p561 = pneg %p346
      %p562 = pneg %p370
      %p563 = pneg %p367
      %p564 = pneg %p391
      %p565 = pneg %p388
      %p566 = pneg %p412
      %p567 = pneg %p409
      %p568 = pneg %p438
      %p569 = pneg %p435
      %p570 = scmp.lt.s32.totalorder %s29, 1
      %s571 = scalar_select %p570, %s29, 1
      %s572 = scalar_lea.vmem %s18, %s571
      %p573 = scmp.lt.s32.totalorder %s29, 1
      %s574 = scalar_select %p573, %s29, 1
      %s575 = smul.addr %s574, 8
      %s576 = scalar_lea.vmem %s0, %s575
      %p577 = scmp.lt.s32.totalorder %s29, 1
      %s578 = scalar_select %p577, %s29, 1
      %s579 = scalar_lea.vmem %s1, %s578
      %p580 = scmp.lt.s32.totalorder %s29, 1
      %s581 = scalar_select %p580, %s29, 1
      %s582 = scalar_lea.vmem %s18, %s581
      %v584 = vld [vmem:[%s576] sm:$0xff]
      %v585 = vld [vmem:[%s2] sm:$0xff]
      %v586 = vadd.f32 %v584, %v585
      %v587 = vlaneseq
      %v588 = vshrl.u32 %v587, 7
      %v589 = vlaneseq
      %v590 = vand.u32 %v589, 127
      %vm591 = vcmp.le.s32.totalorder %v590, %v588
      %v592 = vld [vmem:[%s6] sm:$0x1]
      %v593 = vld [vmem:[%s7] sm:$0x1]
      %v594 = vld [vmem:[%s8] sm:$0xff]
      %v595 = vld [vmem:[%s8 + $0x8] sm:$0xff]
      %v596 = vld [vmem:[%s8 + $0x10] sm:$0xff]
      %v597 = vld [vmem:[%s8 + $0x18] sm:$0xff]
      %v598 = vld [vmem:[%s9] sm:$0x1]
      %v599 = vld [vmem:[%s10] sm:$0xff]
      %v600 = vld [vmem:[%s10 + $0x8] sm:$0xff]
      %v601 = vld [vmem:[%s10 + $0x10] sm:$0xff]
      %v602 = vld [vmem:[%s10 + $0x18] sm:$0xff]
      %v603 = vld [vmem:[%s11] sm:$0x1]
      %v604 = vld [vmem:[%s12] sm:$0x1]
      %v605 = vld [vmem:[%s13] sm:$0x1]
      %v606 = vld [vmem:[%s14] sm:$0xff]
      %v607 = vld [vmem:[%s14 + $0x8] sm:$0xff]
      %v608 = vld [vmem:[%s14 + $0x10] sm:$0xff]
      %v609 = vld [vmem:[%s14 + $0x18] sm:$0xff]
      %v610 = vld [vmem:[%s15] sm:$0x1]
      %v611 = vld [vmem:[%s16] sm:$0xff]
      %v612 = vld [vmem:[%s16 + $0x8] sm:$0xff]
      %v613 = vld [vmem:[%s16 + $0x10] sm:$0xff]
      %v614 = vld [vmem:[%s16 + $0x18] sm:$0xff]
      %v615 = vld [vmem:[%s16 + $0x20] sm:$0xff]
      %v616 = vld [vmem:[%s16 + $0x28] sm:$0xff]
      %v617 = vld [vmem:[%s16 + $0x30] sm:$0xff]
      %v618 = vld [vmem:[%s16 + $0x38] sm:$0xff]
      %v619 = vld [vmem:[%s16 + $0x40] sm:$0xff]
      %v620 = vld [vmem:[%s16 + $0x48] sm:$0xff]
      %v621 = vld [vmem:[%s16 + $0x50] sm:$0xff]
      %v622 = vld [vmem:[%s16 + $0x58] sm:$0xff]
      %v623 = vld [vmem:[%s16 + $0x60] sm:$0xff]
      %v624 = vld [vmem:[%s16 + $0x68] sm:$0xff]
      %v625 = vld [vmem:[%s16 + $0x70] sm:$0xff]
      %v626 = vld [vmem:[%s16 + $0x78] sm:$0xff]
      %v627 = vld [vmem:[%s17] sm:$0x1]
      %vm628 = vcmask 261120
      %v629 = vsel %vm628, %v586, 0.0
      %630 = vadd.xlane.f32.xlu0 %v629
      %v631 = vpop.xlane.xlu0 %630
      %v632 = vrcp.pop 32.0
      %v633 = vmul.f32 %v631, %v632
      %v634 = vsub.f32 %v586, %v633
      %v635 = vmul.f32 %v634, %v634
      %v636 = vsel %vm628, %v635, 0.0
      %637 = vadd.xlane.f32.xlu0 %v636
      %v638 = vpop.xlane.xlu0 %637
      %v639 = vmul.f32 %v638, %v632
      %v640 = vadd.f32 %v639, 1e-05
      %v641 = vrsqrt.pop %v640
      %v642 = vmul.f32 %v634, %v641
      %v644 = vlaneseq
      %v645 = vshrl.u32 %v644, 7
      %v646 = vsub.s32 0, %v645
      %v647 = vrot.slane %v592, %v646
      %v649 = vmul.f32 %v642, %v647
      %v651 = vlaneseq
      %v652 = vshrl.u32 %v651, 7
      %v653 = vsub.s32 0, %v652
      %v654 = vrot.slane %v593, %v653
      %v656 = vadd.f32 %v649, %v654
      %v657 = vpack.c.bf16 %v656, %v656
      %v658 = vpack.c.bf16 %v595, %v594
      %v659 = vpack.c.bf16 %v597, %v596
      %v661 = vlaneseq
      %v662 = vshrl.u32 %v661, 7
      %v663 = vsub.s32 0, %v662
      %v664 = vrot.slane %v598, %v663
      %v667 = vsel %vm628, %v657, 0
      %669 = vmatprep.subr.bf16.mxu0 0
      %670 = vmatpush1.bf16.msra.mxu0 %v658
      %671 = vmatprep.subr.bf16.mxu0 0
      %672 = vmatpush1.bf16.msra.mxu0 %v659
      %673 = vmatprep.subr.bf16.mxu0 0
      %674 = vmatpush1.bf16.msra.mxu0 0
      %675 = vmatprep.subr.bf16.mxu0 0
      %676 = vmatpush1.bf16.msra.mxu0 0
      %677 = vmatprep.subr.bf16.mxu0 0
      %678 = vmatpush1.bf16.msra.mxu0 0
      %679 = vmatprep.subr.bf16.mxu0 0
      %680 = vmatpush1.bf16.msra.mxu0 0
      %681 = vmatprep.subr.bf16.mxu0 0
      %682 = vmatpush1.bf16.msra.mxu0 0
      %683 = vmatprep.subr.bf16.mxu0 0
      %684 = vmatpush1.bf16.msra.mxu0 0
      %685 = vmatprep.subr.bf16.mxu0 0
      %686 = vmatpush1.bf16.msra.mxu0 0
      %687 = vmatprep.subr.bf16.mxu0 0
      %688 = vmatpush1.bf16.msra.mxu0 0
      %689 = vmatprep.subr.bf16.mxu0 0
      %690 = vmatpush1.bf16.msra.mxu0 0
      %691 = vmatprep.subr.bf16.mxu0 0
      %692 = vmatpush1.bf16.msra.mxu0 0
      %693 = vmatprep.subr.bf16.mxu0 0
      %694 = vmatpush1.bf16.msra.mxu0 0
      %695 = vmatprep.subr.bf16.mxu0 0
      %696 = vmatpush1.bf16.msra.mxu0 0
      %697 = vmatprep.subr.bf16.mxu0 0
      %698 = vmatpush1.bf16.msra.mxu0 0
      %699 = vmatprep.subr.bf16.mxu0 0
      %700 = vmatpush1.bf16.msra.mxu0 0
      %701 = vmatprep.mubr.bf16.mxu0 0
      %702 = vmatmul.mubr.bf16.gmra.mrb[0].mxu0 %v667
      %v703 = vpop.f32.mrb[0].mxu0
      %v704 = vadd.f32 %v664, %v703
      %v705 = vpop.f32.mrb[0].mxu0
      %v706 = vpop.f32.mrb[0].mxu0
      %v707 = vpop.f32.mrb[0].mxu0
      %708 = vdwg.mxu0
      %710 = vrot.lane.b32.xlu0 %v704, 96
      %v711 = vpop.permute.xlu0 %710
      %713 = vxpose.xlu0.b32.start [1/16] %v711, 128
      %714 = vxpose.xlu0.b32.cont [2/16] 0.0, 128
      %715 = vxpose.xlu0.b32.cont [3/16] 0.0, 128
      %716 = vxpose.xlu0.b32.cont [4/16] 0.0, 128
      %717 = vxpose.xlu0.b32.cont [5/16] 0.0, 128
      %718 = vxpose.xlu0.b32.cont [6/16] 0.0, 128
      %719 = vxpose.xlu0.b32.cont [7/16] 0.0, 128
      %720 = vxpose.xlu0.b32.cont [8/16] 0.0, 128
      %721 = vxpose.xlu0.b32.cont [9/16] 0.0, 128
      %722 = vxpose.xlu0.b32.cont [10/16] 0.0, 128
      %723 = vxpose.xlu0.b32.cont [11/16] 0.0, 128
      %724 = vxpose.xlu0.b32.cont [12/16] 0.0, 128
      %725 = vxpose.xlu0.b32.cont [13/16] 0.0, 128
      %726 = vxpose.xlu0.b32.cont [14/16] 0.0, 128
      %727 = vxpose.xlu0.b32.cont [15/16] 0.0, 128
      %728 = vxpose.xlu0.b32.end [16/16] 0.0, 128
      %v729 = vpop.trf.xlu0
      %v730 = vpop.trf.xlu0
      %v731 = vpop.trf.xlu0
      %v732 = vpop.trf.xlu0
      %v733 = vpop.trf.xlu0
      %v734 = vpop.trf.xlu0
      %v735 = vpop.trf.xlu0
      %v736 = vpop.trf.xlu0
      %v737 = vpop.trf.xlu0
      %v738 = vpop.trf.xlu0
      %v739 = vpop.trf.xlu0
      %v740 = vpop.trf.xlu0
      %v741 = vpop.trf.xlu0
      %v742 = vpop.trf.xlu0
      %v743 = vpop.trf.xlu0
      %v744 = vpop.trf.xlu0
      %v745 = vpack.c.bf16 %v704, %v704
      %v746 = vpack.c.bf16 %v729, %v729
      %vm747 = vcmask 64512
      %v749 = vsel %vm747, %v745, 0
      %vm751 = vcmask 1043456
      %v753 = vsel %vm751, %v746, 0
      %755 = vmatprep.subr.bf16.mxu0 0
      %756 = vmatpush1.bf16.msra.mxu0 %v753
      %757 = vmatprep.subr.bf16.mxu0 0
      %758 = vmatpush1.bf16.msra.mxu0 0
      %759 = vmatprep.subr.bf16.mxu0 0
      %760 = vmatpush1.bf16.msra.mxu0 0
      %761 = vmatprep.subr.bf16.mxu0 0
      %762 = vmatpush1.bf16.msra.mxu0 0
      %763 = vmatprep.subr.bf16.mxu0 0
      %764 = vmatpush1.bf16.msra.mxu0 0
      %765 = vmatprep.subr.bf16.mxu0 0
      %766 = vmatpush1.bf16.msra.mxu0 0
      %767 = vmatprep.subr.bf16.mxu0 0
      %768 = vmatpush1.bf16.msra.mxu0 0
      %769 = vmatprep.subr.bf16.mxu0 0
      %770 = vmatpush1.bf16.msra.mxu0 0
      %771 = vmatprep.subr.bf16.mxu0 0
      %772 = vmatpush1.bf16.msra.mxu0 0
      %773 = vmatprep.subr.bf16.mxu0 0
      %774 = vmatpush1.bf16.msra.mxu0 0
      %775 = vmatprep.subr.bf16.mxu0 0
      %776 = vmatpush1.bf16.msra.mxu0 0
      %777 = vmatprep.subr.bf16.mxu0 0
      %778 = vmatpush1.bf16.msra.mxu0 0
      %779 = vmatprep.subr.bf16.mxu0 0
      %780 = vmatpush1.bf16.msra.mxu0 0
      %781 = vmatprep.subr.bf16.mxu0 0
      %782 = vmatpush1.bf16.msra.mxu0 0
      %783 = vmatprep.subr.bf16.mxu0 0
      %784 = vmatpush1.bf16.msra.mxu0 0
      %785 = vmatprep.subr.bf16.mxu0 0
      %786 = vmatpush1.bf16.msra.mxu0 0
      %787 = vmatprep.mubr.bf16.mxu0 0
      %788 = vmatmul.mubr.bf16.gmra.mrb[0].mxu0 %v749
      %v789 = vpop.f32.mrb[0].mxu0
      %v790 = vadd.f32 0.0, %v789
      %v791 = vpop.f32.mrb[0].mxu0
      %v792 = vpop.f32.mrb[0].mxu0
      %v793 = vpop.f32.mrb[0].mxu0
      %794 = vdwg.mxu0
      %v795 = vmul.f32 %v790, 0.35355338
      %v796 = vsel %vm591, %v795, -1e+30
      %v797 = vsel %vm747, %v796, -inf
      %798 = vmax.xlane.f32.xlu0 %v797
      %v799 = vpop.xlane.xlu0 %798
      %v800 = vsub.f32 %v796, %v799
      %v801 = vmul.f32 %v800, 1.442695
      %v802 = vpow.pop %v801
      %v803 = vsel %vm747, %v802, 0.0
      %804 = vadd.xlane.f32.xlu0 %v803
      %v805 = vpop.xlane.xlu0 %804
      %v806 = vrcp.pop %v805
      %v807 = vmul.f32 %v802, %v806
      %v808 = vpack.c.bf16 %v807, %v807
      %810 = vrot.lane.b32.xlu0 %v745, 64
      %v811 = vpop.permute.xlu0 %810
      %v813 = vsel %vm747, %v808, 0
      %v816 = vsel %vm751, %v811, 0
      %818 = vmatprep.subr.bf16.mxu0 0
      %819 = vmatpush1.bf16.msra.mxu0 %v816
      %820 = vmatprep.subr.bf16.mxu0 0
      %821 = vmatpush1.bf16.msra.mxu0 0
      %822 = vmatprep.subr.bf16.mxu0 0
      %823 = vmatpush1.bf16.msra.mxu0 0
      %824 = vmatprep.subr.bf16.mxu0 0
      %825 = vmatpush1.bf16.msra.mxu0 0
      %826 = vmatprep.subr.bf16.mxu0 0
      %827 = vmatpush1.bf16.msra.mxu0 0
      %828 = vmatprep.subr.bf16.mxu0 0
      %829 = vmatpush1.bf16.msra.mxu0 0
      %830 = vmatprep.subr.bf16.mxu0 0
      %831 = vmatpush1.bf16.msra.mxu0 0
      %832 = vmatprep.subr.bf16.mxu0 0
      %833 = vmatpush1.bf16.msra.mxu0 0
      %834 = vmatprep.subr.bf16.mxu0 0
      %835 = vmatpush1.bf16.msra.mxu0 0
      %836 = vmatprep.subr.bf16.mxu0 0
      %837 = vmatpush1.bf16.msra.mxu0 0
      %838 = vmatprep.subr.bf16.mxu0 0
      %839 = vmatpush1.bf16.msra.mxu0 0
      %840 = vmatprep.subr.bf16.mxu0 0
      %841 = vmatpush1.bf16.msra.mxu0 0
      %842 = vmatprep.subr.bf16.mxu0 0
      %843 = vmatpush1.bf16.msra.mxu0 0
      %844 = vmatprep.subr.bf16.mxu0 0
      %845 = vmatpush1.bf16.msra.mxu0 0
      %846 = vmatprep.subr.bf16.mxu0 0
      %847 = vmatpush1.bf16.msra.mxu0 0
      %848 = vmatprep.subr.bf16.mxu0 0
      %849 = vmatpush1.bf16.msra.mxu0 0
      %850 = vmatprep.mubr.bf16.mxu0 0
      %851 = vmatmul.mubr.bf16.gmra.mrb[0].mxu0 %v813
      %v852 = vpop.f32.mrb[0].mxu0
      %v853 = vadd.f32 0.0, %v852
      %v854 = vpop.f32.mrb[0].mxu0
      %v855 = vpop.f32.mrb[0].mxu0
      %v856 = vpop.f32.mrb[0].mxu0
      %857 = vdwg.mxu0
      %858 = vrot.lane.b32.xlu0 %v704, 88
      %v859 = vpop.permute.xlu0 %858
      %861 = vxpose.xlu0.b32.start [1/16] %v859, 128
      %862 = vxpose.xlu0.b32.cont [2/16] 0.0, 128
      %863 = vxpose.xlu0.b32.cont [3/16] 0.0, 128
      %864 = vxpose.xlu0.b32.cont [4/16] 0.0, 128
      %865 = vxpose.xlu0.b32.cont [5/16] 0.0, 128
      %866 = vxpose.xlu0.b32.cont [6/16] 0.0, 128
      %867 = vxpose.xlu0.b32.cont [7/16] 0.0, 128
      %868 = vxpose.xlu0.b32.cont [8/16] 0.0, 128
      %869 = vxpose.xlu0.b32.cont [9/16] 0.0, 128
      %870 = vxpose.xlu0.b32.cont [10/16] 0.0, 128
      %871 = vxpose.xlu0.b32.cont [11/16] 0.0, 128
      %872 = vxpose.xlu0.b32.cont [12/16] 0.0, 128
      %873 = vxpose.xlu0.b32.cont [13/16] 0.0, 128
      %874 = vxpose.xlu0.b32.cont [14/16] 0.0, 128
      %875 = vxpose.xlu0.b32.cont [15/16] 0.0, 128
      %876 = vxpose.xlu0.b32.end [16/16] 0.0, 128
      %v877 = vpop.trf.xlu0
      %v878 = vpop.trf.xlu0
      %v879 = vpop.trf.xlu0
      %v880 = vpop.trf.xlu0
      %v881 = vpop.trf.xlu0
      %v882 = vpop.trf.xlu0
      %v883 = vpop.trf.xlu0
      %v884 = vpop.trf.xlu0
      %v885 = vpop.trf.xlu0
      %v886 = vpop.trf.xlu0
      %v887 = vpop.trf.xlu0
      %v888 = vpop.trf.xlu0
      %v889 = vpop.trf.xlu0
      %v890 = vpop.trf.xlu0
      %v891 = vpop.trf.xlu0
      %v892 = vpop.trf.xlu0
      %v893 = vpack.c.bf16 %v877, %v877
      %894 = vrot.lane.b32.xlu0 %v745, 120
      %v895 = vpop.permute.xlu0 %894
      %v897 = vsel %vm747, %v895, 0
      %v900 = vsel %vm751, %v893, 0
      %902 = vmatprep.subr.bf16.mxu0 0
      %903 = vmatpush1.bf16.msra.mxu0 %v900
      %904 = vmatprep.subr.bf16.mxu0 0
      %905 = vmatpush1.bf16.msra.mxu0 0
      %906 = vmatprep.subr.bf16.mxu0 0
      %907 = vmatpush1.bf16.msra.mxu0 0
      %908 = vmatprep.subr.bf16.mxu0 0
      %909 = vmatpush1.bf16.msra.mxu0 0
      %910 = vmatprep.subr.bf16.mxu0 0
      %911 = vmatpush1.bf16.msra.mxu0 0
      %912 = vmatprep.subr.bf16.mxu0 0
      %913 = vmatpush1.bf16.msra.mxu0 0
      %914 = vmatprep.subr.bf16.mxu0 0
      %915 = vmatpush1.bf16.msra.mxu0 0
      %916 = vmatprep.subr.bf16.mxu0 0
      %917 = vmatpush1.bf16.msra.mxu0 0
      %918 = vmatprep.subr.bf16.mxu0 0
      %919 = vmatpush1.bf16.msra.mxu0 0
      %920 = vmatprep.subr.bf16.mxu0 0
      %921 = vmatpush1.bf16.msra.mxu0 0
      %922 = vmatprep.subr.bf16.mxu0 0
      %923 = vmatpush1.bf16.msra.mxu0 0
      %924 = vmatprep.subr.bf16.mxu0 0
      %925 = vmatpush1.bf16.msra.mxu0 0
      %926 = vmatprep.subr.bf16.mxu0 0
      %927 = vmatpush1.bf16.msra.mxu0 0
      %928 = vmatprep.subr.bf16.mxu0 0
      %929 = vmatpush1.bf16.msra.mxu0 0
      %930 = vmatprep.subr.bf16.mxu0 0
      %931 = vmatpush1.bf16.msra.mxu0 0
      %932 = vmatprep.subr.bf16.mxu0 0
      %933 = vmatpush1.bf16.msra.mxu0 0
      %934 = vmatprep.mubr.bf16.mxu0 0
      %935 = vmatmul.mubr.bf16.gmra.mrb[0].mxu0 %v897
      %v936 = vpop.f32.mrb[0].mxu0
      %v937 = vadd.f32 0.0, %v936
      %v938 = vpop.f32.mrb[0].mxu0
      %v939 = vpop.f32.mrb[0].mxu0
      %v940 = vpop.f32.mrb[0].mxu0
      %941 = vdwg.mxu0
      %v942 = vmul.f32 %v937, 0.35355338
      %v943 = vsel %vm591, %v942, -1e+30
      %v944 = vsel %vm747, %v943, -inf
      %945 = vmax.xlane.f32.xlu0 %v944
      %v946 = vpop.xlane.xlu0 %945
      %v947 = vsub.f32 %v943, %v946
      %v948 = vmul.f32 %v947, 1.442695
      %v949 = vpow.pop %v948
      %v950 = vsel %vm747, %v949, 0.0
      %951 = vadd.xlane.f32.xlu0 %v950
      %v952 = vpop.xlane.xlu0 %951
      %v953 = vrcp.pop %v952
      %v954 = vmul.f32 %v949, %v953
      %v955 = vpack.c.bf16 %v954, %v954
      %956 = vrot.lane.b32.xlu0 %v745, 56
      %v957 = vpop.permute.xlu0 %956
      %v959 = vsel %vm747, %v955, 0
      %v962 = vsel %vm751, %v957, 0
      %964 = vmatprep.subr.bf16.mxu0 0
      %965 = vmatpush1.bf16.msra.mxu0 %v962
      %966 = vmatprep.subr.bf16.mxu0 0
      %967 = vmatpush1.bf16.msra.mxu0 0
      %968 = vmatprep.subr.bf16.mxu0 0
      %969 = vmatpush1.bf16.msra.mxu0 0
      %970 = vmatprep.subr.bf16.mxu0 0
      %971 = vmatpush1.bf16.msra.mxu0 0
      %972 = vmatprep.subr.bf16.mxu0 0
      %973 = vmatpush1.bf16.msra.mxu0 0
      %974 = vmatprep.subr.bf16.mxu0 0
      %975 = vmatpush1.bf16.msra.mxu0 0
      %976 = vmatprep.subr.bf16.mxu0 0
      %977 = vmatpush1.bf16.msra.mxu0 0
      %978 = vmatprep.subr.bf16.mxu0 0
      %979 = vmatpush1.bf16.msra.mxu0 0
      %980 = vmatprep.subr.bf16.mxu0 0
      %981 = vmatpush1.bf16.msra.mxu0 0
      %982 = vmatprep.subr.bf16.mxu0 0
      %983 = vmatpush1.bf16.msra.mxu0 0
      %984 = vmatprep.subr.bf16.mxu0 0
      %985 = vmatpush1.bf16.msra.mxu0 0
      %986 = vmatprep.subr.bf16.mxu0 0
      %987 = vmatpush1.bf16.msra.mxu0 0
      %988 = vmatprep.subr.bf16.mxu0 0
      %989 = vmatpush1.bf16.msra.mxu0 0
      %990 = vmatprep.subr.bf16.mxu0 0
      %991 = vmatpush1.bf16.msra.mxu0 0
      %992 = vmatprep.subr.bf16.mxu0 0
      %993 = vmatpush1.bf16.msra.mxu0 0
      %994 = vmatprep.subr.bf16.mxu0 0
      %995 = vmatpush1.bf16.msra.mxu0 0
      %996 = vmatprep.mubr.bf16.mxu0 0
      %997 = vmatmul.mubr.bf16.gmra.mrb[0].mxu0 %v959
      %v998 = vpop.f32.mrb[0].mxu0
      %v999 = vadd.f32 0.0, %v998
      %v1000 = vpop.f32.mrb[0].mxu0
      %v1001 = vpop.f32.mrb[0].mxu0
      %v1002 = vpop.f32.mrb[0].mxu0
      %1003 = vdwg.mxu0
      %1004 = vrot.lane.b32.xlu0 %v704, 80
      %v1005 = vpop.permute.xlu0 %1004
      %1007 = vxpose.xlu0.b32.start [1/16] %v1005, 128
      %1008 = vxpose.xlu0.b32.cont [2/16] 0.0, 128
      %1009 = vxpose.xlu0.b32.cont [3/16] 0.0, 128
      %1010 = vxpose.xlu0.b32.cont [4/16] 0.0, 128
      %1011 = vxpose.xlu0.b32.cont [5/16] 0.0, 128
      %1012 = vxpose.xlu0.b32.cont [6/16] 0.0, 128
      %1013 = vxpose.xlu0.b32.cont [7/16] 0.0, 128
      %1014 = vxpose.xlu0.b32.cont [8/16] 0.0, 128
      %1015 = vxpose.xlu0.b32.cont [9/16] 0.0, 128
      %1016 = vxpose.xlu0.b32.cont [10/16] 0.0, 128
      %1017 = vxpose.xlu0.b32.cont [11/16] 0.0, 128
      %1018 = vxpose.xlu0.b32.cont [12/16] 0.0, 128
      %1019 = vxpose.xlu0.b32.cont [13/16] 0.0, 128
      %1020 = vxpose.xlu0.b32.cont [14/16] 0.0, 128
      %1021 = vxpose.xlu0.b32.cont [15/16] 0.0, 128
      %1022 = vxpose.xlu0.b32.end [16/16] 0.0, 128
      %v1023 = vpop.trf.xlu0
      %v1024 = vpop.trf.xlu0
      %v1025 = vpop.trf.xlu0
      %v1026 = vpop.trf.xlu0
      %v1027 = vpop.trf.xlu0
      %v1028 = vpop.trf.xlu0
      %v1029 = vpop.trf.xlu0
      %v1030 = vpop.trf.xlu0
      %v1031 = vpop.trf.xlu0
      %v1032 = vpop.trf.xlu0
      %v1033 = vpop.trf.xlu0
      %v1034 = vpop.trf.xlu0
      %v1035 = vpop.trf.xlu0
      %v1036 = vpop.trf.xlu0
      %v1037 = vpop.trf.xlu0
      %v1038 = vpop.trf.xlu0
      %v1039 = vpack.c.bf16 %v1023, %v1023
      %1040 = vrot.lane.b32.xlu0 %v745, 112
      %v1041 = vpop.permute.xlu0 %1040
      %v1043 = vsel %vm747, %v1041, 0
      %v1046 = vsel %vm751, %v1039, 0
      %1048 = vmatprep.subr.bf16.mxu0 0
      %1049 = vmatpush1.bf16.msra.mxu0 %v1046
      %1050 = vmatprep.subr.bf16.mxu0 0
      %1051 = vmatpush1.bf16.msra.mxu0 0
      %1052 = vmatprep.subr.bf16.mxu0 0
      %1053 = vmatpush1.bf16.msra.mxu0 0
      %1054 = vmatprep.subr.bf16.mxu0 0
      %1055 = vmatpush1.bf16.msra.mxu0 0
      %1056 = vmatprep.subr.bf16.mxu0 0
      %1057 = vmatpush1.bf16.msra.mxu0 0
      %1058 = vmatprep.subr.bf16.mxu0 0
      %1059 = vmatpush1.bf16.msra.mxu0 0
      %1060 = vmatprep.subr.bf16.mxu0 0
      %1061 = vmatpush1.bf16.msra.mxu0 0
      %1062 = vmatprep.subr.bf16.mxu0 0
      %1063 = vmatpush1.bf16.msra.mxu0 0
      %1064 = vmatprep.subr.bf16.mxu0 0
      %1065 = vmatpush1.bf16.msra.mxu0 0
      %1066 = vmatprep.subr.bf16.mxu0 0
      %1067 = vmatpush1.bf16.msra.mxu0 0
      %1068 = vmatprep.subr.bf16.mxu0 0
      %1069 = vmatpush1.bf16.msra.mxu0 0
      %1070 = vmatprep.subr.bf16.mxu0 0
      %1071 = vmatpush1.bf16.msra.mxu0 0
      %1072 = vmatprep.subr.bf16.mxu0 0
      %1073 = vmatpush1.bf16.msra.mxu0 0
      %1074 = vmatprep.subr.bf16.mxu0 0
      %1075 = vmatpush1.bf16.msra.mxu0 0
      %1076 = vmatprep.subr.bf16.mxu0 0
      %1077 = vmatpush1.bf16.msra.mxu0 0
      %1078 = vmatprep.subr.bf16.mxu0 0
      %1079 = vmatpush1.bf16.msra.mxu0 0
      %1080 = vmatprep.mubr.bf16.mxu0 0
      %1081 = vmatmul.mubr.bf16.gmra.mrb[0].mxu0 %v1043
      %v1082 = vpop.f32.mrb[0].mxu0
      %v1083 = vadd.f32 0.0, %v1082
      %v1084 = vpop.f32.mrb[0].mxu0
      %v1085 = vpop.f32.mrb[0].mxu0
      %v1086 = vpop.f32.mrb[0].mxu0
      %1087 = vdwg.mxu0
      %v1088 = vmul.f32 %v1083, 0.35355338
      %v1089 = vsel %vm591, %v1088, -1e+30
      %v1090 = vsel %vm747, %v1089, -inf
      %1091 = vmax.xlane.f32.xlu0 %v1090
      %v1092 = vpop.xlane.xlu0 %1091
      %v1093 = vsub.f32 %v1089, %v1092
      %v1094 = vmul.f32 %v1093, 1.442695
      %v1095 = vpow.pop %v1094
      %v1096 = vsel %vm747, %v1095, 0.0
      %1097 = vadd.xlane.f32.xlu0 %v1096
      %v1098 = vpop.xlane.xlu0 %1097
      %v1099 = vrcp.pop %v1098
      %v1100 = vmul.f32 %v1095, %v1099
      %v1101 = vpack.c.bf16 %v1100, %v1100
      %1102 = vrot.lane.b32.xlu0 %v745, 48
      %v1103 = vpop.permute.xlu0 %1102
      %v1105 = vsel %vm747, %v1101, 0
      %v1108 = vsel %vm751, %v1103, 0
      %1110 = vmatprep.subr.bf16.mxu0 0
      %1111 = vmatpush1.bf16.msra.mxu0 %v1108
      %1112 = vmatprep.subr.bf16.mxu0 0
      %1113 = vmatpush1.bf16.msra.mxu0 0
      %1114 = vmatprep.subr.bf16.mxu0 0
      %1115 = vmatpush1.bf16.msra.mxu0 0
      %1116 = vmatprep.subr.bf16.mxu0 0
      %1117 = vmatpush1.bf16.msra.mxu0 0
      %1118 = vmatprep.subr.bf16.mxu0 0
      %1119 = vmatpush1.bf16.msra.mxu0 0
      %1120 = vmatprep.subr.bf16.mxu0 0
      %1121 = vmatpush1.bf16.msra.mxu0 0
      %1122 = vmatprep.subr.bf16.mxu0 0
      %1123 = vmatpush1.bf16.msra.mxu0 0
      %1124 = vmatprep.subr.bf16.mxu0 0
      %1125 = vmatpush1.bf16.msra.mxu0 0
      %1126 = vmatprep.subr.bf16.mxu0 0
      %1127 = vmatpush1.bf16.msra.mxu0 0
      %1128 = vmatprep.subr.bf16.mxu0 0
      %1129 = vmatpush1.bf16.msra.mxu0 0
      %1130 = vmatprep.subr.bf16.mxu0 0
      %1131 = vmatpush1.bf16.msra.mxu0 0
      %1132 = vmatprep.subr.bf16.mxu0 0
      %1133 = vmatpush1.bf16.msra.mxu0 0
      %1134 = vmatprep.subr.bf16.mxu0 0
      %1135 = vmatpush1.bf16.msra.mxu0 0
      %1136 = vmatprep.subr.bf16.mxu0 0
      %1137 = vmatpush1.bf16.msra.mxu0 0
      %1138 = vmatprep.subr.bf16.mxu0 0
      %1139 = vmatpush1.bf16.msra.mxu0 0
      %1140 = vmatprep.subr.bf16.mxu0 0
      %1141 = vmatpush1.bf16.msra.mxu0 0
      %1142 = vmatprep.mubr.bf16.mxu0 0
      %1143 = vmatmul.mubr.bf16.gmra.mrb[0].mxu0 %v1105
      %v1144 = vpop.f32.mrb[0].mxu0
      %v1145 = vadd.f32 0.0, %v1144
      %v1146 = vpop.f32.mrb[0].mxu0
      %v1147 = vpop.f32.mrb[0].mxu0
      %v1148 = vpop.f32.mrb[0].mxu0
      %1149 = vdwg.mxu0
      %1150 = vrot.lane.b32.xlu0 %v704, 72
      %v1151 = vpop.permute.xlu0 %1150
      %1153 = vxpose.xlu0.b32.start [1/16] %v1151, 128
      %1154 = vxpose.xlu0.b32.cont [2/16] 0.0, 128
      %1155 = vxpose.xlu0.b32.cont [3/16] 0.0, 128
      %1156 = vxpose.xlu0.b32.cont [4/16] 0.0, 128
      %1157 = vxpose.xlu0.b32.cont [5/16] 0.0, 128
      %1158 = vxpose.xlu0.b32.cont [6/16] 0.0, 128
      %1159 = vxpose.xlu0.b32.cont [7/16] 0.0, 128
      %1160 = vxpose.xlu0.b32.cont [8/16] 0.0, 128
      %1161 = vxpose.xlu0.b32.cont [9/16] 0.0, 128
      %1162 = vxpose.xlu0.b32.cont [10/16] 0.0, 128
      %1163 = vxpose.xlu0.b32.cont [11/16] 0.0, 128
      %1164 = vxpose.xlu0.b32.cont [12/16] 0.0, 128
      %1165 = vxpose.xlu0.b32.cont [13/16] 0.0, 128
      %1166 = vxpose.xlu0.b32.cont [14/16] 0.0, 128
      %1167 = vxpose.xlu0.b32.cont [15/16] 0.0, 128
      %1168 = vxpose.xlu0.b32.end [16/16] 0.0, 128
      %v1169 = vpop.trf.xlu0
      %v1170 = vpop.trf.xlu0
      %v1171 = vpop.trf.xlu0
      %v1172 = vpop.trf.xlu0
      %v1173 = vpop.trf.xlu0
      %v1174 = vpop.trf.xlu0
      %v1175 = vpop.trf.xlu0
      %v1176 = vpop.trf.xlu0
      %v1177 = vpop.trf.xlu0
      %v1178 = vpop.trf.xlu0
      %v1179 = vpop.trf.xlu0
      %v1180 = vpop.trf.xlu0
      %v1181 = vpop.trf.xlu0
      %v1182 = vpop.trf.xlu0
      %v1183 = vpop.trf.xlu0
      %v1184 = vpop.trf.xlu0
      %v1185 = vpack.c.bf16 %v1169, %v1169
      %1186 = vrot.lane.b32.xlu0 %v745, 104
      %v1187 = vpop.permute.xlu0 %1186
      %v1189 = vsel %vm747, %v1187, 0
      %v1192 = vsel %vm751, %v1185, 0
      %1194 = vmatprep.subr.bf16.mxu0 0
      %1195 = vmatpush1.bf16.msra.mxu0 %v1192
      %1196 = vmatprep.subr.bf16.mxu0 0
      %1197 = vmatpush1.bf16.msra.mxu0 0
      %1198 = vmatprep.subr.bf16.mxu0 0
      %1199 = vmatpush1.bf16.msra.mxu0 0
      %1200 = vmatprep.subr.bf16.mxu0 0
      %1201 = vmatpush1.bf16.msra.mxu0 0
      %1202 = vmatprep.subr.bf16.mxu0 0
      %1203 = vmatpush1.bf16.msra.mxu0 0
      %1204 = vmatprep.subr.bf16.mxu0 0
      %1205 = vmatpush1.bf16.msra.mxu0 0
      %1206 = vmatprep.subr.bf16.mxu0 0
      %1207 = vmatpush1.bf16.msra.mxu0 0
      %1208 = vmatprep.subr.bf16.mxu0 0
      %1209 = vmatpush1.bf16.msra.mxu0 0
      %1210 = vmatprep.subr.bf16.mxu0 0
      %1211 = vmatpush1.bf16.msra.mxu0 0
      %1212 = vmatprep.subr.bf16.mxu0 0
      %1213 = vmatpush1.bf16.msra.mxu0 0
      %1214 = vmatprep.subr.bf16.mxu0 0
      %1215 = vmatpush1.bf16.msra.mxu0 0
      %1216 = vmatprep.subr.bf16.mxu0 0
      %1217 = vmatpush1.bf16.msra.mxu0 0
      %1218 = vmatprep.subr.bf16.mxu0 0
      %1219 = vmatpush1.bf16.msra.mxu0 0
      %1220 = vmatprep.subr.bf16.mxu0 0
      %1221 = vmatpush1.bf16.msra.mxu0 0
      %1222 = vmatprep.subr.bf16.mxu0 0
      %1223 = vmatpush1.bf16.msra.mxu0 0
      %1224 = vmatprep.subr.bf16.mxu0 0
      %1225 = vmatpush1.bf16.msra.mxu0 0
      %1226 = vmatprep.mubr.bf16.mxu0 0
      %1227 = vmatmul.mubr.bf16.gmra.mrb[0].mxu0 %v1189
      %v1228 = vpop.f32.mrb[0].mxu0
      %v1229 = vadd.f32 0.0, %v1228
      %v1230 = vpop.f32.mrb[0].mxu0
      %v1231 = vpop.f32.mrb[0].mxu0
      %v1232 = vpop.f32.mrb[0].mxu0
      %1233 = vdwg.mxu0
      %v1234 = vmul.f32 %v1229, 0.35355338
      %v1235 = vsel %vm591, %v1234, -1e+30
      %v1236 = vsel %vm747, %v1235, -inf
      %1237 = vmax.xlane.f32.xlu0 %v1236
      %v1238 = vpop.xlane.xlu0 %1237
      %v1239 = vsub.f32 %v1235, %v1238
      %v1240 = vmul.f32 %v1239, 1.442695
      %v1241 = vpow.pop %v1240
      %v1242 = vsel %vm747, %v1241, 0.0
      %1243 = vadd.xlane.f32.xlu0 %v1242
      %v1244 = vpop.xlane.xlu0 %1243
      %v1245 = vrcp.pop %v1244
      %v1246 = vmul.f32 %v1241, %v1245
      %v1247 = vpack.c.bf16 %v1246, %v1246
      %1248 = vrot.lane.b32.xlu0 %v745, 40
      %v1249 = vpop.permute.xlu0 %1248
      %v1251 = vsel %vm747, %v1247, 0
      %v1254 = vsel %vm751, %v1249, 0
      %1256 = vmatprep.subr.bf16.mxu0 0
      %1257 = vmatpush1.bf16.msra.mxu0 %v1254
      %1258 = vmatprep.subr.bf16.mxu0 0
      %1259 = vmatpush1.bf16.msra.mxu0 0
      %1260 = vmatprep.subr.bf16.mxu0 0
      %1261 = vmatpush1.bf16.msra.mxu0 0
      %1262 = vmatprep.subr.bf16.mxu0 0
      %1263 = vmatpush1.bf16.msra.mxu0 0
      %1264 = vmatprep.subr.bf16.mxu0 0
      %1265 = vmatpush1.bf16.msra.mxu0 0
      %1266 = vmatprep.subr.bf16.mxu0 0
      %1267 = vmatpush1.bf16.msra.mxu0 0
      %1268 = vmatprep.subr.bf16.mxu0 0
      %1269 = vmatpush1.bf16.msra.mxu0 0
      %1270 = vmatprep.subr.bf16.mxu0 0
      %1271 = vmatpush1.bf16.msra.mxu0 0
      %1272 = vmatprep.subr.bf16.mxu0 0
      %1273 = vmatpush1.bf16.msra.mxu0 0
      %1274 = vmatprep.subr.bf16.mxu0 0
      %1275 = vmatpush1.bf16.msra.mxu0 0
      %1276 = vmatprep.subr.bf16.mxu0 0
      %1277 = vmatpush1.bf16.msra.mxu0 0
      %1278 = vmatprep.subr.bf16.mxu0 0
      %1279 = vmatpush1.bf16.msra.mxu0 0
      %1280 = vmatprep.subr.bf16.mxu0 0
      %1281 = vmatpush1.bf16.msra.mxu0 0
      %1282 = vmatprep.subr.bf16.mxu0 0
      %1283 = vmatpush1.bf16.msra.mxu0 0
      %1284 = vmatprep.subr.bf16.mxu0 0
      %1285 = vmatpush1.bf16.msra.mxu0 0
      %1286 = vmatprep.subr.bf16.mxu0 0
      %1287 = vmatpush1.bf16.msra.mxu0 0
      %1288 = vmatprep.mubr.bf16.mxu0 0
      %1289 = vmatmul.mubr.bf16.gmra.mrb[0].mxu0 %v1251
      %v1290 = vpop.f32.mrb[0].mxu0
      %v1291 = vadd.f32 0.0, %v1290
      %v1292 = vpop.f32.mrb[0].mxu0
      %v1293 = vpop.f32.mrb[0].mxu0
      %v1294 = vpop.f32.mrb[0].mxu0
      %1295 = vdwg.mxu0
      %1297 = vrot.lane.b32.xlu0 %v999, 8
      %v1298 = vpop.permute.xlu0 %1297
      %1301 = vrot.lane.b32.xlu0 %v1145, 16
      %v1302 = vpop.permute.xlu0 %1301
      %1305 = vrot.lane.b32.xlu0 %v1291, 24
      %v1306 = vpop.permute.xlu0 %1305
      %v1308 = vsel %vm747, %v853, %v1298
      %vm1309 = vcmask 130048
      %v1310 = vsel %vm1309, %v1308, %v1302
      %vm1311 = vcmask 195584
      %v1312 = vsel %vm1311, %v1310, %v1306
      %v1313 = vpack.c.bf16 %v1312, %v1312
      %v1314 = vpack.c.bf16 %v600, %v599
      %v1315 = vpack.c.bf16 %v602, %v601
      %v1317 = vlaneseq
      %v1318 = vshrl.u32 %v1317, 7
      %v1319 = vsub.s32 0, %v1318
      %v1320 = vrot.slane %v603, %v1319
      %v1323 = vsel %vm628, %v1313, 0
      %1325 = vmatprep.subr.bf16.mxu0 0
      %1326 = vmatpush1.bf16.msra.mxu0 %v1314
      %1327 = vmatprep.subr.bf16.mxu0 0
      %1328 = vmatpush1.bf16.msra.mxu0 %v1315
      %1329 = vmatprep.subr.bf16.mxu0 0
      %1330 = vmatpush1.bf16.msra.mxu0 0
      %1331 = vmatprep.subr.bf16.mxu0 0
      %1332 = vmatpush1.bf16.msra.mxu0 0
      %1333 = vmatprep.subr.bf16.mxu0 0
      %1334 = vmatpush1.bf16.msra.mxu0 0
      %1335 = vmatprep.subr.bf16.mxu0 0
      %1336 = vmatpush1.bf16.msra.mxu0 0
      %1337 = vmatprep.subr.bf16.mxu0 0
      %1338 = vmatpush1.bf16.msra.mxu0 0
      %1339 = vmatprep.subr.bf16.mxu0 0
      %1340 = vmatpush1.bf16.msra.mxu0 0
      %1341 = vmatprep.subr.bf16.mxu0 0
      %1342 = vmatpush1.bf16.msra.mxu0 0
      %1343 = vmatprep.subr.bf16.mxu0 0
      %1344 = vmatpush1.bf16.msra.mxu0 0
      %1345 = vmatprep.subr.bf16.mxu0 0
      %1346 = vmatpush1.bf16.msra.mxu0 0
      %1347 = vmatprep.subr.bf16.mxu0 0
      %1348 = vmatpush1.bf16.msra.mxu0 0
      %1349 = vmatprep.subr.bf16.mxu0 0
      %1350 = vmatpush1.bf16.msra.mxu0 0
      %1351 = vmatprep.subr.bf16.mxu0 0
      %1352 = vmatpush1.bf16.msra.mxu0 0
      %1353 = vmatprep.subr.bf16.mxu0 0
      %1354 = vmatpush1.bf16.msra.mxu0 0
      %1355 = vmatprep.subr.bf16.mxu0 0
      %1356 = vmatpush1.bf16.msra.mxu0 0
      %1357 = vmatprep.mubr.bf16.mxu0 0
      %1358 = vmatmul.mubr.bf16.gmra.mrb[0].mxu0 %v1323
      %v1359 = vpop.f32.mrb[0].mxu0
      %v1360 = vadd.f32 %v1320, %v1359
      %v1361 = vpop.f32.mrb[0].mxu0
      %v1362 = vpop.f32.mrb[0].mxu0
      %v1363 = vpop.f32.mrb[0].mxu0
      %1364 = vdwg.mxu0
      %v1365 = vadd.f32 %v586, %v1360
      %v1366 = vsel %vm628, %v1365, 0.0
      %1367 = vadd.xlane.f32.xlu0 %v1366
      %v1368 = vpop.xlane.xlu0 %1367
      %v1369 = vmul.f32 %v1368, %v632
      %v1370 = vsub.f32 %v1365, %v1369
      %v1371 = vmul.f32 %v1370, %v1370
      %v1372 = vsel %vm628, %v1371, 0.0
      %1373 = vadd.xlane.f32.xlu0 %v1372
      %v1374 = vpop.xlane.xlu0 %1373
      %v1375 = vmul.f32 %v1374, %v632
      %v1376 = vadd.f32 %v1375, 1e-05
      %v1377 = vrsqrt.pop %v1376
      %v1378 = vmul.f32 %v1370, %v1377
      %v1380 = vlaneseq
      %v1381 = vshrl.u32 %v1380, 7
      %v1382 = vsub.s32 0, %v1381
      %v1383 = vrot.slane %v604, %v1382
      %v1385 = vmul.f32 %v1378, %v1383
      %v1387 = vlaneseq
      %v1388 = vshrl.u32 %v1387, 7
      %v1389 = vsub.s32 0, %v1388
      %v1390 = vrot.slane %v605, %v1389
      %v1392 = vadd.f32 %v1385, %v1390
      %v1393 = vpack.c.bf16 %v1392, %v1392
      %v1394 = vpack.c.bf16 %v607, %v606
      %v1395 = vpack.c.bf16 %v609, %v608
      %v1397 = vlaneseq
      %v1398 = vshrl.u32 %v1397, 7
      %v1399 = vsub.s32 0, %v1398
      %v1400 = vrot.slane %v610, %v1399
      %v1403 = vsel %vm628, %v1393, 0
      %1405 = vmatprep.subr.bf16.mxu0 0
      %1406 = vmatpush1.bf16.msra.mxu0 %v1394
      %1407 = vmatprep.subr.bf16.mxu0 0
      %1408 = vmatpush1.bf16.msra.mxu0 %v1395
      %1409 = vmatprep.subr.bf16.mxu0 0
      %1410 = vmatpush1.bf16.msra.mxu0 0
      %1411 = vmatprep.subr.bf16.mxu0 0
      %1412 = vmatpush1.bf16.msra.mxu0 0
      %1413 = vmatprep.subr.bf16.mxu0 0
      %1414 = vmatpush1.bf16.msra.mxu0 0
      %1415 = vmatprep.subr.bf16.mxu0 0
      %1416 = vmatpush1.bf16.msra.mxu0 0
      %1417 = vmatprep.subr.bf16.mxu0 0
      %1418 = vmatpush1.bf16.msra.mxu0 0
      %1419 = vmatprep.subr.bf16.mxu0 0
      %1420 = vmatpush1.bf16.msra.mxu0 0
      %1421 = vmatprep.subr.bf16.mxu0 0
      %1422 = vmatpush1.bf16.msra.mxu0 0
      %1423 = vmatprep.subr.bf16.mxu0 0
      %1424 = vmatpush1.bf16.msra.mxu0 0
      %1425 = vmatprep.subr.bf16.mxu0 0
      %1426 = vmatpush1.bf16.msra.mxu0 0
      %1427 = vmatprep.subr.bf16.mxu0 0
      %1428 = vmatpush1.bf16.msra.mxu0 0
      %1429 = vmatprep.subr.bf16.mxu0 0
      %1430 = vmatpush1.bf16.msra.mxu0 0
      %1431 = vmatprep.subr.bf16.mxu0 0
      %1432 = vmatpush1.bf16.msra.mxu0 0
      %1433 = vmatprep.subr.bf16.mxu0 0
      %1434 = vmatpush1.bf16.msra.mxu0 0
      %1435 = vmatprep.subr.bf16.mxu0 0
      %1436 = vmatpush1.bf16.msra.mxu0 0
      %1437 = vmatprep.mubr.bf16.mxu0 0
      %1438 = vmatmul.mubr.bf16.gmra.mrb[0].mxu0 %v1403
      %v1439 = vpop.f32.mrb[0].mxu0
      %v1440 = vadd.f32 %v1400, %v1439
      %v1441 = vpop.f32.mrb[0].mxu0
      %v1442 = vpop.f32.mrb[0].mxu0
      %v1443 = vpop.f32.mrb[0].mxu0
      %1444 = vdwg.mxu0
      %v1445 = vmul.f32 %v1440, 1.702
      %v1446 = vxor.u32 %v1445, 2147483648
      %v1447 = vmul.f32 %v1446, 1.442695
      %v1448 = vpow.pop %v1447
      %v1449 = vadd.f32 %v1448, 1.0
      %v1450 = vrcp.pop %v1449
      %v1451 = vmul.f32 1.0, %v1450
      %v1452 = vmul.f32 %v1440, %v1451
      %v1453 = vpack.c.bf16 %v1452, %v1452
      %v1454 = vpack.c.bf16 %v612, %v611
      %v1455 = vpack.c.bf16 %v614, %v613
      %v1456 = vpack.c.bf16 %v616, %v615
      %v1457 = vpack.c.bf16 %v618, %v617
      %v1458 = vpack.c.bf16 %v620, %v619
      %v1459 = vpack.c.bf16 %v622, %v621
      %v1460 = vpack.c.bf16 %v624, %v623
      %v1461 = vpack.c.bf16 %v626, %v625
      %v1463 = vlaneseq
      %v1464 = vshrl.u32 %v1463, 7
      %v1465 = vsub.s32 0, %v1464
      %v1466 = vrot.slane %v627, %v1465
      %1468 = vmatprep.subr.bf16.mxu0 0
      %1469 = vmatpush1.bf16.msra.mxu0 %v1454
      %1470 = vmatprep.subr.bf16.mxu0 0
      %1471 = vmatpush1.bf16.msra.mxu0 %v1455
      %1472 = vmatprep.subr.bf16.mxu0 0
      %1473 = vmatpush1.bf16.msra.mxu0 %v1456
      %1474 = vmatprep.subr.bf16.mxu0 0
      %1475 = vmatpush1.bf16.msra.mxu0 %v1457
      %1476 = vmatprep.subr.bf16.mxu0 0
      %1477 = vmatpush1.bf16.msra.mxu0 %v1458
      %1478 = vmatprep.subr.bf16.mxu0 0
      %1479 = vmatpush1.bf16.msra.mxu0 %v1459
      %1480 = vmatprep.subr.bf16.mxu0 0
      %1481 = vmatpush1.bf16.msra.mxu0 %v1460
      %1482 = vmatprep.subr.bf16.mxu0 0
      %1483 = vmatpush1.bf16.msra.mxu0 %v1461
      %1484 = vmatprep.subr.bf16.mxu0 0
      %1485 = vmatpush1.bf16.msra.mxu0 0
      %1486 = vmatprep.subr.bf16.mxu0 0
      %1487 = vmatpush1.bf16.msra.mxu0 0
      %1488 = vmatprep.subr.bf16.mxu0 0
      %1489 = vmatpush1.bf16.msra.mxu0 0
      %1490 = vmatprep.subr.bf16.mxu0 0
      %1491 = vmatpush1.bf16.msra.mxu0 0
      %1492 = vmatprep.subr.bf16.mxu0 0
      %1493 = vmatpush1.bf16.msra.mxu0 0
      %1494 = vmatprep.subr.bf16.mxu0 0
      %1495 = vmatpush1.bf16.msra.mxu0 0
      %1496 = vmatprep.subr.bf16.mxu0 0
      %1497 = vmatpush1.bf16.msra.mxu0 0
      %1498 = vmatprep.subr.bf16.mxu0 0
      %1499 = vmatpush1.bf16.msra.mxu0 0
      %1500 = vmatprep.mubr.bf16.mxu0 0
      %1501 = vmatmul.mubr.bf16.gmra.mrb[0].mxu0 %v1453
      %v1502 = vpop.f32.mrb[0].mxu0
      %v1503 = vadd.f32 %v1466, %v1502
      %v1504 = vpop.f32.mrb[0].mxu0
      %v1505 = vpop.f32.mrb[0].mxu0
      %v1506 = vpop.f32.mrb[0].mxu0
      %1507 = vdwg.mxu0
      %v1508 = vadd.f32 %v1365, %v1503
      %s1509 = scalar_lea.vmem %s6, 1
      %v1510 = vld [vmem:[%s1509] sm:$0x1]
      %s1511 = scalar_lea.vmem %s7, 1
      %v1512 = vld [vmem:[%s1511] sm:$0x1]
      %s1513 = scalar_lea.vmem %s8, 32
      %v1514 = vld [vmem:[%s1513] sm:$0xff]
      %v1515 = vld [vmem:[%s1513 + $0x8] sm:$0xff]
      %v1516 = vld [vmem:[%s1513 + $0x10] sm:$0xff]
      %v1517 = vld [vmem:[%s1513 + $0x18] sm:$0xff]
      %s1518 = scalar_lea.vmem %s9, 1
      %v1519 = vld [vmem:[%s1518] sm:$0x1]
      %s1520 = scalar_lea.vmem %s10, 32
      %v1521 = vld [vmem:[%s1520] sm:$0xff]
      %v1522 = vld [vmem:[%s1520 + $0x8] sm:$0xff]
      %v1523 = vld [vmem:[%s1520 + $0x10] sm:$0xff]
      %v1524 = vld [vmem:[%s1520 + $0x18] sm:$0xff]
      %s1525 = scalar_lea.vmem %s11, 1
      %v1526 = vld [vmem:[%s1525] sm:$0x1]
      %s1527 = scalar_lea.vmem %s12, 1
      %v1528 = vld [vmem:[%s1527] sm:$0x1]
      %s1529 = scalar_lea.vmem %s13, 1
      %v1530 = vld [vmem:[%s1529] sm:$0x1]
      %s1531 = scalar_lea.vmem %s14, 32
      %v1532 = vld [vmem:[%s1531] sm:$0xff]
      %v1533 = vld [vmem:[%s1531 + $0x8] sm:$0xff]
      %v1534 = vld [vmem:[%s1531 + $0x10] sm:$0xff]
      %v1535 = vld [vmem:[%s1531 + $0x18] sm:$0xff]
      %s1536 = scalar_lea.vmem %s15, 1
      %v1537 = vld [vmem:[%s1536] sm:$0x1]
      %s1538 = scalar_lea.vmem %s16, 128
      %v1539 = vld [vmem:[%s1538] sm:$0xff]
      %v1540 = vld [vmem:[%s1538 + $0x8] sm:$0xff]
      %v1541 = vld [vmem:[%s1538 + $0x10] sm:$0xff]
      %v1542 = vld [vmem:[%s1538 + $0x18] sm:$0xff]
      %v1543 = vld [vmem:[%s1538 + $0x20] sm:$0xff]
      %v1544 = vld [vmem:[%s1538 + $0x28] sm:$0xff]
      %v1545 = vld [vmem:[%s1538 + $0x30] sm:$0xff]
      %v1546 = vld [vmem:[%s1538 + $0x38] sm:$0xff]
      %v1547 = vld [vmem:[%s1538 + $0x40] sm:$0xff]
      %v1548 = vld [vmem:[%s1538 + $0x48] sm:$0xff]
      %v1549 = vld [vmem:[%s1538 + $0x50] sm:$0xff]
      %v1550 = vld [vmem:[%s1538 + $0x58] sm:$0xff]
      %v1551 = vld [vmem:[%s1538 + $0x60] sm:$0xff]
      %v1552 = vld [vmem:[%s1538 + $0x68] sm:$0xff]
      %v1553 = vld [vmem:[%s1538 + $0x70] sm:$0xff]
      %v1554 = vld [vmem:[%s1538 + $0x78] sm:$0xff]
      %s1555 = scalar_lea.vmem %s17, 1
      %v1556 = vld [vmem:[%s1555] sm:$0x1]
      %v1557 = vsel %vm628, %v1508, 0.0
      %1558 = vadd.xlane.f32.xlu0 %v1557
      %v1559 = vpop.xlane.xlu0 %1558
      %v1560 = vmul.f32 %v1559, %v632
      %v1561 = vsub.f32 %v1508, %v1560
      %v1562 = vmul.f32 %v1561, %v1561
      %v1563 = vsel %vm628, %v1562, 0.0
      %1564 = vadd.xlane.f32.xlu0 %v1563
      %v1565 = vpop.xlane.xlu0 %1564
      %v1566 = vmul.f32 %v1565, %v632
      %v1567 = vadd.f32 %v1566, 1e-05
      %v1568 = vrsqrt.pop %v1567
      %v1569 = vmul.f32 %v1561, %v1568
      %v1571 = vlaneseq
      %v1572 = vshrl.u32 %v1571, 7
      %v1573 = vsub.s32 0, %v1572
      %v1574 = vrot.slane %v1510, %v1573
      %v1576 = vmul.f32 %v1569, %v1574
      %v1578 = vlaneseq
      %v1579 = vshrl.u32 %v1578, 7
      %v1580 = vsub.s32 0, %v1579
      %v1581 = vrot.slane %v1512, %v1580
      %v1583 = vadd.f32 %v1576, %v1581
      %v1584 = vpack.c.bf16 %v1583, %v1583
      %v1585 = vpack.c.bf16 %v1515, %v1514
      %v1586 = vpack.c.bf16 %v1517, %v1516
      %v1588 = vlaneseq
      %v1589 = vshrl.u32 %v1588, 7
      %v1590 = vsub.s32 0, %v1589
      %v1591 = vrot.slane %v1519, %v1590
      %v1594 = vsel %vm628, %v1584, 0
      %1596 = vmatprep.subr.bf16.mxu0 0
      %1597 = vmatpush1.bf16.msra.mxu0 %v1585
      %1598 = vmatprep.subr.bf16.mxu0 0
      %1599 = vmatpush1.bf16.msra.mxu0 %v1586
      %1600 = vmatprep.subr.bf16.mxu0 0
      %1601 = vmatpush1.bf16.msra.mxu0 0
      %1602 = vmatprep.subr.bf16.mxu0 0
      %1603 = vmatpush1.bf16.msra.mxu0 0
      %1604 = vmatprep.subr.bf16.mxu0 0
      %1605 = vmatpush1.bf16.msra.mxu0 0
      %1606 = vmatprep.subr.bf16.mxu0 0
      %1607 = vmatpush1.bf16.msra.mxu0 0
      %1608 = vmatprep.subr.bf16.mxu0 0
      %1609 = vmatpush1.bf16.msra.mxu0 0
      %1610 = vmatprep.subr.bf16.mxu0 0
      %1611 = vmatpush1.bf16.msra.mxu0 0
      %1612 = vmatprep.subr.bf16.mxu0 0
      %1613 = vmatpush1.bf16.msra.mxu0 0
      %1614 = vmatprep.subr.bf16.mxu0 0
      %1615 = vmatpush1.bf16.msra.mxu0 0
      %1616 = vmatprep.subr.bf16.mxu0 0
      %1617 = vmatpush1.bf16.msra.mxu0 0
      %1618 = vmatprep.subr.bf16.mxu0 0
      %1619 = vmatpush1.bf16.msra.mxu0 0
      %1620 = vmatprep.subr.bf16.mxu0 0
      %1621 = vmatpush1.bf16.msra.mxu0 0
      %1622 = vmatprep.subr.bf16.mxu0 0
      %1623 = vmatpush1.bf16.msra.mxu0 0
      %1624 = vmatprep.subr.bf16.mxu0 0
      %1625 = vmatpush1.bf16.msra.mxu0 0
      %1626 = vmatprep.subr.bf16.mxu0 0
      %1627 = vmatpush1.bf16.msra.mxu0 0
      %1628 = vmatprep.mubr.bf16.mxu0 0
      %1629 = vmatmul.mubr.bf16.gmra.mrb[0].mxu0 %v1594
      %v1630 = vpop.f32.mrb[0].mxu0
      %v1631 = vadd.f32 %v1591, %v1630
      %v1632 = vpop.f32.mrb[0].mxu0
      %v1633 = vpop.f32.mrb[0].mxu0
      %v1634 = vpop.f32.mrb[0].mxu0
      %1635 = vdwg.mxu0
      %1637 = vrot.lane.b32.xlu0 %v1631, 96
      %v1638 = vpop.permute.xlu0 %1637
      %1640 = vxpose.xlu0.b32.start [1/16] %v1638, 128
      %1641 = vxpose.xlu0.b32.cont [2/16] 0.0, 128
      %1642 = vxpose.xlu0.b32.cont [3/16] 0.0, 128
      %1643 = vxpose.xlu0.b32.cont [4/16] 0.0, 128
      %1644 = vxpose.xlu0.b32.cont [5/16] 0.0, 128
      %1645 = vxpose.xlu0.b32.cont [6/16] 0.0, 128
      %1646 = vxpose.xlu0.b32.cont [7/16] 0.0, 128
      %1647 = vxpose.xlu0.b32.cont [8/16] 0.0, 128
      %1648 = vxpose.xlu0.b32.cont [9/16] 0.0, 128
      %1649 = vxpose.xlu0.b32.cont [10/16] 0.0, 128
      %1650 = vxpose.xlu0.b32.cont [11/16] 0.0, 128
      %1651 = vxpose.xlu0.b32.cont [12/16] 0.0, 128
      %1652 = vxpose.xlu0.b32.cont [13/16] 0.0, 128
      %1653 = vxpose.xlu0.b32.cont [14/16] 0.0, 128
      %1654 = vxpose.xlu0.b32.cont [15/16] 0.0, 128
      %1655 = vxpose.xlu0.b32.end [16/16] 0.0, 128
      %v1656 = vpop.trf.xlu0
      %v1657 = vpop.trf.xlu0
      %v1658 = vpop.trf.xlu0
      %v1659 = vpop.trf.xlu0
      %v1660 = vpop.trf.xlu0
      %v1661 = vpop.trf.xlu0
      %v1662 = vpop.trf.xlu0
      %v1663 = vpop.trf.xlu0
      %v1664 = vpop.trf.xlu0
      %v1665 = vpop.trf.xlu0
      %v1666 = vpop.trf.xlu0
      %v1667 = vpop.trf.xlu0
      %v1668 = vpop.trf.xlu0
      %v1669 = vpop.trf.xlu0
      %v1670 = vpop.trf.xlu0
      %v1671 = vpop.trf.xlu0
      %v1672 = vpack.c.bf16 %v1631, %v1631
      %v1673 = vpack.c.bf16 %v1656, %v1656
      %v1675 = vsel %vm747, %v1672, 0
      %v1678 = vsel %vm751, %v1673, 0
      %1680 = vmatprep.subr.bf16.mxu0 0
      %1681 = vmatpush1.bf16.msra.mxu0 %v1678
      %1682 = vmatprep.subr.bf16.mxu0 0
      %1683 = vmatpush1.bf16.msra.mxu0 0
      %1684 = vmatprep.subr.bf16.mxu0 0
      %1685 = vmatpush1.bf16.msra.mxu0 0
      %1686 = vmatprep.subr.bf16.mxu0 0
      %1687 = vmatpush1.bf16.msra.mxu0 0
      %1688 = vmatprep.subr.bf16.mxu0 0
      %1689 = vmatpush1.bf16.msra.mxu0 0
      %1690 = vmatprep.subr.bf16.mxu0 0
      %1691 = vmatpush1.bf16.msra.mxu0 0
      %1692 = vmatprep.subr.bf16.mxu0 0
      %1693 = vmatpush1.bf16.msra.mxu0 0
      %1694 = vmatprep.subr.bf16.mxu0 0
      %1695 = vmatpush1.bf16.msra.mxu0 0
      %1696 = vmatprep.subr.bf16.mxu0 0
      %1697 = vmatpush1.bf16.msra.mxu0 0
      %1698 = vmatprep.subr.bf16.mxu0 0
      %1699 = vmatpush1.bf16.msra.mxu0 0
      %1700 = vmatprep.subr.bf16.mxu0 0
      %1701 = vmatpush1.bf16.msra.mxu0 0
      %1702 = vmatprep.subr.bf16.mxu0 0
      %1703 = vmatpush1.bf16.msra.mxu0 0
      %1704 = vmatprep.subr.bf16.mxu0 0
      %1705 = vmatpush1.bf16.msra.mxu0 0
      %1706 = vmatprep.subr.bf16.mxu0 0
      %1707 = vmatpush1.bf16.msra.mxu0 0
      %1708 = vmatprep.subr.bf16.mxu0 0
      %1709 = vmatpush1.bf16.msra.mxu0 0
      %1710 = vmatprep.subr.bf16.mxu0 0
      %1711 = vmatpush1.bf16.msra.mxu0 0
      %1712 = vmatprep.mubr.bf16.mxu0 0
      %1713 = vmatmul.mubr.bf16.gmra.mrb[0].mxu0 %v1675
      %v1714 = vpop.f32.mrb[0].mxu0
      %v1715 = vadd.f32 0.0, %v1714
      %v1716 = vpop.f32.mrb[0].mxu0
      %v1717 = vpop.f32.mrb[0].mxu0
      %v1718 = vpop.f32.mrb[0].mxu0
      %1719 = vdwg.mxu0
      %v1720 = vmul.f32 %v1715, 0.35355338
      %v1721 = vsel %vm591, %v1720, -1e+30
      %v1722 = vsel %vm747, %v1721, -inf
      %1723 = vmax.xlane.f32.xlu0 %v1722
      %v1724 = vpop.xlane.xlu0 %1723
      %v1725 = vsub.f32 %v1721, %v1724
      %v1726 = vmul.f32 %v1725, 1.442695
      %v1727 = vpow.pop %v1726
      %v1728 = vsel %vm747, %v1727, 0.0
      %1729 = vadd.xlane.f32.xlu0 %v1728
      %v1730 = vpop.xlane.xlu0 %1729
      %v1731 = vrcp.pop %v1730
      %v1732 = vmul.f32 %v1727, %v1731
      %v1733 = vpack.c.bf16 %v1732, %v1732
      %1735 = vrot.lane.b32.xlu0 %v1672, 64
      %v1736 = vpop.permute.xlu0 %1735
      %v1738 = vsel %vm747, %v1733, 0
      %v1741 = vsel %vm751, %v1736, 0
      %1743 = vmatprep.subr.bf16.mxu0 0
      %1744 = vmatpush1.bf16.msra.mxu0 %v1741
      %1745 = vmatprep.subr.bf16.mxu0 0
      %1746 = vmatpush1.bf16.msra.mxu0 0
      %1747 = vmatprep.subr.bf16.mxu0 0
      %1748 = vmatpush1.bf16.msra.mxu0 0
      %1749 = vmatprep.subr.bf16.mxu0 0
      %1750 = vmatpush1.bf16.msra.mxu0 0
      %1751 = vmatprep.subr.bf16.mxu0 0
      %1752 = vmatpush1.bf16.msra.mxu0 0
      %1753 = vmatprep.subr.bf16.mxu0 0
      %1754 = vmatpush1.bf16.msra.mxu0 0
      %1755 = vmatprep.subr.bf16.mxu0 0
      %1756 = vmatpush1.bf16.msra.mxu0 0
      %1757 = vmatprep.subr.bf16.mxu0 0
      %1758 = vmatpush1.bf16.msra.mxu0 0
      %1759 = vmatprep.subr.bf16.mxu0 0
      %1760 = vmatpush1.bf16.msra.mxu0 0
      %1761 = vmatprep.subr.bf16.mxu0 0
      %1762 = vmatpush1.bf16.msra.mxu0 0
      %1763 = vmatprep.subr.bf16.mxu0 0
      %1764 = vmatpush1.bf16.msra.mxu0 0
      %1765 = vmatprep.subr.bf16.mxu0 0
      %1766 = vmatpush1.bf16.msra.mxu0 0
      %1767 = vmatprep.subr.bf16.mxu0 0
      %1768 = vmatpush1.bf16.msra.mxu0 0
      %1769 = vmatprep.subr.bf16.mxu0 0
      %1770 = vmatpush1.bf16.msra.mxu0 0
      %1771 = vmatprep.subr.bf16.mxu0 0
      %1772 = vmatpush1.bf16.msra.mxu0 0
      %1773 = vmatprep.subr.bf16.mxu0 0
      %1774 = vmatpush1.bf16.msra.mxu0 0
      %1775 = vmatprep.mubr.bf16.mxu0 0
      %1776 = vmatmul.mubr.bf16.gmra.mrb[0].mxu0 %v1738
      %v1777 = vpop.f32.mrb[0].mxu0
      %v1778 = vadd.f32 0.0, %v1777
      %v1779 = vpop.f32.mrb[0].mxu0
      %v1780 = vpop.f32.mrb[0].mxu0
      %v1781 = vpop.f32.mrb[0].mxu0
      %1782 = vdwg.mxu0
      %1783 = vrot.lane.b32.xlu0 %v1631, 88
      %v1784 = vpop.permute.xlu0 %1783
      %1786 = vxpose.xlu0.b32.start [1/16] %v1784, 128
      %1787 = vxpose.xlu0.b32.cont [2/16] 0.0, 128
      %1788 = vxpose.xlu0.b32.cont [3/16] 0.0, 128
      %1789 = vxpose.xlu0.b32.cont [4/16] 0.0, 128
      %1790 = vxpose.xlu0.b32.cont [5/16] 0.0, 128
      %1791 = vxpose.xlu0.b32.cont [6/16] 0.0, 128
      %1792 = vxpose.xlu0.b32.cont [7/16] 0.0, 128
      %1793 = vxpose.xlu0.b32.cont [8/16] 0.0, 128
      %1794 = vxpose.xlu0.b32.cont [9/16] 0.0, 128
      %1795 = vxpose.xlu0.b32.cont [10/16] 0.0, 128
      %1796 = vxpose.xlu0.b32.cont [11/16] 0.0, 128
      %1797 = vxpose.xlu0.b32.cont [12/16] 0.0, 128
      %1798 = vxpose.xlu0.b32.cont [13/16] 0.0, 128
      %1799 = vxpose.xlu0.b32.cont [14/16] 0.0, 128
      %1800 = vxpose.xlu0.b32.cont [15/16] 0.0, 128
      %1801 = vxpose.xlu0.b32.end [16/16] 0.0, 128
      %v1802 = vpop.trf.xlu0
      %v1803 = vpop.trf.xlu0
      %v1804 = vpop.trf.xlu0
      %v1805 = vpop.trf.xlu0
      %v1806 = vpop.trf.xlu0
      %v1807 = vpop.trf.xlu0
      %v1808 = vpop.trf.xlu0
      %v1809 = vpop.trf.xlu0
      %v1810 = vpop.trf.xlu0
      %v1811 = vpop.trf.xlu0
      %v1812 = vpop.trf.xlu0
      %v1813 = vpop.trf.xlu0
      %v1814 = vpop.trf.xlu0
      %v1815 = vpop.trf.xlu0
      %v1816 = vpop.trf.xlu0
      %v1817 = vpop.trf.xlu0
      %v1818 = vpack.c.bf16 %v1802, %v1802
      %1819 = vrot.lane.b32.xlu0 %v1672, 120
      %v1820 = vpop.permute.xlu0 %1819
      %v1822 = vsel %vm747, %v1820, 0
      %v1825 = vsel %vm751, %v1818, 0
      %1827 = vmatprep.subr.bf16.mxu0 0
      %1828 = vmatpush1.bf16.msra.mxu0 %v1825
      %1829 = vmatprep.subr.bf16.mxu0 0
      %1830 = vmatpush1.bf16.msra.mxu0 0
      %1831 = vmatprep.subr.bf16.mxu0 0
      %1832 = vmatpush1.bf16.msra.mxu0 0
      %1833 = vmatprep.subr.bf16.mxu0 0
      %1834 = vmatpush1.bf16.msra.mxu0 0
      %1835 = vmatprep.subr.bf16.mxu0 0
      %1836 = vmatpush1.bf16.msra.mxu0 0
      %1837 = vmatprep.subr.bf16.mxu0 0
      %1838 = vmatpush1.bf16.msra.mxu0 0
      %1839 = vmatprep.subr.bf16.mxu0 0
      %1840 = vmatpush1.bf16.msra.mxu0 0
      %1841 = vmatprep.subr.bf16.mxu0 0
      %1842 = vmatpush1.bf16.msra.mxu0 0
      %1843 = vmatprep.subr.bf16.mxu0 0
      %1844 = vmatpush1.bf16.msra.mxu0 0
      %1845 = vmatprep.subr.bf16.mxu0 0
      %1846 = vmatpush1.bf16.msra.mxu0 0
      %1847 = vmatprep.subr.bf16.mxu0 0
      %1848 = vmatpush1.bf16.msra.mxu0 0
      %1849 = vmatprep.subr.bf16.mxu0 0
      %1850 = vmatpush1.bf16.msra.mxu0 0
      %1851 = vmatprep.subr.bf16.mxu0 0
      %1852 = vmatpush1.bf16.msra.mxu0 0
      %1853 = vmatprep.subr.bf16.mxu0 0
      %1854 = vmatpush1.bf16.msra.mxu0 0
      %1855 = vmatprep.subr.bf16.mxu0 0
      %1856 = vmatpush1.bf16.msra.mxu0 0
      %1857 = vmatprep.subr.bf16.mxu0 0
      %1858 = vmatpush1.bf16.msra.mxu0 0
      %1859 = vmatprep.mubr.bf16.mxu0 0
      %1860 = vmatmul.mubr.bf16.gmra.mrb[0].mxu0 %v1822
      %v1861 = vpop.f32.mrb[0].mxu0
      %v1862 = vadd.f32 0.0, %v1861
      %v1863 = vpop.f32.mrb[0].mxu0
      %v1864 = vpop.f32.mrb[0].mxu0
      %v1865 = vpop.f32.mrb[0].mxu0
      %1866 = vdwg.mxu0
      %v1867 = vmul.f32 %v1862, 0.35355338
      %v1868 = vsel %vm591, %v1867, -1e+30
      %v1869 = vsel %vm747, %v1868, -inf
      %1870 = vmax.xlane.f32.xlu0 %v1869
      %v1871 = vpop.xlane.xlu0 %1870
      %v1872 = vsub.f32 %v1868, %v1871
      %v1873 = vmul.f32 %v1872, 1.442695
      %v1874 = vpow.pop %v1873
      %v1875 = vsel %vm747, %v1874, 0.0
      %1876 = vadd.xlane.f32.xlu0 %v1875
      %v1877 = vpop.xlane.xlu0 %1876
      %v1878 = vrcp.pop %v1877
      %v1879 = vmul.f32 %v1874, %v1878
      %v1880 = vpack.c.bf16 %v1879, %v1879
      %1881 = vrot.lane.b32.xlu0 %v1672, 56
      %v1882 = vpop.permute.xlu0 %1881
      %v1884 = vsel %vm747, %v1880, 0
      %v1887 = vsel %vm751, %v1882, 0
      %1889 = vmatprep.subr.bf16.mxu0 0
      %1890 = vmatpush1.bf16.msra.mxu0 %v1887
      %1891 = vmatprep.subr.bf16.mxu0 0
      %1892 = vmatpush1.bf16.msra.mxu0 0
      %1893 = vmatprep.subr.bf16.mxu0 0
      %1894 = vmatpush1.bf16.msra.mxu0 0
      %1895 = vmatprep.subr.bf16.mxu0 0
      %1896 = vmatpush1.bf16.msra.mxu0 0
      %1897 = vmatprep.subr.bf16.mxu0 0
      %1898 = vmatpush1.bf16.msra.mxu0 0
      %1899 = vmatprep.subr.bf16.mxu0 0
      %1900 = vmatpush1.bf16.msra.mxu0 0
      %1901 = vmatprep.subr.bf16.mxu0 0
      %1902 = vmatpush1.bf16.msra.mxu0 0
      %1903 = vmatprep.subr.bf16.mxu0 0
      %1904 = vmatpush1.bf16.msra.mxu0 0
      %1905 = vmatprep.subr.bf16.mxu0 0
      %1906 = vmatpush1.bf16.msra.mxu0 0
      %1907 = vmatprep.subr.bf16.mxu0 0
      %1908 = vmatpush1.bf16.msra.mxu0 0
      %1909 = vmatprep.subr.bf16.mxu0 0
      %1910 = vmatpush1.bf16.msra.mxu0 0
      %1911 = vmatprep.subr.bf16.mxu0 0
      %1912 = vmatpush1.bf16.msra.mxu0 0
      %1913 = vmatprep.subr.bf16.mxu0 0
      %1914 = vmatpush1.bf16.msra.mxu0 0
      %1915 = vmatprep.subr.bf16.mxu0 0
      %1916 = vmatpush1.bf16.msra.mxu0 0
      %1917 = vmatprep.subr.bf16.mxu0 0
      %1918 = vmatpush1.bf16.msra.mxu0 0
      %1919 = vmatprep.subr.bf16.mxu0 0
      %1920 = vmatpush1.bf16.msra.mxu0 0
      %1921 = vmatprep.mubr.bf16.mxu0 0
      %1922 = vmatmul.mubr.bf16.gmra.mrb[0].mxu0 %v1884
      %v1923 = vpop.f32.mrb[0].mxu0
      %v1924 = vadd.f32 0.0, %v1923
      %v1925 = vpop.f32.mrb[0].mxu0
      %v1926 = vpop.f32.mrb[0].mxu0
      %v1927 = vpop.f32.mrb[0].mxu0
      %1928 = vdwg.mxu0
      %1929 = vrot.lane.b32.xlu0 %v1631, 80
      %v1930 = vpop.permute.xlu0 %1929
      %1932 = vxpose.xlu0.b32.start [1/16] %v1930, 128
      %1933 = vxpose.xlu0.b32.cont [2/16] 0.0, 128
      %1934 = vxpose.xlu0.b32.cont [3/16] 0.0, 128
      %1935 = vxpose.xlu0.b32.cont [4/16] 0.0, 128
      %1936 = vxpose.xlu0.b32.cont [5/16] 0.0, 128
      %1937 = vxpose.xlu0.b32.cont [6/16] 0.0, 128
      %1938 = vxpose.xlu0.b32.cont [7/16] 0.0, 128
      %1939 = vxpose.xlu0.b32.cont [8/16] 0.0, 128
      %1940 = vxpose.xlu0.b32.cont [9/16] 0.0, 128
      %1941 = vxpose.xlu0.b32.cont [10/16] 0.0, 128
      %1942 = vxpose.xlu0.b32.cont [11/16] 0.0, 128
      %1943 = vxpose.xlu0.b32.cont [12/16] 0.0, 128
      %1944 = vxpose.xlu0.b32.cont [13/16] 0.0, 128
      %1945 = vxpose.xlu0.b32.cont [14/16] 0.0, 128
      %1946 = vxpose.xlu0.b32.cont [15/16] 0.0, 128
      %1947 = vxpose.xlu0.b32.end [16/16] 0.0, 128
      %v1948 = vpop.trf.xlu0
      %v1949 = vpop.trf.xlu0
      %v1950 = vpop.trf.xlu0
      %v1951 = vpop.trf.xlu0
      %v1952 = vpop.trf.xlu0
      %v1953 = vpop.trf.xlu0
      %v1954 = vpop.trf.xlu0
      %v1955 = vpop.trf.xlu0
      %v1956 = vpop.trf.xlu0
      %v1957 = vpop.trf.xlu0
      %v1958 = vpop.trf.xlu0
      %v1959 = vpop.trf.xlu0
      %v1960 = vpop.trf.xlu0
      %v1961 = vpop.trf.xlu0
      %v1962 = vpop.trf.xlu0
      %v1963 = vpop.trf.xlu0
      %v1964 = vpack.c.bf16 %v1948, %v1948
      %1965 = vrot.lane.b32.xlu0 %v1672, 112
      %v1966 = vpop.permute.xlu0 %1965
      %v1968 = vsel %vm747, %v1966, 0
      %v1971 = vsel %vm751, %v1964, 0
      %1973 = vmatprep.subr.bf16.mxu0 0
      %1974 = vmatpush1.bf16.msra.mxu0 %v1971
      %1975 = vmatprep.subr.bf16.mxu0 0
      %1976 = vmatpush1.bf16.msra.mxu0 0
      %1977 = vmatprep.subr.bf16.mxu0 0
      %1978 = vmatpush1.bf16.msra.mxu0 0
      %1979 = vmatprep.subr.bf16.mxu0 0
      %1980 = vmatpush1.bf16.msra.mxu0 0
      %1981 = vmatprep.subr.bf16.mxu0 0
      %1982 = vmatpush1.bf16.msra.mxu0 0
      %1983 = vmatprep.subr.bf16.mxu0 0
      %1984 = vmatpush1.bf16.msra.mxu0 0
      %1985 = vmatprep.subr.bf16.mxu0 0
      %1986 = vmatpush1.bf16.msra.mxu0 0
      %1987 = vmatprep.subr.bf16.mxu0 0
      %1988 = vmatpush1.bf16.msra.mxu0 0
      %1989 = vmatprep.subr.bf16.mxu0 0
      %1990 = vmatpush1.bf16.msra.mxu0 0
      %1991 = vmatprep.subr.bf16.mxu0 0
      %1992 = vmatpush1.bf16.msra.mxu0 0
      %1993 = vmatprep.subr.bf16.mxu0 0
      %1994 = vmatpush1.bf16.msra.mxu0 0
      %1995 = vmatprep.subr.bf16.mxu0 0
      %1996 = vmatpush1.bf16.msra.mxu0 0
      %1997 = vmatprep.subr.bf16.mxu0 0
      %1998 = vmatpush1.bf16.msra.mxu0 0
      %1999 = vmatprep.subr.bf16.mxu0 0
      %2000 = vmatpush1.bf16.msra.mxu0 0
      %2001 = vmatprep.subr.bf16.mxu0 0
      %2002 = vmatpush1.bf16.msra.mxu0 0
      %2003 = vmatprep.subr.bf16.mxu0 0
      %2004 = vmatpush1.bf16.msra.mxu0 0
      %2005 = vmatprep.mubr.bf16.mxu0 0
      %2006 = vmatmul.mubr.bf16.gmra.mrb[0].mxu0 %v1968
      %v2007 = vpop.f32.mrb[0].mxu0
      %v2008 = vadd.f32 0.0, %v2007
      %v2009 = vpop.f32.mrb[0].mxu0
      %v2010 = vpop.f32.mrb[0].mxu0
      %v2011 = vpop.f32.mrb[0].mxu0
      %2012 = vdwg.mxu0
      %v2013 = vmul.f32 %v2008, 0.35355338
      %v2014 = vsel %vm591, %v2013, -1e+30
      %v2015 = vsel %vm747, %v2014, -inf
      %2016 = vmax.xlane.f32.xlu0 %v2015
      %v2017 = vpop.xlane.xlu0 %2016
      %v2018 = vsub.f32 %v2014, %v2017
      %v2019 = vmul.f32 %v2018, 1.442695
      %v2020 = vpow.pop %v2019
      %v2021 = vsel %vm747, %v2020, 0.0
      %2022 = vadd.xlane.f32.xlu0 %v2021
      %v2023 = vpop.xlane.xlu0 %2022
      %v2024 = vrcp.pop %v2023
      %v2025 = vmul.f32 %v2020, %v2024
      %v2026 = vpack.c.bf16 %v2025, %v2025
      %2027 = vrot.lane.b32.xlu0 %v1672, 48
      %v2028 = vpop.permute.xlu0 %2027
      %v2030 = vsel %vm747, %v2026, 0
      %v2033 = vsel %vm751, %v2028, 0
      %2035 = vmatprep.subr.bf16.mxu0 0
      %2036 = vmatpush1.bf16.msra.mxu0 %v2033
      %2037 = vmatprep.subr.bf16.mxu0 0
      %2038 = vmatpush1.bf16.msra.mxu0 0
      %2039 = vmatprep.subr.bf16.mxu0 0
      %2040 = vmatpush1.bf16.msra.mxu0 0
      %2041 = vmatprep.subr.bf16.mxu0 0
      %2042 = vmatpush1.bf16.msra.mxu0 0
      %2043 = vmatprep.subr.bf16.mxu0 0
      %2044 = vmatpush1.bf16.msra.mxu0 0
      %2045 = vmatprep.subr.bf16.mxu0 0
      %2046 = vmatpush1.bf16.msra.mxu0 0
      %2047 = vmatprep.subr.bf16.mxu0 0
      %2048 = vmatpush1.bf16.msra.mxu0 0
      %2049 = vmatprep.subr.bf16.mxu0 0
      %2050 = vmatpush1.bf16.msra.mxu0 0
      %2051 = vmatprep.subr.bf16.mxu0 0
      %2052 = vmatpush1.bf16.msra.mxu0 0
      %2053 = vmatprep.subr.bf16.mxu0 0
      %2054 = vmatpush1.bf16.msra.mxu0 0
      %2055 = vmatprep.subr.bf16.mxu0 0
      %2056 = vmatpush1.bf16.msra.mxu0 0
      %2057 = vmatprep.subr.bf16.mxu0 0
      %2058 = vmatpush1.bf16.msra.mxu0 0
      %2059 = vmatprep.subr.bf16.mxu0 0
      %2060 = vmatpush1.bf16.msra.mxu0 0
      %2061 = vmatprep.subr.bf16.mxu0 0
      %2062 = vmatpush1.bf16.msra.mxu0 0
      %2063 = vmatprep.subr.bf16.mxu0 0
      %2064 = vmatpush1.bf16.msra.mxu0 0
      %2065 = vmatprep.subr.bf16.mxu0 0
      %2066 = vmatpush1.bf16.msra.mxu0 0
      %2067 = vmatprep.mubr.bf16.mxu0 0
      %2068 = vmatmul.mubr.bf16.gmra.mrb[0].mxu0 %v2030
      %v2069 = vpop.f32.mrb[0].mxu0
      %v2070 = vadd.f32 0.0, %v2069
      %v2071 = vpop.f32.mrb[0].mxu0
      %v2072 = vpop.f32.mrb[0].mxu0
      %v2073 = vpop.f32.mrb[0].mxu0
      %2074 = vdwg.mxu0
      %2075 = vrot.lane.b32.xlu0 %v1631, 72
      %v2076 = vpop.permute.xlu0 %2075
      %2078 = vxpose.xlu0.b32.start [1/16] %v2076, 128
      %2079 = vxpose.xlu0.b32.cont [2/16] 0.0, 128
      %2080 = vxpose.xlu0.b32.cont [3/16] 0.0, 128
      %2081 = vxpose.xlu0.b32.cont [4/16] 0.0, 128
      %2082 = vxpose.xlu0.b32.cont [5/16] 0.0, 128
      %2083 = vxpose.xlu0.b32.cont [6/16] 0.0, 128
      %2084 = vxpose.xlu0.b32.cont [7/16] 0.0, 128
      %2085 = vxpose.xlu0.b32.cont [8/16] 0.0, 128
      %2086 = vxpose.xlu0.b32.cont [9/16] 0.0, 128
      %2087 = vxpose.xlu0.b32.cont [10/16] 0.0, 128
      %2088 = vxpose.xlu0.b32.cont [11/16] 0.0, 128
      %2089 = vxpose.xlu0.b32.cont [12/16] 0.0, 128
      %2090 = vxpose.xlu0.b32.cont [13/16] 0.0, 128
      %2091 = vxpose.xlu0.b32.cont [14/16] 0.0, 128
      %2092 = vxpose.xlu0.b32.cont [15/16] 0.0, 128
      %2093 = vxpose.xlu0.b32.end [16/16] 0.0, 128
      %v2094 = vpop.trf.xlu0
      %v2095 = vpop.trf.xlu0
      %v2096 = vpop.trf.xlu0
      %v2097 = vpop.trf.xlu0
      %v2098 = vpop.trf.xlu0
      %v2099 = vpop.trf.xlu0
      %v2100 = vpop.trf.xlu0
      %v2101 = vpop.trf.xlu0
      %v2102 = vpop.trf.xlu0
      %v2103 = vpop.trf.xlu0
      %v2104 = vpop.trf.xlu0
      %v2105 = vpop.trf.xlu0
      %v2106 = vpop.trf.xlu0
      %v2107 = vpop.trf.xlu0
      %v2108 = vpop.trf.xlu0
      %v2109 = vpop.trf.xlu0
      %v2110 = vpack.c.bf16 %v2094, %v2094
      %2111 = vrot.lane.b32.xlu0 %v1672, 104
      %v2112 = vpop.permute.xlu0 %2111
      %v2114 = vsel %vm747, %v2112, 0
      %v2117 = vsel %vm751, %v2110, 0
      %2119 = vmatprep.subr.bf16.mxu0 0
      %2120 = vmatpush1.bf16.msra.mxu0 %v2117
      %2121 = vmatprep.subr.bf16.mxu0 0
      %2122 = vmatpush1.bf16.msra.mxu0 0
      %2123 = vmatprep.subr.bf16.mxu0 0
      %2124 = vmatpush1.bf16.msra.mxu0 0
      %2125 = vmatprep.subr.bf16.mxu0 0
      %2126 = vmatpush1.bf16.msra.mxu0 0
      %2127 = vmatprep.subr.bf16.mxu0 0
      %2128 = vmatpush1.bf16.msra.mxu0 0
      %2129 = vmatprep.subr.bf16.mxu0 0
      %2130 = vmatpush1.bf16.msra.mxu0 0
      %2131 = vmatprep.subr.bf16.mxu0 0
      %2132 = vmatpush1.bf16.msra.mxu0 0
      %2133 = vmatprep.subr.bf16.mxu0 0
      %2134 = vmatpush1.bf16.msra.mxu0 0
      %2135 = vmatprep.subr.bf16.mxu0 0
      %2136 = vmatpush1.bf16.msra.mxu0 0
      %2137 = vmatprep.subr.bf16.mxu0 0
      %2138 = vmatpush1.bf16.msra.mxu0 0
      %2139 = vmatprep.subr.bf16.mxu0 0
      %2140 = vmatpush1.bf16.msra.mxu0 0
      %2141 = vmatprep.subr.bf16.mxu0 0
      %2142 = vmatpush1.bf16.msra.mxu0 0
      %2143 = vmatprep.subr.bf16.mxu0 0
      %2144 = vmatpush1.bf16.msra.mxu0 0
      %2145 = vmatprep.subr.bf16.mxu0 0
      %2146 = vmatpush1.bf16.msra.mxu0 0
      %2147 = vmatprep.subr.bf16.mxu0 0
      %2148 = vmatpush1.bf16.msra.mxu0 0
      %2149 = vmatprep.subr.bf16.mxu0 0
      %2150 = vmatpush1.bf16.msra.mxu0 0
      %2151 = vmatprep.mubr.bf16.mxu0 0
      %2152 = vmatmul.mubr.bf16.gmra.mrb[0].mxu0 %v2114
      %v2153 = vpop.f32.mrb[0].mxu0
      %v2154 = vadd.f32 0.0, %v2153
      %v2155 = vpop.f32.mrb[0].mxu0
      %v2156 = vpop.f32.mrb[0].mxu0
      %v2157 = vpop.f32.mrb[0].mxu0
      %2158 = vdwg.mxu0
      %v2159 = vmul.f32 %v2154, 0.35355338
      %v2160 = vsel %vm591, %v2159, -1e+30
      %v2161 = vsel %vm747, %v2160, -inf
      %2162 = vmax.xlane.f32.xlu0 %v2161
      %v2163 = vpop.xlane.xlu0 %2162
      %v2164 = vsub.f32 %v2160, %v2163
      %v2165 = vmul.f32 %v2164, 1.442695
      %v2166 = vpow.pop %v2165
      %v2167 = vsel %vm747, %v2166, 0.0
      %2168 = vadd.xlane.f32.xlu0 %v2167
      %v2169 = vpop.xlane.xlu0 %2168
      %v2170 = vrcp.pop %v2169
      %v2171 = vmul.f32 %v2166, %v2170
      %v2172 = vpack.c.bf16 %v2171, %v2171
      %2173 = vrot.lane.b32.xlu0 %v1672, 40
      %v2174 = vpop.permute.xlu0 %2173
      %v2176 = vsel %vm747, %v2172, 0
      %v2179 = vsel %vm751, %v2174, 0
      %2181 = vmatprep.subr.bf16.mxu0 0
      %2182 = vmatpush1.bf16.msra.mxu0 %v2179
      %2183 = vmatprep.subr.bf16.mxu0 0
      %2184 = vmatpush1.bf16.msra.mxu0 0
      %2185 = vmatprep.subr.bf16.mxu0 0
      %2186 = vmatpush1.bf16.msra.mxu0 0
      %2187 = vmatprep.subr.bf16.mxu0 0
      %2188 = vmatpush1.bf16.msra.mxu0 0
      %2189 = vmatprep.subr.bf16.mxu0 0
      %2190 = vmatpush1.bf16.msra.mxu0 0
      %2191 = vmatprep.subr.bf16.mxu0 0
      %2192 = vmatpush1.bf16.msra.mxu0 0
      %2193 = vmatprep.subr.bf16.mxu0 0
      %2194 = vmatpush1.bf16.msra.mxu0 0
      %2195 = vmatprep.subr.bf16.mxu0 0
      %2196 = vmatpush1.bf16.msra.mxu0 0
      %2197 = vmatprep.subr.bf16.mxu0 0
      %2198 = vmatpush1.bf16.msra.mxu0 0
      %2199 = vmatprep.subr.bf16.mxu0 0
      %2200 = vmatpush1.bf16.msra.mxu0 0
      %2201 = vmatprep.subr.bf16.mxu0 0
      %2202 = vmatpush1.bf16.msra.mxu0 0
      %2203 = vmatprep.subr.bf16.mxu0 0
      %2204 = vmatpush1.bf16.msra.mxu0 0
      %2205 = vmatprep.subr.bf16.mxu0 0
      %2206 = vmatpush1.bf16.msra.mxu0 0
      %2207 = vmatprep.subr.bf16.mxu0 0
      %2208 = vmatpush1.bf16.msra.mxu0 0
      %2209 = vmatprep.subr.bf16.mxu0 0
      %2210 = vmatpush1.bf16.msra.mxu0 0
      %2211 = vmatprep.subr.bf16.mxu0 0
      %2212 = vmatpush1.bf16.msra.mxu0 0
      %2213 = vmatprep.mubr.bf16.mxu0 0
      %2214 = vmatmul.mubr.bf16.gmra.mrb[0].mxu0 %v2176
      %v2215 = vpop.f32.mrb[0].mxu0
      %v2216 = vadd.f32 0.0, %v2215
      %v2217 = vpop.f32.mrb[0].mxu0
      %v2218 = vpop.f32.mrb[0].mxu0
      %v2219 = vpop.f32.mrb[0].mxu0
      %2220 = vdwg.mxu0
      %2222 = vrot.lane.b32.xlu0 %v1924, 8
      %v2223 = vpop.permute.xlu0 %2222
      %2226 = vrot.lane.b32.xlu0 %v2070, 16
      %v2227 = vpop.permute.xlu0 %2226
      %2230 = vrot.lane.b32.xlu0 %v2216, 24
      %v2231 = vpop.permute.xlu0 %2230
      %v2233 = vsel %vm747, %v1778, %v2223
      %v2234 = vsel %vm1309, %v2233, %v2227
      %v2235 = vsel %vm1311, %v2234, %v2231
      %v2236 = vpack.c.bf16 %v2235, %v2235
      %v2237 = vpack.c.bf16 %v1522, %v1521
      %v2238 = vpack.c.bf16 %v1524, %v1523
      %v2240 = vlaneseq
      %v2241 = vshrl.u32 %v2240, 7
      %v2242 = vsub.s32 0, %v2241
      %v2243 = vrot.slane %v1526, %v2242
      %v2246 = vsel %vm628, %v2236, 0
      %2248 = vmatprep.subr.bf16.mxu0 0
      %2249 = vmatpush1.bf16.msra.mxu0 %v2237
      %2250 = vmatprep.subr.bf16.mxu0 0
      %2251 = vmatpush1.bf16.msra.mxu0 %v2238
      %2252 = vmatprep.subr.bf16.mxu0 0
      %2253 = vmatpush1.bf16.msra.mxu0 0
      %2254 = vmatprep.subr.bf16.mxu0 0
      %2255 = vmatpush1.bf16.msra.mxu0 0
      %2256 = vmatprep.subr.bf16.mxu0 0
      %2257 = vmatpush1.bf16.msra.mxu0 0
      %2258 = vmatprep.subr.bf16.mxu0 0
      %2259 = vmatpush1.bf16.msra.mxu0 0
      %2260 = vmatprep.subr.bf16.mxu0 0
      %2261 = vmatpush1.bf16.msra.mxu0 0
      %2262 = vmatprep.subr.bf16.mxu0 0
      %2263 = vmatpush1.bf16.msra.mxu0 0
      %2264 = vmatprep.subr.bf16.mxu0 0
      %2265 = vmatpush1.bf16.msra.mxu0 0
      %2266 = vmatprep.subr.bf16.mxu0 0
      %2267 = vmatpush1.bf16.msra.mxu0 0
      %2268 = vmatprep.subr.bf16.mxu0 0
      %2269 = vmatpush1.bf16.msra.mxu0 0
      %2270 = vmatprep.subr.bf16.mxu0 0
      %2271 = vmatpush1.bf16.msra.mxu0 0
      %2272 = vmatprep.subr.bf16.mxu0 0
      %2273 = vmatpush1.bf16.msra.mxu0 0
      %2274 = vmatprep.subr.bf16.mxu0 0
      %2275 = vmatpush1.bf16.msra.mxu0 0
      %2276 = vmatprep.subr.bf16.mxu0 0
      %2277 = vmatpush1.bf16.msra.mxu0 0
      %2278 = vmatprep.subr.bf16.mxu0 0
      %2279 = vmatpush1.bf16.msra.mxu0 0
      %2280 = vmatprep.mubr.bf16.mxu0 0
      %2281 = vmatmul.mubr.bf16.gmra.mrb[0].mxu0 %v2246
      %v2282 = vpop.f32.mrb[0].mxu0
      %v2283 = vadd.f32 %v2243, %v2282
      %v2284 = vpop.f32.mrb[0].mxu0
      %v2285 = vpop.f32.mrb[0].mxu0
      %v2286 = vpop.f32.mrb[0].mxu0
      %2287 = vdwg.mxu0
      %v2288 = vadd.f32 %v1508, %v2283
      %v2289 = vsel %vm628, %v2288, 0.0
      %2290 = vadd.xlane.f32.xlu0 %v2289
      %v2291 = vpop.xlane.xlu0 %2290
      %v2292 = vmul.f32 %v2291, %v632
      %v2293 = vsub.f32 %v2288, %v2292
      %v2294 = vmul.f32 %v2293, %v2293
      %v2295 = vsel %vm628, %v2294, 0.0
      %2296 = vadd.xlane.f32.xlu0 %v2295
      %v2297 = vpop.xlane.xlu0 %2296
      %v2298 = vmul.f32 %v2297, %v632
      %v2299 = vadd.f32 %v2298, 1e-05
      %v2300 = vrsqrt.pop %v2299
      %v2301 = vmul.f32 %v2293, %v2300
      %v2303 = vlaneseq
      %v2304 = vshrl.u32 %v2303, 7
      %v2305 = vsub.s32 0, %v2304
      %v2306 = vrot.slane %v1528, %v2305
      %v2308 = vmul.f32 %v2301, %v2306
      %v2310 = vlaneseq
      %v2311 = vshrl.u32 %v2310, 7
      %v2312 = vsub.s32 0, %v2311
      %v2313 = vrot.slane %v1530, %v2312
      %v2315 = vadd.f32 %v2308, %v2313
      %v2316 = vpack.c.bf16 %v2315, %v2315
      %v2317 = vpack.c.bf16 %v1533, %v1532
      %v2318 = vpack.c.bf16 %v1535, %v1534
      %v2320 = vlaneseq
      %v2321 = vshrl.u32 %v2320, 7
      %v2322 = vsub.s32 0, %v2321
      %v2323 = vrot.slane %v1537, %v2322
      %v2326 = vsel %vm628, %v2316, 0
      %2328 = vmatprep.subr.bf16.mxu0 0
      %2329 = vmatpush1.bf16.msra.mxu0 %v2317
      %2330 = vmatprep.subr.bf16.mxu0 0
      %2331 = vmatpush1.bf16.msra.mxu0 %v2318
      %2332 = vmatprep.subr.bf16.mxu0 0
      %2333 = vmatpush1.bf16.msra.mxu0 0
      %2334 = vmatprep.subr.bf16.mxu0 0
      %2335 = vmatpush1.bf16.msra.mxu0 0
      %2336 = vmatprep.subr.bf16.mxu0 0
      %2337 = vmatpush1.bf16.msra.mxu0 0
      %2338 = vmatprep.subr.bf16.mxu0 0
      %2339 = vmatpush1.bf16.msra.mxu0 0
      %2340 = vmatprep.subr.bf16.mxu0 0
      %2341 = vmatpush1.bf16.msra.mxu0 0
      %2342 = vmatprep.subr.bf16.mxu0 0
      %2343 = vmatpush1.bf16.msra.mxu0 0
      %2344 = vmatprep.subr.bf16.mxu0 0
      %2345 = vmatpush1.bf16.msra.mxu0 0
      %2346 = vmatprep.subr.bf16.mxu0 0
      %2347 = vmatpush1.bf16.msra.mxu0 0
      %2348 = vmatprep.subr.bf16.mxu0 0
      %2349 = vmatpush1.bf16.msra.mxu0 0
      %2350 = vmatprep.subr.bf16.mxu0 0
      %2351 = vmatpush1.bf16.msra.mxu0 0
      %2352 = vmatprep.subr.bf16.mxu0 0
      %2353 = vmatpush1.bf16.msra.mxu0 0
      %2354 = vmatprep.subr.bf16.mxu0 0
      %2355 = vmatpush1.bf16.msra.mxu0 0
      %2356 = vmatprep.subr.bf16.mxu0 0
      %2357 = vmatpush1.bf16.msra.mxu0 0
      %2358 = vmatprep.subr.bf16.mxu0 0
      %2359 = vmatpush1.bf16.msra.mxu0 0
      %2360 = vmatprep.mubr.bf16.mxu0 0
      %2361 = vmatmul.mubr.bf16.gmra.mrb[0].mxu0 %v2326
      %v2362 = vpop.f32.mrb[0].mxu0
      %v2363 = vadd.f32 %v2323, %v2362
      %v2364 = vpop.f32.mrb[0].mxu0
      %v2365 = vpop.f32.mrb[0].mxu0
      %v2366 = vpop.f32.mrb[0].mxu0
      %2367 = vdwg.mxu0
      %v2368 = vmul.f32 %v2363, 1.702
      %v2369 = vxor.u32 %v2368, 2147483648
      %v2370 = vmul.f32 %v2369, 1.442695
      %v2371 = vpow.pop %v2370
      %v2372 = vadd.f32 %v2371, 1.0
      %v2373 = vrcp.pop %v2372
      %v2374 = vmul.f32 1.0, %v2373
      %v2375 = vmul.f32 %v2363, %v2374
      %v2376 = vpack.c.bf16 %v2375, %v2375
      %v2377 = vpack.c.bf16 %v1540, %v1539
      %v2378 = vpack.c.bf16 %v1542, %v1541
      %v2379 = vpack.c.bf16 %v1544, %v1543
      %v2380 = vpack.c.bf16 %v1546, %v1545
      %v2381 = vpack.c.bf16 %v1548, %v1547
      %v2382 = vpack.c.bf16 %v1550, %v1549
      %v2383 = vpack.c.bf16 %v1552, %v1551
      %v2384 = vpack.c.bf16 %v1554, %v1553
      %v2386 = vlaneseq
      %v2387 = vshrl.u32 %v2386, 7
      %v2388 = vsub.s32 0, %v2387
      %v2389 = vrot.slane %v1556, %v2388
      %2391 = vmatprep.subr.bf16.mxu0 0
      %2392 = vmatpush1.bf16.msra.mxu0 %v2377
      %2393 = vmatprep.subr.bf16.mxu0 0
      %2394 = vmatpush1.bf16.msra.mxu0 %v2378
      %2395 = vmatprep.subr.bf16.mxu0 0
      %2396 = vmatpush1.bf16.msra.mxu0 %v2379
      %2397 = vmatprep.subr.bf16.mxu0 0
      %2398 = vmatpush1.bf16.msra.mxu0 %v2380
      %2399 = vmatprep.subr.bf16.mxu0 0
      %2400 = vmatpush1.bf16.msra.mxu0 %v2381
      %2401 = vmatprep.subr.bf16.mxu0 0
      %2402 = vmatpush1.bf16.msra.mxu0 %v2382
      %2403 = vmatprep.subr.bf16.mxu0 0
      %2404 = vmatpush1.bf16.msra.mxu0 %v2383
      %2405 = vmatprep.subr.bf16.mxu0 0
      %2406 = vmatpush1.bf16.msra.mxu0 %v2384
      %2407 = vmatprep.subr.bf16.mxu0 0
      %2408 = vmatpush1.bf16.msra.mxu0 0
      %2409 = vmatprep.subr.bf16.mxu0 0
      %2410 = vmatpush1.bf16.msra.mxu0 0
      %2411 = vmatprep.subr.bf16.mxu0 0
      %2412 = vmatpush1.bf16.msra.mxu0 0
      %2413 = vmatprep.subr.bf16.mxu0 0
      %2414 = vmatpush1.bf16.msra.mxu0 0
      %2415 = vmatprep.subr.bf16.mxu0 0
      %2416 = vmatpush1.bf16.msra.mxu0 0
      %2417 = vmatprep.subr.bf16.mxu0 0
      %2418 = vmatpush1.bf16.msra.mxu0 0
      %2419 = vmatprep.subr.bf16.mxu0 0
      %2420 = vmatpush1.bf16.msra.mxu0 0
      %2421 = vmatprep.subr.bf16.mxu0 0
      %2422 = vmatpush1.bf16.msra.mxu0 0
      %2423 = vmatprep.mubr.bf16.mxu0 0
      %2424 = vmatmul.mubr.bf16.gmra.mrb[0].mxu0 %v2376
      %v2425 = vpop.f32.mrb[0].mxu0
      %v2426 = vadd.f32 %v2389, %v2425
      %v2427 = vpop.f32.mrb[0].mxu0
      %v2428 = vpop.f32.mrb[0].mxu0
      %v2429 = vpop.f32.mrb[0].mxu0
      %2430 = vdwg.mxu0
      %v2431 = vadd.f32 %v2288, %v2426
      %v2432 = vld [vmem:[%s3] sm:$0x1]
      %v2433 = vld [vmem:[%s4] sm:$0x1]
      %v2434 = vsel %vm628, %v2431, 0.0
      %2435 = vadd.xlane.f32.xlu0 %v2434
      %v2436 = vpop.xlane.xlu0 %2435
      %v2437 = vmul.f32 %v2436, %v632
      %v2438 = vsub.f32 %v2431, %v2437
      %v2439 = vmul.f32 %v2438, %v2438
      %v2440 = vsel %vm628, %v2439, 0.0
      %2441 = vadd.xlane.f32.xlu0 %v2440
      %v2442 = vpop.xlane.xlu0 %2441
      %v2443 = vmul.f32 %v2442, %v632
      %v2444 = vadd.f32 %v2443, 1e-05
      %v2445 = vrsqrt.pop %v2444
      %v2446 = vmul.f32 %v2438, %v2445
      %v2448 = vlaneseq
      %v2449 = vshrl.u32 %v2448, 7
      %v2450 = vsub.s32 0, %v2449
      %v2451 = vrot.slane %v2432, %v2450
      %v2453 = vmul.f32 %v2446, %v2451
      %v2455 = vlaneseq
      %v2456 = vshrl.u32 %v2455, 7
      %v2457 = vsub.s32 0, %v2456
      %v2458 = vrot.slane %v2433, %v2457
      %v2460 = vadd.f32 %v2453, %v2458
      %v2461 = vld [vmem:[%s579] sm:$0x1]
      %v2463 = vsel %vm747, %v2461, 0
      %2465 = vmatprep.subr.mxu0 0.0
      %2466 = vmatpush1.msra.mxu0 %v2460
      %2467 = vmatprep.subr.mxu0 0.0
      %2468 = vmatpush1.msra.mxu0 0.0
      %2469 = vmatprep.subr.mxu0 0.0
      %2470 = vmatpush1.msra.mxu0 0.0
      %2471 = vmatprep.subr.mxu0 0.0
      %2472 = vmatpush1.msra.mxu0 0.0
      %2473 = vmatprep.subr.mxu0 0.0
      %2474 = vmatpush1.msra.mxu0 0.0
      %2475 = vmatprep.subr.mxu0 0.0
      %2476 = vmatpush1.msra.mxu0 0.0
      %2477 = vmatprep.subr.mxu0 0.0
      %2478 = vmatpush1.msra.mxu0 0.0
      %2479 = vmatprep.subr.mxu0 0.0
      %2480 = vmatpush1.msra.mxu0 0.0
      %2481 = vmatprep.subr.mxu0 0.0
      %2482 = vmatpush1.msra.mxu0 0.0
      %2483 = vmatprep.subr.mxu0 0.0
      %2484 = vmatpush1.msra.mxu0 0.0
      %2485 = vmatprep.subr.mxu0 0.0
      %2486 = vmatpush1.msra.mxu0 0.0
      %2487 = vmatprep.subr.mxu0 0.0
      %2488 = vmatpush1.msra.mxu0 0.0
      %2489 = vmatprep.subr.mxu0 0.0
      %2490 = vmatpush1.msra.mxu0 0.0
      %2491 = vmatprep.subr.mxu0 0.0
      %2492 = vmatpush1.msra.mxu0 0.0
      %2493 = vmatprep.subr.mxu0 0.0
      %2494 = vmatpush1.msra.mxu0 0.0
      %2495 = vmatprep.subr.mxu0 0.0
      %2496 = vmatpush1.msra.mxu0 0.0
      %2497 = vmatprep.subr.mxu0 0.0
      %2498 = vmatpush1.msra.mxu0 0.0
      %2499 = vmatprep.subr.mxu0 0.0
      %2500 = vmatpush1.msra.mxu0 0.0
      %2501 = vmatprep.subr.mxu0 0.0
      %2502 = vmatpush1.msra.mxu0 0.0
      %2503 = vmatprep.subr.mxu0 0.0
      %2504 = vmatpush1.msra.mxu0 0.0
      %2505 = vmatprep.subr.mxu0 0.0
      %2506 = vmatpush1.msra.mxu0 0.0
      %2507 = vmatprep.subr.mxu0 0.0
      %2508 = vmatpush1.msra.mxu0 0.0
      %2509 = vmatprep.subr.mxu0 0.0
      %2510 = vmatpush1.msra.mxu0 0.0
      %2511 = vmatprep.subr.mxu0 0.0
      %2512 = vmatpush1.msra.mxu0 0.0
      %2513 = vmatprep.subr.mxu0 0.0
      %2514 = vmatpush1.msra.mxu0 0.0
      %2515 = vmatprep.subr.mxu0 0.0
      %2516 = vmatpush1.msra.mxu0 0.0
      %2517 = vmatprep.subr.mxu0 0.0
      %2518 = vmatpush1.msra.mxu0 0.0
      %2519 = vmatprep.subr.mxu0 0.0
      %2520 = vmatpush1.msra.mxu0 0.0
      %2521 = vmatprep.subr.mxu0 0.0
      %2522 = vmatpush1.msra.mxu0 0.0
      %2523 = vmatprep.subr.mxu0 0.0
      %2524 = vmatpush1.msra.mxu0 0.0
      %2525 = vmatprep.subr.mxu0 0.0
      %2526 = vmatpush1.msra.mxu0 0.0
      %2527 = vmatprep.subr.mxu0 0.0
      %2528 = vmatpush1.msra.mxu0 0.0
      %2529 = vmatprep.mubr.f32.mxu0 0.0
      %2530 = vmatmul.mubr.f32.gmra.mrb[0].mxu0 %v2463
      %v2531 = vpop.f32.mrb[0].mxu0
      %v2532 = vadd.f32 0.0, %v2531
      %v2533 = vpop.f32.mrb[0].mxu0
      %2534 = vdwg.mxu0
      %v2535 = vld [vmem:[%s5] sm:$0xff]
      %v2536 = vld [vmem:[%s5 + $0x8] sm:$0xff]
      %v2537 = vld [vmem:[%s5 + $0x10] sm:$0xff]
      %v2538 = vld [vmem:[%s5 + $0x18] sm:$0xff]
      %v2539 = vpack.c.bf16 %v2532, %v2532
      %v2540 = vpack.c.bf16 %v2536, %v2535
      %v2541 = vpack.c.bf16 %v2538, %v2537
      %v2543 = vsel %vm628, %v2539, 0
      %2545 = vmatprep.subr.bf16.mxu0 0
      %2546 = vmatpush1.bf16.msra.mxu0 %v2540
      %2547 = vmatprep.subr.bf16.mxu0 0
      %2548 = vmatpush1.bf16.msra.mxu0 %v2541
      %2549 = vmatprep.subr.bf16.mxu0 0
      %2550 = vmatpush1.bf16.msra.mxu0 0
      %2551 = vmatprep.subr.bf16.mxu0 0
      %2552 = vmatpush1.bf16.msra.mxu0 0
      %2553 = vmatprep.subr.bf16.mxu0 0
      %2554 = vmatpush1.bf16.msra.mxu0 0
      %2555 = vmatprep.subr.bf16.mxu0 0
      %2556 = vmatpush1.bf16.msra.mxu0 0
      %2557 = vmatprep.subr.bf16.mxu0 0
      %2558 = vmatpush1.bf16.msra.mxu0 0
      %2559 = vmatprep.subr.bf16.mxu0 0
      %2560 = vmatpush1.bf16.msra.mxu0 0
      %2561 = vmatprep.subr.bf16.mxu0 0
      %2562 = vmatpush1.bf16.msra.mxu0 0
      %2563 = vmatprep.subr.bf16.mxu0 0
      %2564 = vmatpush1.bf16.msra.mxu0 0
      %2565 = vmatprep.subr.bf16.mxu0 0
      %2566 = vmatpush1.bf16.msra.mxu0 0
      %2567 = vmatprep.subr.bf16.mxu0 0
      %2568 = vmatpush1.bf16.msra.mxu0 0
      %2569 = vmatprep.subr.bf16.mxu0 0
      %2570 = vmatpush1.bf16.msra.mxu0 0
      %2571 = vmatprep.subr.bf16.mxu0 0
      %2572 = vmatpush1.bf16.msra.mxu0 0
      %2573 = vmatprep.subr.bf16.mxu0 0
      %2574 = vmatpush1.bf16.msra.mxu0 0
      %2575 = vmatprep.subr.bf16.mxu0 0
      %2576 = vmatpush1.bf16.msra.mxu0 0
      %2577 = vmatprep.mubr.bf16.mxu0 0
      %2578 = vmatmul.mubr.bf16.gmra.mrb[0].mxu0 %v2543
      %v2579 = vpop.f32.mrb[0].mxu0
      %v2580 = vadd.f32 0.0, %v2579
      %v2581 = vpop.f32.mrb[0].mxu0
      %v2582 = vpop.f32.mrb[0].mxu0
      %v2583 = vpop.f32.mrb[0].mxu0
      %2584 = vdwg.mxu0
      %vm2585 = vcmask 253952
      %2586 = vst.msk [vmem:[%s582] sm:$0x1] %vm2585, %v2580
      %p2587 = scmp.lt.s32.totalorder %s29, 1
      %s2588 = scalar_select %p2587, %s29, 1
      %s2589 = scalar_lea.vmem %s18, %s2588
      // Predicated region
      $region93: #{video_clip_forward.5} parent=91 // pred_check
        %p2590 = pneg %p435
      $region94: #{video_clip_forward.5} parent=91 // pred_check_branch
        %2592 = sbr.rel (%p2590) target = $region96
      $region95: #{video_clip_forward.5} parent=91 // pred_region
        _
      $region96: #{video_clip_forward.5} parent=91 // pred_fallthru
        _
    $region92: #{video_clip_forward.5} parent=5 // pred_fallthru
      _
    %p2593 = scmp.le.s32.totalorder 2, %s24
    // Predicated region
    $region97: #{video_clip_forward.5} parent=5 // pred_check
      %p2594 = pneg %p2593
    $region98: #{video_clip_forward.5} parent=5 // pred_check_branch
      %2596 = sbr.rel (%p2594) target = $region100
    $region99: #{video_clip_forward.5} parent=5 // pred_region
      %s2597 = ssub.s32 %s24, 2
      // Predicated region
      $region101: #{video_clip_forward.5} parent=99 // pred_check
        %p2598 = pneg %p441
      $region102: #{video_clip_forward.5} parent=99 // pred_check_branch
        %2600 = sbr.rel (%p2598) target = $region104
      $region103: #{video_clip_forward.5} parent=99 // pred_region
        %p2601 = scmp.lt.s32.totalorder %s30, 1
        %s2602 = scalar_select %p2601, %s30, 1
        %s2603 = scalar_lea.vmem %s18, %s2602
      $region104: #{video_clip_forward.5} parent=99 // pred_fallthru
        _
    $region100: #{video_clip_forward.5} parent=5 // pred_fallthru
      _
  $region6: #{video_clip_forward.5} parent=0 // loop_footer
    %s28 = sadd.s32 1, %s24
  $region7: #{video_clip_forward.5} parent=0 // loop_footer_branch
    %23 = sbr.rel target = $region3
  $region8: #{video_clip_forward.5} parent=0 // loop_exit
    _

</llo_original>
